<compile_context>
chip_gen: v5e
topology: v5e:2x2
jax: 0.10.0
libtpu: 0.0.40
codegen_flags: <defaults>
</compile_context>

<pallas_src>
import math

import jax
import jax.numpy as jnp
from jax import lax
from jax.experimental import pallas as pl
from jax.experimental.pallas import tpu as pltpu

# -------------------- configuration (small shapes consistent with the module) --------------
B          = 2                      # p['batch']
MAXQLEN    = 4                      # p['maxqlen']   (T1 of the 2-D GRU)
WIN        = 8                      # passage window (original hardcodes 100)
MAXDOCLEN  = 16                     # p['maxdoclen'] -> passagelen = MAXDOCLEN // WIN
PASSAGELEN = MAXDOCLEN // WIN
SPATIAL_H  = 2                      # p['spatialGRU'] (forward requires 4*spatialGRU == 8)
LSTM_H     = 6                      # p['LSTMdim']    (forward hardcodes the 6-split)
KMAX       = 3                      # p['kmax']
EMB_DIM    = 8
VOCAB      = 50

HP = 8                              # sublane padding of every feature chunk
TN = 128                            # lane tile for the batch-of-matrices dim of the 2-D GRU
TB = 128                            # lane tile for the batch dim of the head kernel


# ============================== Pallas kernel 1: 2-D spatial GRU ===========================
def gru2d_kernel(s_ref, wt_ref, wl_ref, wd_ref, wx_ref, wb_ref,
                 ww_ref, wwb_ref, ut_ref, ul_ref, ud_ref, ub_ref,
                 out_ref, hid_ref, rzp_ref, wxp_ref):
    # s_ref: (Q, W, HP, TN)  -- query rows, doc cols, padded channels on sublanes, N on lanes.
    # hid_ref: (2*(W+1), HP, TN) ping-pong hidden rows (slot = row parity; col 0 stays zero).
    # rzp_ref: (W, 7*HP, TN) hoisted gate pre-activations (x + top + diag contributions).
    # wxp_ref: (W, HP, TN)   hoisted W@x + b.
    Q, W = s_ref.shape[0], s_ref.shape[1]
    hp, tn = out_ref.shape

    wrz_t = wt_ref[...]          # (7*HP, HP)  columns acting on h_top
    wrz_l = wl_ref[...]          # (7*HP, HP)  columns acting on h_left
    wrz_d = wd_ref[...]          # (7*HP, HP)  columns acting on h_diag
    wrz_x = wx_ref[...]          # (7*HP, HP)  columns acting on x
    wrz_b = wb_ref[...]          # (7*HP, 1)
    w_w = ww_ref[...]            # (HP, HP)
    w_b = wwb_ref[...]           # (HP, 1)
    u_t = ut_ref[...]            # (HP, HP)
    u_l = ul_ref[...]            # (HP, HP)
    u_d = ud_ref[...]            # (HP, HP)
    u_b = ub_ref[...]            # (HP, 1)

    # zero both ping-pong slots once; column 0 of each slot is never written afterwards,
    # so it permanently provides the zero left/top/diag boundary states.
    hid_ref[...] = jnp.zeros_like(hid_ref)

    unroll = True if W <= 16 else 4

    def row_body(i, carry):
        prev_base = (i % 2) * (W + 1)          # slot holding row i-1 hiddens
        cur_base = (W + 1) - prev_base         # slot that row i writes

        # ---- hoisted, dependency-free per-row precompute (pipelines on the MXU) ----------
        def pre_body(j, c2):
            x = s_ref[i, j]                    # (HP, TN)
            h_top = hid_ref[prev_base + j + 1]
            h_diag = hid_ref[prev_base + j]
            rzp_ref[j] = (jnp.dot(wrz_x, x, preferred_element_type=jnp.float32)
                          + jnp.dot(wrz_t, h_top, preferred_element_type=jnp.float32)
                          + jnp.dot(wrz_d, h_diag, preferred_element_type=jnp.float32)
                          + wrz_b)
            wxp_ref[j] = jnp.dot(w_w, x, preferred_element_type=jnp.float32) + w_b
            return c2

        lax.fori_loop(0, W, pre_body, 0, unroll=unroll)

        # ---- serial wavefront: only h_left-dependent work stays on the chain -------------
        def col_body(j, c2):
            h_top = hid_ref[prev_base + j + 1]
            h_diag = hid_ref[prev_base + j]
            h_left = hid_ref[cur_base + j]

            rz = rzp_ref[j] + jnp.dot(wrz_l, h_left, preferred_element_type=jnp.float32)

            rl = jax.nn.sigmoid(rz[0 * hp:1 * hp])
            rt = jax.nn.sigmoid(rz[1 * hp:2 * hp])
            rd = jax.nn.sigmoid(rz[2 * hp:3 * hp])
            zi = rz[3 * hp:4 * hp]
            zl = rz[4 * hp:5 * hp]
            zt = rz[5 * hp:6 * hp]
            zd = rz[6 * hp:7 * hp]

            # softmax across the 4 "z" gates (per hidden unit, per matrix)
            m = jnp.maximum(jnp.maximum(zi, zl), jnp.maximum(zt, zd))
            ei, el, et, ed = (jnp.exp(zi - m), jnp.exp(zl - m),
                              jnp.exp(zt - m), jnp.exp(zd - m))
            inv = pl.reciprocal(ei + el + et + ed, approx=True)
            zi, zl, zt, zd = ei * inv, el * inv, et * inv, ed * inv

            u = (jnp.dot(u_t, rl * h_top, preferred_element_type=jnp.float32)
                 + jnp.dot(u_l, rt * h_left, preferred_element_type=jnp.float32)
                 + jnp.dot(u_d, rd * h_diag, preferred_element_type=jnp.float32)
                 + u_b)
            h1 = jnp.tanh(wxp_ref[j] + u)
            h = zl * h_left + zt * h_top + zd * h_diag + zi * h1
            hid_ref[cur_base + j + 1] = h
            return c2

        lax.fori_loop(0, W, col_body, 0, unroll=unroll)
        return carry

    lax.fori_loop(0, Q, row_body, 0)

    final_base = (Q % 2) * (W + 1)              # slot written by the last row (static)
    out_ref[...] = hid_ref[final_base + W]


def gru2d_pair(S_pair, cell1, cell3):
    """S_pair: (2, N, Q, W, 3) -> (2, N, SPATIAL_H); cell 0 uses cell1, cell 1 uses cell3."""
    _, N, Q, W, _ = S_pair.shape
    n_pad = int(pl.cdiv(N, TN)) * TN
    n_tiles = n_pad // TN

    St = jnp.transpose(S_pair, (0, 2, 3, 4, 1)).astype(jnp.float32)   # (2, Q, W, 3, N)
    St = jnp.pad(St, ((0, 0), (0, 0), (0, 0), (0, HP - 3), (0, n_pad - N)))

    def stack(fn):
        return jnp.stack([fn(cell1), fn(cell3)], axis=0)

    wrz_t = stack(lambda c: c["wrz_w"][:, 0 * HP:1 * HP])
    wrz_l = stack(lambda c: c["wrz_w"][:, 1 * HP:2 * HP])
    wrz_d = stack(lambda c: c["wrz_w"][:, 2 * HP:3 * HP])
    wrz_x = stack(lambda c: c["wrz_w"][:, 3 * HP:4 * HP])
    wrz_b = stack(lambda c: c["wrz_b"])
    w_w = stack(lambda c: c["w_w"])
    w_b = stack(lambda c: c["w_b"])
    u_t = stack(lambda c: c["u_w"][:, 0 * HP:1 * HP])
    u_l = stack(lambda c: c["u_w"][:, 1 * HP:2 * HP])
    u_d = stack(lambda c: c["u_w"][:, 2 * HP:3 * HP])
    u_b = stack(lambda c: c["u_b"])
    weights = [wrz_t, wrz_l, wrz_d, wrz_x, wrz_b, w_w, w_b, u_t, u_l, u_d, u_b]

    def wspec(a):
        nd = a.ndim
        return pl.BlockSpec((None,) + a.shape[1:],
                            lambda c, n, _nd=nd: (c,) + (0,) * (_nd - 1))

    out = pl.pallas_call(
        gru2d_kernel,
        out_shape=jax.ShapeDtypeStruct((2, HP, n_pad), jnp.float32),
        grid=(2, n_tiles),
        in_specs=[pl.BlockSpec((None, Q, W, HP, TN), lambda c, n: (c, 0, 0, 0, n))]
                 + [wspec(a) for a in weights],
        out_specs=pl.BlockSpec((None, HP, TN), lambda c, n: (c, 0, n)),
        scratch_shapes=[pltpu.VMEM((2 * (W + 1), HP, TN), jnp.float32),
                        pltpu.VMEM((W, 7 * HP, TN), jnp.float32),
                        pltpu.VMEM((W, HP, TN), jnp.float32)],
        compiler_params=pltpu.CompilerParams(
            dimension_semantics=("parallel", "parallel"),
            vmem_limit_bytes=48 * 1024 * 1024),
    )(St, *weights)
    return jnp.transpose(out[:, :SPATIAL_H, :N], (0, 2, 1))           # (2, N, SPATIAL_H)


# ================== Pallas kernel 2: bi-LSTM + Wv + top-k + final linear ===================
def head_kernel(x_ref, wv_w_ref, wv_b_ref,
                wih_f_ref, whh_f_ref, b_f_ref,
                wih_b_ref, whh_b_ref, b_b_ref,
                fc_w_ref, fc_b_ref, out_ref):
    # x_ref: (F=8, P*TB) -- features on sublanes, (passage step, batch) flattened on lanes.
    hp = wv_w_ref.shape[0]              # 8 = sublane-padded LSTM hidden (valid rows = LSTM_H)
    kmax = fc_w_ref.shape[0]
    tb = out_ref.shape[1]
    P = x_ref.shape[1] // tb

    x_all = x_ref[...]                  # (8, P*TB)
    whh_f = whh_f_ref[...]
    whh_b = whh_b_ref[...]

    # hoisted input-to-hidden projections: one wide matmul each instead of P tiny ones.
    gi_f = jnp.dot(wih_f_ref[...], x_all, preferred_element_type=jnp.float32) + b_f_ref[...]
    gi_b = jnp.dot(wih_b_ref[...], x_all, preferred_element_type=jnp.float32) + b_b_ref[...]
    vt_all = jnp.tanh(jnp.dot(wv_w_ref[...], x_all,
                              preferred_element_type=jnp.float32) + wv_b_ref[...])

    def lstm_step(gi, h, c, whh):
        g = gi + jnp.dot(whh, h, preferred_element_type=jnp.float32)   # (4*hp, TB)
        i = jax.nn.sigmoid(g[0 * hp:1 * hp])
        f = jax.nn.sigmoid(g[1 * hp:2 * hp])
        gg = jnp.tanh(g[2 * hp:3 * hp])
        o = jax.nn.sigmoid(g[3 * hp:4 * hp])
        c_new = f * c + i * gg
        return o * jnp.tanh(c_new), c_new

    zero = jnp.zeros((hp, tb), jnp.float32)
    h, c = zero, zero
    h_fwd = []
    for t in range(P):
        h, c = lstm_step(gi_f[:, t * tb:(t + 1) * tb], h, c, whh_f)
        h_fwd.append(h)
    h, c = zero, zero
    h_bwd = [None] * P
    for t in range(P - 1, -1, -1):
        h, c = lstm_step(gi_b[:, t * tb:(t + 1) * tb], h, c, whh_b)
        h_bwd[t] = h

    # evidence = cat((vt, lstm_fwd + lstm_bwd), dim=0) ordering
    evidence = ([vt_all[:, t * tb:(t + 1) * tb] for t in range(P)]
                + [h_fwd[t] + h_bwd[t] for t in range(P)])
    n_ev = len(evidence)

    # top-k via kmax running-max sweeps (stable: ties broken by lowest evidence index)
    NEG = jnp.float32(-1e30)
    score = jnp.zeros((1, tb), jnp.float32)
    for kk in range(kmax):
        cur = evidence[0]
        for t in range(1, n_ev):
            cur = jnp.maximum(cur, evidence[t])
        w_k = fc_w_ref[kk]                                  # (hp, 1)
        score = score + jnp.sum(w_k * cur, axis=0, keepdims=True)
        if kk + 1 < kmax:
            taken = jnp.zeros((hp, tb), jnp.bool_)
            nxt = []
            for t in range(n_ev):
                sel = jnp.logical_and(evidence[t] == cur, jnp.logical_not(taken))
                nxt.append(jnp.where(sel, NEG, evidence[t]))
                taken = jnp.logical_or(taken, sel)
            evidence = nxt
    out_ref[...] = score + fc_b_ref[...]


def head(tpl, p):
    """tpl: (P, B, 4*SPATIAL_H) -> score (B,)"""
    P_, b, F = tpl.shape
    x = jnp.transpose(tpl, (2, 0, 1)).astype(jnp.float32)              # (F, P, B)
    x = jnp.pad(x, ((0, 0), (0, 0), (0, TB - b))).reshape(F, P_ * TB)  # (F, P*TB)

    vspec = pl.BlockSpec(memory_space=pltpu.MemorySpace.VMEM)
    out = pl.pallas_call(
        head_kernel,
        out_shape=jax.ShapeDtypeStruct((1, TB), jnp.float32),
        in_specs=[vspec] * 11,
        out_specs=vspec,
    )(x, p["wv_w"], p["wv_b"],
      p["w_ih_f"], p["w_hh_f"], p["b_f"],
      p["w_ih_b"], p["w_hh_b"], p["b_b"],
      p["fc_w"], p["fc_b"])
    return out[0, :b]


# ================================ parameter construction ===================================
def block_pad_matrix(w, row_sizes, col_sizes, pad=HP):
    out = jnp.zeros((len(row_sizes) * pad, len(col_sizes) * pad), jnp.float32)
    r0 = 0
    for ri, rs in enumerate(row_sizes):
        c0 = 0
        for ci, cs in enumerate(col_sizes):
            out = out.at[ri * pad:ri * pad + rs, ci * pad:ci * pad + cs].set(
                w[r0:r0 + rs, c0:c0 + cs])
            c0 += cs
        r0 += rs
    return out


def block_pad_bias(b, row_sizes, pad=HP):
    out = jnp.zeros((len(row_sizes) * pad, 1), jnp.float32)
    r0 = 0
    for ri, rs in enumerate(row_sizes):
        out = out.at[ri * pad:ri * pad + rs, :].set(b[r0:r0 + rs].reshape(rs, 1))
        r0 += rs
    return out


def init_params(key):
    keys = jax.random.split(key, 32)
    kit = iter(keys)

    def uni(shape, std):
        return jax.random.uniform(next(kit), shape, jnp.float32, -std, std)

    E, H, Hl = EMB_DIM, SPATIAL_H, LSTM_H
    params = {}
    params["embedding"] = jax.random.normal(next(kit), (VOCAB, E), jnp.float32) * 0.1
    s_ws = 1.0 / math.sqrt(E)
    params["ws_w"] = uni((1, E), s_ws)
    params["ws_b"] = uni((1,), s_ws)

    def gru_cell_params():
        s_wrz = 1.0 / math.sqrt(3 * H + 3)
        s_w = 1.0 / math.sqrt(3)
        s_u = 1.0 / math.sqrt(3 * H)
        wrz_w = uni((7 * H, 3 * H + 3), s_wrz)
        wrz_b = uni((7 * H,), s_wrz)
        w_w = uni((H, 3), s_w)
        w_b = uni((H,), s_w)
        u_w = uni((H, 3 * H), s_u)
        u_b = uni((H,), s_u)
        return {
            "wrz_w": block_pad_matrix(wrz_w, [H] * 7, [H, H, H, 3]),
            "wrz_b": block_pad_bias(wrz_b, [H] * 7),
            "w_w": block_pad_matrix(w_w, [H], [3]),
            "w_b": block_pad_bias(w_b, [H]),
            "u_w": block_pad_matrix(u_w, [H], [H, H, H]),
            "u_b": block_pad_bias(u_b, [H]),
        }

    params["gru1"] = gru_cell_params()
    params["gru3"] = gru_cell_params()

    F = 4 * H
    s_l = 1.0 / math.sqrt(Hl)
    s_v = 1.0 / math.sqrt(F)
    s_fc = 1.0 / math.sqrt(Hl * KMAX)
    w_ih_f = uni((4 * Hl, F), s_l); w_hh_f = uni((4 * Hl, Hl), s_l)
    b_f = uni((4 * Hl,), s_l) + uni((4 * Hl,), s_l)        # b_ih + b_hh
    w_ih_b = uni((4 * Hl, F), s_l); w_hh_b = uni((4 * Hl, Hl), s_l)
    b_b = uni((4 * Hl,), s_l) + uni((4 * Hl,), s_l)
    wv_w = uni((Hl, F), s_v); wv_b = uni((Hl,), s_v)
    fc_w = uni((1, Hl * KMAX), s_fc)
    fc_b = uni((1,), s_fc)

    fc_r = fc_w.reshape(Hl, KMAX)                          # [feature, k]  (ans.view ordering)
    fc_pad = jnp.zeros((KMAX, HP, 1), jnp.float32).at[:, :Hl, 0].set(fc_r.T)

    params["head"] = {
        "wv_w": block_pad_matrix(wv_w, [Hl], [F]),
        "wv_b": block_pad_bias(wv_b, [Hl]),
        "w_ih_f": block_pad_matrix(w_ih_f, [Hl] * 4, [F]),
        "w_hh_f": block_pad_matrix(w_hh_f, [Hl] * 4, [Hl]),
        "b_f": block_pad_bias(b_f, [Hl] * 4),
        "w_ih_b": block_pad_matrix(w_ih_b, [Hl] * 4, [F]),
        "w_hh_b": block_pad_matrix(w_hh_b, [Hl] * 4, [Hl]),
        "b_b": block_pad_bias(b_b, [Hl] * 4),
        "fc_w": fc_pad,
        "fc_b": fc_b.reshape(1, 1),
    }
    return params


# ===================================== full forward ========================================
def hint_forward(params, sentence, query_sentence, M_XOR, M_cos, masks):
    P, W, Q = PASSAGELEN, WIN, MAXQLEN
    emb = params["embedding"]
    # TODO(synk): embedding gather + 1-unit Ws projection kept as plain-JAX glue (not hot path).
    x = emb[sentence]                                      # (B, D, E)
    qx = emb[query_sentence]                               # (B, Q, E)
    X_i = (qx @ params["ws_w"].T + params["ws_b"]).reshape(B, Q)
    Y_j = (x @ params["ws_w"].T + params["ws_b"]).reshape(B, MAXDOCLEN)

    Xp = jnp.broadcast_to(X_i[None, :, :, None], (P, B, Q, W))
    Yp = jnp.broadcast_to(
        jnp.transpose(Y_j.reshape(B, P, W), (1, 0, 2))[:, :, None, :], (P, B, Q, W))
    to_p = lambda M: jnp.transpose(M.reshape(B, Q, P, W), (2, 0, 1, 3))
    Mcos_p, Mxor_p, mask_p = to_p(M_cos), to_p(M_XOR), to_p(masks)

    S_cos = jnp.stack([Xp, Yp, Mcos_p], axis=-1) * (1.0 - mask_p)[..., None]
    S_xor = jnp.stack([Xp, Yp, Mxor_p], axis=-1) * (1.0 - mask_p)[..., None]
    S_cos1 = S_cos.reshape(P * B, Q, W, 3)
    S_xor1 = S_xor.reshape(P * B, Q, W, 3)

    # forward-direction input [xor ; cos] and the doubly-reversed (matrix_inv) input, stacked
    # along a "cell" axis so both 2-D GRU cells run in ONE fused pallas_call.
    S_fwd = jnp.concatenate([S_xor1, S_cos1], axis=0)
    S_inv = jnp.concatenate([S_xor1[:, ::-1, ::-1, :], S_cos1[:, ::-1, ::-1, :]], axis=0)
    H_pair = gru2d_pair(jnp.stack([S_fwd, S_inv], axis=0),
                        params["gru1"], params["gru3"])            # (2, 2*P*B, SPATIAL_H)
    H_fwd, H_inv = H_pair[0], H_pair[1]

    e = jnp.concatenate([H_fwd[:P * B], H_fwd[P * B:]], axis=-1)
    e_inv = jnp.concatenate([H_inv[:P * B], H_inv[P * B:]], axis=-1)
    passage_level_e = jnp.concatenate([e, e_inv], axis=-1)          # (P*B, 4*SPATIAL_H)
    tpl = passage_level_e.reshape(P, B, 4 * SPATIAL_H)
    return head(tpl, params["head"])                                # (B,)


if __name__ == "__main__":
    key = jax.random.PRNGKey(0)
    kp, k1, k2, k3, k4, k5 = jax.random.split(key, 6)
    params = init_params(kp)

    sentence = jax.random.randint(k1, (B, MAXDOCLEN), 0, VOCAB, dtype=jnp.int32)
    query_sentence = jax.random.randint(k2, (B, MAXQLEN), 0, VOCAB, dtype=jnp.int32)
    M_XOR = jax.random.bernoulli(k3, 0.5, (B, MAXQLEN, MAXDOCLEN)).astype(jnp.float32)
    M_cos = jax.random.uniform(k4, (B, MAXQLEN, MAXDOCLEN), jnp.float32, -1.0, 1.0)
    masks = jax.random.bernoulli(k5, 0.2, (B, MAXQLEN, MAXDOCLEN)).astype(jnp.float32)

    score = jax.jit(hint_forward)(params, sentence, query_sentence, M_XOR, M_cos, masks)
    score = jax.block_until_ready(score)
    assert score.shape == (B,), score.shape
    assert bool(jnp.all(jnp.isfinite(score)))
    print("KERNEL_OK")
</pallas_src>

<mosaic_0001>
module attributes {stable_mosaic.version = 11 : i64} {
  func.func @head_kernel(%arg0: memref<8x256xf32, #tpu.memory_space<vmem>>, %arg1: memref<8x8xf32, #tpu.memory_space<vmem>>, %arg2: memref<8x1xf32, #tpu.memory_space<vmem>>, %arg3: memref<32x8xf32, #tpu.memory_space<vmem>>, %arg4: memref<32x8xf32, #tpu.memory_space<vmem>>, %arg5: memref<32x1xf32, #tpu.memory_space<vmem>>, %arg6: memref<32x8xf32, #tpu.memory_space<vmem>>, %arg7: memref<32x8xf32, #tpu.memory_space<vmem>>, %arg8: memref<32x1xf32, #tpu.memory_space<vmem>>, %arg9: memref<3x8x1xf32, #tpu.memory_space<vmem>>, %arg10: memref<1x1xf32, #tpu.memory_space<vmem>>, %arg11: memref<1x128xf32, #tpu.memory_space<vmem>>) attributes {dimension_semantics = [], scalar_prefetch = 0 : i64, scratch_operands = 0 : i64, tpu.core_type = #tpu.core_type<tc>} {
    %c0 = arith.constant 0 : index
    %c0_0 = arith.constant 0 : index
    %0 = vector.load %arg0[%c0, %c0_0] : memref<8x256xf32, #tpu.memory_space<vmem>>, vector<8x256xf32>
    %c0_1 = arith.constant 0 : index
    %c0_2 = arith.constant 0 : index
    %1 = vector.load %arg4[%c0_1, %c0_2] : memref<32x8xf32, #tpu.memory_space<vmem>>, vector<32x8xf32>
    %c0_3 = arith.constant 0 : index
    %c0_4 = arith.constant 0 : index
    %2 = vector.load %arg7[%c0_3, %c0_4] : memref<32x8xf32, #tpu.memory_space<vmem>>, vector<32x8xf32>
    %c0_5 = arith.constant 0 : index
    %c0_6 = arith.constant 0 : index
    %3 = vector.load %arg3[%c0_5, %c0_6] : memref<32x8xf32, #tpu.memory_space<vmem>>, vector<32x8xf32>
    %cst = arith.constant dense<0.000000e+00> : vector<32x256xf32>
    %4 = tpu.matmul %3, %0, %cst {dimension_numbers = #tpu.dot_dimension_numbers<[1], [0], [0], [1], [0, 0, 1, 1], [], []>} : vector<32x8xf32>, vector<8x256xf32>, vector<32x256xf32> -> vector<32x256xf32>
    %c0_7 = arith.constant 0 : index
    %c0_8 = arith.constant 0 : index
    %5 = vector.load %arg5[%c0_7, %c0_8] : memref<32x1xf32, #tpu.memory_space<vmem>>, vector<32x1xf32>
    %6 = vector.broadcast %5 : vector<32x1xf32> to vector<32x256xf32>
    %7 = arith.addf %4, %6 : vector<32x256xf32>
    %c0_9 = arith.constant 0 : index
    %c0_10 = arith.constant 0 : index
    %8 = vector.load %arg6[%c0_9, %c0_10] : memref<32x8xf32, #tpu.memory_space<vmem>>, vector<32x8xf32>
    %cst_11 = arith.constant dense<0.000000e+00> : vector<32x256xf32>
    %9 = tpu.matmul %8, %0, %cst_11 {dimension_numbers = #tpu.dot_dimension_numbers<[1], [0], [0], [1], [0, 0, 1, 1], [], []>} : vector<32x8xf32>, vector<8x256xf32>, vector<32x256xf32> -> vector<32x256xf32>
    %c0_12 = arith.constant 0 : index
    %c0_13 = arith.constant 0 : index
    %10 = vector.load %arg8[%c0_12, %c0_13] : memref<32x1xf32, #tpu.memory_space<vmem>>, vector<32x1xf32>
    %11 = vector.broadcast %10 : vector<32x1xf32> to vector<32x256xf32>
    %12 = arith.addf %9, %11 : vector<32x256xf32>
    %c0_14 = arith.constant 0 : index
    %c0_15 = arith.constant 0 : index
    %13 = vector.load %arg1[%c0_14, %c0_15] : memref<8x8xf32, #tpu.memory_space<vmem>>, vector<8x8xf32>
    %cst_16 = arith.constant dense<0.000000e+00> : vector<8x256xf32>
    %14 = tpu.matmul %13, %0, %cst_16 {dimension_numbers = #tpu.dot_dimension_numbers<[1], [0], [0], [1], [0, 0, 1, 1], [], []>} : vector<8x8xf32>, vector<8x256xf32>, vector<8x256xf32> -> vector<8x256xf32>
    %c0_17 = arith.constant 0 : index
    %c0_18 = arith.constant 0 : index
    %15 = vector.load %arg2[%c0_17, %c0_18] : memref<8x1xf32, #tpu.memory_space<vmem>>, vector<8x1xf32>
    %16 = vector.broadcast %15 : vector<8x1xf32> to vector<8x256xf32>
    %17 = arith.addf %14, %16 : vector<8x256xf32>
    %18 = math.tanh %17 : vector<8x256xf32>
    %cst_19 = arith.constant 0.000000e+00 : f32
    %19 = vector.broadcast %cst_19 : f32 to vector<8x128xf32>
    %20 = vector.extract_strided_slice %7 {offsets = [0, 0], sizes = [32, 128], strides = [1, 1]} : vector<32x256xf32> to vector<32x128xf32>
    %cst_20 = arith.constant dense<0.000000e+00> : vector<32x128xf32>
    %21 = tpu.matmul %1, %19, %cst_20 {dimension_numbers = #tpu.dot_dimension_numbers<[1], [0], [0], [1], [0, 0, 1, 1], [], []>} : vector<32x8xf32>, vector<8x128xf32>, vector<32x128xf32> -> vector<32x128xf32>
    %22 = arith.addf %20, %21 : vector<32x128xf32>
    %23 = vector.extract_strided_slice %22 {offsets = [0, 0], sizes = [8, 128], strides = [1, 1]} : vector<32x128xf32> to vector<8x128xf32>
    %24 = arith.negf %23 : vector<8x128xf32>
    %25 = math.exp %24 : vector<8x128xf32>
    %cst_21 = arith.constant 1.000000e+00 : f32
    %26 = vector.broadcast %cst_21 : f32 to vector<8x128xf32>
    %27 = arith.addf %26, %25 : vector<8x128xf32>
    %28 = arith.divf %26, %27 : vector<8x128xf32>
    %29 = vector.extract_strided_slice %22 {offsets = [8, 0], sizes = [8, 128], strides = [1, 1]} : vector<32x128xf32> to vector<8x128xf32>
    %30 = arith.negf %29 : vector<8x128xf32>
    %31 = math.exp %30 : vector<8x128xf32>
    %cst_22 = arith.constant 1.000000e+00 : f32
    %32 = vector.broadcast %cst_22 : f32 to vector<8x128xf32>
    %33 = arith.addf %32, %31 : vector<8x128xf32>
    %34 = arith.divf %32, %33 : vector<8x128xf32>
    %35 = vector.extract_strided_slice %22 {offsets = [16, 0], sizes = [8, 128], strides = [1, 1]} : vector<32x128xf32> to vector<8x128xf32>
    %36 = math.tanh %35 : vector<8x128xf32>
    %37 = vector.extract_strided_slice %22 {offsets = [24, 0], sizes = [8, 128], strides = [1, 1]} : vector<32x128xf32> to vector<8x128xf32>
    %38 = arith.negf %37 : vector<8x128xf32>
    %39 = math.exp %38 : vector<8x128xf32>
    %cst_23 = arith.constant 1.000000e+00 : f32
    %40 = vector.broadcast %cst_23 : f32 to vector<8x128xf32>
    %41 = arith.addf %40, %39 : vector<8x128xf32>
    %42 = arith.divf %40, %41 : vector<8x128xf32>
    %43 = arith.mulf %34, %19 : vector<8x128xf32>
    %44 = arith.mulf %28, %36 : vector<8x128xf32>
    %45 = arith.addf %43, %44 : vector<8x128xf32>
    %46 = math.tanh %45 : vector<8x128xf32>
    %47 = arith.mulf %42, %46 : vector<8x128xf32>
    %48 = vector.extract_strided_slice %7 {offsets = [0, 128], sizes = [32, 128], strides = [1, 1]} : vector<32x256xf32> to vector<32x128xf32>
    %cst_24 = arith.constant dense<0.000000e+00> : vector<32x128xf32>
    %49 = tpu.matmul %1, %47, %cst_24 {dimension_numbers = #tpu.dot_dimension_numbers<[1], [0], [0], [1], [0, 0, 1, 1], [], []>} : vector<32x8xf32>, vector<8x128xf32>, vector<32x128xf32> -> vector<32x128xf32>
    %50 = arith.addf %48, %49 : vector<32x128xf32>
    %51 = vector.extract_strided_slice %50 {offsets = [0, 0], sizes = [8, 128], strides = [1, 1]} : vector<32x128xf32> to vector<8x128xf32>
    %52 = arith.negf %51 : vector<8x128xf32>
    %53 = math.exp %52 : vector<8x128xf32>
    %cst_25 = arith.constant 1.000000e+00 : f32
    %54 = vector.broadcast %cst_25 : f32 to vector<8x128xf32>
    %55 = arith.addf %54, %53 : vector<8x128xf32>
    %56 = arith.divf %54, %55 : vector<8x128xf32>
    %57 = vector.extract_strided_slice %50 {offsets = [8, 0], sizes = [8, 128], strides = [1, 1]} : vector<32x128xf32> to vector<8x128xf32>
    %58 = arith.negf %57 : vector<8x128xf32>
    %59 = math.exp %58 : vector<8x128xf32>
    %cst_26 = arith.constant 1.000000e+00 : f32
    %60 = vector.broadcast %cst_26 : f32 to vector<8x128xf32>
    %61 = arith.addf %60, %59 : vector<8x128xf32>
    %62 = arith.divf %60, %61 : vector<8x128xf32>
    %63 = vector.extract_strided_slice %50 {offsets = [16, 0], sizes = [8, 128], strides = [1, 1]} : vector<32x128xf32> to vector<8x128xf32>
    %64 = math.tanh %63 : vector<8x128xf32>
    %65 = vector.extract_strided_slice %50 {offsets = [24, 0], sizes = [8, 128], strides = [1, 1]} : vector<32x128xf32> to vector<8x128xf32>
    %66 = arith.negf %65 : vector<8x128xf32>
    %67 = math.exp %66 : vector<8x128xf32>
    %cst_27 = arith.constant 1.000000e+00 : f32
    %68 = vector.broadcast %cst_27 : f32 to vector<8x128xf32>
    %69 = arith.addf %68, %67 : vector<8x128xf32>
    %70 = arith.divf %68, %69 : vector<8x128xf32>
    %71 = arith.mulf %62, %45 : vector<8x128xf32>
    %72 = arith.mulf %56, %64 : vector<8x128xf32>
    %73 = arith.addf %71, %72 : vector<8x128xf32>
    %74 = math.tanh %73 : vector<8x128xf32>
    %75 = arith.mulf %70, %74 : vector<8x128xf32>
    %76 = vector.extract_strided_slice %12 {offsets = [0, 128], sizes = [32, 128], strides = [1, 1]} : vector<32x256xf32> to vector<32x128xf32>
    %cst_28 = arith.constant dense<0.000000e+00> : vector<32x128xf32>
    %77 = tpu.matmul %2, %19, %cst_28 {dimension_numbers = #tpu.dot_dimension_numbers<[1], [0], [0], [1], [0, 0, 1, 1], [], []>} : vector<32x8xf32>, vector<8x128xf32>, vector<32x128xf32> -> vector<32x128xf32>
    %78 = arith.addf %76, %77 : vector<32x128xf32>
    %79 = vector.extract_strided_slice %78 {offsets = [0, 0], sizes = [8, 128], strides = [1, 1]} : vector<32x128xf32> to vector<8x128xf32>
    %80 = arith.negf %79 : vector<8x128xf32>
    %81 = math.exp %80 : vector<8x128xf32>
    %cst_29 = arith.constant 1.000000e+00 : f32
    %82 = vector.broadcast %cst_29 : f32 to vector<8x128xf32>
    %83 = arith.addf %82, %81 : vector<8x128xf32>
    %84 = arith.divf %82, %83 : vector<8x128xf32>
    %85 = vector.extract_strided_slice %78 {offsets = [8, 0], sizes = [8, 128], strides = [1, 1]} : vector<32x128xf32> to vector<8x128xf32>
    %86 = arith.negf %85 : vector<8x128xf32>
    %87 = math.exp %86 : vector<8x128xf32>
    %cst_30 = arith.constant 1.000000e+00 : f32
    %88 = vector.broadcast %cst_30 : f32 to vector<8x128xf32>
    %89 = arith.addf %88, %87 : vector<8x128xf32>
    %90 = arith.divf %88, %89 : vector<8x128xf32>
    %91 = vector.extract_strided_slice %78 {offsets = [16, 0], sizes = [8, 128], strides = [1, 1]} : vector<32x128xf32> to vector<8x128xf32>
    %92 = math.tanh %91 : vector<8x128xf32>
    %93 = vector.extract_strided_slice %78 {offsets = [24, 0], sizes = [8, 128], strides = [1, 1]} : vector<32x128xf32> to vector<8x128xf32>
    %94 = arith.negf %93 : vector<8x128xf32>
    %95 = math.exp %94 : vector<8x128xf32>
    %cst_31 = arith.constant 1.000000e+00 : f32
    %96 = vector.broadcast %cst_31 : f32 to vector<8x128xf32>
    %97 = arith.addf %96, %95 : vector<8x128xf32>
    %98 = arith.divf %96, %97 : vector<8x128xf32>
    %99 = arith.mulf %90, %19 : vector<8x128xf32>
    %100 = arith.mulf %84, %92 : vector<8x128xf32>
    %101 = arith.addf %99, %100 : vector<8x128xf32>
    %102 = math.tanh %101 : vector<8x128xf32>
    %103 = arith.mulf %98, %102 : vector<8x128xf32>
    %104 = vector.extract_strided_slice %12 {offsets = [0, 0], sizes = [32, 128], strides = [1, 1]} : vector<32x256xf32> to vector<32x128xf32>
    %cst_32 = arith.constant dense<0.000000e+00> : vector<32x128xf32>
    %105 = tpu.matmul %2, %103, %cst_32 {dimension_numbers = #tpu.dot_dimension_numbers<[1], [0], [0], [1], [0, 0, 1, 1], [], []>} : vector<32x8xf32>, vector<8x128xf32>, vector<32x128xf32> -> vector<32x128xf32>
    %106 = arith.addf %104, %105 : vector<32x128xf32>
    %107 = vector.extract_strided_slice %106 {offsets = [0, 0], sizes = [8, 128], strides = [1, 1]} : vector<32x128xf32> to vector<8x128xf32>
    %108 = arith.negf %107 : vector<8x128xf32>
    %109 = math.exp %108 : vector<8x128xf32>
    %cst_33 = arith.constant 1.000000e+00 : f32
    %110 = vector.broadcast %cst_33 : f32 to vector<8x128xf32>
    %111 = arith.addf %110, %109 : vector<8x128xf32>
    %112 = arith.divf %110, %111 : vector<8x128xf32>
    %113 = vector.extract_strided_slice %106 {offsets = [8, 0], sizes = [8, 128], strides = [1, 1]} : vector<32x128xf32> to vector<8x128xf32>
    %114 = arith.negf %113 : vector<8x128xf32>
    %115 = math.exp %114 : vector<8x128xf32>
    %cst_34 = arith.constant 1.000000e+00 : f32
    %116 = vector.broadcast %cst_34 : f32 to vector<8x128xf32>
    %117 = arith.addf %116, %115 : vector<8x128xf32>
    %118 = arith.divf %116, %117 : vector<8x128xf32>
    %119 = vector.extract_strided_slice %106 {offsets = [16, 0], sizes = [8, 128], strides = [1, 1]} : vector<32x128xf32> to vector<8x128xf32>
    %120 = math.tanh %119 : vector<8x128xf32>
    %121 = vector.extract_strided_slice %106 {offsets = [24, 0], sizes = [8, 128], strides = [1, 1]} : vector<32x128xf32> to vector<8x128xf32>
    %122 = arith.negf %121 : vector<8x128xf32>
    %123 = math.exp %122 : vector<8x128xf32>
    %cst_35 = arith.constant 1.000000e+00 : f32
    %124 = vector.broadcast %cst_35 : f32 to vector<8x128xf32>
    %125 = arith.addf %124, %123 : vector<8x128xf32>
    %126 = arith.divf %124, %125 : vector<8x128xf32>
    %127 = arith.mulf %118, %101 : vector<8x128xf32>
    %128 = arith.mulf %112, %120 : vector<8x128xf32>
    %129 = arith.addf %127, %128 : vector<8x128xf32>
    %130 = math.tanh %129 : vector<8x128xf32>
    %131 = arith.mulf %126, %130 : vector<8x128xf32>
    %132 = vector.extract_strided_slice %18 {offsets = [0, 0], sizes = [8, 128], strides = [1, 1]} : vector<8x256xf32> to vector<8x128xf32>
    %133 = vector.extract_strided_slice %18 {offsets = [0, 128], sizes = [8, 128], strides = [1, 1]} : vector<8x256xf32> to vector<8x128xf32>
    %134 = arith.addf %47, %131 : vector<8x128xf32>
    %135 = arith.addf %75, %103 : vector<8x128xf32>
    %cst_36 = arith.constant 0.000000e+00 : f32
    %136 = vector.broadcast %cst_36 : f32 to vector<1x128xf32>
    %137 = arith.maximumf %132, %133 : vector<8x128xf32>
    %138 = arith.maximumf %137, %134 : vector<8x128xf32>
    %139 = arith.maximumf %138, %135 : vector<8x128xf32>
    %c0_37 = arith.constant 0 : index
    %c0_38 = arith.constant 0 : index
    %c0_39 = arith.constant 0 : index
    %140 = vector.load %arg9[%c0_37, %c0_38, %c0_39] : memref<3x8x1xf32, #tpu.memory_space<vmem>>, vector<1x8x1xf32>
    %141 = vector.shape_cast %140 : vector<1x8x1xf32> to vector<8x1xf32>
    %142 = vector.broadcast %141 : vector<8x1xf32> to vector<8x128xf32>
    %143 = arith.mulf %142, %139 : vector<8x128xf32>
    %cst_40 = arith.constant dense<0.000000e+00> : vector<128xf32>
    %144 = vector.multi_reduction <add>, %143, %cst_40 [0] : vector<8x128xf32> to vector<128xf32>
    %145 = vector.shape_cast %144 : vector<128xf32> to vector<1x128xf32>
    %146 = arith.addf %136, %145 : vector<1x128xf32>
    %false = arith.constant false
    %147 = vector.broadcast %false : i1 to vector<8x128xi1>
    %148 = arith.cmpf oeq, %132, %139 : vector<8x128xf32>
    %cst_41 = arith.constant dense<true> : vector<8x128xi1>
    %149 = arith.xori %147, %cst_41 : vector<8x128xi1>
    %150 = arith.andi %148, %149 : vector<8x128xi1>
    %cst_42 = arith.constant -1.000000e+30 : f32
    %151 = vector.broadcast %cst_42 : f32 to vector<8x128xf32>
    %152 = arith.select %150, %151, %132 : vector<8x128xi1>, vector<8x128xf32>
    %153 = arith.ori %147, %150 : vector<8x128xi1>
    %154 = arith.cmpf oeq, %133, %139 : vector<8x128xf32>
    %cst_43 = arith.constant dense<true> : vector<8x128xi1>
    %155 = arith.xori %153, %cst_43 : vector<8x128xi1>
    %156 = arith.andi %154, %155 : vector<8x128xi1>
    %cst_44 = arith.constant -1.000000e+30 : f32
    %157 = vector.broadcast %cst_44 : f32 to vector<8x128xf32>
    %158 = arith.select %156, %157, %133 : vector<8x128xi1>, vector<8x128xf32>
    %159 = arith.ori %153, %156 : vector<8x128xi1>
    %160 = arith.cmpf oeq, %134, %139 : vector<8x128xf32>
    %cst_45 = arith.constant dense<true> : vector<8x128xi1>
    %161 = arith.xori %159, %cst_45 : vector<8x128xi1>
    %162 = arith.andi %160, %161 : vector<8x128xi1>
    %cst_46 = arith.constant -1.000000e+30 : f32
    %163 = vector.broadcast %cst_46 : f32 to vector<8x128xf32>
    %164 = arith.select %162, %163, %134 : vector<8x128xi1>, vector<8x128xf32>
    %165 = arith.ori %159, %162 : vector<8x128xi1>
    %166 = arith.cmpf oeq, %135, %139 : vector<8x128xf32>
    %cst_47 = arith.constant dense<true> : vector<8x128xi1>
    %167 = arith.xori %165, %cst_47 : vector<8x128xi1>
    %168 = arith.andi %166, %167 : vector<8x128xi1>
    %cst_48 = arith.constant -1.000000e+30 : f32
    %169 = vector.broadcast %cst_48 : f32 to vector<8x128xf32>
    %170 = arith.select %168, %169, %135 : vector<8x128xi1>, vector<8x128xf32>
    %171 = arith.maximumf %152, %158 : vector<8x128xf32>
    %172 = arith.maximumf %171, %164 : vector<8x128xf32>
    %173 = arith.maximumf %172, %170 : vector<8x128xf32>
    %c1 = arith.constant 1 : index
    %c0_49 = arith.constant 0 : index
    %c0_50 = arith.constant 0 : index
    %174 = vector.load %arg9[%c1, %c0_49, %c0_50] : memref<3x8x1xf32, #tpu.memory_space<vmem>>, vector<1x8x1xf32>
    %175 = vector.shape_cast %174 : vector<1x8x1xf32> to vector<8x1xf32>
    %176 = vector.broadcast %175 : vector<8x1xf32> to vector<8x128xf32>
    %177 = arith.mulf %176, %173 : vector<8x128xf32>
    %cst_51 = arith.constant dense<0.000000e+00> : vector<128xf32>
    %178 = vector.multi_reduction <add>, %177, %cst_51 [0] : vector<8x128xf32> to vector<128xf32>
    %179 = vector.shape_cast %178 : vector<128xf32> to vector<1x128xf32>
    %180 = arith.addf %146, %179 : vector<1x128xf32>
    %false_52 = arith.constant false
    %181 = vector.broadcast %false_52 : i1 to vector<8x128xi1>
    %182 = arith.cmpf oeq, %152, %173 : vector<8x128xf32>
    %cst_53 = arith.constant dense<true> : vector<8x128xi1>
    %183 = arith.xori %181, %cst_53 : vector<8x128xi1>
    %184 = arith.andi %182, %183 : vector<8x128xi1>
    %cst_54 = arith.constant -1.000000e+30 : f32
    %185 = vector.broadcast %cst_54 : f32 to vector<8x128xf32>
    %186 = arith.select %184, %185, %152 : vector<8x128xi1>, vector<8x128xf32>
    %187 = arith.ori %181, %184 : vector<8x128xi1>
    %188 = arith.cmpf oeq, %158, %173 : vector<8x128xf32>
    %cst_55 = arith.constant dense<true> : vector<8x128xi1>
    %189 = arith.xori %187, %cst_55 : vector<8x128xi1>
    %190 = arith.andi %188, %189 : vector<8x128xi1>
    %cst_56 = arith.constant -1.000000e+30 : f32
    %191 = vector.broadcast %cst_56 : f32 to vector<8x128xf32>
    %192 = arith.select %190, %191, %158 : vector<8x128xi1>, vector<8x128xf32>
    %193 = arith.ori %187, %190 : vector<8x128xi1>
    %194 = arith.cmpf oeq, %164, %173 : vector<8x128xf32>
    %cst_57 = arith.constant dense<true> : vector<8x128xi1>
    %195 = arith.xori %193, %cst_57 : vector<8x128xi1>
    %196 = arith.andi %194, %195 : vector<8x128xi1>
    %cst_58 = arith.constant -1.000000e+30 : f32
    %197 = vector.broadcast %cst_58 : f32 to vector<8x128xf32>
    %198 = arith.select %196, %197, %164 : vector<8x128xi1>, vector<8x128xf32>
    %199 = arith.ori %193, %196 : vector<8x128xi1>
    %200 = arith.cmpf oeq, %170, %173 : vector<8x128xf32>
    %cst_59 = arith.constant dense<true> : vector<8x128xi1>
    %201 = arith.xori %199, %cst_59 : vector<8x128xi1>
    %202 = arith.andi %200, %201 : vector<8x128xi1>
    %cst_60 = arith.constant -1.000000e+30 : f32
    %203 = vector.broadcast %cst_60 : f32 to vector<8x128xf32>
    %204 = arith.select %202, %203, %170 : vector<8x128xi1>, vector<8x128xf32>
    %205 = arith.maximumf %186, %192 : vector<8x128xf32>
    %206 = arith.maximumf %205, %198 : vector<8x128xf32>
    %207 = arith.maximumf %206, %204 : vector<8x128xf32>
    %c2 = arith.constant 2 : index
    %c0_61 = arith.constant 0 : index
    %c0_62 = arith.constant 0 : index
    %208 = vector.load %arg9[%c2, %c0_61, %c0_62] : memref<3x8x1xf32, #tpu.memory_space<vmem>>, vector<1x8x1xf32>
    %209 = vector.shape_cast %208 : vector<1x8x1xf32> to vector<8x1xf32>
    %210 = vector.broadcast %209 : vector<8x1xf32> to vector<8x128xf32>
    %211 = arith.mulf %210, %207 : vector<8x128xf32>
    %cst_63 = arith.constant dense<0.000000e+00> : vector<128xf32>
    %212 = vector.multi_reduction <add>, %211, %cst_63 [0] : vector<8x128xf32> to vector<128xf32>
    %213 = vector.shape_cast %212 : vector<128xf32> to vector<1x128xf32>
    %214 = arith.addf %180, %213 : vector<1x128xf32>
    %c0_64 = arith.constant 0 : index
    %c0_65 = arith.constant 0 : index
    %215 = vector.load %arg10[%c0_64, %c0_65] : memref<1x1xf32, #tpu.memory_space<vmem>>, vector<1x1xf32>
    %216 = vector.broadcast %215 : vector<1x1xf32> to vector<1x128xf32>
    %217 = arith.addf %214, %216 : vector<1x128xf32>
    %c0_66 = arith.constant 0 : index
    %c0_67 = arith.constant 0 : index
    %218 = vector.load %arg11[%c0_66, %c0_67] : memref<1x128xf32, #tpu.memory_space<vmem>>, vector<1x128xf32>
    tpu.vector_store %arg11[%c0_66, %c0_67], %217 {strides = array<i32>} : memref<1x128xf32, #tpu.memory_space<vmem>>, vector<1x128xf32>,
    return
  }
}

module attributes {stable_mosaic.version = 11 : i64} {
  func.func @gru2d_kernel(%arg0: i32, %arg1: i32, %arg2: memref<1x4x8x8x128xf32, #tpu.memory_space<vmem>>, %arg3: memref<1x56x8xf32, #tpu.memory_space<vmem>>, %arg4: memref<1x56x8xf32, #tpu.memory_space<vmem>>, %arg5: memref<1x56x8xf32, #tpu.memory_space<vmem>>, %arg6: memref<1x56x8xf32, #tpu.memory_space<vmem>>, %arg7: memref<1x56x1xf32, #tpu.memory_space<vmem>>, %arg8: memref<1x8x8xf32, #tpu.memory_space<vmem>>, %arg9: memref<1x8x1xf32, #tpu.memory_space<vmem>>, %arg10: memref<1x8x8xf32, #tpu.memory_space<vmem>>, %arg11: memref<1x8x8xf32, #tpu.memory_space<vmem>>, %arg12: memref<1x8x8xf32, #tpu.memory_space<vmem>>, %arg13: memref<1x8x1xf32, #tpu.memory_space<vmem>>, %arg14: memref<1x8x128xf32, #tpu.memory_space<vmem>>, %arg15: memref<18x8x128xf32, #tpu.memory_space<vmem>>, %arg16: memref<8x56x128xf32, #tpu.memory_space<vmem>>, %arg17: memref<8x8x128xf32, #tpu.memory_space<vmem>>) attributes {dimension_semantics = [#tpu.dimension_semantics<parallel>, #tpu.dimension_semantics<parallel>], iteration_bounds = array<i64: 2, 1>, scalar_prefetch = 0 : i64, scratch_operands = 3 : i64, tpu.core_type = #tpu.core_type<tc>, window_params = [{transform_indices = @transform_0, window_bounds = array<i64: 1, 4, 8, 8, 128>}, {transform_indices = @transform_1, window_bounds = array<i64: 1, 56, 8>}, {transform_indices = @transform_2, window_bounds = array<i64: 1, 56, 8>}, {transform_indices = @transform_3, window_bounds = array<i64: 1, 56, 8>}, {transform_indices = @transform_4, window_bounds = array<i64: 1, 56, 8>}, {transform_indices = @transform_5, window_bounds = array<i64: 1, 56, 1>}, {transform_indices = @transform_6, window_bounds = array<i64: 1, 8, 8>}, {transform_indices = @transform_7, window_bounds = array<i64: 1, 8, 1>}, {transform_indices = @transform_8, window_bounds = array<i64: 1, 8, 8>}, {transform_indices = @transform_9, window_bounds = array<i64: 1, 8, 8>}, {transform_indices = @transform_10, window_bounds = array<i64: 1, 8, 8>}, {transform_indices = @transform_11, window_bounds = array<i64: 1, 8, 1>}, {transform_indices = @transform_12, window_bounds = array<i64: 1, 8, 128>}]} {
    %c0 = arith.constant 0 : index
    %c0_0 = arith.constant 0 : index
    %c0_1 = arith.constant 0 : index
    %0 = vector.load %arg3[%c0, %c0_0, %c0_1] : memref<1x56x8xf32, #tpu.memory_space<vmem>>, vector<1x56x8xf32>
    %1 = vector.shape_cast %0 : vector<1x56x8xf32> to vector<56x8xf32>
    %c0_2 = arith.constant 0 : index
    %c0_3 = arith.constant 0 : index
    %c0_4 = arith.constant 0 : index
    %2 = vector.load %arg4[%c0_2, %c0_3, %c0_4] : memref<1x56x8xf32, #tpu.memory_space<vmem>>, vector<1x56x8xf32>
    %3 = vector.shape_cast %2 : vector<1x56x8xf32> to vector<56x8xf32>
    %c0_5 = arith.constant 0 : index
    %c0_6 = arith.constant 0 : index
    %c0_7 = arith.constant 0 : index
    %4 = vector.load %arg5[%c0_5, %c0_6, %c0_7] : memref<1x56x8xf32, #tpu.memory_space<vmem>>, vector<1x56x8xf32>
    %5 = vector.shape_cast %4 : vector<1x56x8xf32> to vector<56x8xf32>
    %c0_8 = arith.constant 0 : index
    %c0_9 = arith.constant 0 : index
    %c0_10 = arith.constant 0 : index
    %6 = vector.load %arg6[%c0_8, %c0_9, %c0_10] : memref<1x56x8xf32, #tpu.memory_space<vmem>>, vector<1x56x8xf32>
    %7 = vector.shape_cast %6 : vector<1x56x8xf32> to vector<56x8xf32>
    %c0_11 = arith.constant 0 : index
    %c0_12 = arith.constant 0 : index
    %c0_13 = arith.constant 0 : index
    %8 = vector.load %arg7[%c0_11, %c0_12, %c0_13] : memref<1x56x1xf32, #tpu.memory_space<vmem>>, vector<1x56x1xf32>
    %9 = vector.shape_cast %8 : vector<1x56x1xf32> to vector<56x1xf32>
    %c0_14 = arith.constant 0 : index
    %c0_15 = arith.constant 0 : index
    %c0_16 = arith.constant 0 : index
    %10 = vector.load %arg8[%c0_14, %c0_15, %c0_16] : memref<1x8x8xf32, #tpu.memory_space<vmem>>, vector<1x8x8xf32>
    %11 = vector.shape_cast %10 : vector<1x8x8xf32> to vector<8x8xf32>
    %c0_17 = arith.constant 0 : index
    %c0_18 = arith.constant 0 : index
    %c0_19 = arith.constant 0 : index
    %12 = vector.load %arg9[%c0_17, %c0_18, %c0_19] : memref<1x8x1xf32, #tpu.memory_space<vmem>>, vector<1x8x1xf32>
    %13 = vector.shape_cast %12 : vector<1x8x1xf32> to vector<8x1xf32>
    %c0_20 = arith.constant 0 : index
    %c0_21 = arith.constant 0 : index
    %c0_22 = arith.constant 0 : index
    %14 = vector.load %arg10[%c0_20, %c0_21, %c0_22] : memref<1x8x8xf32, #tpu.memory_space<vmem>>, vector<1x8x8xf32>
    %15 = vector.shape_cast %14 : vector<1x8x8xf32> to vector<8x8xf32>
    %c0_23 = arith.constant 0 : index
    %c0_24 = arith.constant 0 : index
    %c0_25 = arith.constant 0 : index
    %16 = vector.load %arg11[%c0_23, %c0_24, %c0_25] : memref<1x8x8xf32, #tpu.memory_space<vmem>>, vector<1x8x8xf32>
    %17 = vector.shape_cast %16 : vector<1x8x8xf32> to vector<8x8xf32>
    %c0_26 = arith.constant 0 : index
    %c0_27 = arith.constant 0 : index
    %c0_28 = arith.constant 0 : index
    %18 = vector.load %arg12[%c0_26, %c0_27, %c0_28] : memref<1x8x8xf32, #tpu.memory_space<vmem>>, vector<1x8x8xf32>
    %19 = vector.shape_cast %18 : vector<1x8x8xf32> to vector<8x8xf32>
    %c0_29 = arith.constant 0 : index
    %c0_30 = arith.constant 0 : index
    %c0_31 = arith.constant 0 : index
    %20 = vector.load %arg13[%c0_29, %c0_30, %c0_31] : memref<1x8x1xf32, #tpu.memory_space<vmem>>, vector<1x8x1xf32>
    %21 = vector.shape_cast %20 : vector<1x8x1xf32> to vector<8x1xf32>
    %cst = arith.constant 0.000000e+00 : f32
    %22 = vector.broadcast %cst : f32 to vector<18x8x128xf32>
    %c0_32 = arith.constant 0 : index
    %c0_33 = arith.constant 0 : index
    %c0_34 = arith.constant 0 : index
    %23 = vector.load %arg15[%c0_32, %c0_33, %c0_34] : memref<18x8x128xf32, #tpu.memory_space<vmem>>, vector<18x8x128xf32>
    tpu.vector_store %arg15[%c0_32, %c0_33, %c0_34], %22 {strides = array<i32>} : memref<18x8x128xf32, #tpu.memory_space<vmem>>, vector<18x8x128xf32>,
    %c0_i32 = arith.constant 0 : i32
    %c4_i32 = arith.constant 4 : i32
    %24 = arith.addi %c0_i32, %c4_i32 : i32
    %c1_i32 = arith.constant 1 : i32
    scf.for %arg18 = %c0_i32 to %24 step %c1_i32  : i32 {
      %c2_i32 = arith.constant 2 : i32
      %c0_i32_41 = arith.constant 0 : i32
      %30 = arith.cmpi eq, %c2_i32, %c0_i32_41 : i32
      %c1_i32_42 = arith.constant 1 : i32
      %31 = arith.select %30, %c1_i32_42, %c2_i32 : i32
      %32 = arith.remsi %arg18, %31 : i32
      %c0_i32_43 = arith.constant 0 : i32
      %33 = arith.cmpi ne, %32, %c0_i32_43 : i32
      %c0_i32_44 = arith.constant 0 : i32
      %34 = arith.cmpi slt, %32, %c0_i32_44 : i32
      %c0_i32_45 = arith.constant 0 : i32
      %35 = arith.cmpi slt, %31, %c0_i32_45 : i32
      %36 = arith.xori %34, %35 : i1
      %37 = arith.andi %36, %33 : i1
      %38 = arith.addi %32, %31 : i32
      %39 = arith.select %37, %38, %32 : i32
      %c9_i32 = arith.constant 9 : i32
      %40 = arith.muli %39, %c9_i32 : i32
      %c9_i32_46 = arith.constant 9 : i32
      %41 = arith.subi %c9_i32_46, %40 : i32
      %c0_i32_47 = arith.constant 0 : i32
      %c0_48 = arith.constant 0 : index
      %42 = arith.index_cast %arg18 : i32 to index
      %43 = arith.index_cast %c0_i32_47 : i32 to index
      %c0_49 = arith.constant 0 : index
      %c0_50 = arith.constant 0 : index
      %44 = vector.load %arg2[%c0_48, %42, %43, %c0_49, %c0_50] : memref<1x4x8x8x128xf32, #tpu.memory_space<vmem>>, vector<1x1x1x8x128xf32>
      %45 = vector.shape_cast %44 : vector<1x1x1x8x128xf32> to vector<8x128xf32>
      %46 = arith.addi %40, %c0_i32_47 : i32
      %c1_i32_51 = arith.constant 1 : i32
      %47 = arith.addi %46, %c1_i32_51 : i32
      %48 = arith.index_cast %47 : i32 to index
      %c0_52 = arith.constant 0 : index
      %c0_53 = arith.constant 0 : index
      %49 = vector.load %arg15[%48, %c0_52, %c0_53] : memref<18x8x128xf32, #tpu.memory_space<vmem>>, vector<1x8x128xf32>
      %50 = vector.shape_cast %49 : vector<1x8x128xf32> to vector<8x128xf32>
      %51 = arith.addi %40, %c0_i32_47 : i32
      %52 = arith.index_cast %51 : i32 to index
      %c0_54 = arith.constant 0 : index
      %c0_55 = arith.constant 0 : index
      %53 = vector.load %arg15[%52, %c0_54, %c0_55] : memref<18x8x128xf32, #tpu.memory_space<vmem>>, vector<1x8x128xf32>
      %54 = vector.shape_cast %53 : vector<1x8x128xf32> to vector<8x128xf32>
      %cst_56 = arith.constant dense<0.000000e+00> : vector<56x128xf32>
      %55 = tpu.matmul %7, %45, %cst_56 {dimension_numbers = #tpu.dot_dimension_numbers<[1], [0], [0], [1], [0, 0, 1, 1], [], []>} : vector<56x8xf32>, vector<8x128xf32>, vector<56x128xf32> -> vector<56x128xf32>
      %cst_57 = arith.constant dense<0.000000e+00> : vector<56x128xf32>
      %56 = tpu.matmul %1, %50, %cst_57 {dimension_numbers = #tpu.dot_dimension_numbers<[1], [0], [0], [1], [0, 0, 1, 1], [], []>} : vector<56x8xf32>, vector<8x128xf32>, vector<56x128xf32> -> vector<56x128xf32>
      %57 = arith.addf %55, %56 : vector<56x128xf32>
      %cst_58 = arith.constant dense<0.000000e+00> : vector<56x128xf32>
      %58 = tpu.matmul %5, %54, %cst_58 {dimension_numbers = #tpu.dot_dimension_numbers<[1], [0], [0], [1], [0, 0, 1, 1], [], []>} : vector<56x8xf32>, vector<8x128xf32>, vector<56x128xf32> -> vector<56x128xf32>
      %59 = arith.addf %57, %58 : vector<56x128xf32>
      %60 = vector.broadcast %9 : vector<56x1xf32> to vector<56x128xf32>
      %61 = arith.addf %59, %60 : vector<56x128xf32>
      %62 = arith.index_cast %c0_i32_47 : i32 to index
      %c0_59 = arith.constant 0 : index
      %c0_60 = arith.constant 0 : index
      %63 = vector.load %arg16[%62, %c0_59, %c0_60] : memref<8x56x128xf32, #tpu.memory_space<vmem>>, vector<1x56x128xf32>
      %64 = vector.shape_cast %63 : vector<1x56x128xf32> to vector<56x128xf32>
      %65 = vector.shape_cast %61 : vector<56x128xf32> to vector<1x56x128xf32>
      tpu.vector_store %arg16[%62, %c0_59, %c0_60], %65 {strides = array<i32>} : memref<8x56x128xf32, #tpu.memory_space<vmem>>, vector<1x56x128xf32>,
      %cst_61 = arith.constant dense<0.000000e+00> : vector<8x128xf32>
      %66 = tpu.matmul %11, %45, %cst_61 {dimension_numbers = #tpu.dot_dimension_numbers<[1], [0], [0], [1], [0, 0, 1, 1], [], []>} : vector<8x8xf32>, vector<8x128xf32>, vector<8x128xf32> -> vector<8x128xf32>
      %67 = vector.broadcast %13 : vector<8x1xf32> to vector<8x128xf32>
      %68 = arith.addf %66, %67 : vector<8x128xf32>
      %69 = arith.index_cast %c0_i32_47 : i32 to index
      %c0_62 = arith.constant 0 : index
      %c0_63 = arith.constant 0 : index
      %70 = vector.load %arg17[%69, %c0_62, %c0_63] : memref<8x8x128xf32, #tpu.memory_space<vmem>>, vector<1x8x128xf32>
      %71 = vector.shape_cast %70 : vector<1x8x128xf32> to vector<8x128xf32>
      %72 = vector.shape_cast %68 : vector<8x128xf32> to vector<1x8x128xf32>
      tpu.vector_store %arg17[%69, %c0_62, %c0_63], %72 {strides = array<i32>} : memref<8x8x128xf32, #tpu.memory_space<vmem>>, vector<1x8x128xf32>,
      %c1_i32_64 = arith.constant 1 : i32
      %c0_65 = arith.constant 0 : index
      %73 = arith.index_cast %arg18 : i32 to index
      %74 = arith.index_cast %c1_i32_64 : i32 to index
      %c0_66 = arith.constant 0 : index
      %c0_67 = arith.constant 0 : index
      %75 = vector.load %arg2[%c0_65, %73, %74, %c0_66, %c0_67] : memref<1x4x8x8x128xf32, #tpu.memory_space<vmem>>, vector<1x1x1x8x128xf32>
      %76 = vector.shape_cast %75 : vector<1x1x1x8x128xf32> to vector<8x128xf32>
      %77 = arith.addi %40, %c1_i32_64 : i32
      %c1_i32_68 = arith.constant 1 : i32
      %78 = arith.addi %77, %c1_i32_68 : i32
      %79 = arith.index_cast %78 : i32 to index
      %c0_69 = arith.constant 0 : index
      %c0_70 = arith.constant 0 : index
      %80 = vector.load %arg15[%79, %c0_69, %c0_70] : memref<18x8x128xf32, #tpu.memory_space<vmem>>, vector<1x8x128xf32>
      %81 = vector.shape_cast %80 : vector<1x8x128xf32> to vector<8x128xf32>
      %82 = arith.addi %40, %c1_i32_64 : i32
      %83 = arith.index_cast %82 : i32 to index
      %c0_71 = arith.constant 0 : index
      %c0_72 = arith.constant 0 : index
      %84 = vector.load %arg15[%83, %c0_71, %c0_72] : memref<18x8x128xf32, #tpu.memory_space<vmem>>, vector<1x8x128xf32>
      %85 = vector.shape_cast %84 : vector<1x8x128xf32> to vector<8x128xf32>
      %cst_73 = arith.constant dense<0.000000e+00> : vector<56x128xf32>
      %86 = tpu.matmul %7, %76, %cst_73 {dimension_numbers = #tpu.dot_dimension_numbers<[1], [0], [0], [1], [0, 0, 1, 1], [], []>} : vector<56x8xf32>, vector<8x128xf32>, vector<56x128xf32> -> vector<56x128xf32>
      %cst_74 = arith.constant dense<0.000000e+00> : vector<56x128xf32>
      %87 = tpu.matmul %1, %81, %cst_74 {dimension_numbers = #tpu.dot_dimension_numbers<[1], [0], [0], [1], [0, 0, 1, 1], [], []>} : vector<56x8xf32>, vector<8x128xf32>, vector<56x128xf32> -> vector<56x128xf32>
      %88 = arith.addf %86, %87 : vector<56x128xf32>
      %cst_75 = arith.constant dense<0.000000e+00> : vector<56x128xf32>
      %89 = tpu.matmul %5, %85, %cst_75 {dimension_numbers = #tpu.dot_dimension_numbers<[1], [0], [0], [1], [0, 0, 1, 1], [], []>} : vector<56x8xf32>, vector<8x128xf32>, vector<56x128xf32> -> vector<56x128xf32>
      %90 = arith.addf %88, %89 : vector<56x128xf32>
      %91 = vector.broadcast %9 : vector<56x1xf32> to vector<56x128xf32>
      %92 = arith.addf %90, %91 : vector<56x128xf32>
      %93 = arith.index_cast %c1_i32_64 : i32 to index
      %c0_76 = arith.constant 0 : index
      %c0_77 = arith.constant 0 : index
      %94 = vector.load %arg16[%93, %c0_76, %c0_77] : memref<8x56x128xf32, #tpu.memory_space<vmem>>, vector<1x56x128xf32>
      %95 = vector.shape_cast %94 : vector<1x56x128xf32> to vector<56x128xf32>
      %96 = vector.shape_cast %92 : vector<56x128xf32> to vector<1x56x128xf32>
      tpu.vector_store %arg16[%93, %c0_76, %c0_77], %96 {strides = array<i32>} : memref<8x56x128xf32, #tpu.memory_space<vmem>>, vector<1x56x128xf32>,
      %cst_78 = arith.constant dense<0.000000e+00> : vector<8x128xf32>
      %97 = tpu.matmul %11, %76, %cst_78 {dimension_numbers = #tpu.dot_dimension_numbers<[1], [0], [0], [1], [0, 0, 1, 1], [], []>} : vector<8x8xf32>, vector<8x128xf32>, vector<8x128xf32> -> vector<8x128xf32>
      %98 = vector.broadcast %13 : vector<8x1xf32> to vector<8x128xf32>
      %99 = arith.addf %97, %98 : vector<8x128xf32>
      %100 = arith.index_cast %c1_i32_64 : i32 to index
      %c0_79 = arith.constant 0 : index
      %c0_80 = arith.constant 0 : index
      %101 = vector.load %arg17[%100, %c0_79, %c0_80] : memref<8x8x128xf32, #tpu.memory_space<vmem>>, vector<1x8x128xf32>
      %102 = vector.shape_cast %101 : vector<1x8x128xf32> to vector<8x128xf32>
      %103 = vector.shape_cast %99 : vector<8x128xf32> to vector<1x8x128xf32>
      tpu.vector_store %arg17[%100, %c0_79, %c0_80], %103 {strides = array<i32>} : memref<8x8x128xf32, #tpu.memory_space<vmem>>, vector<1x8x128xf32>,
      %c2_i32_81 = arith.constant 2 : i32
      %c0_82 = arith.constant 0 : index
      %104 = arith.index_cast %arg18 : i32 to index
      %105 = arith.index_cast %c2_i32_81 : i32 to index
      %c0_83 = arith.constant 0 : index
      %c0_84 = arith.constant 0 : index
      %106 = vector.load %arg2[%c0_82, %104, %105, %c0_83, %c0_84] : memref<1x4x8x8x128xf32, #tpu.memory_space<vmem>>, vector<1x1x1x8x128xf32>
      %107 = vector.shape_cast %106 : vector<1x1x1x8x128xf32> to vector<8x128xf32>
      %108 = arith.addi %40, %c2_i32_81 : i32
      %c1_i32_85 = arith.constant 1 : i32
      %109 = arith.addi %108, %c1_i32_85 : i32
      %110 = arith.index_cast %109 : i32 to index
      %c0_86 = arith.constant 0 : index
      %c0_87 = arith.constant 0 : index
      %111 = vector.load %arg15[%110, %c0_86, %c0_87] : memref<18x8x128xf32, #tpu.memory_space<vmem>>, vector<1x8x128xf32>
      %112 = vector.shape_cast %111 : vector<1x8x128xf32> to vector<8x128xf32>
      %113 = arith.addi %40, %c2_i32_81 : i32
      %114 = arith.index_cast %113 : i32 to index
      %c0_88 = arith.constant 0 : index
      %c0_89 = arith.constant 0 : index
      %115 = vector.load %arg15[%114, %c0_88, %c0_89] : memref<18x8x128xf32, #tpu.memory_space<vmem>>, vector<1x8x128xf32>
      %116 = vector.shape_cast %115 : vector<1x8x128xf32> to vector<8x128xf32>
      %cst_90 = arith.constant dense<0.000000e+00> : vector<56x128xf32>
      %117 = tpu.matmul %7, %107, %cst_90 {dimension_numbers = #tpu.dot_dimension_numbers<[1], [0], [0], [1], [0, 0, 1, 1], [], []>} : vector<56x8xf32>, vector<8x128xf32>, vector<56x128xf32> -> vector<56x128xf32>
      %cst_91 = arith.constant dense<0.000000e+00> : vector<56x128xf32>
      %118 = tpu.matmul %1, %112, %cst_91 {dimension_numbers = #tpu.dot_dimension_numbers<[1], [0], [0], [1], [0, 0, 1, 1], [], []>} : vector<56x8xf32>, vector<8x128xf32>, vector<56x128xf32> -> vector<56x128xf32>
      %119 = arith.addf %117, %118 : vector<56x128xf32>
      %cst_92 = arith.constant dense<0.000000e+00> : vector<56x128xf32>
      %120 = tpu.matmul %5, %116, %cst_92 {dimension_numbers = #tpu.dot_dimension_numbers<[1], [0], [0], [1], [0, 0, 1, 1], [], []>} : vector<56x8xf32>, vector<8x128xf32>, vector<56x128xf32> -> vector<56x128xf32>
      %121 = arith.addf %119, %120 : vector<56x128xf32>
      %122 = vector.broadcast %9 : vector<56x1xf32> to vector<56x128xf32>
      %123 = arith.addf %121, %122 : vector<56x128xf32>
      %124 = arith.index_cast %c2_i32_81 : i32 to index
      %c0_93 = arith.constant 0 : index
      %c0_94 = arith.constant 0 : index
      %125 = vector.load %arg16[%124, %c0_93, %c0_94] : memref<8x56x128xf32, #tpu.memory_space<vmem>>, vector<1x56x128xf32>
      %126 = vector.shape_cast %125 : vector<1x56x128xf32> to vector<56x128xf32>
      %127 = vector.shape_cast %123 : vector<56x128xf32> to vector<1x56x128xf32>
      tpu.vector_store %arg16[%124, %c0_93, %c0_94], %127 {strides = array<i32>} : memref<8x56x128xf32, #tpu.memory_space<vmem>>, vector<1x56x128xf32>,
      %cst_95 = arith.constant dense<0.000000e+00> : vector<8x128xf32>
      %128 = tpu.matmul %11, %107, %cst_95 {dimension_numbers = #tpu.dot_dimension_numbers<[1], [0], [0], [1], [0, 0, 1, 1], [], []>} : vector<8x8xf32>, vector<8x128xf32>, vector<8x128xf32> -> vector<8x128xf32>
      %129 = vector.broadcast %13 : vector<8x1xf32> to vector<8x128xf32>
      %130 = arith.addf %128, %129 : vector<8x128xf32>
      %131 = arith.index_cast %c2_i32_81 : i32 to index
      %c0_96 = arith.constant 0 : index
      %c0_97 = arith.constant 0 : index
      %132 = vector.load %arg17[%131, %c0_96, %c0_97] : memref<8x8x128xf32, #tpu.memory_space<vmem>>, vector<1x8x128xf32>
      %133 = vector.shape_cast %132 : vector<1x8x128xf32> to vector<8x128xf32>
      %134 = vector.shape_cast %130 : vector<8x128xf32> to vector<1x8x128xf32>
      tpu.vector_store %arg17[%131, %c0_96, %c0_97], %134 {strides = array<i32>} : memref<8x8x128xf32, #tpu.memory_space<vmem>>, vector<1x8x128xf32>,
      %c3_i32 = arith.constant 3 : i32
      %c0_98 = arith.constant 0 : index
      %135 = arith.index_cast %arg18 : i32 to index
      %136 = arith.index_cast %c3_i32 : i32 to index
      %c0_99 = arith.constant 0 : index
      %c0_100 = arith.constant 0 : index
      %137 = vector.load %arg2[%c0_98, %135, %136, %c0_99, %c0_100] : memref<1x4x8x8x128xf32, #tpu.memory_space<vmem>>, vector<1x1x1x8x128xf32>
      %138 = vector.shape_cast %137 : vector<1x1x1x8x128xf32> to vector<8x128xf32>
      %139 = arith.addi %40, %c3_i32 : i32
      %c1_i32_101 = arith.constant 1 : i32
      %140 = arith.addi %139, %c1_i32_101 : i32
      %141 = arith.index_cast %140 : i32 to index
      %c0_102 = arith.constant 0 : index
      %c0_103 = arith.constant 0 : index
      %142 = vector.load %arg15[%141, %c0_102, %c0_103] : memref<18x8x128xf32, #tpu.memory_space<vmem>>, vector<1x8x128xf32>
      %143 = vector.shape_cast %142 : vector<1x8x128xf32> to vector<8x128xf32>
      %144 = arith.addi %40, %c3_i32 : i32
      %145 = arith.index_cast %144 : i32 to index
      %c0_104 = arith.constant 0 : index
      %c0_105 = arith.constant 0 : index
      %146 = vector.load %arg15[%145, %c0_104, %c0_105] : memref<18x8x128xf32, #tpu.memory_space<vmem>>, vector<1x8x128xf32>
      %147 = vector.shape_cast %146 : vector<1x8x128xf32> to vector<8x128xf32>
      %cst_106 = arith.constant dense<0.000000e+00> : vector<56x128xf32>
      %148 = tpu.matmul %7, %138, %cst_106 {dimension_numbers = #tpu.dot_dimension_numbers<[1], [0], [0], [1], [0, 0, 1, 1], [], []>} : vector<56x8xf32>, vector<8x128xf32>, vector<56x128xf32> -> vector<56x128xf32>
      %cst_107 = arith.constant dense<0.000000e+00> : vector<56x128xf32>
      %149 = tpu.matmul %1, %143, %cst_107 {dimension_numbers = #tpu.dot_dimension_numbers<[1], [0], [0], [1], [0, 0, 1, 1], [], []>} : vector<56x8xf32>, vector<8x128xf32>, vector<56x128xf32> -> vector<56x128xf32>
      %150 = arith.addf %148, %149 : vector<56x128xf32>
      %cst_108 = arith.constant dense<0.000000e+00> : vector<56x128xf32>
      %151 = tpu.matmul %5, %147, %cst_108 {dimension_numbers = #tpu.dot_dimension_numbers<[1], [0], [0], [1], [0, 0, 1, 1], [], []>} : vector<56x8xf32>, vector<8x128xf32>, vector<56x128xf32> -> vector<56x128xf32>
      %152 = arith.addf %150, %151 : vector<56x128xf32>
      %153 = vector.broadcast %9 : vector<56x1xf32> to vector<56x128xf32>
      %154 = arith.addf %152, %153 : vector<56x128xf32>
      %155 = arith.index_cast %c3_i32 : i32 to index
      %c0_109 = arith.constant 0 : index
      %c0_110 = arith.constant 0 : index
      %156 = vector.load %arg16[%155, %c0_109, %c0_110] : memref<8x56x128xf32, #tpu.memory_space<vmem>>, vector<1x56x128xf32>
      %157 = vector.shape_cast %156 : vector<1x56x128xf32> to vector<56x128xf32>
      %158 = vector.shape_cast %154 : vector<56x128xf32> to vector<1x56x128xf32>
      tpu.vector_store %arg16[%155, %c0_109, %c0_110], %158 {strides = array<i32>} : memref<8x56x128xf32, #tpu.memory_space<vmem>>, vector<1x56x128xf32>,
      %cst_111 = arith.constant dense<0.000000e+00> : vector<8x128xf32>
      %159 = tpu.matmul %11, %138, %cst_111 {dimension_numbers = #tpu.dot_dimension_numbers<[1], [0], [0], [1], [0, 0, 1, 1], [], []>} : vector<8x8xf32>, vector<8x128xf32>, vector<8x128xf32> -> vector<8x128xf32>
      %160 = vector.broadcast %13 : vector<8x1xf32> to vector<8x128xf32>
      %161 = arith.addf %159, %160 : vector<8x128xf32>
      %162 = arith.index_cast %c3_i32 : i32 to index
      %c0_112 = arith.constant 0 : index
      %c0_113 = arith.constant 0 : index
      %163 = vector.load %arg17[%162, %c0_112, %c0_113] : memref<8x8x128xf32, #tpu.memory_space<vmem>>, vector<1x8x128xf32>
      %164 = vector.shape_cast %163 : vector<1x8x128xf32> to vector<8x128xf32>
      %165 = vector.shape_cast %161 : vector<8x128xf32> to vector<1x8x128xf32>
      tpu.vector_store %arg17[%162, %c0_112, %c0_113], %165 {strides = array<i32>} : memref<8x8x128xf32, #tpu.memory_space<vmem>>, vector<1x8x128xf32>,
      %c4_i32_114 = arith.constant 4 : i32
      %c0_115 = arith.constant 0 : index
      %166 = arith.index_cast %arg18 : i32 to index
      %167 = arith.index_cast %c4_i32_114 : i32 to index
      %c0_116 = arith.constant 0 : index
      %c0_117 = arith.constant 0 : index
      %168 = vector.load %arg2[%c0_115, %166, %167, %c0_116, %c0_117] : memref<1x4x8x8x128xf32, #tpu.memory_space<vmem>>, vector<1x1x1x8x128xf32>
      %169 = vector.shape_cast %168 : vector<1x1x1x8x128xf32> to vector<8x128xf32>
      %170 = arith.addi %40, %c4_i32_114 : i32
      %c1_i32_118 = arith.constant 1 : i32
      %171 = arith.addi %170, %c1_i32_118 : i32
      %172 = arith.index_cast %171 : i32 to index
      %c0_119 = arith.constant 0 : index
      %c0_120 = arith.constant 0 : index
      %173 = vector.load %arg15[%172, %c0_119, %c0_120] : memref<18x8x128xf32, #tpu.memory_space<vmem>>, vector<1x8x128xf32>
      %174 = vector.shape_cast %173 : vector<1x8x128xf32> to vector<8x128xf32>
      %175 = arith.addi %40, %c4_i32_114 : i32
      %176 = arith.index_cast %175 : i32 to index
      %c0_121 = arith.constant 0 : index
      %c0_122 = arith.constant 0 : index
      %177 = vector.load %arg15[%176, %c0_121, %c0_122] : memref<18x8x128xf32, #tpu.memory_space<vmem>>, vector<1x8x128xf32>
      %178 = vector.shape_cast %177 : vector<1x8x128xf32> to vector<8x128xf32>
      %cst_123 = arith.constant dense<0.000000e+00> : vector<56x128xf32>
      %179 = tpu.matmul %7, %169, %cst_123 {dimension_numbers = #tpu.dot_dimension_numbers<[1], [0], [0], [1], [0, 0, 1, 1], [], []>} : vector<56x8xf32>, vector<8x128xf32>, vector<56x128xf32> -> vector<56x128xf32>
      %cst_124 = arith.constant dense<0.000000e+00> : vector<56x128xf32>
      %180 = tpu.matmul %1, %174, %cst_124 {dimension_numbers = #tpu.dot_dimension_numbers<[1], [0], [0], [1], [0, 0, 1, 1], [], []>} : vector<56x8xf32>, vector<8x128xf32>, vector<56x128xf32> -> vector<56x128xf32>
      %181 = arith.addf %179, %180 : vector<56x128xf32>
      %cst_125 = arith.constant dense<0.000000e+00> : vector<56x128xf32>
      %182 = tpu.matmul %5, %178, %cst_125 {dimension_numbers = #tpu.dot_dimension_numbers<[1], [0], [0], [1], [0, 0, 1, 1], [], []>} : vector<56x8xf32>, vector<8x128xf32>, vector<56x128xf32> -> vector<56x128xf32>
      %183 = arith.addf %181, %182 : vector<56x128xf32>
      %184 = vector.broadcast %9 : vector<56x1xf32> to vector<56x128xf32>
      %185 = arith.addf %183, %184 : vector<56x128xf32>
      %186 = arith.index_cast %c4_i32_114 : i32 to index
      %c0_126 = arith.constant 0 : index
      %c0_127 = arith.constant 0 : index
      %187 = vector.load %arg16[%186, %c0_126, %c0_127] : memref<8x56x128xf32, #tpu.memory_space<vmem>>, vector<1x56x128xf32>
      %188 = vector.shape_cast %187 : vector<1x56x128xf32> to vector<56x128xf32>
      %189 = vector.shape_cast %185 : vector<56x128xf32> to vector<1x56x128xf32>
      tpu.vector_store %arg16[%186, %c0_126, %c0_127], %189 {strides = array<i32>} : memref<8x56x128xf32, #tpu.memory_space<vmem>>, vector<1x56x128xf32>,
      %cst_128 = arith.constant dense<0.000000e+00> : vector<8x128xf32>
      %190 = tpu.matmul %11, %169, %cst_128 {dimension_numbers = #tpu.dot_dimension_numbers<[1], [0], [0], [1], [0, 0, 1, 1], [], []>} : vector<8x8xf32>, vector<8x128xf32>, vector<8x128xf32> -> vector<8x128xf32>
      %191 = vector.broadcast %13 : vector<8x1xf32> to vector<8x128xf32>
      %192 = arith.addf %190, %191 : vector<8x128xf32>
      %193 = arith.index_cast %c4_i32_114 : i32 to index
      %c0_129 = arith.constant 0 : index
      %c0_130 = arith.constant 0 : index
      %194 = vector.load %arg17[%193, %c0_129, %c0_130] : memref<8x8x128xf32, #tpu.memory_space<vmem>>, vector<1x8x128xf32>
      %195 = vector.shape_cast %194 : vector<1x8x128xf32> to vector<8x128xf32>
      %196 = vector.shape_cast %192 : vector<8x128xf32> to vector<1x8x128xf32>
      tpu.vector_store %arg17[%193, %c0_129, %c0_130], %196 {strides = array<i32>} : memref<8x8x128xf32, #tpu.memory_space<vmem>>, vector<1x8x128xf32>,
      %c5_i32 = arith.constant 5 : i32
      %c0_131 = arith.constant 0 : index
      %197 = arith.index_cast %arg18 : i32 to index
      %198 = arith.index_cast %c5_i32 : i32 to index
      %c0_132 = arith.constant 0 : index
      %c0_133 = arith.constant 0 : index
      %199 = vector.load %arg2[%c0_131, %197, %198, %c0_132, %c0_133] : memref<1x4x8x8x128xf32, #tpu.memory_space<vmem>>, vector<1x1x1x8x128xf32>
      %200 = vector.shape_cast %199 : vector<1x1x1x8x128xf32> to vector<8x128xf32>
      %201 = arith.addi %40, %c5_i32 : i32
      %c1_i32_134 = arith.constant 1 : i32
      %202 = arith.addi %201, %c1_i32_134 : i32
      %203 = arith.index_cast %202 : i32 to index
      %c0_135 = arith.constant 0 : index
      %c0_136 = arith.constant 0 : index
      %204 = vector.load %arg15[%203, %c0_135, %c0_136] : memref<18x8x128xf32, #tpu.memory_space<vmem>>, vector<1x8x128xf32>
      %205 = vector.shape_cast %204 : vector<1x8x128xf32> to vector<8x128xf32>
      %206 = arith.addi %40, %c5_i32 : i32
      %207 = arith.index_cast %206 : i32 to index
      %c0_137 = arith.constant 0 : index
      %c0_138 = arith.constant 0 : index
      %208 = vector.load %arg15[%207, %c0_137, %c0_138] : memref<18x8x128xf32, #tpu.memory_space<vmem>>, vector<1x8x128xf32>
      %209 = vector.shape_cast %208 : vector<1x8x128xf32> to vector<8x128xf32>
      %cst_139 = arith.constant dense<0.000000e+00> : vector<56x128xf32>
      %210 = tpu.matmul %7, %200, %cst_139 {dimension_numbers = #tpu.dot_dimension_numbers<[1], [0], [0], [1], [0, 0, 1, 1], [], []>} : vector<56x8xf32>, vector<8x128xf32>, vector<56x128xf32> -> vector<56x128xf32>
      %cst_140 = arith.constant dense<0.000000e+00> : vector<56x128xf32>
      %211 = tpu.matmul %1, %205, %cst_140 {dimension_numbers = #tpu.dot_dimension_numbers<[1], [0], [0], [1], [0, 0, 1, 1], [], []>} : vector<56x8xf32>, vector<8x128xf32>, vector<56x128xf32> -> vector<56x128xf32>
      %212 = arith.addf %210, %211 : vector<56x128xf32>
      %cst_141 = arith.constant dense<0.000000e+00> : vector<56x128xf32>
      %213 = tpu.matmul %5, %209, %cst_141 {dimension_numbers = #tpu.dot_dimension_numbers<[1], [0], [0], [1], [0, 0, 1, 1], [], []>} : vector<56x8xf32>, vector<8x128xf32>, vector<56x128xf32> -> vector<56x128xf32>
      %214 = arith.addf %212, %213 : vector<56x128xf32>
      %215 = vector.broadcast %9 : vector<56x1xf32> to vector<56x128xf32>
      %216 = arith.addf %214, %215 : vector<56x128xf32>
      %217 = arith.index_cast %c5_i32 : i32 to index
      %c0_142 = arith.constant 0 : index
      %c0_143 = arith.constant 0 : index
      %218 = vector.load %arg16[%217, %c0_142, %c0_143] : memref<8x56x128xf32, #tpu.memory_space<vmem>>, vector<1x56x128xf32>
      %219 = vector.shape_cast %218 : vector<1x56x128xf32> to vector<56x128xf32>
      %220 = vector.shape_cast %216 : vector<56x128xf32> to vector<1x56x128xf32>
      tpu.vector_store %arg16[%217, %c0_142, %c0_143], %220 {strides = array<i32>} : memref<8x56x128xf32, #tpu.memory_space<vmem>>, vector<1x56x128xf32>,
      %cst_144 = arith.constant dense<0.000000e+00> : vector<8x128xf32>
      %221 = tpu.matmul %11, %200, %cst_144 {dimension_numbers = #tpu.dot_dimension_numbers<[1], [0], [0], [1], [0, 0, 1, 1], [], []>} : vector<8x8xf32>, vector<8x128xf32>, vector<8x128xf32> -> vector<8x128xf32>
      %222 = vector.broadcast %13 : vector<8x1xf32> to vector<8x128xf32>
      %223 = arith.addf %221, %222 : vector<8x128xf32>
      %224 = arith.index_cast %c5_i32 : i32 to index
      %c0_145 = arith.constant 0 : index
      %c0_146 = arith.constant 0 : index
      %225 = vector.load %arg17[%224, %c0_145, %c0_146] : memref<8x8x128xf32, #tpu.memory_space<vmem>>, vector<1x8x128xf32>
      %226 = vector.shape_cast %225 : vector<1x8x128xf32> to vector<8x128xf32>
      %227 = vector.shape_cast %223 : vector<8x128xf32> to vector<1x8x128xf32>
      tpu.vector_store %arg17[%224, %c0_145, %c0_146], %227 {strides = array<i32>} : memref<8x8x128xf32, #tpu.memory_space<vmem>>, vector<1x8x128xf32>,
      %c6_i32 = arith.constant 6 : i32
      %c0_147 = arith.constant 0 : index
      %228 = arith.index_cast %arg18 : i32 to index
      %229 = arith.index_cast %c6_i32 : i32 to index
      %c0_148 = arith.constant 0 : index
      %c0_149 = arith.constant 0 : index
      %230 = vector.load %arg2[%c0_147, %228, %229, %c0_148, %c0_149] : memref<1x4x8x8x128xf32, #tpu.memory_space<vmem>>, vector<1x1x1x8x128xf32>
      %231 = vector.shape_cast %230 : vector<1x1x1x8x128xf32> to vector<8x128xf32>
      %232 = arith.addi %40, %c6_i32 : i32
      %c1_i32_150 = arith.constant 1 : i32
      %233 = arith.addi %232, %c1_i32_150 : i32
      %234 = arith.index_cast %233 : i32 to index
      %c0_151 = arith.constant 0 : index
      %c0_152 = arith.constant 0 : index
      %235 = vector.load %arg15[%234, %c0_151, %c0_152] : memref<18x8x128xf32, #tpu.memory_space<vmem>>, vector<1x8x128xf32>
      %236 = vector.shape_cast %235 : vector<1x8x128xf32> to vector<8x128xf32>
      %237 = arith.addi %40, %c6_i32 : i32
      %238 = arith.index_cast %237 : i32 to index
      %c0_153 = arith.constant 0 : index
      %c0_154 = arith.constant 0 : index
      %239 = vector.load %arg15[%238, %c0_153, %c0_154] : memref<18x8x128xf32, #tpu.memory_space<vmem>>, vector<1x8x128xf32>
      %240 = vector.shape_cast %239 : vector<1x8x128xf32> to vector<8x128xf32>
      %cst_155 = arith.constant dense<0.000000e+00> : vector<56x128xf32>
      %241 = tpu.matmul %7, %231, %cst_155 {dimension_numbers = #tpu.dot_dimension_numbers<[1], [0], [0], [1], [0, 0, 1, 1], [], []>} : vector<56x8xf32>, vector<8x128xf32>, vector<56x128xf32> -> vector<56x128xf32>
      %cst_156 = arith.constant dense<0.000000e+00> : vector<56x128xf32>
      %242 = tpu.matmul %1, %236, %cst_156 {dimension_numbers = #tpu.dot_dimension_numbers<[1], [0], [0], [1], [0, 0, 1, 1], [], []>} : vector<56x8xf32>, vector<8x128xf32>, vector<56x128xf32> -> vector<56x128xf32>
      %243 = arith.addf %241, %242 : vector<56x128xf32>
      %cst_157 = arith.constant dense<0.000000e+00> : vector<56x128xf32>
      %244 = tpu.matmul %5, %240, %cst_157 {dimension_numbers = #tpu.dot_dimension_numbers<[1], [0], [0], [1], [0, 0, 1, 1], [], []>} : vector<56x8xf32>, vector<8x128xf32>, vector<56x128xf32> -> vector<56x128xf32>
      %245 = arith.addf %243, %244 : vector<56x128xf32>
      %246 = vector.broadcast %9 : vector<56x1xf32> to vector<56x128xf32>
      %247 = arith.addf %245, %246 : vector<56x128xf32>
      %248 = arith.index_cast %c6_i32 : i32 to index
      %c0_158 = arith.constant 0 : index
      %c0_159 = arith.constant 0 : index
      %249 = vector.load %arg16[%248, %c0_158, %c0_159] : memref<8x56x128xf32, #tpu.memory_space<vmem>>, vector<1x56x128xf32>
      %250 = vector.shape_cast %249 : vector<1x56x128xf32> to vector<56x128xf32>
      %251 = vector.shape_cast %247 : vector<56x128xf32> to vector<1x56x128xf32>
      tpu.vector_store %arg16[%248, %c0_158, %c0_159], %251 {strides = array<i32>} : memref<8x56x128xf32, #tpu.memory_space<vmem>>, vector<1x56x128xf32>,
      %cst_160 = arith.constant dense<0.000000e+00> : vector<8x128xf32>
      %252 = tpu.matmul %11, %231, %cst_160 {dimension_numbers = #tpu.dot_dimension_numbers<[1], [0], [0], [1], [0, 0, 1, 1], [], []>} : vector<8x8xf32>, vector<8x128xf32>, vector<8x128xf32> -> vector<8x128xf32>
      %253 = vector.broadcast %13 : vector<8x1xf32> to vector<8x128xf32>
      %254 = arith.addf %252, %253 : vector<8x128xf32>
      %255 = arith.index_cast %c6_i32 : i32 to index
      %c0_161 = arith.constant 0 : index
      %c0_162 = arith.constant 0 : index
      %256 = vector.load %arg17[%255, %c0_161, %c0_162] : memref<8x8x128xf32, #tpu.memory_space<vmem>>, vector<1x8x128xf32>
      %257 = vector.shape_cast %256 : vector<1x8x128xf32> to vector<8x128xf32>
      %258 = vector.shape_cast %254 : vector<8x128xf32> to vector<1x8x128xf32>
      tpu.vector_store %arg17[%255, %c0_161, %c0_162], %258 {strides = array<i32>} : memref<8x8x128xf32, #tpu.memory_space<vmem>>, vector<1x8x128xf32>,
      %c7_i32 = arith.constant 7 : i32
      %c0_163 = arith.constant 0 : index
      %259 = arith.index_cast %arg18 : i32 to index
      %260 = arith.index_cast %c7_i32 : i32 to index
      %c0_164 = arith.constant 0 : index
      %c0_165 = arith.constant 0 : index
      %261 = vector.load %arg2[%c0_163, %259, %260, %c0_164, %c0_165] : memref<1x4x8x8x128xf32, #tpu.memory_space<vmem>>, vector<1x1x1x8x128xf32>
      %262 = vector.shape_cast %261 : vector<1x1x1x8x128xf32> to vector<8x128xf32>
      %263 = arith.addi %40, %c7_i32 : i32
      %c1_i32_166 = arith.constant 1 : i32
      %264 = arith.addi %263, %c1_i32_166 : i32
      %265 = arith.index_cast %264 : i32 to index
      %c0_167 = arith.constant 0 : index
      %c0_168 = arith.constant 0 : index
      %266 = vector.load %arg15[%265, %c0_167, %c0_168] : memref<18x8x128xf32, #tpu.memory_space<vmem>>, vector<1x8x128xf32>
      %267 = vector.shape_cast %266 : vector<1x8x128xf32> to vector<8x128xf32>
      %268 = arith.addi %40, %c7_i32 : i32
      %269 = arith.index_cast %268 : i32 to index
      %c0_169 = arith.constant 0 : index
      %c0_170 = arith.constant 0 : index
      %270 = vector.load %arg15[%269, %c0_169, %c0_170] : memref<18x8x128xf32, #tpu.memory_space<vmem>>, vector<1x8x128xf32>
      %271 = vector.shape_cast %270 : vector<1x8x128xf32> to vector<8x128xf32>
      %cst_171 = arith.constant dense<0.000000e+00> : vector<56x128xf32>
      %272 = tpu.matmul %7, %262, %cst_171 {dimension_numbers = #tpu.dot_dimension_numbers<[1], [0], [0], [1], [0, 0, 1, 1], [], []>} : vector<56x8xf32>, vector<8x128xf32>, vector<56x128xf32> -> vector<56x128xf32>
      %cst_172 = arith.constant dense<0.000000e+00> : vector<56x128xf32>
      %273 = tpu.matmul %1, %267, %cst_172 {dimension_numbers = #tpu.dot_dimension_numbers<[1], [0], [0], [1], [0, 0, 1, 1], [], []>} : vector<56x8xf32>, vector<8x128xf32>, vector<56x128xf32> -> vector<56x128xf32>
      %274 = arith.addf %272, %273 : vector<56x128xf32>
      %cst_173 = arith.constant dense<0.000000e+00> : vector<56x128xf32>
      %275 = tpu.matmul %5, %271, %cst_173 {dimension_numbers = #tpu.dot_dimension_numbers<[1], [0], [0], [1], [0, 0, 1, 1], [], []>} : vector<56x8xf32>, vector<8x128xf32>, vector<56x128xf32> -> vector<56x128xf32>
      %276 = arith.addf %274, %275 : vector<56x128xf32>
      %277 = vector.broadcast %9 : vector<56x1xf32> to vector<56x128xf32>
      %278 = arith.addf %276, %277 : vector<56x128xf32>
      %279 = arith.index_cast %c7_i32 : i32 to index
      %c0_174 = arith.constant 0 : index
      %c0_175 = arith.constant 0 : index
      %280 = vector.load %arg16[%279, %c0_174, %c0_175] : memref<8x56x128xf32, #tpu.memory_space<vmem>>, vector<1x56x128xf32>
      %281 = vector.shape_cast %280 : vector<1x56x128xf32> to vector<56x128xf32>
      %282 = vector.shape_cast %278 : vector<56x128xf32> to vector<1x56x128xf32>
      tpu.vector_store %arg16[%279, %c0_174, %c0_175], %282 {strides = array<i32>} : memref<8x56x128xf32, #tpu.memory_space<vmem>>, vector<1x56x128xf32>,
      %cst_176 = arith.constant dense<0.000000e+00> : vector<8x128xf32>
      %283 = tpu.matmul %11, %262, %cst_176 {dimension_numbers = #tpu.dot_dimension_numbers<[1], [0], [0], [1], [0, 0, 1, 1], [], []>} : vector<8x8xf32>, vector<8x128xf32>, vector<8x128xf32> -> vector<8x128xf32>
      %284 = vector.broadcast %13 : vector<8x1xf32> to vector<8x128xf32>
      %285 = arith.addf %283, %284 : vector<8x128xf32>
      %286 = arith.index_cast %c7_i32 : i32 to index
      %c0_177 = arith.constant 0 : index
      %c0_178 = arith.constant 0 : index
      %287 = vector.load %arg17[%286, %c0_177, %c0_178] : memref<8x8x128xf32, #tpu.memory_space<vmem>>, vector<1x8x128xf32>
      %288 = vector.shape_cast %287 : vector<1x8x128xf32> to vector<8x128xf32>
      %289 = vector.shape_cast %285 : vector<8x128xf32> to vector<1x8x128xf32>
      tpu.vector_store %arg17[%286, %c0_177, %c0_178], %289 {strides = array<i32>} : memref<8x8x128xf32, #tpu.memory_space<vmem>>, vector<1x8x128xf32>,
      %c8_i32 = arith.constant 8 : i32
      %c0_i32_179 = arith.constant 0 : i32
      %290 = arith.addi %40, %c0_i32_179 : i32
      %c1_i32_180 = arith.constant 1 : i32
      %291 = arith.addi %290, %c1_i32_180 : i32
      %292 = arith.index_cast %291 : i32 to index
      %c0_181 = arith.constant 0 : index
      %c0_182 = arith.constant 0 : index
      %293 = vector.load %arg15[%292, %c0_181, %c0_182] : memref<18x8x128xf32, #tpu.memory_space<vmem>>, vector<1x8x128xf32>
      %294 = vector.shape_cast %293 : vector<1x8x128xf32> to vector<8x128xf32>
      %295 = arith.addi %40, %c0_i32_179 : i32
      %296 = arith.index_cast %295 : i32 to index
      %c0_183 = arith.constant 0 : index
      %c0_184 = arith.constant 0 : index
      %297 = vector.load %arg15[%296, %c0_183, %c0_184] : memref<18x8x128xf32, #tpu.memory_space<vmem>>, vector<1x8x128xf32>
      %298 = vector.shape_cast %297 : vector<1x8x128xf32> to vector<8x128xf32>
      %299 = arith.addi %41, %c0_i32_179 : i32
      %300 = arith.index_cast %299 : i32 to index
      %c0_185 = arith.constant 0 : index
      %c0_186 = arith.constant 0 : index
      %301 = vector.load %arg15[%300, %c0_185, %c0_186] : memref<18x8x128xf32, #tpu.memory_space<vmem>>, vector<1x8x128xf32>
      %302 = vector.shape_cast %301 : vector<1x8x128xf32> to vector<8x128xf32>
      %303 = arith.index_cast %c0_i32_179 : i32 to index
      %c0_187 = arith.constant 0 : index
      %c0_188 = arith.constant 0 : index
      %304 = vector.load %arg16[%303, %c0_187, %c0_188] : memref<8x56x128xf32, #tpu.memory_space<vmem>>, vector<1x56x128xf32>
      %305 = vector.shape_cast %304 : vector<1x56x128xf32> to vector<56x128xf32>
      %cst_189 = arith.constant dense<0.000000e+00> : vector<56x128xf32>
      %306 = tpu.matmul %3, %302, %cst_189 {dimension_numbers = #tpu.dot_dimension_numbers<[1], [0], [0], [1], [0, 0, 1, 1], [], []>} : vector<56x8xf32>, vector<8x128xf32>, vector<56x128xf32> -> vector<56x128xf32>
      %307 = arith.addf %305, %306 : vector<56x128xf32>
      %308 = vector.extract_strided_slice %307 {offsets = [0, 0], sizes = [8, 128], strides = [1, 1]} : vector<56x128xf32> to vector<8x128xf32>
      %309 = arith.negf %308 : vector<8x128xf32>
      %310 = math.exp %309 : vector<8x128xf32>
      %cst_190 = arith.constant 1.000000e+00 : f32
      %311 = vector.broadcast %cst_190 : f32 to vector<8x128xf32>
      %312 = arith.addf %311, %310 : vector<8x128xf32>
      %313 = arith.divf %311, %312 : vector<8x128xf32>
      %314 = vector.extract_strided_slice %307 {offsets = [8, 0], sizes = [8, 128], strides = [1, 1]} : vector<56x128xf32> to vector<8x128xf32>
      %315 = arith.negf %314 : vector<8x128xf32>
      %316 = math.exp %315 : vector<8x128xf32>
      %cst_191 = arith.constant 1.000000e+00 : f32
      %317 = vector.broadcast %cst_191 : f32 to vector<8x128xf32>
      %318 = arith.addf %317, %316 : vector<8x128xf32>
      %319 = arith.divf %317, %318 : vector<8x128xf32>
      %320 = vector.extract_strided_slice %307 {offsets = [16, 0], sizes = [8, 128], strides = [1, 1]} : vector<56x128xf32> to vector<8x128xf32>
      %321 = arith.negf %320 : vector<8x128xf32>
      %322 = math.exp %321 : vector<8x128xf32>
      %cst_192 = arith.constant 1.000000e+00 : f32
      %323 = vector.broadcast %cst_192 : f32 to vector<8x128xf32>
      %324 = arith.addf %323, %322 : vector<8x128xf32>
      %325 = arith.divf %323, %324 : vector<8x128xf32>
      %326 = vector.extract_strided_slice %307 {offsets = [24, 0], sizes = [8, 128], strides = [1, 1]} : vector<56x128xf32> to vector<8x128xf32>
      %327 = vector.extract_strided_slice %307 {offsets = [32, 0], sizes = [8, 128], strides = [1, 1]} : vector<56x128xf32> to vector<8x128xf32>
      %328 = vector.extract_strided_slice %307 {offsets = [40, 0], sizes = [8, 128], strides = [1, 1]} : vector<56x128xf32> to vector<8x128xf32>
      %329 = vector.extract_strided_slice %307 {offsets = [48, 0], sizes = [8, 128], strides = [1, 1]} : vector<56x128xf32> to vector<8x128xf32>
      %330 = arith.maximumf %326, %327 : vector<8x128xf32>
      %331 = arith.maximumf %328, %329 : vector<8x128xf32>
      %332 = arith.maximumf %330, %331 : vector<8x128xf32>
      %333 = arith.subf %326, %332 : vector<8x128xf32>
      %334 = math.exp %333 : vector<8x128xf32>
      %335 = arith.subf %327, %332 : vector<8x128xf32>
      %336 = math.exp %335 : vector<8x128xf32>
      %337 = arith.subf %328, %332 : vector<8x128xf32>
      %338 = math.exp %337 : vector<8x128xf32>
      %339 = arith.subf %329, %332 : vector<8x128xf32>
      %340 = math.exp %339 : vector<8x128xf32>
      %341 = arith.addf %334, %336 : vector<8x128xf32>
      %342 = arith.addf %341, %338 : vector<8x128xf32>
      %343 = arith.addf %342, %340 : vector<8x128xf32>
      %344 = tpu.reciprocal %343 {approx = true} : vector<8x128xf32> -> vector<8x128xf32>
      %345 = arith.mulf %334, %344 : vector<8x128xf32>
      %346 = arith.mulf %336, %344 : vector<8x128xf32>
      %347 = arith.mulf %338, %344 : vector<8x128xf32>
      %348 = arith.mulf %340, %344 : vector<8x128xf32>
      %349 = arith.mulf %313, %294 : vector<8x128xf32>
      %cst_193 = arith.constant dense<0.000000e+00> : vector<8x128xf32>
      %350 = tpu.matmul %15, %349, %cst_193 {dimension_numbers = #tpu.dot_dimension_numbers<[1], [0], [0], [1], [0, 0, 1, 1], [], []>} : vector<8x8xf32>, vector<8x128xf32>, vector<8x128xf32> -> vector<8x128xf32>
      %351 = arith.mulf %319, %302 : vector<8x128xf32>
      %cst_194 = arith.constant dense<0.000000e+00> : vector<8x128xf32>
      %352 = tpu.matmul %17, %351, %cst_194 {dimension_numbers = #tpu.dot_dimension_numbers<[1], [0], [0], [1], [0, 0, 1, 1], [], []>} : vector<8x8xf32>, vector<8x128xf32>, vector<8x128xf32> -> vector<8x128xf32>
      %353 = arith.addf %350, %352 : vector<8x128xf32>
      %354 = arith.mulf %325, %298 : vector<8x128xf32>
      %cst_195 = arith.constant dense<0.000000e+00> : vector<8x128xf32>
      %355 = tpu.matmul %19, %354, %cst_195 {dimension_numbers = #tpu.dot_dimension_numbers<[1], [0], [0], [1], [0, 0, 1, 1], [], []>} : vector<8x8xf32>, vector<8x128xf32>, vector<8x128xf32> -> vector<8x128xf32>
      %356 = arith.addf %353, %355 : vector<8x128xf32>
      %357 = vector.broadcast %21 : vector<8x1xf32> to vector<8x128xf32>
      %358 = arith.addf %356, %357 : vector<8x128xf32>
      %359 = arith.index_cast %c0_i32_179 : i32 to index
      %c0_196 = arith.constant 0 : index
      %c0_197 = arith.constant 0 : index
      %360 = vector.load %arg17[%359, %c0_196, %c0_197] : memref<8x8x128xf32, #tpu.memory_space<vmem>>, vector<1x8x128xf32>
      %361 = vector.shape_cast %360 : vector<1x8x128xf32> to vector<8x128xf32>
      %362 = arith.addf %361, %358 : vector<8x128xf32>
      %363 = math.tanh %362 : vector<8x128xf32>
      %364 = arith.mulf %346, %302 : vector<8x128xf32>
      %365 = arith.mulf %347, %294 : vector<8x128xf32>
      %366 = arith.addf %364, %365 : vector<8x128xf32>
      %367 = arith.mulf %348, %298 : vector<8x128xf32>
      %368 = arith.addf %366, %367 : vector<8x128xf32>
      %369 = arith.mulf %345, %363 : vector<8x128xf32>
      %370 = arith.addf %368, %369 : vector<8x128xf32>
      %371 = arith.addi %41, %c0_i32_179 : i32
      %c1_i32_198 = arith.constant 1 : i32
      %372 = arith.addi %371, %c1_i32_198 : i32
      %373 = arith.index_cast %372 : i32 to index
      %c0_199 = arith.constant 0 : index
      %c0_200 = arith.constant 0 : index
      %374 = vector.load %arg15[%373, %c0_199, %c0_200] : memref<18x8x128xf32, #tpu.memory_space<vmem>>, vector<1x8x128xf32>
      %375 = vector.shape_cast %374 : vector<1x8x128xf32> to vector<8x128xf32>
      %376 = vector.shape_cast %370 : vector<8x128xf32> to vector<1x8x128xf32>
      tpu.vector_store %arg15[%373, %c0_199, %c0_200], %376 {strides = array<i32>} : memref<18x8x128xf32, #tpu.memory_space<vmem>>, vector<1x8x128xf32>,
      %c1_i32_201 = arith.constant 1 : i32
      %377 = arith.addi %40, %c1_i32_201 : i32
      %c1_i32_202 = arith.constant 1 : i32
      %378 = arith.addi %377, %c1_i32_202 : i32
      %379 = arith.index_cast %378 : i32 to index
      %c0_203 = arith.constant 0 : index
      %c0_204 = arith.constant 0 : index
      %380 = vector.load %arg15[%379, %c0_203, %c0_204] : memref<18x8x128xf32, #tpu.memory_space<vmem>>, vector<1x8x128xf32>
      %381 = vector.shape_cast %380 : vector<1x8x128xf32> to vector<8x128xf32>
      %382 = arith.addi %40, %c1_i32_201 : i32
      %383 = arith.index_cast %382 : i32 to index
      %c0_205 = arith.constant 0 : index
      %c0_206 = arith.constant 0 : index
      %384 = vector.load %arg15[%383, %c0_205, %c0_206] : memref<18x8x128xf32, #tpu.memory_space<vmem>>, vector<1x8x128xf32>
      %385 = vector.shape_cast %384 : vector<1x8x128xf32> to vector<8x128xf32>
      %386 = arith.addi %41, %c1_i32_201 : i32
      %387 = arith.index_cast %386 : i32 to index
      %c0_207 = arith.constant 0 : index
      %c0_208 = arith.constant 0 : index
      %388 = vector.load %arg15[%387, %c0_207, %c0_208] : memref<18x8x128xf32, #tpu.memory_space<vmem>>, vector<1x8x128xf32>
      %389 = vector.shape_cast %388 : vector<1x8x128xf32> to vector<8x128xf32>
      %390 = arith.index_cast %c1_i32_201 : i32 to index
      %c0_209 = arith.constant 0 : index
      %c0_210 = arith.constant 0 : index
      %391 = vector.load %arg16[%390, %c0_209, %c0_210] : memref<8x56x128xf32, #tpu.memory_space<vmem>>, vector<1x56x128xf32>
      %392 = vector.shape_cast %391 : vector<1x56x128xf32> to vector<56x128xf32>
      %cst_211 = arith.constant dense<0.000000e+00> : vector<56x128xf32>
      %393 = tpu.matmul %3, %389, %cst_211 {dimension_numbers = #tpu.dot_dimension_numbers<[1], [0], [0], [1], [0, 0, 1, 1], [], []>} : vector<56x8xf32>, vector<8x128xf32>, vector<56x128xf32> -> vector<56x128xf32>
      %394 = arith.addf %392, %393 : vector<56x128xf32>
      %395 = vector.extract_strided_slice %394 {offsets = [0, 0], sizes = [8, 128], strides = [1, 1]} : vector<56x128xf32> to vector<8x128xf32>
      %396 = arith.negf %395 : vector<8x128xf32>
      %397 = math.exp %396 : vector<8x128xf32>
      %cst_212 = arith.constant 1.000000e+00 : f32
      %398 = vector.broadcast %cst_212 : f32 to vector<8x128xf32>
      %399 = arith.addf %398, %397 : vector<8x128xf32>
      %400 = arith.divf %398, %399 : vector<8x128xf32>
      %401 = vector.extract_strided_slice %394 {offsets = [8, 0], sizes = [8, 128], strides = [1, 1]} : vector<56x128xf32> to vector<8x128xf32>
      %402 = arith.negf %401 : vector<8x128xf32>
      %403 = math.exp %402 : vector<8x128xf32>
      %cst_213 = arith.constant 1.000000e+00 : f32
      %404 = vector.broadcast %cst_213 : f32 to vector<8x128xf32>
      %405 = arith.addf %404, %403 : vector<8x128xf32>
      %406 = arith.divf %404, %405 : vector<8x128xf32>
      %407 = vector.extract_strided_slice %394 {offsets = [16, 0], sizes = [8, 128], strides = [1, 1]} : vector<56x128xf32> to vector<8x128xf32>
      %408 = arith.negf %407 : vector<8x128xf32>
      %409 = math.exp %408 : vector<8x128xf32>
      %cst_214 = arith.constant 1.000000e+00 : f32
      %410 = vector.broadcast %cst_214 : f32 to vector<8x128xf32>
      %411 = arith.addf %410, %409 : vector<8x128xf32>
      %412 = arith.divf %410, %411 : vector<8x128xf32>
      %413 = vector.extract_strided_slice %394 {offsets = [24, 0], sizes = [8, 128], strides = [1, 1]} : vector<56x128xf32> to vector<8x128xf32>
      %414 = vector.extract_strided_slice %394 {offsets = [32, 0], sizes = [8, 128], strides = [1, 1]} : vector<56x128xf32> to vector<8x128xf32>
      %415 = vector.extract_strided_slice %394 {offsets = [40, 0], sizes = [8, 128], strides = [1, 1]} : vector<56x128xf32> to vector<8x128xf32>
      %416 = vector.extract_strided_slice %394 {offsets = [48, 0], sizes = [8, 128], strides = [1, 1]} : vector<56x128xf32> to vector<8x128xf32>
      %417 = arith.maximumf %413, %414 : vector<8x128xf32>
      %418 = arith.maximumf %415, %416 : vector<8x128xf32>
      %419 = arith.maximumf %417, %418 : vector<8x128xf32>
      %420 = arith.subf %413, %419 : vector<8x128xf32>
      %421 = math.exp %420 : vector<8x128xf32>
      %422 = arith.subf %414, %419 : vector<8x128xf32>
      %423 = math.exp %422 : vector<8x128xf32>
      %424 = arith.subf %415, %419 : vector<8x128xf32>
      %425 = math.exp %424 : vector<8x128xf32>
      %426 = arith.subf %416, %419 : vector<8x128xf32>
      %427 = math.exp %426 : vector<8x128xf32>
      %428 = arith.addf %421, %423 : vector<8x128xf32>
      %429 = arith.addf %428, %425 : vector<8x128xf32>
      %430 = arith.addf %429, %427 : vector<8x128xf32>
      %431 = tpu.reciprocal %430 {approx = true} : vector<8x128xf32> -> vector<8x128xf32>
      %432 = arith.mulf %421, %431 : vector<8x128xf32>
      %433 = arith.mulf %423, %431 : vector<8x128xf32>
      %434 = arith.mulf %425, %431 : vector<8x128xf32>
      %435 = arith.mulf %427, %431 : vector<8x128xf32>
      %436 = arith.mulf %400, %381 : vector<8x128xf32>
      %cst_215 = arith.constant dense<0.000000e+00> : vector<8x128xf32>
      %437 = tpu.matmul %15, %436, %cst_215 {dimension_numbers = #tpu.dot_dimension_numbers<[1], [0], [0], [1], [0, 0, 1, 1], [], []>} : vector<8x8xf32>, vector<8x128xf32>, vector<8x128xf32> -> vector<8x128xf32>
      %438 = arith.mulf %406, %389 : vector<8x128xf32>
      %cst_216 = arith.constant dense<0.000000e+00> : vector<8x128xf32>
      %439 = tpu.matmul %17, %438, %cst_216 {dimension_numbers = #tpu.dot_dimension_numbers<[1], [0], [0], [1], [0, 0, 1, 1], [], []>} : vector<8x8xf32>, vector<8x128xf32>, vector<8x128xf32> -> vector<8x128xf32>
      %440 = arith.addf %437, %439 : vector<8x128xf32>
      %441 = arith.mulf %412, %385 : vector<8x128xf32>
      %cst_217 = arith.constant dense<0.000000e+00> : vector<8x128xf32>
      %442 = tpu.matmul %19, %441, %cst_217 {dimension_numbers = #tpu.dot_dimension_numbers<[1], [0], [0], [1], [0, 0, 1, 1], [], []>} : vector<8x8xf32>, vector<8x128xf32>, vector<8x128xf32> -> vector<8x128xf32>
      %443 = arith.addf %440, %442 : vector<8x128xf32>
      %444 = vector.broadcast %21 : vector<8x1xf32> to vector<8x128xf32>
      %445 = arith.addf %443, %444 : vector<8x128xf32>
      %446 = arith.index_cast %c1_i32_201 : i32 to index
      %c0_218 = arith.constant 0 : index
      %c0_219 = arith.constant 0 : index
      %447 = vector.load %arg17[%446, %c0_218, %c0_219] : memref<8x8x128xf32, #tpu.memory_space<vmem>>, vector<1x8x128xf32>
      %448 = vector.shape_cast %447 : vector<1x8x128xf32> to vector<8x128xf32>
      %449 = arith.addf %448, %445 : vector<8x128xf32>
      %450 = math.tanh %449 : vector<8x128xf32>
      %451 = arith.mulf %433, %389 : vector<8x128xf32>
      %452 = arith.mulf %434, %381 : vector<8x128xf32>
      %453 = arith.addf %451, %452 : vector<8x128xf32>
      %454 = arith.mulf %435, %385 : vector<8x128xf32>
      %455 = arith.addf %453, %454 : vector<8x128xf32>
      %456 = arith.mulf %432, %450 : vector<8x128xf32>
      %457 = arith.addf %455, %456 : vector<8x128xf32>
      %458 = arith.addi %41, %c1_i32_201 : i32
      %c1_i32_220 = arith.constant 1 : i32
      %459 = arith.addi %458, %c1_i32_220 : i32
      %460 = arith.index_cast %459 : i32 to index
      %c0_221 = arith.constant 0 : index
      %c0_222 = arith.constant 0 : index
      %461 = vector.load %arg15[%460, %c0_221, %c0_222] : memref<18x8x128xf32, #tpu.memory_space<vmem>>, vector<1x8x128xf32>
      %462 = vector.shape_cast %461 : vector<1x8x128xf32> to vector<8x128xf32>
      %463 = vector.shape_cast %457 : vector<8x128xf32> to vector<1x8x128xf32>
      tpu.vector_store %arg15[%460, %c0_221, %c0_222], %463 {strides = array<i32>} : memref<18x8x128xf32, #tpu.memory_space<vmem>>, vector<1x8x128xf32>,
      %c2_i32_223 = arith.constant 2 : i32
      %464 = arith.addi %40, %c2_i32_223 : i32
      %c1_i32_224 = arith.constant 1 : i32
      %465 = arith.addi %464, %c1_i32_224 : i32
      %466 = arith.index_cast %465 : i32 to index
      %c0_225 = arith.constant 0 : index
      %c0_226 = arith.constant 0 : index
      %467 = vector.load %arg15[%466, %c0_225, %c0_226] : memref<18x8x128xf32, #tpu.memory_space<vmem>>, vector<1x8x128xf32>
      %468 = vector.shape_cast %467 : vector<1x8x128xf32> to vector<8x128xf32>
      %469 = arith.addi %40, %c2_i32_223 : i32
      %470 = arith.index_cast %469 : i32 to index
      %c0_227 = arith.constant 0 : index
      %c0_228 = arith.constant 0 : index
      %471 = vector.load %arg15[%470, %c0_227, %c0_228] : memref<18x8x128xf32, #tpu.memory_space<vmem>>, vector<1x8x128xf32>
      %472 = vector.shape_cast %471 : vector<1x8x128xf32> to vector<8x128xf32>
      %473 = arith.addi %41, %c2_i32_223 : i32
      %474 = arith.index_cast %473 : i32 to index
      %c0_229 = arith.constant 0 : index
      %c0_230 = arith.constant 0 : index
      %475 = vector.load %arg15[%474, %c0_229, %c0_230] : memref<18x8x128xf32, #tpu.memory_space<vmem>>, vector<1x8x128xf32>
      %476 = vector.shape_cast %475 : vector<1x8x128xf32> to vector<8x128xf32>
      %477 = arith.index_cast %c2_i32_223 : i32 to index
      %c0_231 = arith.constant 0 : index
      %c0_232 = arith.constant 0 : index
      %478 = vector.load %arg16[%477, %c0_231, %c0_232] : memref<8x56x128xf32, #tpu.memory_space<vmem>>, vector<1x56x128xf32>
      %479 = vector.shape_cast %478 : vector<1x56x128xf32> to vector<56x128xf32>
      %cst_233 = arith.constant dense<0.000000e+00> : vector<56x128xf32>
      %480 = tpu.matmul %3, %476, %cst_233 {dimension_numbers = #tpu.dot_dimension_numbers<[1], [0], [0], [1], [0, 0, 1, 1], [], []>} : vector<56x8xf32>, vector<8x128xf32>, vector<56x128xf32> -> vector<56x128xf32>
      %481 = arith.addf %479, %480 : vector<56x128xf32>
      %482 = vector.extract_strided_slice %481 {offsets = [0, 0], sizes = [8, 128], strides = [1, 1]} : vector<56x128xf32> to vector<8x128xf32>
      %483 = arith.negf %482 : vector<8x128xf32>
      %484 = math.exp %483 : vector<8x128xf32>
      %cst_234 = arith.constant 1.000000e+00 : f32
      %485 = vector.broadcast %cst_234 : f32 to vector<8x128xf32>
      %486 = arith.addf %485, %484 : vector<8x128xf32>
      %487 = arith.divf %485, %486 : vector<8x128xf32>
      %488 = vector.extract_strided_slice %481 {offsets = [8, 0], sizes = [8, 128], strides = [1, 1]} : vector<56x128xf32> to vector<8x128xf32>
      %489 = arith.negf %488 : vector<8x128xf32>
      %490 = math.exp %489 : vector<8x128xf32>
      %cst_235 = arith.constant 1.000000e+00 : f32
      %491 = vector.broadcast %cst_235 : f32 to vector<8x128xf32>
      %492 = arith.addf %491, %490 : vector<8x128xf32>
      %493 = arith.divf %491, %492 : vector<8x128xf32>
      %494 = vector.extract_strided_slice %481 {offsets = [16, 0], sizes = [8, 128], strides = [1, 1]} : vector<56x128xf32> to vector<8x128xf32>
      %495 = arith.negf %494 : vector<8x128xf32>
      %496 = math.exp %495 : vector<8x128xf32>
      %cst_236 = arith.constant 1.000000e+00 : f32
      %497 = vector.broadcast %cst_236 : f32 to vector<8x128xf32>
      %498 = arith.addf %497, %496 : vector<8x128xf32>
      %499 = arith.divf %497, %498 : vector<8x128xf32>
      %500 = vector.extract_strided_slice %481 {offsets = [24, 0], sizes = [8, 128], strides = [1, 1]} : vector<56x128xf32> to vector<8x128xf32>
      %501 = vector.extract_strided_slice %481 {offsets = [32, 0], sizes = [8, 128], strides = [1, 1]} : vector<56x128xf32> to vector<8x128xf32>
      %502 = vector.extract_strided_slice %481 {offsets = [40, 0], sizes = [8, 128], strides = [1, 1]} : vector<56x128xf32> to vector<8x128xf32>
      %503 = vector.extract_strided_slice %481 {offsets = [48, 0], sizes = [8, 128], strides = [1, 1]} : vector<56x128xf32> to vector<8x128xf32>
      %504 = arith.maximumf %500, %501 : vector<8x128xf32>
      %505 = arith.maximumf %502, %503 : vector<8x128xf32>
      %506 = arith.maximumf %504, %505 : vector<8x128xf32>
      %507 = arith.subf %500, %506 : vector<8x128xf32>
      %508 = math.exp %507 : vector<8x128xf32>
      %509 = arith.subf %501, %506 : vector<8x128xf32>
      %510 = math.exp %509 : vector<8x128xf32>
      %511 = arith.subf %502, %506 : vector<8x128xf32>
      %512 = math.exp %511 : vector<8x128xf32>
      %513 = arith.subf %503, %506 : vector<8x128xf32>
      %514 = math.exp %513 : vector<8x128xf32>
      %515 = arith.addf %508, %510 : vector<8x128xf32>
      %516 = arith.addf %515, %512 : vector<8x128xf32>
      %517 = arith.addf %516, %514 : vector<8x128xf32>
      %518 = tpu.reciprocal %517 {approx = true} : vector<8x128xf32> -> vector<8x128xf32>
      %519 = arith.mulf %508, %518 : vector<8x128xf32>
      %520 = arith.mulf %510, %518 : vector<8x128xf32>
      %521 = arith.mulf %512, %518 : vector<8x128xf32>
      %522 = arith.mulf %514, %518 : vector<8x128xf32>
      %523 = arith.mulf %487, %468 : vector<8x128xf32>
      %cst_237 = arith.constant dense<0.000000e+00> : vector<8x128xf32>
      %524 = tpu.matmul %15, %523, %cst_237 {dimension_numbers = #tpu.dot_dimension_numbers<[1], [0], [0], [1], [0, 0, 1, 1], [], []>} : vector<8x8xf32>, vector<8x128xf32>, vector<8x128xf32> -> vector<8x128xf32>
      %525 = arith.mulf %493, %476 : vector<8x128xf32>
      %cst_238 = arith.constant dense<0.000000e+00> : vector<8x128xf32>
      %526 = tpu.matmul %17, %525, %cst_238 {dimension_numbers = #tpu.dot_dimension_numbers<[1], [0], [0], [1], [0, 0, 1, 1], [], []>} : vector<8x8xf32>, vector<8x128xf32>, vector<8x128xf32> -> vector<8x128xf32>
      %527 = arith.addf %524, %526 : vector<8x128xf32>
      %528 = arith.mulf %499, %472 : vector<8x128xf32>
      %cst_239 = arith.constant dense<0.000000e+00> : vector<8x128xf32>
      %529 = tpu.matmul %19, %528, %cst_239 {dimension_numbers = #tpu.dot_dimension_numbers<[1], [0], [0], [1], [0, 0, 1, 1], [], []>} : vector<8x8xf32>, vector<8x128xf32>, vector<8x128xf32> -> vector<8x128xf32>
      %530 = arith.addf %527, %529 : vector<8x128xf32>
      %531 = vector.broadcast %21 : vector<8x1xf32> to vector<8x128xf32>
      %532 = arith.addf %530, %531 : vector<8x128xf32>
      %533 = arith.index_cast %c2_i32_223 : i32 to index
      %c0_240 = arith.constant 0 : index
      %c0_241 = arith.constant 0 : index
      %534 = vector.load %arg17[%533, %c0_240, %c0_241] : memref<8x8x128xf32, #tpu.memory_space<vmem>>, vector<1x8x128xf32>
      %535 = vector.shape_cast %534 : vector<1x8x128xf32> to vector<8x128xf32>
      %536 = arith.addf %535, %532 : vector<8x128xf32>
      %537 = math.tanh %536 : vector<8x128xf32>
      %538 = arith.mulf %520, %476 : vector<8x128xf32>
      %539 = arith.mulf %521, %468 : vector<8x128xf32>
      %540 = arith.addf %538, %539 : vector<8x128xf32>
      %541 = arith.mulf %522, %472 : vector<8x128xf32>
      %542 = arith.addf %540, %541 : vector<8x128xf32>
      %543 = arith.mulf %519, %537 : vector<8x128xf32>
      %544 = arith.addf %542, %543 : vector<8x128xf32>
      %545 = arith.addi %41, %c2_i32_223 : i32
      %c1_i32_242 = arith.constant 1 : i32
      %546 = arith.addi %545, %c1_i32_242 : i32
      %547 = arith.index_cast %546 : i32 to index
      %c0_243 = arith.constant 0 : index
      %c0_244 = arith.constant 0 : index
      %548 = vector.load %arg15[%547, %c0_243, %c0_244] : memref<18x8x128xf32, #tpu.memory_space<vmem>>, vector<1x8x128xf32>
      %549 = vector.shape_cast %548 : vector<1x8x128xf32> to vector<8x128xf32>
      %550 = vector.shape_cast %544 : vector<8x128xf32> to vector<1x8x128xf32>
      tpu.vector_store %arg15[%547, %c0_243, %c0_244], %550 {strides = array<i32>} : memref<18x8x128xf32, #tpu.memory_space<vmem>>, vector<1x8x128xf32>,
      %c3_i32_245 = arith.constant 3 : i32
      %551 = arith.addi %40, %c3_i32_245 : i32
      %c1_i32_246 = arith.constant 1 : i32
      %552 = arith.addi %551, %c1_i32_246 : i32
      %553 = arith.index_cast %552 : i32 to index
      %c0_247 = arith.constant 0 : index
      %c0_248 = arith.constant 0 : index
      %554 = vector.load %arg15[%553, %c0_247, %c0_248] : memref<18x8x128xf32, #tpu.memory_space<vmem>>, vector<1x8x128xf32>
      %555 = vector.shape_cast %554 : vector<1x8x128xf32> to vector<8x128xf32>
      %556 = arith.addi %40, %c3_i32_245 : i32
      %557 = arith.index_cast %556 : i32 to index
      %c0_249 = arith.constant 0 : index
      %c0_250 = arith.constant 0 : index
      %558 = vector.load %arg15[%557, %c0_249, %c0_250] : memref<18x8x128xf32, #tpu.memory_space<vmem>>, vector<1x8x128xf32>
      %559 = vector.shape_cast %558 : vector<1x8x128xf32> to vector<8x128xf32>
      %560 = arith.addi %41, %c3_i32_245 : i32
      %561 = arith.index_cast %560 : i32 to index
      %c0_251 = arith.constant 0 : index
      %c0_252 = arith.constant 0 : index
      %562 = vector.load %arg15[%561, %c0_251, %c0_252] : memref<18x8x128xf32, #tpu.memory_space<vmem>>, vector<1x8x128xf32>
      %563 = vector.shape_cast %562 : vector<1x8x128xf32> to vector<8x128xf32>
      %564 = arith.index_cast %c3_i32_245 : i32 to index
      %c0_253 = arith.constant 0 : index
      %c0_254 = arith.constant 0 : index
      %565 = vector.load %arg16[%564, %c0_253, %c0_254] : memref<8x56x128xf32, #tpu.memory_space<vmem>>, vector<1x56x128xf32>
      %566 = vector.shape_cast %565 : vector<1x56x128xf32> to vector<56x128xf32>
      %cst_255 = arith.constant dense<0.000000e+00> : vector<56x128xf32>
      %567 = tpu.matmul %3, %563, %cst_255 {dimension_numbers = #tpu.dot_dimension_numbers<[1], [0], [0], [1], [0, 0, 1, 1], [], []>} : vector<56x8xf32>, vector<8x128xf32>, vector<56x128xf32> -> vector<56x128xf32>
      %568 = arith.addf %566, %567 : vector<56x128xf32>
      %569 = vector.extract_strided_slice %568 {offsets = [0, 0], sizes = [8, 128], strides = [1, 1]} : vector<56x128xf32> to vector<8x128xf32>
      %570 = arith.negf %569 : vector<8x128xf32>
      %571 = math.exp %570 : vector<8x128xf32>
      %cst_256 = arith.constant 1.000000e+00 : f32
      %572 = vector.broadcast %cst_256 : f32 to vector<8x128xf32>
      %573 = arith.addf %572, %571 : vector<8x128xf32>
      %574 = arith.divf %572, %573 : vector<8x128xf32>
      %575 = vector.extract_strided_slice %568 {offsets = [8, 0], sizes = [8, 128], strides = [1, 1]} : vector<56x128xf32> to vector<8x128xf32>
      %576 = arith.negf %575 : vector<8x128xf32>
      %577 = math.exp %576 : vector<8x128xf32>
      %cst_257 = arith.constant 1.000000e+00 : f32
      %578 = vector.broadcast %cst_257 : f32 to vector<8x128xf32>
      %579 = arith.addf %578, %577 : vector<8x128xf32>
      %580 = arith.divf %578, %579 : vector<8x128xf32>
      %581 = vector.extract_strided_slice %568 {offsets = [16, 0], sizes = [8, 128], strides = [1, 1]} : vector<56x128xf32> to vector<8x128xf32>
      %582 = arith.negf %581 : vector<8x128xf32>
      %583 = math.exp %582 : vector<8x128xf32>
      %cst_258 = arith.constant 1.000000e+00 : f32
      %584 = vector.broadcast %cst_258 : f32 to vector<8x128xf32>
      %585 = arith.addf %584, %583 : vector<8x128xf32>
      %586 = arith.divf %584, %585 : vector<8x128xf32>
      %587 = vector.extract_strided_slice %568 {offsets = [24, 0], sizes = [8, 128], strides = [1, 1]} : vector<56x128xf32> to vector<8x128xf32>
      %588 = vector.extract_strided_slice %568 {offsets = [32, 0], sizes = [8, 128], strides = [1, 1]} : vector<56x128xf32> to vector<8x128xf32>
      %589 = vector.extract_strided_slice %568 {offsets = [40, 0], sizes = [8, 128], strides = [1, 1]} : vector<56x128xf32> to vector<8x128xf32>
      %590 = vector.extract_strided_slice %568 {offsets = [48, 0], sizes = [8, 128], strides = [1, 1]} : vector<56x128xf32> to vector<8x128xf32>
      %591 = arith.maximumf %587, %588 : vector<8x128xf32>
      %592 = arith.maximumf %589, %590 : vector<8x128xf32>
      %593 = arith.maximumf %591, %592 : vector<8x128xf32>
      %594 = arith.subf %587, %593 : vector<8x128xf32>
      %595 = math.exp %594 : vector<8x128xf32>
      %596 = arith.subf %588, %593 : vector<8x128xf32>
      %597 = math.exp %596 : vector<8x128xf32>
      %598 = arith.subf %589, %593 : vector<8x128xf32>
      %599 = math.exp %598 : vector<8x128xf32>
      %600 = arith.subf %590, %593 : vector<8x128xf32>
      %601 = math.exp %600 : vector<8x128xf32>
      %602 = arith.addf %595, %597 : vector<8x128xf32>
      %603 = arith.addf %602, %599 : vector<8x128xf32>
      %604 = arith.addf %603, %601 : vector<8x128xf32>
      %605 = tpu.reciprocal %604 {approx = true} : vector<8x128xf32> -> vector<8x128xf32>
      %606 = arith.mulf %595, %605 : vector<8x128xf32>
      %607 = arith.mulf %597, %605 : vector<8x128xf32>
      %608 = arith.mulf %599, %605 : vector<8x128xf32>
      %609 = arith.mulf %601, %605 : vector<8x128xf32>
      %610 = arith.mulf %574, %555 : vector<8x128xf32>
      %cst_259 = arith.constant dense<0.000000e+00> : vector<8x128xf32>
      %611 = tpu.matmul %15, %610, %cst_259 {dimension_numbers = #tpu.dot_dimension_numbers<[1], [0], [0], [1], [0, 0, 1, 1], [], []>} : vector<8x8xf32>, vector<8x128xf32>, vector<8x128xf32> -> vector<8x128xf32>
      %612 = arith.mulf %580, %563 : vector<8x128xf32>
      %cst_260 = arith.constant dense<0.000000e+00> : vector<8x128xf32>
      %613 = tpu.matmul %17, %612, %cst_260 {dimension_numbers = #tpu.dot_dimension_numbers<[1], [0], [0], [1], [0, 0, 1, 1], [], []>} : vector<8x8xf32>, vector<8x128xf32>, vector<8x128xf32> -> vector<8x128xf32>
      %614 = arith.addf %611, %613 : vector<8x128xf32>
      %615 = arith.mulf %586, %559 : vector<8x128xf32>
      %cst_261 = arith.constant dense<0.000000e+00> : vector<8x128xf32>
      %616 = tpu.matmul %19, %615, %cst_261 {dimension_numbers = #tpu.dot_dimension_numbers<[1], [0], [0], [1], [0, 0, 1, 1], [], []>} : vector<8x8xf32>, vector<8x128xf32>, vector<8x128xf32> -> vector<8x128xf32>
      %617 = arith.addf %614, %616 : vector<8x128xf32>
      %618 = vector.broadcast %21 : vector<8x1xf32> to vector<8x128xf32>
      %619 = arith.addf %617, %618 : vector<8x128xf32>
      %620 = arith.index_cast %c3_i32_245 : i32 to index
      %c0_262 = arith.constant 0 : index
      %c0_263 = arith.constant 0 : index
      %621 = vector.load %arg17[%620, %c0_262, %c0_263] : memref<8x8x128xf32, #tpu.memory_space<vmem>>, vector<1x8x128xf32>
      %622 = vector.shape_cast %621 : vector<1x8x128xf32> to vector<8x128xf32>
      %623 = arith.addf %622, %619 : vector<8x128xf32>
      %624 = math.tanh %623 : vector<8x128xf32>
      %625 = arith.mulf %607, %563 : vector<8x128xf32>
      %626 = arith.mulf %608, %555 : vector<8x128xf32>
      %627 = arith.addf %625, %626 : vector<8x128xf32>
      %628 = arith.mulf %609, %559 : vector<8x128xf32>
      %629 = arith.addf %627, %628 : vector<8x128xf32>
      %630 = arith.mulf %606, %624 : vector<8x128xf32>
      %631 = arith.addf %629, %630 : vector<8x128xf32>
      %632 = arith.addi %41, %c3_i32_245 : i32
      %c1_i32_264 = arith.constant 1 : i32
      %633 = arith.addi %632, %c1_i32_264 : i32
      %634 = arith.index_cast %633 : i32 to index
      %c0_265 = arith.constant 0 : index
      %c0_266 = arith.constant 0 : index
      %635 = vector.load %arg15[%634, %c0_265, %c0_266] : memref<18x8x128xf32, #tpu.memory_space<vmem>>, vector<1x8x128xf32>
      %636 = vector.shape_cast %635 : vector<1x8x128xf32> to vector<8x128xf32>
      %637 = vector.shape_cast %631 : vector<8x128xf32> to vector<1x8x128xf32>
      tpu.vector_store %arg15[%634, %c0_265, %c0_266], %637 {strides = array<i32>} : memref<18x8x128xf32, #tpu.memory_space<vmem>>, vector<1x8x128xf32>,
      %c4_i32_267 = arith.constant 4 : i32
      %638 = arith.addi %40, %c4_i32_267 : i32
      %c1_i32_268 = arith.constant 1 : i32
      %639 = arith.addi %638, %c1_i32_268 : i32
      %640 = arith.index_cast %639 : i32 to index
      %c0_269 = arith.constant 0 : index
      %c0_270 = arith.constant 0 : index
      %641 = vector.load %arg15[%640, %c0_269, %c0_270] : memref<18x8x128xf32, #tpu.memory_space<vmem>>, vector<1x8x128xf32>
      %642 = vector.shape_cast %641 : vector<1x8x128xf32> to vector<8x128xf32>
      %643 = arith.addi %40, %c4_i32_267 : i32
      %644 = arith.index_cast %643 : i32 to index
      %c0_271 = arith.constant 0 : index
      %c0_272 = arith.constant 0 : index
      %645 = vector.load %arg15[%644, %c0_271, %c0_272] : memref<18x8x128xf32, #tpu.memory_space<vmem>>, vector<1x8x128xf32>
      %646 = vector.shape_cast %645 : vector<1x8x128xf32> to vector<8x128xf32>
      %647 = arith.addi %41, %c4_i32_267 : i32
      %648 = arith.index_cast %647 : i32 to index
      %c0_273 = arith.constant 0 : index
      %c0_274 = arith.constant 0 : index
      %649 = vector.load %arg15[%648, %c0_273, %c0_274] : memref<18x8x128xf32, #tpu.memory_space<vmem>>, vector<1x8x128xf32>
      %650 = vector.shape_cast %649 : vector<1x8x128xf32> to vector<8x128xf32>
      %651 = arith.index_cast %c4_i32_267 : i32 to index
      %c0_275 = arith.constant 0 : index
      %c0_276 = arith.constant 0 : index
      %652 = vector.load %arg16[%651, %c0_275, %c0_276] : memref<8x56x128xf32, #tpu.memory_space<vmem>>, vector<1x56x128xf32>
      %653 = vector.shape_cast %652 : vector<1x56x128xf32> to vector<56x128xf32>
      %cst_277 = arith.constant dense<0.000000e+00> : vector<56x128xf32>
      %654 = tpu.matmul %3, %650, %cst_277 {dimension_numbers = #tpu.dot_dimension_numbers<[1], [0], [0], [1], [0, 0, 1, 1], [], []>} : vector<56x8xf32>, vector<8x128xf32>, vector<56x128xf32> -> vector<56x128xf32>
      %655 = arith.addf %653, %654 : vector<56x128xf32>
      %656 = vector.extract_strided_slice %655 {offsets = [0, 0], sizes = [8, 128], strides = [1, 1]} : vector<56x128xf32> to vector<8x128xf32>
      %657 = arith.negf %656 : vector<8x128xf32>
      %658 = math.exp %657 : vector<8x128xf32>
      %cst_278 = arith.constant 1.000000e+00 : f32
      %659 = vector.broadcast %cst_278 : f32 to vector<8x128xf32>
      %660 = arith.addf %659, %658 : vector<8x128xf32>
      %661 = arith.divf %659, %660 : vector<8x128xf32>
      %662 = vector.extract_strided_slice %655 {offsets = [8, 0], sizes = [8, 128], strides = [1, 1]} : vector<56x128xf32> to vector<8x128xf32>
      %663 = arith.negf %662 : vector<8x128xf32>
      %664 = math.exp %663 : vector<8x128xf32>
      %cst_279 = arith.constant 1.000000e+00 : f32
      %665 = vector.broadcast %cst_279 : f32 to vector<8x128xf32>
      %666 = arith.addf %665, %664 : vector<8x128xf32>
      %667 = arith.divf %665, %666 : vector<8x128xf32>
      %668 = vector.extract_strided_slice %655 {offsets = [16, 0], sizes = [8, 128], strides = [1, 1]} : vector<56x128xf32> to vector<8x128xf32>
      %669 = arith.negf %668 : vector<8x128xf32>
      %670 = math.exp %669 : vector<8x128xf32>
      %cst_280 = arith.constant 1.000000e+00 : f32
      %671 = vector.broadcast %cst_280 : f32 to vector<8x128xf32>
      %672 = arith.addf %671, %670 : vector<8x128xf32>
      %673 = arith.divf %671, %672 : vector<8x128xf32>
      %674 = vector.extract_strided_slice %655 {offsets = [24, 0], sizes = [8, 128], strides = [1, 1]} : vector<56x128xf32> to vector<8x128xf32>
      %675 = vector.extract_strided_slice %655 {offsets = [32, 0], sizes = [8, 128], strides = [1, 1]} : vector<56x128xf32> to vector<8x128xf32>
      %676 = vector.extract_strided_slice %655 {offsets = [40, 0], sizes = [8, 128], strides = [1, 1]} : vector<56x128xf32> to vector<8x128xf32>
      %677 = vector.extract_strided_slice %655 {offsets = [48, 0], sizes = [8, 128], strides = [1, 1]} : vector<56x128xf32> to vector<8x128xf32>
      %678 = arith.maximumf %674, %675 : vector<8x128xf32>
      %679 = arith.maximumf %676, %677 : vector<8x128xf32>
      %680 = arith.maximumf %678, %679 : vector<8x128xf32>
      %681 = arith.subf %674, %680 : vector<8x128xf32>
      %682 = math.exp %681 : vector<8x128xf32>
      %683 = arith.subf %675, %680 : vector<8x128xf32>
      %684 = math.exp %683 : vector<8x128xf32>
      %685 = arith.subf %676, %680 : vector<8x128xf32>
      %686 = math.exp %685 : vector<8x128xf32>
      %687 = arith.subf %677, %680 : vector<8x128xf32>
      %688 = math.exp %687 : vector<8x128xf32>
      %689 = arith.addf %682, %684 : vector<8x128xf32>
      %690 = arith.addf %689, %686 : vector<8x128xf32>
      %691 = arith.addf %690, %688 : vector<8x128xf32>
      %692 = tpu.reciprocal %691 {approx = true} : vector<8x128xf32> -> vector<8x128xf32>
      %693 = arith.mulf %682, %692 : vector<8x128xf32>
      %694 = arith.mulf %684, %692 : vector<8x128xf32>
      %695 = arith.mulf %686, %692 : vector<8x128xf32>
      %696 = arith.mulf %688, %692 : vector<8x128xf32>
      %697 = arith.mulf %661, %642 : vector<8x128xf32>
      %cst_281 = arith.constant dense<0.000000e+00> : vector<8x128xf32>
      %698 = tpu.matmul %15, %697, %cst_281 {dimension_numbers = #tpu.dot_dimension_numbers<[1], [0], [0], [1], [0, 0, 1, 1], [], []>} : vector<8x8xf32>, vector<8x128xf32>, vector<8x128xf32> -> vector<8x128xf32>
      %699 = arith.mulf %667, %650 : vector<8x128xf32>
      %cst_282 = arith.constant dense<0.000000e+00> : vector<8x128xf32>
      %700 = tpu.matmul %17, %699, %cst_282 {dimension_numbers = #tpu.dot_dimension_numbers<[1], [0], [0], [1], [0, 0, 1, 1], [], []>} : vector<8x8xf32>, vector<8x128xf32>, vector<8x128xf32> -> vector<8x128xf32>
      %701 = arith.addf %698, %700 : vector<8x128xf32>
      %702 = arith.mulf %673, %646 : vector<8x128xf32>
      %cst_283 = arith.constant dense<0.000000e+00> : vector<8x128xf32>
      %703 = tpu.matmul %19, %702, %cst_283 {dimension_numbers = #tpu.dot_dimension_numbers<[1], [0], [0], [1], [0, 0, 1, 1], [], []>} : vector<8x8xf32>, vector<8x128xf32>, vector<8x128xf32> -> vector<8x128xf32>
      %704 = arith.addf %701, %703 : vector<8x128xf32>
      %705 = vector.broadcast %21 : vector<8x1xf32> to vector<8x128xf32>
      %706 = arith.addf %704, %705 : vector<8x128xf32>
      %707 = arith.index_cast %c4_i32_267 : i32 to index
      %c0_284 = arith.constant 0 : index
      %c0_285 = arith.constant 0 : index
      %708 = vector.load %arg17[%707, %c0_284, %c0_285] : memref<8x8x128xf32, #tpu.memory_space<vmem>>, vector<1x8x128xf32>
      %709 = vector.shape_cast %708 : vector<1x8x128xf32> to vector<8x128xf32>
      %710 = arith.addf %709, %706 : vector<8x128xf32>
      %711 = math.tanh %710 : vector<8x128xf32>
      %712 = arith.mulf %694, %650 : vector<8x128xf32>
      %713 = arith.mulf %695, %642 : vector<8x128xf32>
      %714 = arith.addf %712, %713 : vector<8x128xf32>
      %715 = arith.mulf %696, %646 : vector<8x128xf32>
      %716 = arith.addf %714, %715 : vector<8x128xf32>
      %717 = arith.mulf %693, %711 : vector<8x128xf32>
      %718 = arith.addf %716, %717 : vector<8x128xf32>
      %719 = arith.addi %41, %c4_i32_267 : i32
      %c1_i32_286 = arith.constant 1 : i32
      %720 = arith.addi %719, %c1_i32_286 : i32
      %721 = arith.index_cast %720 : i32 to index
      %c0_287 = arith.constant 0 : index
      %c0_288 = arith.constant 0 : index
      %722 = vector.load %arg15[%721, %c0_287, %c0_288] : memref<18x8x128xf32, #tpu.memory_space<vmem>>, vector<1x8x128xf32>
      %723 = vector.shape_cast %722 : vector<1x8x128xf32> to vector<8x128xf32>
      %724 = vector.shape_cast %718 : vector<8x128xf32> to vector<1x8x128xf32>
      tpu.vector_store %arg15[%721, %c0_287, %c0_288], %724 {strides = array<i32>} : memref<18x8x128xf32, #tpu.memory_space<vmem>>, vector<1x8x128xf32>,
      %c5_i32_289 = arith.constant 5 : i32
      %725 = arith.addi %40, %c5_i32_289 : i32
      %c1_i32_290 = arith.constant 1 : i32
      %726 = arith.addi %725, %c1_i32_290 : i32
      %727 = arith.index_cast %726 : i32 to index
      %c0_291 = arith.constant 0 : index
      %c0_292 = arith.constant 0 : index
      %728 = vector.load %arg15[%727, %c0_291, %c0_292] : memref<18x8x128xf32, #tpu.memory_space<vmem>>, vector<1x8x128xf32>
      %729 = vector.shape_cast %728 : vector<1x8x128xf32> to vector<8x128xf32>
      %730 = arith.addi %40, %c5_i32_289 : i32
      %731 = arith.index_cast %730 : i32 to index
      %c0_293 = arith.constant 0 : index
      %c0_294 = arith.constant 0 : index
      %732 = vector.load %arg15[%731, %c0_293, %c0_294] : memref<18x8x128xf32, #tpu.memory_space<vmem>>, vector<1x8x128xf32>
      %733 = vector.shape_cast %732 : vector<1x8x128xf32> to vector<8x128xf32>
      %734 = arith.addi %41, %c5_i32_289 : i32
      %735 = arith.index_cast %734 : i32 to index
      %c0_295 = arith.constant 0 : index
      %c0_296 = arith.constant 0 : index
      %736 = vector.load %arg15[%735, %c0_295, %c0_296] : memref<18x8x128xf32, #tpu.memory_space<vmem>>, vector<1x8x128xf32>
      %737 = vector.shape_cast %736 : vector<1x8x128xf32> to vector<8x128xf32>
      %738 = arith.index_cast %c5_i32_289 : i32 to index
      %c0_297 = arith.constant 0 : index
      %c0_298 = arith.constant 0 : index
      %739 = vector.load %arg16[%738, %c0_297, %c0_298] : memref<8x56x128xf32, #tpu.memory_space<vmem>>, vector<1x56x128xf32>
      %740 = vector.shape_cast %739 : vector<1x56x128xf32> to vector<56x128xf32>
      %cst_299 = arith.constant dense<0.000000e+00> : vector<56x128xf32>
      %741 = tpu.matmul %3, %737, %cst_299 {dimension_numbers = #tpu.dot_dimension_numbers<[1], [0], [0], [1], [0, 0, 1, 1], [], []>} : vector<56x8xf32>, vector<8x128xf32>, vector<56x128xf32> -> vector<56x128xf32>
      %742 = arith.addf %740, %741 : vector<56x128xf32>
      %743 = vector.extract_strided_slice %742 {offsets = [0, 0], sizes = [8, 128], strides = [1, 1]} : vector<56x128xf32> to vector<8x128xf32>
      %744 = arith.negf %743 : vector<8x128xf32>
      %745 = math.exp %744 : vector<8x128xf32>
      %cst_300 = arith.constant 1.000000e+00 : f32
      %746 = vector.broadcast %cst_300 : f32 to vector<8x128xf32>
      %747 = arith.addf %746, %745 : vector<8x128xf32>
      %748 = arith.divf %746, %747 : vector<8x128xf32>
      %749 = vector.extract_strided_slice %742 {offsets = [8, 0], sizes = [8, 128], strides = [1, 1]} : vector<56x128xf32> to vector<8x128xf32>
      %750 = arith.negf %749 : vector<8x128xf32>
      %751 = math.exp %750 : vector<8x128xf32>
      %cst_301 = arith.constant 1.000000e+00 : f32
      %752 = vector.broadcast %cst_301 : f32 to vector<8x128xf32>
      %753 = arith.addf %752, %751 : vector<8x128xf32>
      %754 = arith.divf %752, %753 : vector<8x128xf32>
      %755 = vector.extract_strided_slice %742 {offsets = [16, 0], sizes = [8, 128], strides = [1, 1]} : vector<56x128xf32> to vector<8x128xf32>
      %756 = arith.negf %755 : vector<8x128xf32>
      %757 = math.exp %756 : vector<8x128xf32>
      %cst_302 = arith.constant 1.000000e+00 : f32
      %758 = vector.broadcast %cst_302 : f32 to vector<8x128xf32>
      %759 = arith.addf %758, %757 : vector<8x128xf32>
      %760 = arith.divf %758, %759 : vector<8x128xf32>
      %761 = vector.extract_strided_slice %742 {offsets = [24, 0], sizes = [8, 128], strides = [1, 1]} : vector<56x128xf32> to vector<8x128xf32>
      %762 = vector.extract_strided_slice %742 {offsets = [32, 0], sizes = [8, 128], strides = [1, 1]} : vector<56x128xf32> to vector<8x128xf32>
      %763 = vector.extract_strided_slice %742 {offsets = [40, 0], sizes = [8, 128], strides = [1, 1]} : vector<56x128xf32> to vector<8x128xf32>
      %764 = vector.extract_strided_slice %742 {offsets = [48, 0], sizes = [8, 128], strides = [1, 1]} : vector<56x128xf32> to vector<8x128xf32>
      %765 = arith.maximumf %761, %762 : vector<8x128xf32>
      %766 = arith.maximumf %763, %764 : vector<8x128xf32>
      %767 = arith.maximumf %765, %766 : vector<8x128xf32>
      %768 = arith.subf %761, %767 : vector<8x128xf32>
      %769 = math.exp %768 : vector<8x128xf32>
      %770 = arith.subf %762, %767 : vector<8x128xf32>
      %771 = math.exp %770 : vector<8x128xf32>
      %772 = arith.subf %763, %767 : vector<8x128xf32>
      %773 = math.exp %772 : vector<8x128xf32>
      %774 = arith.subf %764, %767 : vector<8x128xf32>
      %775 = math.exp %774 : vector<8x128xf32>
      %776 = arith.addf %769, %771 : vector<8x128xf32>
      %777 = arith.addf %776, %773 : vector<8x128xf32>
      %778 = arith.addf %777, %775 : vector<8x128xf32>
      %779 = tpu.reciprocal %778 {approx = true} : vector<8x128xf32> -> vector<8x128xf32>
      %780 = arith.mulf %769, %779 : vector<8x128xf32>
      %781 = arith.mulf %771, %779 : vector<8x128xf32>
      %782 = arith.mulf %773, %779 : vector<8x128xf32>
      %783 = arith.mulf %775, %779 : vector<8x128xf32>
      %784 = arith.mulf %748, %729 : vector<8x128xf32>
      %cst_303 = arith.constant dense<0.000000e+00> : vector<8x128xf32>
      %785 = tpu.matmul %15, %784, %cst_303 {dimension_numbers = #tpu.dot_dimension_numbers<[1], [0], [0], [1], [0, 0, 1, 1], [], []>} : vector<8x8xf32>, vector<8x128xf32>, vector<8x128xf32> -> vector<8x128xf32>
      %786 = arith.mulf %754, %737 : vector<8x128xf32>
      %cst_304 = arith.constant dense<0.000000e+00> : vector<8x128xf32>
      %787 = tpu.matmul %17, %786, %cst_304 {dimension_numbers = #tpu.dot_dimension_numbers<[1], [0], [0], [1], [0, 0, 1, 1], [], []>} : vector<8x8xf32>, vector<8x128xf32>, vector<8x128xf32> -> vector<8x128xf32>
      %788 = arith.addf %785, %787 : vector<8x128xf32>
      %789 = arith.mulf %760, %733 : vector<8x128xf32>
      %cst_305 = arith.constant dense<0.000000e+00> : vector<8x128xf32>
      %790 = tpu.matmul %19, %789, %cst_305 {dimension_numbers = #tpu.dot_dimension_numbers<[1], [0], [0], [1], [0, 0, 1, 1], [], []>} : vector<8x8xf32>, vector<8x128xf32>, vector<8x128xf32> -> vector<8x128xf32>
      %791 = arith.addf %788, %790 : vector<8x128xf32>
      %792 = vector.broadcast %21 : vector<8x1xf32> to vector<8x128xf32>
      %793 = arith.addf %791, %792 : vector<8x128xf32>
      %794 = arith.index_cast %c5_i32_289 : i32 to index
      %c0_306 = arith.constant 0 : index
      %c0_307 = arith.constant 0 : index
      %795 = vector.load %arg17[%794, %c0_306, %c0_307] : memref<8x8x128xf32, #tpu.memory_space<vmem>>, vector<1x8x128xf32>
      %796 = vector.shape_cast %795 : vector<1x8x128xf32> to vector<8x128xf32>
      %797 = arith.addf %796, %793 : vector<8x128xf32>
      %798 = math.tanh %797 : vector<8x128xf32>
      %799 = arith.mulf %781, %737 : vector<8x128xf32>
      %800 = arith.mulf %782, %729 : vector<8x128xf32>
      %801 = arith.addf %799, %800 : vector<8x128xf32>
      %802 = arith.mulf %783, %733 : vector<8x128xf32>
      %803 = arith.addf %801, %802 : vector<8x128xf32>
      %804 = arith.mulf %780, %798 : vector<8x128xf32>
      %805 = arith.addf %803, %804 : vector<8x128xf32>
      %806 = arith.addi %41, %c5_i32_289 : i32
      %c1_i32_308 = arith.constant 1 : i32
      %807 = arith.addi %806, %c1_i32_308 : i32
      %808 = arith.index_cast %807 : i32 to index
      %c0_309 = arith.constant 0 : index
      %c0_310 = arith.constant 0 : index
      %809 = vector.load %arg15[%808, %c0_309, %c0_310] : memref<18x8x128xf32, #tpu.memory_space<vmem>>, vector<1x8x128xf32>
      %810 = vector.shape_cast %809 : vector<1x8x128xf32> to vector<8x128xf32>
      %811 = vector.shape_cast %805 : vector<8x128xf32> to vector<1x8x128xf32>
      tpu.vector_store %arg15[%808, %c0_309, %c0_310], %811 {strides = array<i32>} : memref<18x8x128xf32, #tpu.memory_space<vmem>>, vector<1x8x128xf32>,
      %c6_i32_311 = arith.constant 6 : i32
      %812 = arith.addi %40, %c6_i32_311 : i32
      %c1_i32_312 = arith.constant 1 : i32
      %813 = arith.addi %812, %c1_i32_312 : i32
      %814 = arith.index_cast %813 : i32 to index
      %c0_313 = arith.constant 0 : index
      %c0_314 = arith.constant 0 : index
      %815 = vector.load %arg15[%814, %c0_313, %c0_314] : memref<18x8x128xf32, #tpu.memory_space<vmem>>, vector<1x8x128xf32>
      %816 = vector.shape_cast %815 : vector<1x8x128xf32> to vector<8x128xf32>
      %817 = arith.addi %40, %c6_i32_311 : i32
      %818 = arith.index_cast %817 : i32 to index
      %c0_315 = arith.constant 0 : index
      %c0_316 = arith.constant 0 : index
      %819 = vector.load %arg15[%818, %c0_315, %c0_316] : memref<18x8x128xf32, #tpu.memory_space<vmem>>, vector<1x8x128xf32>
      %820 = vector.shape_cast %819 : vector<1x8x128xf32> to vector<8x128xf32>
      %821 = arith.addi %41, %c6_i32_311 : i32
      %822 = arith.index_cast %821 : i32 to index
      %c0_317 = arith.constant 0 : index
      %c0_318 = arith.constant 0 : index
      %823 = vector.load %arg15[%822, %c0_317, %c0_318] : memref<18x8x128xf32, #tpu.memory_space<vmem>>, vector<1x8x128xf32>
      %824 = vector.shape_cast %823 : vector<1x8x128xf32> to vector<8x128xf32>
      %825 = arith.index_cast %c6_i32_311 : i32 to index
      %c0_319 = arith.constant 0 : index
      %c0_320 = arith.constant 0 : index
      %826 = vector.load %arg16[%825, %c0_319, %c0_320] : memref<8x56x128xf32, #tpu.memory_space<vmem>>, vector<1x56x128xf32>
      %827 = vector.shape_cast %826 : vector<1x56x128xf32> to vector<56x128xf32>
      %cst_321 = arith.constant dense<0.000000e+00> : vector<56x128xf32>
      %828 = tpu.matmul %3, %824, %cst_321 {dimension_numbers = #tpu.dot_dimension_numbers<[1], [0], [0], [1], [0, 0, 1, 1], [], []>} : vector<56x8xf32>, vector<8x128xf32>, vector<56x128xf32> -> vector<56x128xf32>
      %829 = arith.addf %827, %828 : vector<56x128xf32>
      %830 = vector.extract_strided_slice %829 {offsets = [0, 0], sizes = [8, 128], strides = [1, 1]} : vector<56x128xf32> to vector<8x128xf32>
      %831 = arith.negf %830 : vector<8x128xf32>
      %832 = math.exp %831 : vector<8x128xf32>
      %cst_322 = arith.constant 1.000000e+00 : f32
      %833 = vector.broadcast %cst_322 : f32 to vector<8x128xf32>
      %834 = arith.addf %833, %832 : vector<8x128xf32>
      %835 = arith.divf %833, %834 : vector<8x128xf32>
      %836 = vector.extract_strided_slice %829 {offsets = [8, 0], sizes = [8, 128], strides = [1, 1]} : vector<56x128xf32> to vector<8x128xf32>
      %837 = arith.negf %836 : vector<8x128xf32>
      %838 = math.exp %837 : vector<8x128xf32>
      %cst_323 = arith.constant 1.000000e+00 : f32
      %839 = vector.broadcast %cst_323 : f32 to vector<8x128xf32>
      %840 = arith.addf %839, %838 : vector<8x128xf32>
      %841 = arith.divf %839, %840 : vector<8x128xf32>
      %842 = vector.extract_strided_slice %829 {offsets = [16, 0], sizes = [8, 128], strides = [1, 1]} : vector<56x128xf32> to vector<8x128xf32>
      %843 = arith.negf %842 : vector<8x128xf32>
      %844 = math.exp %843 : vector<8x128xf32>
      %cst_324 = arith.constant 1.000000e+00 : f32
      %845 = vector.broadcast %cst_324 : f32 to vector<8x128xf32>
      %846 = arith.addf %845, %844 : vector<8x128xf32>
      %847 = arith.divf %845, %846 : vector<8x128xf32>
      %848 = vector.extract_strided_slice %829 {offsets = [24, 0], sizes = [8, 128], strides = [1, 1]} : vector<56x128xf32> to vector<8x128xf32>
      %849 = vector.extract_strided_slice %829 {offsets = [32, 0], sizes = [8, 128], strides = [1, 1]} : vector<56x128xf32> to vector<8x128xf32>
      %850 = vector.extract_strided_slice %829 {offsets = [40, 0], sizes = [8, 128], strides = [1, 1]} : vector<56x128xf32> to vector<8x128xf32>
      %851 = vector.extract_strided_slice %829 {offsets = [48, 0], sizes = [8, 128], strides = [1, 1]} : vector<56x128xf32> to vector<8x128xf32>
      %852 = arith.maximumf %848, %849 : vector<8x128xf32>
      %853 = arith.maximumf %850, %851 : vector<8x128xf32>
      %854 = arith.maximumf %852, %853 : vector<8x128xf32>
      %855 = arith.subf %848, %854 : vector<8x128xf32>
      %856 = math.exp %855 : vector<8x128xf32>
      %857 = arith.subf %849, %854 : vector<8x128xf32>
      %858 = math.exp %857 : vector<8x128xf32>
      %859 = arith.subf %850, %854 : vector<8x128xf32>
      %860 = math.exp %859 : vector<8x128xf32>
      %861 = arith.subf %851, %854 : vector<8x128xf32>
      %862 = math.exp %861 : vector<8x128xf32>
      %863 = arith.addf %856, %858 : vector<8x128xf32>
      %864 = arith.addf %863, %860 : vector<8x128xf32>
      %865 = arith.addf %864, %862 : vector<8x128xf32>
      %866 = tpu.reciprocal %865 {approx = true} : vector<8x128xf32> -> vector<8x128xf32>
      %867 = arith.mulf %856, %866 : vector<8x128xf32>
      %868 = arith.mulf %858, %866 : vector<8x128xf32>
      %869 = arith.mulf %860, %866 : vector<8x128xf32>
      %870 = arith.mulf %862, %866 : vector<8x128xf32>
      %871 = arith.mulf %835, %816 : vector<8x128xf32>
      %cst_325 = arith.constant dense<0.000000e+00> : vector<8x128xf32>
      %872 = tpu.matmul %15, %871, %cst_325 {dimension_numbers = #tpu.dot_dimension_numbers<[1], [0], [0], [1], [0, 0, 1, 1], [], []>} : vector<8x8xf32>, vector<8x128xf32>, vector<8x128xf32> -> vector<8x128xf32>
      %873 = arith.mulf %841, %824 : vector<8x128xf32>
      %cst_326 = arith.constant dense<0.000000e+00> : vector<8x128xf32>
      %874 = tpu.matmul %17, %873, %cst_326 {dimension_numbers = #tpu.dot_dimension_numbers<[1], [0], [0], [1], [0, 0, 1, 1], [], []>} : vector<8x8xf32>, vector<8x128xf32>, vector<8x128xf32> -> vector<8x128xf32>
      %875 = arith.addf %872, %874 : vector<8x128xf32>
      %876 = arith.mulf %847, %820 : vector<8x128xf32>
      %cst_327 = arith.constant dense<0.000000e+00> : vector<8x128xf32>
      %877 = tpu.matmul %19, %876, %cst_327 {dimension_numbers = #tpu.dot_dimension_numbers<[1], [0], [0], [1], [0, 0, 1, 1], [], []>} : vector<8x8xf32>, vector<8x128xf32>, vector<8x128xf32> -> vector<8x128xf32>
      %878 = arith.addf %875, %877 : vector<8x128xf32>
      %879 = vector.broadcast %21 : vector<8x1xf32> to vector<8x128xf32>
      %880 = arith.addf %878, %879 : vector<8x128xf32>
      %881 = arith.index_cast %c6_i32_311 : i32 to index
      %c0_328 = arith.constant 0 : index
      %c0_329 = arith.constant 0 : index
      %882 = vector.load %arg17[%881, %c0_328, %c0_329] : memref<8x8x128xf32, #tpu.memory_space<vmem>>, vector<1x8x128xf32>
      %883 = vector.shape_cast %882 : vector<1x8x128xf32> to vector<8x128xf32>
      %884 = arith.addf %883, %880 : vector<8x128xf32>
      %885 = math.tanh %884 : vector<8x128xf32>
      %886 = arith.mulf %868, %824 : vector<8x128xf32>
      %887 = arith.mulf %869, %816 : vector<8x128xf32>
      %888 = arith.addf %886, %887 : vector<8x128xf32>
      %889 = arith.mulf %870, %820 : vector<8x128xf32>
      %890 = arith.addf %888, %889 : vector<8x128xf32>
      %891 = arith.mulf %867, %885 : vector<8x128xf32>
      %892 = arith.addf %890, %891 : vector<8x128xf32>
      %893 = arith.addi %41, %c6_i32_311 : i32
      %c1_i32_330 = arith.constant 1 : i32
      %894 = arith.addi %893, %c1_i32_330 : i32
      %895 = arith.index_cast %894 : i32 to index
      %c0_331 = arith.constant 0 : index
      %c0_332 = arith.constant 0 : index
      %896 = vector.load %arg15[%895, %c0_331, %c0_332] : memref<18x8x128xf32, #tpu.memory_space<vmem>>, vector<1x8x128xf32>
      %897 = vector.shape_cast %896 : vector<1x8x128xf32> to vector<8x128xf32>
      %898 = vector.shape_cast %892 : vector<8x128xf32> to vector<1x8x128xf32>
      tpu.vector_store %arg15[%895, %c0_331, %c0_332], %898 {strides = array<i32>} : memref<18x8x128xf32, #tpu.memory_space<vmem>>, vector<1x8x128xf32>,
      %c7_i32_333 = arith.constant 7 : i32
      %899 = arith.addi %40, %c7_i32_333 : i32
      %c1_i32_334 = arith.constant 1 : i32
      %900 = arith.addi %899, %c1_i32_334 : i32
      %901 = arith.index_cast %900 : i32 to index
      %c0_335 = arith.constant 0 : index
      %c0_336 = arith.constant 0 : index
      %902 = vector.load %arg15[%901, %c0_335, %c0_336] : memref<18x8x128xf32, #tpu.memory_space<vmem>>, vector<1x8x128xf32>
      %903 = vector.shape_cast %902 : vector<1x8x128xf32> to vector<8x128xf32>
      %904 = arith.addi %40, %c7_i32_333 : i32
      %905 = arith.index_cast %904 : i32 to index
      %c0_337 = arith.constant 0 : index
      %c0_338 = arith.constant 0 : index
      %906 = vector.load %arg15[%905, %c0_337, %c0_338] : memref<18x8x128xf32, #tpu.memory_space<vmem>>, vector<1x8x128xf32>
      %907 = vector.shape_cast %906 : vector<1x8x128xf32> to vector<8x128xf32>
      %908 = arith.addi %41, %c7_i32_333 : i32
      %909 = arith.index_cast %908 : i32 to index
      %c0_339 = arith.constant 0 : index
      %c0_340 = arith.constant 0 : index
      %910 = vector.load %arg15[%909, %c0_339, %c0_340] : memref<18x8x128xf32, #tpu.memory_space<vmem>>, vector<1x8x128xf32>
      %911 = vector.shape_cast %910 : vector<1x8x128xf32> to vector<8x128xf32>
      %912 = arith.index_cast %c7_i32_333 : i32 to index
      %c0_341 = arith.constant 0 : index
      %c0_342 = arith.constant 0 : index
      %913 = vector.load %arg16[%912, %c0_341, %c0_342] : memref<8x56x128xf32, #tpu.memory_space<vmem>>, vector<1x56x128xf32>
      %914 = vector.shape_cast %913 : vector<1x56x128xf32> to vector<56x128xf32>
      %cst_343 = arith.constant dense<0.000000e+00> : vector<56x128xf32>
      %915 = tpu.matmul %3, %911, %cst_343 {dimension_numbers = #tpu.dot_dimension_numbers<[1], [0], [0], [1], [0, 0, 1, 1], [], []>} : vector<56x8xf32>, vector<8x128xf32>, vector<56x128xf32> -> vector<56x128xf32>
      %916 = arith.addf %914, %915 : vector<56x128xf32>
      %917 = vector.extract_strided_slice %916 {offsets = [0, 0], sizes = [8, 128], strides = [1, 1]} : vector<56x128xf32> to vector<8x128xf32>
      %918 = arith.negf %917 : vector<8x128xf32>
      %919 = math.exp %918 : vector<8x128xf32>
      %cst_344 = arith.constant 1.000000e+00 : f32
      %920 = vector.broadcast %cst_344 : f32 to vector<8x128xf32>
      %921 = arith.addf %920, %919 : vector<8x128xf32>
      %922 = arith.divf %920, %921 : vector<8x128xf32>
      %923 = vector.extract_strided_slice %916 {offsets = [8, 0], sizes = [8, 128], strides = [1, 1]} : vector<56x128xf32> to vector<8x128xf32>
      %924 = arith.negf %923 : vector<8x128xf32>
      %925 = math.exp %924 : vector<8x128xf32>
      %cst_345 = arith.constant 1.000000e+00 : f32
      %926 = vector.broadcast %cst_345 : f32 to vector<8x128xf32>
      %927 = arith.addf %926, %925 : vector<8x128xf32>
      %928 = arith.divf %926, %927 : vector<8x128xf32>
      %929 = vector.extract_strided_slice %916 {offsets = [16, 0], sizes = [8, 128], strides = [1, 1]} : vector<56x128xf32> to vector<8x128xf32>
      %930 = arith.negf %929 : vector<8x128xf32>
      %931 = math.exp %930 : vector<8x128xf32>
      %cst_346 = arith.constant 1.000000e+00 : f32
      %932 = vector.broadcast %cst_346 : f32 to vector<8x128xf32>
      %933 = arith.addf %932, %931 : vector<8x128xf32>
      %934 = arith.divf %932, %933 : vector<8x128xf32>
      %935 = vector.extract_strided_slice %916 {offsets = [24, 0], sizes = [8, 128], strides = [1, 1]} : vector<56x128xf32> to vector<8x128xf32>
      %936 = vector.extract_strided_slice %916 {offsets = [32, 0], sizes = [8, 128], strides = [1, 1]} : vector<56x128xf32> to vector<8x128xf32>
      %937 = vector.extract_strided_slice %916 {offsets = [40, 0], sizes = [8, 128], strides = [1, 1]} : vector<56x128xf32> to vector<8x128xf32>
      %938 = vector.extract_strided_slice %916 {offsets = [48, 0], sizes = [8, 128], strides = [1, 1]} : vector<56x128xf32> to vector<8x128xf32>
      %939 = arith.maximumf %935, %936 : vector<8x128xf32>
      %940 = arith.maximumf %937, %938 : vector<8x128xf32>
      %941 = arith.maximumf %939, %940 : vector<8x128xf32>
      %942 = arith.subf %935, %941 : vector<8x128xf32>
      %943 = math.exp %942 : vector<8x128xf32>
      %944 = arith.subf %936, %941 : vector<8x128xf32>
      %945 = math.exp %944 : vector<8x128xf32>
      %946 = arith.subf %937, %941 : vector<8x128xf32>
      %947 = math.exp %946 : vector<8x128xf32>
      %948 = arith.subf %938, %941 : vector<8x128xf32>
      %949 = math.exp %948 : vector<8x128xf32>
      %950 = arith.addf %943, %945 : vector<8x128xf32>
      %951 = arith.addf %950, %947 : vector<8x128xf32>
      %952 = arith.addf %951, %949 : vector<8x128xf32>
      %953 = tpu.reciprocal %952 {approx = true} : vector<8x128xf32> -> vector<8x128xf32>
      %954 = arith.mulf %943, %953 : vector<8x128xf32>
      %955 = arith.mulf %945, %953 : vector<8x128xf32>
      %956 = arith.mulf %947, %953 : vector<8x128xf32>
      %957 = arith.mulf %949, %953 : vector<8x128xf32>
      %958 = arith.mulf %922, %903 : vector<8x128xf32>
      %cst_347 = arith.constant dense<0.000000e+00> : vector<8x128xf32>
      %959 = tpu.matmul %15, %958, %cst_347 {dimension_numbers = #tpu.dot_dimension_numbers<[1], [0], [0], [1], [0, 0, 1, 1], [], []>} : vector<8x8xf32>, vector<8x128xf32>, vector<8x128xf32> -> vector<8x128xf32>
      %960 = arith.mulf %928, %911 : vector<8x128xf32>
      %cst_348 = arith.constant dense<0.000000e+00> : vector<8x128xf32>
      %961 = tpu.matmul %17, %960, %cst_348 {dimension_numbers = #tpu.dot_dimension_numbers<[1], [0], [0], [1], [0, 0, 1, 1], [], []>} : vector<8x8xf32>, vector<8x128xf32>, vector<8x128xf32> -> vector<8x128xf32>
      %962 = arith.addf %959, %961 : vector<8x128xf32>
      %963 = arith.mulf %934, %907 : vector<8x128xf32>
      %cst_349 = arith.constant dense<0.000000e+00> : vector<8x128xf32>
      %964 = tpu.matmul %19, %963, %cst_349 {dimension_numbers = #tpu.dot_dimension_numbers<[1], [0], [0], [1], [0, 0, 1, 1], [], []>} : vector<8x8xf32>, vector<8x128xf32>, vector<8x128xf32> -> vector<8x128xf32>
      %965 = arith.addf %962, %964 : vector<8x128xf32>
      %966 = vector.broadcast %21 : vector<8x1xf32> to vector<8x128xf32>
      %967 = arith.addf %965, %966 : vector<8x128xf32>
      %968 = arith.index_cast %c7_i32_333 : i32 to index
      %c0_350 = arith.constant 0 : index
      %c0_351 = arith.constant 0 : index
      %969 = vector.load %arg17[%968, %c0_350, %c0_351] : memref<8x8x128xf32, #tpu.memory_space<vmem>>, vector<1x8x128xf32>
      %970 = vector.shape_cast %969 : vector<1x8x128xf32> to vector<8x128xf32>
      %971 = arith.addf %970, %967 : vector<8x128xf32>
      %972 = math.tanh %971 : vector<8x128xf32>
      %973 = arith.mulf %955, %911 : vector<8x128xf32>
      %974 = arith.mulf %956, %903 : vector<8x128xf32>
      %975 = arith.addf %973, %974 : vector<8x128xf32>
      %976 = arith.mulf %957, %907 : vector<8x128xf32>
      %977 = arith.addf %975, %976 : vector<8x128xf32>
      %978 = arith.mulf %954, %972 : vector<8x128xf32>
      %979 = arith.addf %977, %978 : vector<8x128xf32>
      %980 = arith.addi %41, %c7_i32_333 : i32
      %c1_i32_352 = arith.constant 1 : i32
      %981 = arith.addi %980, %c1_i32_352 : i32
      %982 = arith.index_cast %981 : i32 to index
      %c0_353 = arith.constant 0 : index
      %c0_354 = arith.constant 0 : index
      %983 = vector.load %arg15[%982, %c0_353, %c0_354] : memref<18x8x128xf32, #tpu.memory_space<vmem>>, vector<1x8x128xf32>
      %984 = vector.shape_cast %983 : vector<1x8x128xf32> to vector<8x128xf32>
      %985 = vector.shape_cast %979 : vector<8x128xf32> to vector<1x8x128xf32>
      tpu.vector_store %arg15[%982, %c0_353, %c0_354], %985 {strides = array<i32>} : memref<18x8x128xf32, #tpu.memory_space<vmem>>, vector<1x8x128xf32>,
      %c8_i32_355 = arith.constant 8 : i32
    }
    %c4_i32_35 = arith.constant 4 : i32
    %c8 = arith.constant 8 : index
    %c0_36 = arith.constant 0 : index
    %c0_37 = arith.constant 0 : index
    %25 = vector.load %arg15[%c8, %c0_36, %c0_37] : memref<18x8x128xf32, #tpu.memory_space<vmem>>, vector<1x8x128xf32>
    %26 = vector.shape_cast %25 : vector<1x8x128xf32> to vector<8x128xf32>
    %c0_38 = arith.constant 0 : index
    %c0_39 = arith.constant 0 : index
    %c0_40 = arith.constant 0 : index
    %27 = vector.load %arg14[%c0_38, %c0_39, %c0_40] : memref<1x8x128xf32, #tpu.memory_space<vmem>>, vector<1x8x128xf32>
    %28 = vector.shape_cast %27 : vector<1x8x128xf32> to vector<8x128xf32>
    %29 = vector.shape_cast %26 : vector<8x128xf32> to vector<1x8x128xf32>
    tpu.vector_store %arg14[%c0_38, %c0_39, %c0_40], %29 {strides = array<i32>} : memref<1x8x128xf32, #tpu.memory_space<vmem>>, vector<1x8x128xf32>,
    return
  }
  func.func @transform_0(%arg0: i32, %arg1: i32) -> (i32, i32, i32, i32, i32) {
    %c0_i32 = arith.constant 0 : i32
    %c0_i32_0 = arith.constant 0 : i32
    %c0_i32_1 = arith.constant 0 : i32
    %c0_i32_2 = arith.constant 0 : i32
    return %arg0, %c0_i32, %c0_i32_0, %c0_i32_1, %arg1 : i32, i32, i32, i32, i32
  }
  func.func @transform_1(%arg0: i32, %arg1: i32) -> (i32, i32, i32) {
    %c0_i32 = arith.constant 0 : i32
    %c0_i32_0 = arith.constant 0 : i32
    %c0_i32_1 = arith.constant 0 : i32
    return %arg0, %c0_i32, %c0_i32_0 : i32, i32, i32
  }
  func.func @transform_2(%arg0: i32, %arg1: i32) -> (i32, i32, i32) {
    %c0_i32 = arith.constant 0 : i32
    %c0_i32_0 = arith.constant 0 : i32
    %c0_i32_1 = arith.constant 0 : i32
    return %arg0, %c0_i32, %c0_i32_0 : i32, i32, i32
  }
  func.func @transform_3(%arg0: i32, %arg1: i32) -> (i32, i32, i32) {
    %c0_i32 = arith.constant 0 : i32
    %c0_i32_0 = arith.constant 0 : i32
    %c0_i32_1 = arith.constant 0 : i32
    return %arg0, %c0_i32, %c0_i32_0 : i32, i32, i32
  }
  func.func @transform_4(%arg0: i32, %arg1: i32) -> (i32, i32, i32) {
    %c0_i32 = arith.constant 0 : i32
    %c0_i32_0 = arith.constant 0 : i32
    %c0_i32_1 = arith.constant 0 : i32
    return %arg0, %c0_i32, %c0_i32_0 : i32, i32, i32
  }
  func.func @transform_5(%arg0: i32, %arg1: i32) -> (i32, i32, i32) {
    %c0_i32 = arith.constant 0 : i32
    %c0_i32_0 = arith.constant 0 : i32
    %c0_i32_1 = arith.constant 0 : i32
    return %arg0, %c0_i32, %c0_i32_0 : i32, i32, i32
  }
  func.func @transform_6(%arg0: i32, %arg1: i32) -> (i32, i32, i32) {
    %c0_i32 = arith.constant 0 : i32
    %c0_i32_0 = arith.constant 0 : i32
    %c0_i32_1 = arith.constant 0 : i32
    return %arg0, %c0_i32, %c0_i32_0 : i32, i32, i32
  }
  func.func @transform_7(%arg0: i32, %arg1: i32) -> (i32, i32, i32) {
    %c0_i32 = arith.constant 0 : i32
    %c0_i32_0 = arith.constant 0 : i32
    %c0_i32_1 = arith.constant 0 : i32
    return %arg0, %c0_i32, %c0_i32_0 : i32, i32, i32
  }
  func.func @transform_8(%arg0: i32, %arg1: i32) -> (i32, i32, i32) {
    %c0_i32 = arith.constant 0 : i32
    %c0_i32_0 = arith.constant 0 : i32
    %c0_i32_1 = arith.constant 0 : i32
    return %arg0, %c0_i32, %c0_i32_0 : i32, i32, i32
  }
  func.func @transform_9(%arg0: i32, %arg1: i32) -> (i32, i32, i32) {
    %c0_i32 = arith.constant 0 : i32
    %c0_i32_0 = arith.constant 0 : i32
    %c0_i32_1 = arith.constant 0 : i32
    return %arg0, %c0_i32, %c0_i32_0 : i32, i32, i32
  }
  func.func @transform_10(%arg0: i32, %arg1: i32) -> (i32, i32, i32) {
    %c0_i32 = arith.constant 0 : i32
    %c0_i32_0 = arith.constant 0 : i32
    %c0_i32_1 = arith.constant 0 : i32
    return %arg0, %c0_i32, %c0_i32_0 : i32, i32, i32
  }
  func.func @transform_11(%arg0: i32, %arg1: i32) -> (i32, i32, i32) {
    %c0_i32 = arith.constant 0 : i32
    %c0_i32_0 = arith.constant 0 : i32
    %c0_i32_1 = arith.constant 0 : i32
    return %arg0, %c0_i32, %c0_i32_0 : i32, i32, i32
  }
  func.func @transform_12(%arg0: i32, %arg1: i32) -> (i32, i32, i32) {
    %c0_i32 = arith.constant 0 : i32
    %c0_i32_0 = arith.constant 0 : i32
    return %arg0, %c0_i32, %arg1 : i32, i32, i32
  }
}

</mosaic_0001>

<llo_original>
// kernel: hint_forward.3
$region0: #{hint_forward.3}
  #allocation0 [shape = 'u32[]', space=smem, size = 0x4, offset = 0x4, fixed_abs, tag = 'smem constant byte address 0x4 - core index']
  #allocation1 [shape = 'u32[72,128]{1,0:T(1,128)}', space=vmem, size = 0x9000, scoped, tag = 'internal scratch']
  #allocation2 [shape = 'f32[1,1]{1,0:T(1,128)S(1)}', space=vmem, size = 0x200, scoped, tag = 'scoped memory for hint_forward.3']
  %s0 = inlined_call_operand.vmem [shape: f32[8,256], index: 0, kind: input, shape index: {}]
  %s1 = inlined_call_operand.vmem [shape: f32[8,8], index: 1, kind: input, shape index: {}]
  %s2 = inlined_call_operand.vmem [shape: f32[8,1], index: 2, kind: input, shape index: {}]
  %s3 = inlined_call_operand.vmem [shape: f32[32,8], index: 3, kind: input, shape index: {}]
  %s4 = inlined_call_operand.vmem [shape: f32[32,8], index: 4, kind: input, shape index: {}]
  %s5 = inlined_call_operand.vmem [shape: f32[32,1], index: 5, kind: input, shape index: {}]
  %s6 = inlined_call_operand.vmem [shape: f32[32,8], index: 6, kind: input, shape index: {}]
  %s7 = inlined_call_operand.vmem [shape: f32[32,8], index: 7, kind: input, shape index: {}]
  %s8 = inlined_call_operand.vmem [shape: f32[32,1], index: 8, kind: input, shape index: {}]
  %s9 = inlined_call_operand.vmem [shape: f32[3,8,1], index: 9, kind: input, shape index: {}]
  %s10 = inlined_call_operand.<no memory space> [shape: f32[1,1], index: 10, kind: input, shape index: {}]
  %s11 = inlined_call_operand.vmem [shape: f32[1,128], index: 11, kind: output, shape index: {}]
  %s12 = sld [smem:[#allocation0]]
  $region54: #{hint_forward.3} parent=0
    _
  %s14 = ssub.s32 1, %s12
  %s15 = scalar_select 0, %s14, %s12
  %v16 = vstv %s10
  %17 = vst [vmem:[#allocation2] sm:$0x1] %v16
  // Predicated region
  $region2: #{hint_forward.3} parent=0 // pred_check
    _
  $region3: #{hint_forward.3} parent=0 // pred_check_branch
    %19 = sbr.rel (0) target = $region5
  $region4: #{hint_forward.3} parent=0 // pred_region
    _
  $region5: #{hint_forward.3} parent=0 // pred_fallthru
    _
  // Predicated region
  $region6: #{hint_forward.3} parent=0 // pred_check
    _
  $region7: #{hint_forward.3} parent=0 // pred_check_branch
    %21 = sbr.rel (0) target = $region9
  $region8: #{hint_forward.3} parent=0 // pred_region
    _
  $region9: #{hint_forward.3} parent=0 // pred_fallthru
    _
  // Predicated region
  $region10: #{hint_forward.3} parent=0 // pred_check
    _
  $region11: #{hint_forward.3} parent=0 // pred_check_branch
    %23 = sbr.rel (0) target = $region13
  $region12: #{hint_forward.3} parent=0 // pred_region
    _
  $region13: #{hint_forward.3} parent=0 // pred_fallthru
    _
  // Predicated region
  $region14: #{hint_forward.3} parent=0 // pred_check
    _
  $region15: #{hint_forward.3} parent=0 // pred_check_branch
    %25 = sbr.rel (0) target = $region17
  $region16: #{hint_forward.3} parent=0 // pred_region
    _
  $region17: #{hint_forward.3} parent=0 // pred_fallthru
    _
  // Predicated region
  $region18: #{hint_forward.3} parent=0 // pred_check
    _
  $region19: #{hint_forward.3} parent=0 // pred_check_branch
    %27 = sbr.rel (0) target = $region21
  $region20: #{hint_forward.3} parent=0 // pred_region
    _
  $region21: #{hint_forward.3} parent=0 // pred_fallthru
    _
  // Predicated region
  $region22: #{hint_forward.3} parent=0 // pred_check
    _
  $region23: #{hint_forward.3} parent=0 // pred_check_branch
    %29 = sbr.rel (0) target = $region25
  $region24: #{hint_forward.3} parent=0 // pred_region
    _
  $region25: #{hint_forward.3} parent=0 // pred_fallthru
    _
  // Predicated region
  $region26: #{hint_forward.3} parent=0 // pred_check
    _
  $region27: #{hint_forward.3} parent=0 // pred_check_branch
    %31 = sbr.rel (0) target = $region29
  $region28: #{hint_forward.3} parent=0 // pred_region
    _
  $region29: #{hint_forward.3} parent=0 // pred_fallthru
    _
  // Predicated region
  $region30: #{hint_forward.3} parent=0 // pred_check
    _
  $region31: #{hint_forward.3} parent=0 // pred_check_branch
    %33 = sbr.rel (0) target = $region33
  $region32: #{hint_forward.3} parent=0 // pred_region
    _
  $region33: #{hint_forward.3} parent=0 // pred_fallthru
    _
  // Predicated region
  $region34: #{hint_forward.3} parent=0 // pred_check
    _
  $region35: #{hint_forward.3} parent=0 // pred_check_branch
    %35 = sbr.rel (0) target = $region37
  $region36: #{hint_forward.3} parent=0 // pred_region
    _
  $region37: #{hint_forward.3} parent=0 // pred_fallthru
    _
  // Predicated region
  $region38: #{hint_forward.3} parent=0 // pred_check
    _
  $region39: #{hint_forward.3} parent=0 // pred_check_branch
    %37 = sbr.rel (0) target = $region41
  $region40: #{hint_forward.3} parent=0 // pred_region
    _
  $region41: #{hint_forward.3} parent=0 // pred_fallthru
    _
  // Predicated region
  $region42: #{hint_forward.3} parent=0 // pred_check
    _
  $region43: #{hint_forward.3} parent=0 // pred_check_branch
    %39 = sbr.rel (0) target = $region45
  $region44: #{hint_forward.3} parent=0 // pred_region
    _
  $region45: #{hint_forward.3} parent=0 // pred_fallthru
    _
  %v40 = vld [vmem:[%s0] sm:$0xff]
  %v41 = vld [vmem:[%s0 + $0x8] sm:$0xff]
  %v42 = vld [vmem:[%s4] sm:$0xff]
  %v43 = vld [vmem:[%s4 + $0x8] sm:$0xff]
  %v44 = vld [vmem:[%s4 + $0x10] sm:$0xff]
  %v45 = vld [vmem:[%s4 + $0x18] sm:$0xff]
  %v46 = vld [vmem:[%s7] sm:$0xff]
  %v47 = vld [vmem:[%s7 + $0x8] sm:$0xff]
  %v48 = vld [vmem:[%s7 + $0x10] sm:$0xff]
  %v49 = vld [vmem:[%s7 + $0x18] sm:$0xff]
  %v50 = vld [vmem:[%s3] sm:$0xff]
  %v51 = vld [vmem:[%s3 + $0x8] sm:$0xff]
  %v52 = vld [vmem:[%s3 + $0x10] sm:$0xff]
  %v53 = vld [vmem:[%s3 + $0x18] sm:$0xff]
  %v54 = vld [vmem:[%s5] sm:$0xff]
  %v55 = vld [vmem:[%s5 + $0x8] sm:$0xff]
  %v56 = vld [vmem:[%s5 + $0x10] sm:$0xff]
  %v57 = vld [vmem:[%s5 + $0x18] sm:$0xff]
  %59 = vset.pattern.permute.xlu0 0
  %60 = vperm.xlu0 %59, %v54
  %v61 = vpop.permute.xlu0 %60
  %64 = vset.pattern.permute.xlu0 0
  %65 = vperm.xlu0 %64, %v55
  %v66 = vpop.permute.xlu0 %65
  %69 = vset.pattern.permute.xlu0 0
  %70 = vperm.xlu0 %69, %v56
  %v71 = vpop.permute.xlu0 %70
  %74 = vset.pattern.permute.xlu0 0
  %75 = vperm.xlu0 %74, %v57
  %v76 = vpop.permute.xlu0 %75
  %vm78 = vcmask 64512
  %v80 = vsel %vm78, %v50, 0
  %v83 = vsel %vm78, %v51, 0
  %v86 = vsel %vm78, %v52, 0
  %v89 = vsel %vm78, %v53, 0
  %91 = vmatpush.msra.mxu0 0.0
  %92 = vmatpush.msra.mxu0 0.0
  %93 = vmatpush.msra.mxu0 0.0
  %94 = vmatpush.msra.mxu0 0.0
  %95 = vmatpush.msra.mxu0 0.0
  %96 = vmatpush.msra.mxu0 0.0
  %97 = vmatpush.msra.mxu0 0.0
  %98 = vmatpush.msra.mxu0 0.0
  %99 = vmatpush.msra.mxu0 0.0
  %100 = vmatpush.msra.mxu0 0.0
  %101 = vmatpush.msra.mxu0 0.0
  %102 = vmatpush.msra.mxu0 0.0
  %103 = vmatpush.msra.mxu0 0.0
  %104 = vmatpush.msra.mxu0 0.0
  %105 = vmatpush.msra.mxu0 0.0
  %106 = vmatpush.msra.mxu0 %v40
  %107 = vmatmul.f32.gmra.mxu0 %v80
  %v108 = vpop.f32.mrf.mxu0
  %v109 = vadd.f32 %v61, %v108
  %110 = vmatmul.f32.gmra.mxu0 %v83
  %v111 = vpop.f32.mrf.mxu0
  %v112 = vadd.f32 %v66, %v111
  %113 = vmatmul.f32.gmra.mxu0 %v86
  %v114 = vpop.f32.mrf.mxu0
  %v115 = vadd.f32 %v71, %v114
  %116 = vmatmul.f32.gmra.mxu0 %v89
  %v117 = vpop.f32.mrf.mxu0
  %v118 = vadd.f32 %v76, %v117
  %119 = vdwg.mxu0
  %120 = vmatpush.msra.mxu0 0.0
  %121 = vmatpush.msra.mxu0 0.0
  %122 = vmatpush.msra.mxu0 0.0
  %123 = vmatpush.msra.mxu0 0.0
  %124 = vmatpush.msra.mxu0 0.0
  %125 = vmatpush.msra.mxu0 0.0
  %126 = vmatpush.msra.mxu0 0.0
  %127 = vmatpush.msra.mxu0 0.0
  %128 = vmatpush.msra.mxu0 0.0
  %129 = vmatpush.msra.mxu0 0.0
  %130 = vmatpush.msra.mxu0 0.0
  %131 = vmatpush.msra.mxu0 0.0
  %132 = vmatpush.msra.mxu0 0.0
  %133 = vmatpush.msra.mxu0 0.0
  %134 = vmatpush.msra.mxu0 0.0
  %135 = vmatpush.msra.mxu0 %v41
  %136 = vmatmul.f32.gmra.mxu0 %v80
  %v137 = vpop.f32.mrf.mxu0
  %v138 = vadd.f32 %v61, %v137
  %139 = vmatmul.f32.gmra.mxu0 %v83
  %v140 = vpop.f32.mrf.mxu0
  %v141 = vadd.f32 %v66, %v140
  %142 = vmatmul.f32.gmra.mxu0 %v86
  %v143 = vpop.f32.mrf.mxu0
  %v144 = vadd.f32 %v71, %v143
  %145 = vmatmul.f32.gmra.mxu0 %v89
  %v146 = vpop.f32.mrf.mxu0
  %v147 = vadd.f32 %v76, %v146
  %148 = vdwg.mxu0
  %v149 = vld [vmem:[%s6] sm:$0xff]
  %v150 = vld [vmem:[%s6 + $0x8] sm:$0xff]
  %v151 = vld [vmem:[%s6 + $0x10] sm:$0xff]
  %v152 = vld [vmem:[%s6 + $0x18] sm:$0xff]
  %v153 = vld [vmem:[%s8] sm:$0xff]
  %v154 = vld [vmem:[%s8 + $0x8] sm:$0xff]
  %v155 = vld [vmem:[%s8 + $0x10] sm:$0xff]
  %v156 = vld [vmem:[%s8 + $0x18] sm:$0xff]
  %158 = vset.pattern.permute.xlu0 0
  %159 = vperm.xlu0 %158, %v153
  %v160 = vpop.permute.xlu0 %159
  %163 = vset.pattern.permute.xlu0 0
  %164 = vperm.xlu0 %163, %v154
  %v165 = vpop.permute.xlu0 %164
  %168 = vset.pattern.permute.xlu0 0
  %169 = vperm.xlu0 %168, %v155
  %v170 = vpop.permute.xlu0 %169
  %173 = vset.pattern.permute.xlu0 0
  %174 = vperm.xlu0 %173, %v156
  %v175 = vpop.permute.xlu0 %174
  %v178 = vsel %vm78, %v149, 0
  %v181 = vsel %vm78, %v150, 0
  %v184 = vsel %vm78, %v151, 0
  %v187 = vsel %vm78, %v152, 0
  %189 = vmatpush.msra.mxu0 0.0
  %190 = vmatpush.msra.mxu0 0.0
  %191 = vmatpush.msra.mxu0 0.0
  %192 = vmatpush.msra.mxu0 0.0
  %193 = vmatpush.msra.mxu0 0.0
  %194 = vmatpush.msra.mxu0 0.0
  %195 = vmatpush.msra.mxu0 0.0
  %196 = vmatpush.msra.mxu0 0.0
  %197 = vmatpush.msra.mxu0 0.0
  %198 = vmatpush.msra.mxu0 0.0
  %199 = vmatpush.msra.mxu0 0.0
  %200 = vmatpush.msra.mxu0 0.0
  %201 = vmatpush.msra.mxu0 0.0
  %202 = vmatpush.msra.mxu0 0.0
  %203 = vmatpush.msra.mxu0 0.0
  %204 = vmatpush.msra.mxu0 %v40
  %205 = vmatmul.f32.gmra.mxu0 %v178
  %v206 = vpop.f32.mrf.mxu0
  %v207 = vadd.f32 %v160, %v206
  %208 = vmatmul.f32.gmra.mxu0 %v181
  %v209 = vpop.f32.mrf.mxu0
  %v210 = vadd.f32 %v165, %v209
  %211 = vmatmul.f32.gmra.mxu0 %v184
  %v212 = vpop.f32.mrf.mxu0
  %v213 = vadd.f32 %v170, %v212
  %214 = vmatmul.f32.gmra.mxu0 %v187
  %v215 = vpop.f32.mrf.mxu0
  %v216 = vadd.f32 %v175, %v215
  %217 = vdwg.mxu0
  %218 = vmatpush.msra.mxu0 0.0
  %219 = vmatpush.msra.mxu0 0.0
  %220 = vmatpush.msra.mxu0 0.0
  %221 = vmatpush.msra.mxu0 0.0
  %222 = vmatpush.msra.mxu0 0.0
  %223 = vmatpush.msra.mxu0 0.0
  %224 = vmatpush.msra.mxu0 0.0
  %225 = vmatpush.msra.mxu0 0.0
  %226 = vmatpush.msra.mxu0 0.0
  %227 = vmatpush.msra.mxu0 0.0
  %228 = vmatpush.msra.mxu0 0.0
  %229 = vmatpush.msra.mxu0 0.0
  %230 = vmatpush.msra.mxu0 0.0
  %231 = vmatpush.msra.mxu0 0.0
  %232 = vmatpush.msra.mxu0 0.0
  %233 = vmatpush.msra.mxu0 %v41
  %234 = vmatmul.f32.gmra.mxu0 %v178
  %v235 = vpop.f32.mrf.mxu0
  %v236 = vadd.f32 %v160, %v235
  %237 = vmatmul.f32.gmra.mxu0 %v181
  %v238 = vpop.f32.mrf.mxu0
  %v239 = vadd.f32 %v165, %v238
  %240 = vmatmul.f32.gmra.mxu0 %v184
  %v241 = vpop.f32.mrf.mxu0
  %v242 = vadd.f32 %v170, %v241
  %243 = vmatmul.f32.gmra.mxu0 %v187
  %v244 = vpop.f32.mrf.mxu0
  %v245 = vadd.f32 %v175, %v244
  %246 = vdwg.mxu0
  %v247 = vld [vmem:[%s1] sm:$0xff]
  %v248 = vld [vmem:[%s2] sm:$0xff]
  %250 = vset.pattern.permute.xlu0 0
  %251 = vperm.xlu0 %250, %v248
  %v252 = vpop.permute.xlu0 %251
  %v255 = vsel %vm78, %v247, 0
  %257 = vmatpush.msra.mxu0 0.0
  %258 = vmatpush.msra.mxu0 0.0
  %259 = vmatpush.msra.mxu0 0.0
  %260 = vmatpush.msra.mxu0 0.0
  %261 = vmatpush.msra.mxu0 0.0
  %262 = vmatpush.msra.mxu0 0.0
  %263 = vmatpush.msra.mxu0 0.0
  %264 = vmatpush.msra.mxu0 0.0
  %265 = vmatpush.msra.mxu0 0.0
  %266 = vmatpush.msra.mxu0 0.0
  %267 = vmatpush.msra.mxu0 0.0
  %268 = vmatpush.msra.mxu0 0.0
  %269 = vmatpush.msra.mxu0 0.0
  %270 = vmatpush.msra.mxu0 0.0
  %271 = vmatpush.msra.mxu0 0.0
  %272 = vmatpush.msra.mxu0 %v40
  %273 = vmatmul.f32.gmra.mxu0 %v255
  %v274 = vpop.f32.mrf.mxu0
  %v275 = vadd.f32 %v252, %v274
  %276 = vdwg.mxu0
  %277 = vmatpush.msra.mxu0 0.0
  %278 = vmatpush.msra.mxu0 0.0
  %279 = vmatpush.msra.mxu0 0.0
  %280 = vmatpush.msra.mxu0 0.0
  %281 = vmatpush.msra.mxu0 0.0
  %282 = vmatpush.msra.mxu0 0.0
  %283 = vmatpush.msra.mxu0 0.0
  %284 = vmatpush.msra.mxu0 0.0
  %285 = vmatpush.msra.mxu0 0.0
  %286 = vmatpush.msra.mxu0 0.0
  %287 = vmatpush.msra.mxu0 0.0
  %288 = vmatpush.msra.mxu0 0.0
  %289 = vmatpush.msra.mxu0 0.0
  %290 = vmatpush.msra.mxu0 0.0
  %291 = vmatpush.msra.mxu0 0.0
  %292 = vmatpush.msra.mxu0 %v41
  %293 = vmatmul.f32.gmra.mxu0 %v255
  %v294 = vpop.f32.mrf.mxu0
  %v295 = vadd.f32 %v252, %v294
  %296 = vdwg.mxu0
  %v297 = vtanh.pop %v275
  %v298 = vtanh.pop %v295
  %v300 = vsel %vm78, %v42, 0
  %v303 = vsel %vm78, %v43, 0
  %v306 = vsel %vm78, %v44, 0
  %v309 = vsel %vm78, %v45, 0
  %311 = vmatpush.msra.mxu0 0.0
  %312 = vmatpush.msra.mxu0 0.0
  %313 = vmatpush.msra.mxu0 0.0
  %314 = vmatpush.msra.mxu0 0.0
  %315 = vmatpush.msra.mxu0 0.0
  %316 = vmatpush.msra.mxu0 0.0
  %317 = vmatpush.msra.mxu0 0.0
  %318 = vmatpush.msra.mxu0 0.0
  %319 = vmatpush.msra.mxu0 0.0
  %320 = vmatpush.msra.mxu0 0.0
  %321 = vmatpush.msra.mxu0 0.0
  %322 = vmatpush.msra.mxu0 0.0
  %323 = vmatpush.msra.mxu0 0.0
  %324 = vmatpush.msra.mxu0 0.0
  %325 = vmatpush.msra.mxu0 0.0
  %326 = vmatpush.msra.mxu0 0.0
  %327 = vmatmul.f32.gmra.mxu0 %v300
  %v328 = vpop.f32.mrf.mxu0
  %v329 = vadd.f32 0.0, %v328
  %330 = vmatmul.f32.gmra.mxu0 %v303
  %v331 = vpop.f32.mrf.mxu0
  %v332 = vadd.f32 0.0, %v331
  %333 = vmatmul.f32.gmra.mxu0 %v306
  %v334 = vpop.f32.mrf.mxu0
  %v335 = vadd.f32 0.0, %v334
  %336 = vmatmul.f32.gmra.mxu0 %v309
  %v337 = vpop.f32.mrf.mxu0
  %v338 = vadd.f32 0.0, %v337
  %339 = vdwg.mxu0
  %v340 = vadd.f32 %v109, %v329
  %v341 = vadd.f32 %v112, %v332
  %v342 = vadd.f32 %v115, %v335
  %v343 = vadd.f32 %v118, %v338
  %v344 = vxor.u32 %v340, 2147483648
  %v345 = vmul.f32 %v344, 1.442695
  %v346 = vpow.pop %v345
  %v347 = vadd.f32 %v346, 1.0
  %v348 = vrcp.pop %v347
  %v349 = vmul.f32 %v347, %v348
  %v350 = vsub.f32 1.0, %v349
  %v351 = vmul.f32 %v348, %v350
  %v352 = vadd.f32 %v348, %v351
  %vm353 = vweird.f32 %v347
  %vm354 = vweird.f32 %v348
  %vm355 = vmor %vm353, %vm354
  %v356 = vsel %vm355, %v348, %v352
  %v357 = vand.u32 2147483647, %v347
  %vm358 = vcmp.eq.f32.partialorder %v357, 8.507059e+37
  %v359 = vand.u32 %v347, 2147483648
  %v360 = vor.u32 1.1754944e-38, %v359
  %v361 = vsel %vm358, %v360, %v356
  %v362 = vmul.f32 1.0, %v361
  %v363 = vxor.u32 %v341, 2147483648
  %v364 = vmul.f32 %v363, 1.442695
  %v365 = vpow.pop %v364
  %v366 = vadd.f32 %v365, 1.0
  %v367 = vrcp.pop %v366
  %v368 = vmul.f32 %v366, %v367
  %v369 = vsub.f32 1.0, %v368
  %v370 = vmul.f32 %v367, %v369
  %v371 = vadd.f32 %v367, %v370
  %vm372 = vweird.f32 %v366
  %vm373 = vweird.f32 %v367
  %vm374 = vmor %vm372, %vm373
  %v375 = vsel %vm374, %v367, %v371
  %v376 = vand.u32 2147483647, %v366
  %vm377 = vcmp.eq.f32.partialorder %v376, 8.507059e+37
  %v378 = vand.u32 %v366, 2147483648
  %v379 = vor.u32 1.1754944e-38, %v378
  %v380 = vsel %vm377, %v379, %v375
  %v381 = vmul.f32 1.0, %v380
  %v382 = vtanh.pop %v342
  %v383 = vxor.u32 %v343, 2147483648
  %v384 = vmul.f32 %v383, 1.442695
  %v385 = vpow.pop %v384
  %v386 = vadd.f32 %v385, 1.0
  %v387 = vrcp.pop %v386
  %v388 = vmul.f32 %v386, %v387
  %v389 = vsub.f32 1.0, %v388
  %v390 = vmul.f32 %v387, %v389
  %v391 = vadd.f32 %v387, %v390
  %vm392 = vweird.f32 %v386
  %vm393 = vweird.f32 %v387
  %vm394 = vmor %vm392, %vm393
  %v395 = vsel %vm394, %v387, %v391
  %v396 = vand.u32 2147483647, %v386
  %vm397 = vcmp.eq.f32.partialorder %v396, 8.507059e+37
  %v398 = vand.u32 %v386, 2147483648
  %v399 = vor.u32 1.1754944e-38, %v398
  %v400 = vsel %vm397, %v399, %v395
  %v401 = vmul.f32 1.0, %v400
  %v402 = vmul.f32 %v381, 0.0
  %v403 = vmul.f32 %v362, %v382
  %v404 = vadd.f32 %v402, %v403
  %v405 = vtanh.pop %v404
  %v406 = vmul.f32 %v401, %v405
  %407 = vmatpush.msra.mxu0 0.0
  %408 = vmatpush.msra.mxu0 0.0
  %409 = vmatpush.msra.mxu0 0.0
  %410 = vmatpush.msra.mxu0 0.0
  %411 = vmatpush.msra.mxu0 0.0
  %412 = vmatpush.msra.mxu0 0.0
  %413 = vmatpush.msra.mxu0 0.0
  %414 = vmatpush.msra.mxu0 0.0
  %415 = vmatpush.msra.mxu0 0.0
  %416 = vmatpush.msra.mxu0 0.0
  %417 = vmatpush.msra.mxu0 0.0
  %418 = vmatpush.msra.mxu0 0.0
  %419 = vmatpush.msra.mxu0 0.0
  %420 = vmatpush.msra.mxu0 0.0
  %421 = vmatpush.msra.mxu0 0.0
  %422 = vmatpush.msra.mxu0 %v406
  %423 = vmatmul.f32.gmra.mxu0 %v300
  %v424 = vpop.f32.mrf.mxu0
  %v425 = vadd.f32 0.0, %v424
  %426 = vmatmul.f32.gmra.mxu0 %v303
  %v427 = vpop.f32.mrf.mxu0
  %v428 = vadd.f32 0.0, %v427
  %429 = vmatmul.f32.gmra.mxu0 %v306
  %v430 = vpop.f32.mrf.mxu0
  %v431 = vadd.f32 0.0, %v430
  %432 = vmatmul.f32.gmra.mxu0 %v309
  %v433 = vpop.f32.mrf.mxu0
  %v434 = vadd.f32 0.0, %v433
  %435 = vdwg.mxu0
  %v436 = vadd.f32 %v138, %v425
  %v437 = vadd.f32 %v141, %v428
  %v438 = vadd.f32 %v144, %v431
  %v439 = vadd.f32 %v147, %v434
  %v440 = vxor.u32 %v436, 2147483648
  %v441 = vmul.f32 %v440, 1.442695
  %v442 = vpow.pop %v441
  %v443 = vadd.f32 %v442, 1.0
  %v444 = vrcp.pop %v443
  %v445 = vmul.f32 %v443, %v444
  %v446 = vsub.f32 1.0, %v445
  %v447 = vmul.f32 %v444, %v446
  %v448 = vadd.f32 %v444, %v447
  %vm449 = vweird.f32 %v443
  %vm450 = vweird.f32 %v444
  %vm451 = vmor %vm449, %vm450
  %v452 = vsel %vm451, %v444, %v448
  %v453 = vand.u32 2147483647, %v443
  %vm454 = vcmp.eq.f32.partialorder %v453, 8.507059e+37
  %v455 = vand.u32 %v443, 2147483648
  %v456 = vor.u32 1.1754944e-38, %v455
  %v457 = vsel %vm454, %v456, %v452
  %v458 = vmul.f32 1.0, %v457
  %v459 = vxor.u32 %v437, 2147483648
  %v460 = vmul.f32 %v459, 1.442695
  %v461 = vpow.pop %v460
  %v462 = vadd.f32 %v461, 1.0
  %v463 = vrcp.pop %v462
  %v464 = vmul.f32 %v462, %v463
  %v465 = vsub.f32 1.0, %v464
  %v466 = vmul.f32 %v463, %v465
  %v467 = vadd.f32 %v463, %v466
  %vm468 = vweird.f32 %v462
  %vm469 = vweird.f32 %v463
  %vm470 = vmor %vm468, %vm469
  %v471 = vsel %vm470, %v463, %v467
  %v472 = vand.u32 2147483647, %v462
  %vm473 = vcmp.eq.f32.partialorder %v472, 8.507059e+37
  %v474 = vand.u32 %v462, 2147483648
  %v475 = vor.u32 1.1754944e-38, %v474
  %v476 = vsel %vm473, %v475, %v471
  %v477 = vmul.f32 1.0, %v476
  %v478 = vtanh.pop %v438
  %v479 = vxor.u32 %v439, 2147483648
  %v480 = vmul.f32 %v479, 1.442695
  %v481 = vpow.pop %v480
  %v482 = vadd.f32 %v481, 1.0
  %v483 = vrcp.pop %v482
  %v484 = vmul.f32 %v482, %v483
  %v485 = vsub.f32 1.0, %v484
  %v486 = vmul.f32 %v483, %v485
  %v487 = vadd.f32 %v483, %v486
  %vm488 = vweird.f32 %v482
  %vm489 = vweird.f32 %v483
  %vm490 = vmor %vm488, %vm489
  %v491 = vsel %vm490, %v483, %v487
  %v492 = vand.u32 2147483647, %v482
  %vm493 = vcmp.eq.f32.partialorder %v492, 8.507059e+37
  %v494 = vand.u32 %v482, 2147483648
  %v495 = vor.u32 1.1754944e-38, %v494
  %v496 = vsel %vm493, %v495, %v491
  %v497 = vmul.f32 1.0, %v496
  %v498 = vmul.f32 %v477, %v404
  %v499 = vmul.f32 %v458, %v478
  %v500 = vadd.f32 %v498, %v499
  %v501 = vtanh.pop %v500
  %v502 = vmul.f32 %v497, %v501
  %v504 = vsel %vm78, %v46, 0
  %v507 = vsel %vm78, %v47, 0
  %v510 = vsel %vm78, %v48, 0
  %v513 = vsel %vm78, %v49, 0
  %515 = vmatpush.msra.mxu0 0.0
  %516 = vmatpush.msra.mxu0 0.0
  %517 = vmatpush.msra.mxu0 0.0
  %518 = vmatpush.msra.mxu0 0.0
  %519 = vmatpush.msra.mxu0 0.0
  %520 = vmatpush.msra.mxu0 0.0
  %521 = vmatpush.msra.mxu0 0.0
  %522 = vmatpush.msra.mxu0 0.0
  %523 = vmatpush.msra.mxu0 0.0
  %524 = vmatpush.msra.mxu0 0.0
  %525 = vmatpush.msra.mxu0 0.0
  %526 = vmatpush.msra.mxu0 0.0
  %527 = vmatpush.msra.mxu0 0.0
  %528 = vmatpush.msra.mxu0 0.0
  %529 = vmatpush.msra.mxu0 0.0
  %530 = vmatpush.msra.mxu0 0.0
  %531 = vmatmul.f32.gmra.mxu0 %v504
  %v532 = vpop.f32.mrf.mxu0
  %v533 = vadd.f32 0.0, %v532
  %534 = vmatmul.f32.gmra.mxu0 %v507
  %v535 = vpop.f32.mrf.mxu0
  %v536 = vadd.f32 0.0, %v535
  %537 = vmatmul.f32.gmra.mxu0 %v510
  %v538 = vpop.f32.mrf.mxu0
  %v539 = vadd.f32 0.0, %v538
  %540 = vmatmul.f32.gmra.mxu0 %v513
  %v541 = vpop.f32.mrf.mxu0
  %v542 = vadd.f32 0.0, %v541
  %543 = vdwg.mxu0
  %v544 = vadd.f32 %v236, %v533
  %v545 = vadd.f32 %v239, %v536
  %v546 = vadd.f32 %v242, %v539
  %v547 = vadd.f32 %v245, %v542
  %v548 = vxor.u32 %v544, 2147483648
  %v549 = vmul.f32 %v548, 1.442695
  %v550 = vpow.pop %v549
  %v551 = vadd.f32 %v550, 1.0
  %v552 = vrcp.pop %v551
  %v553 = vmul.f32 %v551, %v552
  %v554 = vsub.f32 1.0, %v553
  %v555 = vmul.f32 %v552, %v554
  %v556 = vadd.f32 %v552, %v555
  %vm557 = vweird.f32 %v551
  %vm558 = vweird.f32 %v552
  %vm559 = vmor %vm557, %vm558
  %v560 = vsel %vm559, %v552, %v556
  %v561 = vand.u32 2147483647, %v551
  %vm562 = vcmp.eq.f32.partialorder %v561, 8.507059e+37
  %v563 = vand.u32 %v551, 2147483648
  %v564 = vor.u32 1.1754944e-38, %v563
  %v565 = vsel %vm562, %v564, %v560
  %v566 = vmul.f32 1.0, %v565
  %v567 = vxor.u32 %v545, 2147483648
  %v568 = vmul.f32 %v567, 1.442695
  %v569 = vpow.pop %v568
  %v570 = vadd.f32 %v569, 1.0
  %v571 = vrcp.pop %v570
  %v572 = vmul.f32 %v570, %v571
  %v573 = vsub.f32 1.0, %v572
  %v574 = vmul.f32 %v571, %v573
  %v575 = vadd.f32 %v571, %v574
  %vm576 = vweird.f32 %v570
  %vm577 = vweird.f32 %v571
  %vm578 = vmor %vm576, %vm577
  %v579 = vsel %vm578, %v571, %v575
  %v580 = vand.u32 2147483647, %v570
  %vm581 = vcmp.eq.f32.partialorder %v580, 8.507059e+37
  %v582 = vand.u32 %v570, 2147483648
  %v583 = vor.u32 1.1754944e-38, %v582
  %v584 = vsel %vm581, %v583, %v579
  %v585 = vmul.f32 1.0, %v584
  %v586 = vtanh.pop %v546
  %v587 = vxor.u32 %v547, 2147483648
  %v588 = vmul.f32 %v587, 1.442695
  %v589 = vpow.pop %v588
  %v590 = vadd.f32 %v589, 1.0
  %v591 = vrcp.pop %v590
  %v592 = vmul.f32 %v590, %v591
  %v593 = vsub.f32 1.0, %v592
  %v594 = vmul.f32 %v591, %v593
  %v595 = vadd.f32 %v591, %v594
  %vm596 = vweird.f32 %v590
  %vm597 = vweird.f32 %v591
  %vm598 = vmor %vm596, %vm597
  %v599 = vsel %vm598, %v591, %v595
  %v600 = vand.u32 2147483647, %v590
  %vm601 = vcmp.eq.f32.partialorder %v600, 8.507059e+37
  %v602 = vand.u32 %v590, 2147483648
  %v603 = vor.u32 1.1754944e-38, %v602
  %v604 = vsel %vm601, %v603, %v599
  %v605 = vmul.f32 1.0, %v604
  %v606 = vmul.f32 %v585, 0.0
  %v607 = vmul.f32 %v566, %v586
  %v608 = vadd.f32 %v606, %v607
  %v609 = vtanh.pop %v608
  %v610 = vmul.f32 %v605, %v609
  %611 = vmatpush.msra.mxu0 0.0
  %612 = vmatpush.msra.mxu0 0.0
  %613 = vmatpush.msra.mxu0 0.0
  %614 = vmatpush.msra.mxu0 0.0
  %615 = vmatpush.msra.mxu0 0.0
  %616 = vmatpush.msra.mxu0 0.0
  %617 = vmatpush.msra.mxu0 0.0
  %618 = vmatpush.msra.mxu0 0.0
  %619 = vmatpush.msra.mxu0 0.0
  %620 = vmatpush.msra.mxu0 0.0
  %621 = vmatpush.msra.mxu0 0.0
  %622 = vmatpush.msra.mxu0 0.0
  %623 = vmatpush.msra.mxu0 0.0
  %624 = vmatpush.msra.mxu0 0.0
  %625 = vmatpush.msra.mxu0 0.0
  %626 = vmatpush.msra.mxu0 %v610
  %627 = vmatmul.f32.gmra.mxu0 %v504
  %v628 = vpop.f32.mrf.mxu0
  %v629 = vadd.f32 0.0, %v628
  %630 = vmatmul.f32.gmra.mxu0 %v507
  %v631 = vpop.f32.mrf.mxu0
  %v632 = vadd.f32 0.0, %v631
  %633 = vmatmul.f32.gmra.mxu0 %v510
  %v634 = vpop.f32.mrf.mxu0
  %v635 = vadd.f32 0.0, %v634
  %636 = vmatmul.f32.gmra.mxu0 %v513
  %v637 = vpop.f32.mrf.mxu0
  %v638 = vadd.f32 0.0, %v637
  %639 = vdwg.mxu0
  %v640 = vadd.f32 %v207, %v629
  %v641 = vadd.f32 %v210, %v632
  %v642 = vadd.f32 %v213, %v635
  %v643 = vadd.f32 %v216, %v638
  %v644 = vxor.u32 %v640, 2147483648
  %v645 = vmul.f32 %v644, 1.442695
  %v646 = vpow.pop %v645
  %v647 = vadd.f32 %v646, 1.0
  %v648 = vrcp.pop %v647
  %v649 = vmul.f32 %v647, %v648
  %v650 = vsub.f32 1.0, %v649
  %v651 = vmul.f32 %v648, %v650
  %v652 = vadd.f32 %v648, %v651
  %vm653 = vweird.f32 %v647
  %vm654 = vweird.f32 %v648
  %vm655 = vmor %vm653, %vm654
  %v656 = vsel %vm655, %v648, %v652
  %v657 = vand.u32 2147483647, %v647
  %vm658 = vcmp.eq.f32.partialorder %v657, 8.507059e+37
  %v659 = vand.u32 %v647, 2147483648
  %v660 = vor.u32 1.1754944e-38, %v659
  %v661 = vsel %vm658, %v660, %v656
  %v662 = vmul.f32 1.0, %v661
  %v663 = vxor.u32 %v641, 2147483648
  %v664 = vmul.f32 %v663, 1.442695
  %v665 = vpow.pop %v664
  %v666 = vadd.f32 %v665, 1.0
  %v667 = vrcp.pop %v666
  %v668 = vmul.f32 %v666, %v667
  %v669 = vsub.f32 1.0, %v668
  %v670 = vmul.f32 %v667, %v669
  %v671 = vadd.f32 %v667, %v670
  %vm672 = vweird.f32 %v666
  %vm673 = vweird.f32 %v667
  %vm674 = vmor %vm672, %vm673
  %v675 = vsel %vm674, %v667, %v671
  %v676 = vand.u32 2147483647, %v666
  %vm677 = vcmp.eq.f32.partialorder %v676, 8.507059e+37
  %v678 = vand.u32 %v666, 2147483648
  %v679 = vor.u32 1.1754944e-38, %v678
  %v680 = vsel %vm677, %v679, %v675
  %v681 = vmul.f32 1.0, %v680
  %v682 = vtanh.pop %v642
  %v683 = vxor.u32 %v643, 2147483648
  %v684 = vmul.f32 %v683, 1.442695
  %v685 = vpow.pop %v684
  %v686 = vadd.f32 %v685, 1.0
  %v687 = vrcp.pop %v686
  %v688 = vmul.f32 %v686, %v687
  %v689 = vsub.f32 1.0, %v688
  %v690 = vmul.f32 %v687, %v689
  %v691 = vadd.f32 %v687, %v690
  %vm692 = vweird.f32 %v686
  %vm693 = vweird.f32 %v687
  %vm694 = vmor %vm692, %vm693
  %v695 = vsel %vm694, %v687, %v691
  %v696 = vand.u32 2147483647, %v686
  %vm697 = vcmp.eq.f32.partialorder %v696, 8.507059e+37
  %v698 = vand.u32 %v686, 2147483648
  %v699 = vor.u32 1.1754944e-38, %v698
  %v700 = vsel %vm697, %v699, %v695
  %v701 = vmul.f32 1.0, %v700
  %v702 = vmul.f32 %v681, %v608
  %v703 = vmul.f32 %v662, %v682
  %v704 = vadd.f32 %v702, %v703
  %v705 = vtanh.pop %v704
  %v706 = vmul.f32 %v701, %v705
  %v707 = vadd.f32 %v406, %v706
  %v708 = vadd.f32 %v502, %v610
  %v709 = vmax.f32 %v297, %v298
  %v710 = vmax.f32 %v709, %v707
  %v711 = vmax.f32 %v710, %v708
  %v712 = vld [vmem:[%s9] sm:$0xff]
  %714 = vset.pattern.permute.xlu0 0
  %715 = vperm.xlu0 %714, %v712
  %v716 = vpop.permute.xlu0 %715
  %v718 = vmul.f32 %v716, %v711
  %v719 = vrot.slane %v718, 4
  %v720 = vadd.f32 %v718, %v719
  %v721 = vrot.slane %v720, 2
  %v722 = vadd.f32 %v720, %v721
  %v723 = vrot.slane %v722, 1
  %v724 = vadd.f32 %v722, %v723
  %v725 = vadd.f32 %v724, 0.0
  %vm726 = vcmp.eq.f32.partialorder %v297, %v711
  %v727 = vsel %vm726, -1e+30, %v297
  %vm728 = vcmp.eq.f32.partialorder %v298, %v711
  %vm729 = vmxor %vm726, 1
  %vm730 = vmand %vm728, %vm729
  %v731 = vsel %vm730, -1e+30, %v298
  %vm732 = vmor %vm726, %vm730
  %vm733 = vcmp.eq.f32.partialorder %v707, %v711
  %vm734 = vmxor %vm732, 1
  %vm735 = vmand %vm733, %vm734
  %v736 = vsel %vm735, -1e+30, %v707
  %vm737 = vmor %vm732, %vm735
  %vm738 = vcmp.eq.f32.partialorder %v708, %v711
  %vm739 = vmxor %vm737, 1
  %vm740 = vmand %vm738, %vm739
  %v741 = vsel %vm740, -1e+30, %v708
  %v742 = vmax.f32 %v727, %v731
  %v743 = vmax.f32 %v742, %v736
  %v744 = vmax.f32 %v743, %v741
  %s745 = scalar_lea.vmem %s9, 8
  %v746 = vld [vmem:[%s745] sm:$0xff]
  %748 = vset.pattern.permute.xlu0 0
  %749 = vperm.xlu0 %748, %v746
  %v750 = vpop.permute.xlu0 %749
  %v752 = vmul.f32 %v750, %v744
  %v753 = vrot.slane %v752, 4
  %v754 = vadd.f32 %v752, %v753
  %v755 = vrot.slane %v754, 2
  %v756 = vadd.f32 %v754, %v755
  %v757 = vrot.slane %v756, 1
  %v758 = vadd.f32 %v756, %v757
  %v759 = vadd.f32 %v725, %v758
  %vm760 = vcmp.eq.f32.partialorder %v727, %v744
  %v761 = vsel %vm760, -1e+30, %v727
  %vm762 = vcmp.eq.f32.partialorder %v731, %v744
  %vm763 = vmxor %vm760, 1
  %vm764 = vmand %vm762, %vm763
  %v765 = vsel %vm764, -1e+30, %v731
  %vm766 = vmor %vm760, %vm764
  %vm767 = vcmp.eq.f32.partialorder %v736, %v744
  %vm768 = vmxor %vm766, 1
  %vm769 = vmand %vm767, %vm768
  %v770 = vsel %vm769, -1e+30, %v736
  %vm771 = vmor %vm766, %vm769
  %vm772 = vcmp.eq.f32.partialorder %v741, %v744
  %vm773 = vmxor %vm771, 1
  %vm774 = vmand %vm772, %vm773
  %v775 = vsel %vm774, -1e+30, %v741
  %v776 = vmax.f32 %v761, %v765
  %v777 = vmax.f32 %v776, %v770
  %v778 = vmax.f32 %v777, %v775
  %s779 = scalar_lea.vmem %s9, 16
  %v780 = vld [vmem:[%s779] sm:$0xff]
  %782 = vset.pattern.permute.xlu0 0
  %783 = vperm.xlu0 %782, %v780
  %v784 = vpop.permute.xlu0 %783
  %v786 = vmul.f32 %v784, %v778
  %v787 = vrot.slane %v786, 4
  %v788 = vadd.f32 %v786, %v787
  %v789 = vrot.slane %v788, 2
  %v790 = vadd.f32 %v788, %v789
  %v791 = vrot.slane %v790, 1
  %v792 = vadd.f32 %v790, %v791
  %v793 = vadd.f32 %v759, %v792
  %v794 = vld [vmem:[#allocation2] sm:$0x1]
  %796 = vset.pattern.permute.xlu0 0
  %797 = vperm.xlu0 %796, %v794
  %v798 = vpop.permute.xlu0 %797
  %v800 = vperm.slane %v798, 0
  %v801 = vadd.f32 %v793, %v800
  %802 = vst [vmem:[%s11] sm:$0x1] %v801
  // Predicated region
  $region46: #{hint_forward.3} parent=0 // pred_check
    _
  $region47: #{hint_forward.3} parent=0 // pred_check_branch
    %804 = sbr.rel (0) target = $region49
  $region48: #{hint_forward.3} parent=0 // pred_region
    _
  $region49: #{hint_forward.3} parent=0 // pred_fallthru
    _
  // Predicated region
  $region50: #{hint_forward.3} parent=0 // pred_check
    _
  $region51: #{hint_forward.3} parent=0 // pred_check_branch
    %806 = sbr.rel (0) target = $region53
  $region52: #{hint_forward.3} parent=0 // pred_region
    _
  $region53: #{hint_forward.3} parent=0 // pred_fallthru
    _

// kernel: hint_forward.2
$region0: #{hint_forward.2}
  #allocation0 [shape = 'u32[]', space=smem, size = 0x4, offset = 0x4, fixed_abs, tag = 'smem constant byte address 0x4 - core index']
  #allocation1 [shape = 'u32[72,128]{1,0:T(1,128)}', space=vmem, size = 0x9000, scoped, tag = 'internal scratch']
  #allocation2 [shape = 'f32[18,8,128]{2,1,0:T(8,128)}', space=vmem, size = 0x12000, scoped, tag = 'scratch operand']
  #allocation3 [shape = 'f32[8,56,128]{2,1,0:T(8,128)}', space=vmem, size = 0x38000, scoped, tag = 'scratch operand']
  #allocation4 [shape = 'f32[8,8,128]{2,1,0:T(8,128)}', space=vmem, size = 0x8000, scoped, tag = 'scratch operand']
  %s0 = inlined_call_operand.vmem [shape: f32[2,4,8,8,128], index: 0, kind: input, shape index: {}]
  %s1 = inlined_call_operand.vmem [shape: f32[2,56,8], index: 1, kind: input, shape index: {}]
  %s2 = inlined_call_operand.vmem [shape: f32[2,56,8], index: 2, kind: input, shape index: {}]
  %s3 = inlined_call_operand.vmem [shape: f32[2,56,8], index: 3, kind: input, shape index: {}]
  %s4 = inlined_call_operand.vmem [shape: f32[2,56,8], index: 4, kind: input, shape index: {}]
  %s5 = inlined_call_operand.vmem [shape: f32[2,56,1], index: 5, kind: input, shape index: {}]
  %s6 = inlined_call_operand.vmem [shape: f32[2,8,8], index: 6, kind: input, shape index: {}]
  %s7 = inlined_call_operand.vmem [shape: f32[2,8,1], index: 7, kind: input, shape index: {}]
  %s8 = inlined_call_operand.vmem [shape: f32[2,8,8], index: 8, kind: input, shape index: {}]
  %s9 = inlined_call_operand.vmem [shape: f32[2,8,8], index: 9, kind: input, shape index: {}]
  %s10 = inlined_call_operand.vmem [shape: f32[2,8,8], index: 10, kind: input, shape index: {}]
  %s11 = inlined_call_operand.vmem [shape: f32[2,8,1], index: 11, kind: input, shape index: {}]
  %s12 = inlined_call_operand.vmem [shape: f32[2,8,128], index: 12, kind: output, shape index: {}]
  %s13 = sld [smem:[#allocation0]]
  $region88: #{hint_forward.2} parent=0
    _
  %s15 = ssub.s32 1, %s13
  %s16 = scalar_select 0, %s15, %s13
  loop: start=0, step=1, limit=4
  $region2: #{hint_forward.2} parent=0 // loop_pre_header
    _
  $region3: #{hint_forward.2} parent=0 // loop_header
    %s18 = sphi 0, %s22
    %p19 = scmp.ge.s32.totalorder %s18, 4
    %s25 = sphi 0, %s37
    %s26 = sphi 0, %s33
    %s27 = sphi 0, %s25
    %s28 = sphi 0, %s26
    %s29 = sphi 0, %s27
    %s30 = sphi 0, %s28
    %s42 = sphi 0, %s44
    %s45 = sphi 0, %s42
    %s46 = sphi 0, %s45
    %s62 = sphi 0, %s46
    %s68 = sphi 0, %s70
    %s71 = sphi 0, %s68
    %s72 = sphi 0, %s71
    %s88 = sphi 0, %s72
    %s94 = sphi 0, %s96
    %s97 = sphi 0, %s94
    %s98 = sphi 0, %s97
    %s114 = sphi 0, %s98
    %s120 = sphi 0, %s122
    %s123 = sphi 0, %s120
    %s124 = sphi 0, %s123
    %s140 = sphi 0, %s124
    %s146 = sphi 0, %s148
    %s149 = sphi 0, %s146
    %s150 = sphi 0, %s149
    %s166 = sphi 0, %s150
    %s172 = sphi 0, %s174
    %s175 = sphi 0, %s172
    %s176 = sphi 0, %s175
    %s192 = sphi 0, %s176
    %s198 = sphi 0, %s200
    %s201 = sphi 0, %s198
    %s202 = sphi 0, %s201
    %s218 = sphi 0, %s202
    %s224 = sphi 0, %s226
    %s227 = sphi 0, %s224
    %s228 = sphi 0, %s227
    %s244 = sphi 0, %s228
    %s250 = sphi 0, %s252
    %s253 = sphi 0, %s250
    %s254 = sphi 0, %s253
    %s270 = sphi 0, %s254
    %s276 = sphi 0, %s278
    %s279 = sphi 0, %s276
    %s280 = sphi 0, %s279
    %s296 = sphi 0, %s280
    %s302 = sphi 0, %s304
    %s305 = sphi 0, %s302
    %s306 = sphi 0, %s305
    %s322 = sphi 0, %s306
    %s328 = sphi 0, %s330
    %s331 = sphi 0, %s328
    %s332 = sphi 0, %s331
    %s348 = sphi 0, %s332
    %s356 = sphi 0, %s358
    %s359 = sphi 0, %s356
    %s360 = sphi 0, %s359
    %s376 = sphi 0, %s360
  $region4: #{hint_forward.2} parent=0 // loop_header_branch
    %21 = sbr.rel (%p19) target = $region8
  $region5: #{hint_forward.2} parent=0 // loop_body
    %s23 = ssub.s32 %s18, 1
    %s24 = ssub.s32 %s18, 2
    %s31 = sadd.s32 1, %s26
    %p32 = scmp.ge.s32.totalorder %s31, 1
    %s33 = scalar_select %p32, 0, %s31
    %s34 = sadd.s32 1, %s25
    %s35 = scalar_select %p32, %s34, %s25
    %p36 = scmp.ge.s32.totalorder %s35, 2
    %s37 = scalar_select %p36, 0, %s35
    %s38 = ssub.s32 %s25, %s37
    %s39 = ssub.s32 %s26, %s33
    %s40 = sor.u32 %s38, %s39
    %p41 = scmp.eq.s32.totalorder %s40, 0
    %s43 = sadd.s32 %s42, 1
    %s44 = scalar_select %p41, %s42, %s43
    %p47 = pneg %p41
    %p48 = scmp.eq.s32.totalorder %s18, 1
    %p49 = por %p47, %p48
    %p50 = scmp.ne.s32.totalorder %s42, %s45
    %p51 = scmp.eq.s32.totalorder %s18, 0
    %p52 = por %p50, %p51
    %p53 = scmp.ne.s32.totalorder %s42, %s45
    %p54 = scmp.eq.s32.totalorder %s23, 1
    %p55 = por %p53, %p54
    %p56 = scmp.ne.s32.totalorder %s45, %s46
    %p57 = scmp.eq.s32.totalorder %s23, 0
    %p58 = por %p56, %p57
    %p59 = scmp.ne.s32.totalorder %s45, %s46
    %p60 = scmp.eq.s32.totalorder %s24, 1
    %p61 = por %p59, %p60
    %p63 = scmp.ne.s32.totalorder %s46, %s62
    %p64 = scmp.eq.s32.totalorder %s24, 0
    %p65 = por %p63, %p64
    %s66 = ssub.s32 %s25, %s37
    %p67 = scmp.eq.s32.totalorder %s66, 0
    %s69 = sadd.s32 %s68, 1
    %s70 = scalar_select %p67, %s68, %s69
    %p73 = pneg %p67
    %p74 = scmp.eq.s32.totalorder %s18, 1
    %p75 = por %p73, %p74
    %p76 = scmp.ne.s32.totalorder %s68, %s71
    %p77 = scmp.eq.s32.totalorder %s18, 0
    %p78 = por %p76, %p77
    %p79 = scmp.ne.s32.totalorder %s68, %s71
    %p80 = scmp.eq.s32.totalorder %s23, 1
    %p81 = por %p79, %p80
    %p82 = scmp.ne.s32.totalorder %s71, %s72
    %p83 = scmp.eq.s32.totalorder %s23, 0
    %p84 = por %p82, %p83
    %p85 = scmp.ne.s32.totalorder %s71, %s72
    %p86 = scmp.eq.s32.totalorder %s24, 1
    %p87 = por %p85, %p86
    %p89 = scmp.ne.s32.totalorder %s72, %s88
    %p90 = scmp.eq.s32.totalorder %s24, 0
    %p91 = por %p89, %p90
    %s92 = ssub.s32 %s25, %s37
    %p93 = scmp.eq.s32.totalorder %s92, 0
    %s95 = sadd.s32 %s94, 1
    %s96 = scalar_select %p93, %s94, %s95
    %p99 = pneg %p93
    %p100 = scmp.eq.s32.totalorder %s18, 1
    %p101 = por %p99, %p100
    %p102 = scmp.ne.s32.totalorder %s94, %s97
    %p103 = scmp.eq.s32.totalorder %s18, 0
    %p104 = por %p102, %p103
    %p105 = scmp.ne.s32.totalorder %s94, %s97
    %p106 = scmp.eq.s32.totalorder %s23, 1
    %p107 = por %p105, %p106
    %p108 = scmp.ne.s32.totalorder %s97, %s98
    %p109 = scmp.eq.s32.totalorder %s23, 0
    %p110 = por %p108, %p109
    %p111 = scmp.ne.s32.totalorder %s97, %s98
    %p112 = scmp.eq.s32.totalorder %s24, 1
    %p113 = por %p111, %p112
    %p115 = scmp.ne.s32.totalorder %s98, %s114
    %p116 = scmp.eq.s32.totalorder %s24, 0
    %p117 = por %p115, %p116
    %s118 = ssub.s32 %s25, %s37
    %p119 = scmp.eq.s32.totalorder %s118, 0
    %s121 = sadd.s32 %s120, 1
    %s122 = scalar_select %p119, %s120, %s121
    %p125 = pneg %p119
    %p126 = scmp.eq.s32.totalorder %s18, 1
    %p127 = por %p125, %p126
    %p128 = scmp.ne.s32.totalorder %s120, %s123
    %p129 = scmp.eq.s32.totalorder %s18, 0
    %p130 = por %p128, %p129
    %p131 = scmp.ne.s32.totalorder %s120, %s123
    %p132 = scmp.eq.s32.totalorder %s23, 1
    %p133 = por %p131, %p132
    %p134 = scmp.ne.s32.totalorder %s123, %s124
    %p135 = scmp.eq.s32.totalorder %s23, 0
    %p136 = por %p134, %p135
    %p137 = scmp.ne.s32.totalorder %s123, %s124
    %p138 = scmp.eq.s32.totalorder %s24, 1
    %p139 = por %p137, %p138
    %p141 = scmp.ne.s32.totalorder %s124, %s140
    %p142 = scmp.eq.s32.totalorder %s24, 0
    %p143 = por %p141, %p142
    %s144 = ssub.s32 %s25, %s37
    %p145 = scmp.eq.s32.totalorder %s144, 0
    %s147 = sadd.s32 %s146, 1
    %s148 = scalar_select %p145, %s146, %s147
    %p151 = pneg %p145
    %p152 = scmp.eq.s32.totalorder %s18, 1
    %p153 = por %p151, %p152
    %p154 = scmp.ne.s32.totalorder %s146, %s149
    %p155 = scmp.eq.s32.totalorder %s18, 0
    %p156 = por %p154, %p155
    %p157 = scmp.ne.s32.totalorder %s146, %s149
    %p158 = scmp.eq.s32.totalorder %s23, 1
    %p159 = por %p157, %p158
    %p160 = scmp.ne.s32.totalorder %s149, %s150
    %p161 = scmp.eq.s32.totalorder %s23, 0
    %p162 = por %p160, %p161
    %p163 = scmp.ne.s32.totalorder %s149, %s150
    %p164 = scmp.eq.s32.totalorder %s24, 1
    %p165 = por %p163, %p164
    %p167 = scmp.ne.s32.totalorder %s150, %s166
    %p168 = scmp.eq.s32.totalorder %s24, 0
    %p169 = por %p167, %p168
    %s170 = ssub.s32 %s25, %s37
    %p171 = scmp.eq.s32.totalorder %s170, 0
    %s173 = sadd.s32 %s172, 1
    %s174 = scalar_select %p171, %s172, %s173
    %p177 = pneg %p171
    %p178 = scmp.eq.s32.totalorder %s18, 1
    %p179 = por %p177, %p178
    %p180 = scmp.ne.s32.totalorder %s172, %s175
    %p181 = scmp.eq.s32.totalorder %s18, 0
    %p182 = por %p180, %p181
    %p183 = scmp.ne.s32.totalorder %s172, %s175
    %p184 = scmp.eq.s32.totalorder %s23, 1
    %p185 = por %p183, %p184
    %p186 = scmp.ne.s32.totalorder %s175, %s176
    %p187 = scmp.eq.s32.totalorder %s23, 0
    %p188 = por %p186, %p187
    %p189 = scmp.ne.s32.totalorder %s175, %s176
    %p190 = scmp.eq.s32.totalorder %s24, 1
    %p191 = por %p189, %p190
    %p193 = scmp.ne.s32.totalorder %s176, %s192
    %p194 = scmp.eq.s32.totalorder %s24, 0
    %p195 = por %p193, %p194
    %s196 = ssub.s32 %s25, %s37
    %p197 = scmp.eq.s32.totalorder %s196, 0
    %s199 = sadd.s32 %s198, 1
    %s200 = scalar_select %p197, %s198, %s199
    %p203 = pneg %p197
    %p204 = scmp.eq.s32.totalorder %s18, 1
    %p205 = por %p203, %p204
    %p206 = scmp.ne.s32.totalorder %s198, %s201
    %p207 = scmp.eq.s32.totalorder %s18, 0
    %p208 = por %p206, %p207
    %p209 = scmp.ne.s32.totalorder %s198, %s201
    %p210 = scmp.eq.s32.totalorder %s23, 1
    %p211 = por %p209, %p210
    %p212 = scmp.ne.s32.totalorder %s201, %s202
    %p213 = scmp.eq.s32.totalorder %s23, 0
    %p214 = por %p212, %p213
    %p215 = scmp.ne.s32.totalorder %s201, %s202
    %p216 = scmp.eq.s32.totalorder %s24, 1
    %p217 = por %p215, %p216
    %p219 = scmp.ne.s32.totalorder %s202, %s218
    %p220 = scmp.eq.s32.totalorder %s24, 0
    %p221 = por %p219, %p220
    %s222 = ssub.s32 %s25, %s37
    %p223 = scmp.eq.s32.totalorder %s222, 0
    %s225 = sadd.s32 %s224, 1
    %s226 = scalar_select %p223, %s224, %s225
    %p229 = pneg %p223
    %p230 = scmp.eq.s32.totalorder %s18, 1
    %p231 = por %p229, %p230
    %p232 = scmp.ne.s32.totalorder %s224, %s227
    %p233 = scmp.eq.s32.totalorder %s18, 0
    %p234 = por %p232, %p233
    %p235 = scmp.ne.s32.totalorder %s224, %s227
    %p236 = scmp.eq.s32.totalorder %s23, 1
    %p237 = por %p235, %p236
    %p238 = scmp.ne.s32.totalorder %s227, %s228
    %p239 = scmp.eq.s32.totalorder %s23, 0
    %p240 = por %p238, %p239
    %p241 = scmp.ne.s32.totalorder %s227, %s228
    %p242 = scmp.eq.s32.totalorder %s24, 1
    %p243 = por %p241, %p242
    %p245 = scmp.ne.s32.totalorder %s228, %s244
    %p246 = scmp.eq.s32.totalorder %s24, 0
    %p247 = por %p245, %p246
    %s248 = ssub.s32 %s25, %s37
    %p249 = scmp.eq.s32.totalorder %s248, 0
    %s251 = sadd.s32 %s250, 1
    %s252 = scalar_select %p249, %s250, %s251
    %p255 = pneg %p249
    %p256 = scmp.eq.s32.totalorder %s18, 1
    %p257 = por %p255, %p256
    %p258 = scmp.ne.s32.totalorder %s250, %s253
    %p259 = scmp.eq.s32.totalorder %s18, 0
    %p260 = por %p258, %p259
    %p261 = scmp.ne.s32.totalorder %s250, %s253
    %p262 = scmp.eq.s32.totalorder %s23, 1
    %p263 = por %p261, %p262
    %p264 = scmp.ne.s32.totalorder %s253, %s254
    %p265 = scmp.eq.s32.totalorder %s23, 0
    %p266 = por %p264, %p265
    %p267 = scmp.ne.s32.totalorder %s253, %s254
    %p268 = scmp.eq.s32.totalorder %s24, 1
    %p269 = por %p267, %p268
    %p271 = scmp.ne.s32.totalorder %s254, %s270
    %p272 = scmp.eq.s32.totalorder %s24, 0
    %p273 = por %p271, %p272
    %s274 = ssub.s32 %s25, %s37
    %p275 = scmp.eq.s32.totalorder %s274, 0
    %s277 = sadd.s32 %s276, 1
    %s278 = scalar_select %p275, %s276, %s277
    %p281 = pneg %p275
    %p282 = scmp.eq.s32.totalorder %s18, 1
    %p283 = por %p281, %p282
    %p284 = scmp.ne.s32.totalorder %s276, %s279
    %p285 = scmp.eq.s32.totalorder %s18, 0
    %p286 = por %p284, %p285
    %p287 = scmp.ne.s32.totalorder %s276, %s279
    %p288 = scmp.eq.s32.totalorder %s23, 1
    %p289 = por %p287, %p288
    %p290 = scmp.ne.s32.totalorder %s279, %s280
    %p291 = scmp.eq.s32.totalorder %s23, 0
    %p292 = por %p290, %p291
    %p293 = scmp.ne.s32.totalorder %s279, %s280
    %p294 = scmp.eq.s32.totalorder %s24, 1
    %p295 = por %p293, %p294
    %p297 = scmp.ne.s32.totalorder %s280, %s296
    %p298 = scmp.eq.s32.totalorder %s24, 0
    %p299 = por %p297, %p298
    %s300 = ssub.s32 %s25, %s37
    %p301 = scmp.eq.s32.totalorder %s300, 0
    %s303 = sadd.s32 %s302, 1
    %s304 = scalar_select %p301, %s302, %s303
    %p307 = pneg %p301
    %p308 = scmp.eq.s32.totalorder %s18, 1
    %p309 = por %p307, %p308
    %p310 = scmp.ne.s32.totalorder %s302, %s305
    %p311 = scmp.eq.s32.totalorder %s18, 0
    %p312 = por %p310, %p311
    %p313 = scmp.ne.s32.totalorder %s302, %s305
    %p314 = scmp.eq.s32.totalorder %s23, 1
    %p315 = por %p313, %p314
    %p316 = scmp.ne.s32.totalorder %s305, %s306
    %p317 = scmp.eq.s32.totalorder %s23, 0
    %p318 = por %p316, %p317
    %p319 = scmp.ne.s32.totalorder %s305, %s306
    %p320 = scmp.eq.s32.totalorder %s24, 1
    %p321 = por %p319, %p320
    %p323 = scmp.ne.s32.totalorder %s306, %s322
    %p324 = scmp.eq.s32.totalorder %s24, 0
    %p325 = por %p323, %p324
    %s326 = ssub.s32 %s25, %s37
    %p327 = scmp.eq.s32.totalorder %s326, 0
    %s329 = sadd.s32 %s328, 1
    %s330 = scalar_select %p327, %s328, %s329
    %p333 = pneg %p327
    %p334 = scmp.eq.s32.totalorder %s18, 1
    %p335 = por %p333, %p334
    %p336 = scmp.ne.s32.totalorder %s328, %s331
    %p337 = scmp.eq.s32.totalorder %s18, 0
    %p338 = por %p336, %p337
    %p339 = scmp.ne.s32.totalorder %s328, %s331
    %p340 = scmp.eq.s32.totalorder %s23, 1
    %p341 = por %p339, %p340
    %p342 = scmp.ne.s32.totalorder %s331, %s332
    %p343 = scmp.eq.s32.totalorder %s23, 0
    %p344 = por %p342, %p343
    %p345 = scmp.ne.s32.totalorder %s331, %s332
    %p346 = scmp.eq.s32.totalorder %s24, 1
    %p347 = por %p345, %p346
    %p349 = scmp.ne.s32.totalorder %s332, %s348
    %p350 = scmp.eq.s32.totalorder %s24, 0
    %p351 = por %p349, %p350
    %s352 = ssub.s32 %s25, %s37
    %s353 = ssub.s32 %s26, %s33
    %s354 = sor.u32 %s352, %s353
    %p355 = scmp.eq.s32.totalorder %s354, 0
    %s357 = sadd.s32 %s356, 1
    %s358 = scalar_select %p355, %s356, %s357
    %p361 = pneg %p355
    %p362 = scmp.eq.s32.totalorder %s18, 1
    %p363 = por %p361, %p362
    %p364 = scmp.ne.s32.totalorder %s356, %s359
    %p365 = scmp.eq.s32.totalorder %s18, 0
    %p366 = por %p364, %p365
    %p367 = scmp.ne.s32.totalorder %s356, %s359
    %p368 = scmp.eq.s32.totalorder %s23, 1
    %p369 = por %p367, %p368
    %p370 = scmp.ne.s32.totalorder %s359, %s360
    %p371 = scmp.eq.s32.totalorder %s23, 0
    %p372 = por %p370, %p371
    %p373 = scmp.ne.s32.totalorder %s359, %s360
    %p374 = scmp.eq.s32.totalorder %s24, 1
    %p375 = por %p373, %p374
    %p377 = scmp.ne.s32.totalorder %s360, %s376
    %p378 = scmp.eq.s32.totalorder %s24, 0
    %p379 = por %p377, %p378
    %p380 = scmp.le.s32.totalorder 1, %s18
    %p381 = scmp.lt.s32.totalorder %s18, 3
    %p382 = pnand %p380, %p381
    %p383 = pneg %p382
    // Predicated region
    $region9: #{hint_forward.2} parent=5 // pred_check
      _
    $region10: #{hint_forward.2} parent=5 // pred_check_branch
      %385 = sbr.rel (%p382) target = $region12
    $region11: #{hint_forward.2} parent=5 // pred_region
      %s386 = ssub.s32 %s18, 1
    $region12: #{hint_forward.2} parent=5 // pred_fallthru
      _
    %p387 = scmp.lt.s32.totalorder %s18, 2
    // Predicated region
    $region13: #{hint_forward.2} parent=5 // pred_check
      %p388 = pneg %p387
    $region14: #{hint_forward.2} parent=5 // pred_check_branch
      %390 = sbr.rel (%p388) target = $region16
    $region15: #{hint_forward.2} parent=5 // pred_region
      // Predicated region
      $region17: #{hint_forward.2} parent=15 // pred_check
        %p391 = pneg %p52
      $region18: #{hint_forward.2} parent=15 // pred_check_branch
        %393 = sbr.rel (%p391) target = $region20
      $region19: #{hint_forward.2} parent=15 // pred_region
        %p394 = scmp.lt.s32.totalorder %s25, 1
        %s395 = scalar_select %p394, %s25, 1
        %p396 = scmp.lt.s32.totalorder %s26, 0
        %s397 = scalar_select %p396, %s26, 0
        %s398 = smul.addr %s395, 32
        %s399 = sadd.s32 %s397, %s398
        %s400 = smul.addr %s399, 8
        %s401 = scalar_lea.vmem %s0, %s400
      $region20: #{hint_forward.2} parent=15 // pred_fallthru
        _
      // Predicated region
      $region21: #{hint_forward.2} parent=15 // pred_check
        %p402 = pneg %p78
      $region22: #{hint_forward.2} parent=15 // pred_check_branch
        %404 = sbr.rel (%p402) target = $region24
      $region23: #{hint_forward.2} parent=15 // pred_region
        %p405 = scmp.lt.s32.totalorder %s25, 1
        %s406 = scalar_select %p405, %s25, 1
        %s407 = smul.addr %s406, 7
        %s408 = smul.addr %s407, 8
        %s409 = scalar_lea.vmem %s1, %s408
      $region24: #{hint_forward.2} parent=15 // pred_fallthru
        _
      // Predicated region
      $region25: #{hint_forward.2} parent=15 // pred_check
        %p410 = pneg %p104
      $region26: #{hint_forward.2} parent=15 // pred_check_branch
        %412 = sbr.rel (%p410) target = $region28
      $region27: #{hint_forward.2} parent=15 // pred_region
        %p413 = scmp.lt.s32.totalorder %s25, 1
        %s414 = scalar_select %p413, %s25, 1
        %s415 = smul.addr %s414, 7
        %s416 = smul.addr %s415, 8
        %s417 = scalar_lea.vmem %s2, %s416
      $region28: #{hint_forward.2} parent=15 // pred_fallthru
        _
      // Predicated region
      $region29: #{hint_forward.2} parent=15 // pred_check
        %p418 = pneg %p130
      $region30: #{hint_forward.2} parent=15 // pred_check_branch
        %420 = sbr.rel (%p418) target = $region32
      $region31: #{hint_forward.2} parent=15 // pred_region
        %p421 = scmp.lt.s32.totalorder %s25, 1
        %s422 = scalar_select %p421, %s25, 1
        %s423 = smul.addr %s422, 7
        %s424 = smul.addr %s423, 8
        %s425 = scalar_lea.vmem %s3, %s424
      $region32: #{hint_forward.2} parent=15 // pred_fallthru
        _
      // Predicated region
      $region33: #{hint_forward.2} parent=15 // pred_check
        %p426 = pneg %p156
      $region34: #{hint_forward.2} parent=15 // pred_check_branch
        %428 = sbr.rel (%p426) target = $region36
      $region35: #{hint_forward.2} parent=15 // pred_region
        %p429 = scmp.lt.s32.totalorder %s25, 1
        %s430 = scalar_select %p429, %s25, 1
        %s431 = smul.addr %s430, 7
        %s432 = smul.addr %s431, 8
        %s433 = scalar_lea.vmem %s4, %s432
      $region36: #{hint_forward.2} parent=15 // pred_fallthru
        _
      // Predicated region
      $region37: #{hint_forward.2} parent=15 // pred_check
        %p434 = pneg %p182
      $region38: #{hint_forward.2} parent=15 // pred_check_branch
        %436 = sbr.rel (%p434) target = $region40
      $region39: #{hint_forward.2} parent=15 // pred_region
        %p437 = scmp.lt.s32.totalorder %s25, 1
        %s438 = scalar_select %p437, %s25, 1
        %s439 = smul.addr %s438, 7
        %s440 = smul.addr %s439, 8
        %s441 = scalar_lea.vmem %s5, %s440
      $region40: #{hint_forward.2} parent=15 // pred_fallthru
        _
      // Predicated region
      $region41: #{hint_forward.2} parent=15 // pred_check
        %p442 = pneg %p208
      $region42: #{hint_forward.2} parent=15 // pred_check_branch
        %444 = sbr.rel (%p442) target = $region44
      $region43: #{hint_forward.2} parent=15 // pred_region
        %p445 = scmp.lt.s32.totalorder %s25, 1
        %s446 = scalar_select %p445, %s25, 1
        %s447 = smul.addr %s446, 8
        %s448 = scalar_lea.vmem %s6, %s447
      $region44: #{hint_forward.2} parent=15 // pred_fallthru
        _
      // Predicated region
      $region45: #{hint_forward.2} parent=15 // pred_check
        %p449 = pneg %p234
      $region46: #{hint_forward.2} parent=15 // pred_check_branch
        %451 = sbr.rel (%p449) target = $region48
      $region47: #{hint_forward.2} parent=15 // pred_region
        %p452 = scmp.lt.s32.totalorder %s25, 1
        %s453 = scalar_select %p452, %s25, 1
        %s454 = smul.addr %s453, 8
        %s455 = scalar_lea.vmem %s7, %s454
      $region48: #{hint_forward.2} parent=15 // pred_fallthru
        _
      // Predicated region
      $region49: #{hint_forward.2} parent=15 // pred_check
        %p456 = pneg %p260
      $region50: #{hint_forward.2} parent=15 // pred_check_branch
        %458 = sbr.rel (%p456) target = $region52
      $region51: #{hint_forward.2} parent=15 // pred_region
        %p459 = scmp.lt.s32.totalorder %s25, 1
        %s460 = scalar_select %p459, %s25, 1
        %s461 = smul.addr %s460, 8
        %s462 = scalar_lea.vmem %s8, %s461
      $region52: #{hint_forward.2} parent=15 // pred_fallthru
        _
      // Predicated region
      $region53: #{hint_forward.2} parent=15 // pred_check
        %p463 = pneg %p286
      $region54: #{hint_forward.2} parent=15 // pred_check_branch
        %465 = sbr.rel (%p463) target = $region56
      $region55: #{hint_forward.2} parent=15 // pred_region
        %p466 = scmp.lt.s32.totalorder %s25, 1
        %s467 = scalar_select %p466, %s25, 1
        %s468 = smul.addr %s467, 8
        %s469 = scalar_lea.vmem %s9, %s468
      $region56: #{hint_forward.2} parent=15 // pred_fallthru
        _
      // Predicated region
      $region57: #{hint_forward.2} parent=15 // pred_check
        %p470 = pneg %p312
      $region58: #{hint_forward.2} parent=15 // pred_check_branch
        %472 = sbr.rel (%p470) target = $region60
      $region59: #{hint_forward.2} parent=15 // pred_region
        %p473 = scmp.lt.s32.totalorder %s25, 1
        %s474 = scalar_select %p473, %s25, 1
        %s475 = smul.addr %s474, 8
        %s476 = scalar_lea.vmem %s10, %s475
      $region60: #{hint_forward.2} parent=15 // pred_fallthru
        _
      // Predicated region
      $region61: #{hint_forward.2} parent=15 // pred_check
        %p477 = pneg %p338
      $region62: #{hint_forward.2} parent=15 // pred_check_branch
        %479 = sbr.rel (%p477) target = $region64
      $region63: #{hint_forward.2} parent=15 // pred_region
        %p480 = scmp.lt.s32.totalorder %s25, 1
        %s481 = scalar_select %p480, %s25, 1
        %s482 = smul.addr %s481, 8
        %s483 = scalar_lea.vmem %s11, %s482
      $region64: #{hint_forward.2} parent=15 // pred_fallthru
        _
    $region16: #{hint_forward.2} parent=5 // pred_fallthru
      _
    %p484 = scmp.le.s32.totalorder 1, %s18
    %p485 = scmp.lt.s32.totalorder %s18, 3
    %p486 = pnand %p484, %p485
    %p487 = pneg %p486
    // Predicated region
    $region65: #{hint_forward.2} parent=5 // pred_check
      _
    $region66: #{hint_forward.2} parent=5 // pred_check_branch
      %489 = sbr.rel (%p486) target = $region68
    $region67: #{hint_forward.2} parent=5 // pred_region
      %s490 = ssub.s32 %s18, 1
      %p491 = scmp.lt.s32.totalorder %s27, 1
      %s492 = scalar_select %p491, %s27, 1
      %p493 = scmp.lt.s32.totalorder %s28, 0
      %s494 = scalar_select %p493, %s28, 0
      %s495 = smul.addr %s492, 32
      %s496 = sadd.s32 %s494, %s495
      %s497 = smul.addr %s496, 8
      %s498 = scalar_lea.vmem %s0, %s497
      %p499 = pneg %p58
      %p500 = pneg %p55
      %p501 = scmp.lt.s32.totalorder %s27, 1
      %s502 = scalar_select %p501, %s27, 1
      %s503 = smul.addr %s502, 7
      %s504 = smul.addr %s503, 8
      %s505 = scalar_lea.vmem %s1, %s504
      %p506 = pneg %p84
      %p507 = pneg %p81
      %p508 = scmp.lt.s32.totalorder %s27, 1
      %s509 = scalar_select %p508, %s27, 1
      %s510 = smul.addr %s509, 7
      %s511 = smul.addr %s510, 8
      %s512 = scalar_lea.vmem %s2, %s511
      %p513 = pneg %p110
      %p514 = pneg %p107
      %p515 = scmp.lt.s32.totalorder %s27, 1
      %s516 = scalar_select %p515, %s27, 1
      %s517 = smul.addr %s516, 7
      %s518 = smul.addr %s517, 8
      %s519 = scalar_lea.vmem %s3, %s518
      %p520 = pneg %p136
      %p521 = pneg %p133
      %p522 = scmp.lt.s32.totalorder %s27, 1
      %s523 = scalar_select %p522, %s27, 1
      %s524 = smul.addr %s523, 7
      %s525 = smul.addr %s524, 8
      %s526 = scalar_lea.vmem %s4, %s525
      %p527 = pneg %p162
      %p528 = pneg %p159
      %p529 = scmp.lt.s32.totalorder %s27, 1
      %s530 = scalar_select %p529, %s27, 1
      %s531 = smul.addr %s530, 7
      %s532 = smul.addr %s531, 8
      %s533 = scalar_lea.vmem %s5, %s532
      %p534 = pneg %p188
      %p535 = pneg %p185
      %p536 = scmp.lt.s32.totalorder %s27, 1
      %s537 = scalar_select %p536, %s27, 1
      %s538 = smul.addr %s537, 8
      %s539 = scalar_lea.vmem %s6, %s538
      %p540 = pneg %p214
      %p541 = pneg %p211
      %p542 = scmp.lt.s32.totalorder %s27, 1
      %s543 = scalar_select %p542, %s27, 1
      %s544 = smul.addr %s543, 8
      %s545 = scalar_lea.vmem %s7, %s544
      %p546 = pneg %p240
      %p547 = pneg %p237
      %p548 = scmp.lt.s32.totalorder %s27, 1
      %s549 = scalar_select %p548, %s27, 1
      %s550 = smul.addr %s549, 8
      %s551 = scalar_lea.vmem %s8, %s550
      %p552 = pneg %p266
      %p553 = pneg %p263
      %p554 = scmp.lt.s32.totalorder %s27, 1
      %s555 = scalar_select %p554, %s27, 1
      %s556 = smul.addr %s555, 8
      %s557 = scalar_lea.vmem %s9, %s556
      %p558 = pneg %p292
      %p559 = pneg %p289
      %p560 = scmp.lt.s32.totalorder %s27, 1
      %s561 = scalar_select %p560, %s27, 1
      %s562 = smul.addr %s561, 8
      %s563 = scalar_lea.vmem %s10, %s562
      %p564 = pneg %p318
      %p565 = pneg %p315
      %p566 = scmp.lt.s32.totalorder %s27, 1
      %s567 = scalar_select %p566, %s27, 1
      %s568 = smul.addr %s567, 8
      %s569 = scalar_lea.vmem %s11, %s568
      %p570 = pneg %p344
      %p571 = pneg %p341
      %p572 = pneg %p372
      %p573 = pneg %p369
      %p574 = scmp.lt.s32.totalorder %s27, 1
      %s575 = scalar_select %p574, %s27, 1
      %p576 = scmp.lt.s32.totalorder %s28, 0
      %s577 = scalar_select %p576, %s28, 0
      %s578 = sadd.s32 %s577, %s575
      %s579 = smul.addr %s578, 8
      %s580 = scalar_lea.vmem %s12, %s579
      %p581 = scmp.lt.s32.totalorder %s27, 1
      %s582 = scalar_select %p581, %s27, 1
      %p583 = scmp.lt.s32.totalorder %s28, 0
      %s584 = scalar_select %p583, %s28, 0
      %s585 = smul.addr %s582, 32
      %s586 = sadd.s32 %s584, %s585
      %s587 = smul.addr %s586, 8
      %s588 = scalar_lea.vmem %s0, %s587
      %p589 = scmp.lt.s32.totalorder %s27, 1
      %s590 = scalar_select %p589, %s27, 1
      %s591 = smul.addr %s590, 7
      %s592 = smul.addr %s591, 8
      %s593 = scalar_lea.vmem %s1, %s592
      %p594 = scmp.lt.s32.totalorder %s27, 1
      %s595 = scalar_select %p594, %s27, 1
      %s596 = smul.addr %s595, 7
      %s597 = smul.addr %s596, 8
      %s598 = scalar_lea.vmem %s2, %s597
      %p599 = scmp.lt.s32.totalorder %s27, 1
      %s600 = scalar_select %p599, %s27, 1
      %s601 = smul.addr %s600, 7
      %s602 = smul.addr %s601, 8
      %s603 = scalar_lea.vmem %s3, %s602
      %p604 = scmp.lt.s32.totalorder %s27, 1
      %s605 = scalar_select %p604, %s27, 1
      %s606 = smul.addr %s605, 7
      %s607 = smul.addr %s606, 8
      %s608 = scalar_lea.vmem %s4, %s607
      %p609 = scmp.lt.s32.totalorder %s27, 1
      %s610 = scalar_select %p609, %s27, 1
      %s611 = smul.addr %s610, 7
      %s612 = smul.addr %s611, 8
      %s613 = scalar_lea.vmem %s5, %s612
      %p614 = scmp.lt.s32.totalorder %s27, 1
      %s615 = scalar_select %p614, %s27, 1
      %s616 = smul.addr %s615, 8
      %s617 = scalar_lea.vmem %s6, %s616
      %p618 = scmp.lt.s32.totalorder %s27, 1
      %s619 = scalar_select %p618, %s27, 1
      %s620 = smul.addr %s619, 8
      %s621 = scalar_lea.vmem %s7, %s620
      %p622 = scmp.lt.s32.totalorder %s27, 1
      %s623 = scalar_select %p622, %s27, 1
      %s624 = smul.addr %s623, 8
      %s625 = scalar_lea.vmem %s8, %s624
      %p626 = scmp.lt.s32.totalorder %s27, 1
      %s627 = scalar_select %p626, %s27, 1
      %s628 = smul.addr %s627, 8
      %s629 = scalar_lea.vmem %s9, %s628
      %p630 = scmp.lt.s32.totalorder %s27, 1
      %s631 = scalar_select %p630, %s27, 1
      %s632 = smul.addr %s631, 8
      %s633 = scalar_lea.vmem %s10, %s632
      %p634 = scmp.lt.s32.totalorder %s27, 1
      %s635 = scalar_select %p634, %s27, 1
      %s636 = smul.addr %s635, 8
      %s637 = scalar_lea.vmem %s11, %s636
      %p638 = scmp.lt.s32.totalorder %s27, 1
      %s639 = scalar_select %p638, %s27, 1
      %p640 = scmp.lt.s32.totalorder %s28, 0
      %s641 = scalar_select %p640, %s28, 0
      %s642 = sadd.s32 %s641, %s639
      %s643 = smul.addr %s642, 8
      %s644 = scalar_lea.vmem %s12, %s643
      %v645 = vld [vmem:[%s593] sm:$0xff]
      %v646 = vld [vmem:[%s593 + $0x8] sm:$0xff]
      %v647 = vld [vmem:[%s593 + $0x10] sm:$0xff]
      %v648 = vld [vmem:[%s593 + $0x18] sm:$0xff]
      %v649 = vld [vmem:[%s593 + $0x20] sm:$0xff]
      %v650 = vld [vmem:[%s593 + $0x28] sm:$0xff]
      %v651 = vld [vmem:[%s593 + $0x30] sm:$0xff]
      %v652 = vld [vmem:[%s598] sm:$0xff]
      %v653 = vld [vmem:[%s598 + $0x8] sm:$0xff]
      %v654 = vld [vmem:[%s598 + $0x10] sm:$0xff]
      %v655 = vld [vmem:[%s598 + $0x18] sm:$0xff]
      %v656 = vld [vmem:[%s598 + $0x20] sm:$0xff]
      %v657 = vld [vmem:[%s598 + $0x28] sm:$0xff]
      %v658 = vld [vmem:[%s598 + $0x30] sm:$0xff]
      %v659 = vld [vmem:[%s603] sm:$0xff]
      %v660 = vld [vmem:[%s603 + $0x8] sm:$0xff]
      %v661 = vld [vmem:[%s603 + $0x10] sm:$0xff]
      %v662 = vld [vmem:[%s603 + $0x18] sm:$0xff]
      %v663 = vld [vmem:[%s603 + $0x20] sm:$0xff]
      %v664 = vld [vmem:[%s603 + $0x28] sm:$0xff]
      %v665 = vld [vmem:[%s603 + $0x30] sm:$0xff]
      %v666 = vld [vmem:[%s608] sm:$0xff]
      %v667 = vld [vmem:[%s608 + $0x8] sm:$0xff]
      %v668 = vld [vmem:[%s608 + $0x10] sm:$0xff]
      %v669 = vld [vmem:[%s608 + $0x18] sm:$0xff]
      %v670 = vld [vmem:[%s608 + $0x20] sm:$0xff]
      %v671 = vld [vmem:[%s608 + $0x28] sm:$0xff]
      %v672 = vld [vmem:[%s608 + $0x30] sm:$0xff]
      %v673 = vld [vmem:[%s613] sm:$0xff]
      %v674 = vld [vmem:[%s613 + $0x8] sm:$0xff]
      %v675 = vld [vmem:[%s613 + $0x10] sm:$0xff]
      %v676 = vld [vmem:[%s613 + $0x18] sm:$0xff]
      %v677 = vld [vmem:[%s613 + $0x20] sm:$0xff]
      %v678 = vld [vmem:[%s613 + $0x28] sm:$0xff]
      %v679 = vld [vmem:[%s613 + $0x30] sm:$0xff]
      %v680 = vld [vmem:[%s617] sm:$0xff]
      %v681 = vld [vmem:[%s621] sm:$0xff]
      %v682 = vld [vmem:[%s625] sm:$0xff]
      %v683 = vld [vmem:[%s629] sm:$0xff]
      %v684 = vld [vmem:[%s633] sm:$0xff]
      %v685 = vld [vmem:[%s637] sm:$0xff]
      %686 = vst [vmem:[#allocation2] sm:$0xff] 0.0
      %687 = vst [vmem:[#allocation2 + $0x8] sm:$0xff] 0.0
      %688 = vst [vmem:[#allocation2 + $0x10] sm:$0xff] 0.0
      %689 = vst [vmem:[#allocation2 + $0x18] sm:$0xff] 0.0
      %690 = vst [vmem:[#allocation2 + $0x20] sm:$0xff] 0.0
      %691 = vst [vmem:[#allocation2 + $0x28] sm:$0xff] 0.0
      %692 = vst [vmem:[#allocation2 + $0x30] sm:$0xff] 0.0
      %693 = vst [vmem:[#allocation2 + $0x38] sm:$0xff] 0.0
      %694 = vst [vmem:[#allocation2 + $0x40] sm:$0xff] 0.0
      %695 = vst [vmem:[#allocation2 + $0x48] sm:$0xff] 0.0
      %696 = vst [vmem:[#allocation2 + $0x50] sm:$0xff] 0.0
      %697 = vst [vmem:[#allocation2 + $0x58] sm:$0xff] 0.0
      %698 = vst [vmem:[#allocation2 + $0x60] sm:$0xff] 0.0
      %699 = vst [vmem:[#allocation2 + $0x68] sm:$0xff] 0.0
      %700 = vst [vmem:[#allocation2 + $0x70] sm:$0xff] 0.0
      %701 = vst [vmem:[#allocation2 + $0x78] sm:$0xff] 0.0
      %702 = vst [vmem:[#allocation2 + $0x80] sm:$0xff] 0.0
      %703 = vst [vmem:[#allocation2 + $0x88] sm:$0xff] 0.0
      loop: start=0, step=1, limit=4
      $region69: #{hint_forward.2} parent=67 // loop_pre_header
        _
      $region70: #{hint_forward.2} parent=67 // loop_header
        %s705 = sphi 0, %s709
        %p706 = scmp.ge.s32.totalorder %s705, 4
      $region71: #{hint_forward.2} parent=67 // loop_header_branch
        %708 = sbr.rel (%p706) target = $region75
      $region72: #{hint_forward.2} parent=67 // loop_body
        %p710 = scmp.lt.s32.totalorder %s705, 0
        %s711 = ssub.s32 0, %s705
        %s712 = scalar_select %p710, %s711, %s705
        %s713 = sand.u32 %s712, 1
        %s714 = ssub.s32 0, %s713
        %s715 = scalar_select %p710, %s714, %s713
        %p716 = scmp.ne.s32.totalorder %s715, 0
        %p717 = scmp.lt.s32.totalorder %s715, 0
        %p718 = pnand %p717, %p716
        %p719 = pneg %p718
        %s720 = sadd.s32 %s715, 2
        %s721 = scalar_select %p719, %s720, %s715
        %s722 = smul.u32 %s721, 9
        %s723 = ssub.s32 9, %s722
        %s724 = smul.u32 %s705, 64
        %s725 = scalar_lea.vmem %s588, %s724
        %v726 = vld [vmem:[%s725] sm:$0xff]
        %s727 = sadd.s32 %s722, 1
        %s728 = smul.u32 %s727, 8
        %s729 = scalar_lea.vmem [#allocation2], %s728
        %v730 = vld [vmem:[%s729] sm:$0xff]
        %s731 = smul.u32 %s722, 8
        %s732 = scalar_lea.vmem [#allocation2], %s731
        %v733 = vld [vmem:[%s732] sm:$0xff]
        %vm734 = vcmask 64512
        %v736 = vsel %vm734, %v645, 0
        %v739 = vsel %vm734, %v646, 0
        %v742 = vsel %vm734, %v647, 0
        %v745 = vsel %vm734, %v648, 0
        %v748 = vsel %vm734, %v649, 0
        %v751 = vsel %vm734, %v650, 0
        %v754 = vsel %vm734, %v651, 0
        %756 = vmatpush.msra.mxu0 0.0
        %757 = vmatpush.msra.mxu0 0.0
        %758 = vmatpush.msra.mxu0 0.0
        %759 = vmatpush.msra.mxu0 0.0
        %760 = vmatpush.msra.mxu0 0.0
        %761 = vmatpush.msra.mxu0 0.0
        %762 = vmatpush.msra.mxu0 0.0
        %763 = vmatpush.msra.mxu0 0.0
        %764 = vmatpush.msra.mxu0 0.0
        %765 = vmatpush.msra.mxu0 0.0
        %766 = vmatpush.msra.mxu0 0.0
        %767 = vmatpush.msra.mxu0 0.0
        %768 = vmatpush.msra.mxu0 0.0
        %769 = vmatpush.msra.mxu0 0.0
        %770 = vmatpush.msra.mxu0 0.0
        %771 = vmatpush.msra.mxu0 %v730
        %772 = vmatmul.f32.gmra.mxu0 %v736
        %v773 = vpop.f32.mrf.mxu0
        %v774 = vadd.f32 0.0, %v773
        %775 = vmatmul.f32.gmra.mxu0 %v739
        %v776 = vpop.f32.mrf.mxu0
        %v777 = vadd.f32 0.0, %v776
        %778 = vmatmul.f32.gmra.mxu0 %v742
        %v779 = vpop.f32.mrf.mxu0
        %v780 = vadd.f32 0.0, %v779
        %781 = vmatmul.f32.gmra.mxu0 %v745
        %v782 = vpop.f32.mrf.mxu0
        %v783 = vadd.f32 0.0, %v782
        %784 = vmatmul.f32.gmra.mxu0 %v748
        %v785 = vpop.f32.mrf.mxu0
        %v786 = vadd.f32 0.0, %v785
        %787 = vmatmul.f32.gmra.mxu0 %v751
        %v788 = vpop.f32.mrf.mxu0
        %v789 = vadd.f32 0.0, %v788
        %790 = vmatmul.f32.gmra.mxu0 %v754
        %v791 = vpop.f32.mrf.mxu0
        %v792 = vadd.f32 0.0, %v791
        %793 = vdwg.mxu0
        %v795 = vsel %vm734, %v666, 0
        %v798 = vsel %vm734, %v667, 0
        %v801 = vsel %vm734, %v668, 0
        %v804 = vsel %vm734, %v669, 0
        %v807 = vsel %vm734, %v670, 0
        %v810 = vsel %vm734, %v671, 0
        %v813 = vsel %vm734, %v672, 0
        %815 = vmatpush.msra.mxu0 0.0
        %816 = vmatpush.msra.mxu0 0.0
        %817 = vmatpush.msra.mxu0 0.0
        %818 = vmatpush.msra.mxu0 0.0
        %819 = vmatpush.msra.mxu0 0.0
        %820 = vmatpush.msra.mxu0 0.0
        %821 = vmatpush.msra.mxu0 0.0
        %822 = vmatpush.msra.mxu0 0.0
        %823 = vmatpush.msra.mxu0 0.0
        %824 = vmatpush.msra.mxu0 0.0
        %825 = vmatpush.msra.mxu0 0.0
        %826 = vmatpush.msra.mxu0 0.0
        %827 = vmatpush.msra.mxu0 0.0
        %828 = vmatpush.msra.mxu0 0.0
        %829 = vmatpush.msra.mxu0 0.0
        %830 = vmatpush.msra.mxu0 %v726
        %831 = vmatmul.f32.gmra.mxu0 %v795
        %v832 = vpop.f32.mrf.mxu0
        %v833 = vadd.f32 %v774, %v832
        %834 = vmatmul.f32.gmra.mxu0 %v798
        %v835 = vpop.f32.mrf.mxu0
        %v836 = vadd.f32 %v777, %v835
        %837 = vmatmul.f32.gmra.mxu0 %v801
        %v838 = vpop.f32.mrf.mxu0
        %v839 = vadd.f32 %v780, %v838
        %840 = vmatmul.f32.gmra.mxu0 %v804
        %v841 = vpop.f32.mrf.mxu0
        %v842 = vadd.f32 %v783, %v841
        %843 = vmatmul.f32.gmra.mxu0 %v807
        %v844 = vpop.f32.mrf.mxu0
        %v845 = vadd.f32 %v786, %v844
        %846 = vmatmul.f32.gmra.mxu0 %v810
        %v847 = vpop.f32.mrf.mxu0
        %v848 = vadd.f32 %v789, %v847
        %849 = vmatmul.f32.gmra.mxu0 %v813
        %v850 = vpop.f32.mrf.mxu0
        %v851 = vadd.f32 %v792, %v850
        %852 = vdwg.mxu0
        %v854 = vsel %vm734, %v659, 0
        %v857 = vsel %vm734, %v660, 0
        %v860 = vsel %vm734, %v661, 0
        %v863 = vsel %vm734, %v662, 0
        %v866 = vsel %vm734, %v663, 0
        %v869 = vsel %vm734, %v664, 0
        %v872 = vsel %vm734, %v665, 0
        %874 = vmatpush.msra.mxu0 0.0
        %875 = vmatpush.msra.mxu0 0.0
        %876 = vmatpush.msra.mxu0 0.0
        %877 = vmatpush.msra.mxu0 0.0
        %878 = vmatpush.msra.mxu0 0.0
        %879 = vmatpush.msra.mxu0 0.0
        %880 = vmatpush.msra.mxu0 0.0
        %881 = vmatpush.msra.mxu0 0.0
        %882 = vmatpush.msra.mxu0 0.0
        %883 = vmatpush.msra.mxu0 0.0
        %884 = vmatpush.msra.mxu0 0.0
        %885 = vmatpush.msra.mxu0 0.0
        %886 = vmatpush.msra.mxu0 0.0
        %887 = vmatpush.msra.mxu0 0.0
        %888 = vmatpush.msra.mxu0 0.0
        %889 = vmatpush.msra.mxu0 %v733
        %890 = vmatmul.f32.gmra.mxu0 %v854
        %v891 = vpop.f32.mrf.mxu0
        %v892 = vadd.f32 0.0, %v891
        %893 = vmatmul.f32.gmra.mxu0 %v857
        %v894 = vpop.f32.mrf.mxu0
        %v895 = vadd.f32 0.0, %v894
        %896 = vmatmul.f32.gmra.mxu0 %v860
        %v897 = vpop.f32.mrf.mxu0
        %v898 = vadd.f32 0.0, %v897
        %899 = vmatmul.f32.gmra.mxu0 %v863
        %v900 = vpop.f32.mrf.mxu0
        %v901 = vadd.f32 0.0, %v900
        %902 = vmatmul.f32.gmra.mxu0 %v866
        %v903 = vpop.f32.mrf.mxu0
        %v904 = vadd.f32 0.0, %v903
        %905 = vmatmul.f32.gmra.mxu0 %v869
        %v906 = vpop.f32.mrf.mxu0
        %v907 = vadd.f32 0.0, %v906
        %908 = vmatmul.f32.gmra.mxu0 %v872
        %v909 = vpop.f32.mrf.mxu0
        %v910 = vadd.f32 0.0, %v909
        %911 = vdwg.mxu0
        %v912 = vadd.f32 %v833, %v892
        %v913 = vadd.f32 %v836, %v895
        %v914 = vadd.f32 %v839, %v898
        %v915 = vadd.f32 %v842, %v901
        %v916 = vadd.f32 %v845, %v904
        %v917 = vadd.f32 %v848, %v907
        %v918 = vadd.f32 %v851, %v910
        %920 = vset.pattern.permute.xlu0 0
        %921 = vperm.xlu0 %920, %v673
        %v922 = vpop.permute.xlu0 %921
        %925 = vset.pattern.permute.xlu0 0
        %926 = vperm.xlu0 %925, %v674
        %v927 = vpop.permute.xlu0 %926
        %930 = vset.pattern.permute.xlu0 0
        %931 = vperm.xlu0 %930, %v675
        %v932 = vpop.permute.xlu0 %931
        %935 = vset.pattern.permute.xlu0 0
        %936 = vperm.xlu0 %935, %v676
        %v937 = vpop.permute.xlu0 %936
        %940 = vset.pattern.permute.xlu0 0
        %941 = vperm.xlu0 %940, %v677
        %v942 = vpop.permute.xlu0 %941
        %945 = vset.pattern.permute.xlu0 0
        %946 = vperm.xlu0 %945, %v678
        %v947 = vpop.permute.xlu0 %946
        %950 = vset.pattern.permute.xlu0 0
        %951 = vperm.xlu0 %950, %v679
        %v952 = vpop.permute.xlu0 %951
        %v954 = vadd.f32 %v912, %v922
        %v955 = vadd.f32 %v913, %v927
        %v956 = vadd.f32 %v914, %v932
        %v957 = vadd.f32 %v915, %v937
        %v958 = vadd.f32 %v916, %v942
        %v959 = vadd.f32 %v917, %v947
        %v960 = vadd.f32 %v918, %v952
        %961 = vst [vmem:[#allocation3] sm:$0xff] %v954
        %962 = vst [vmem:[#allocation3 + $0x8] sm:$0xff] %v955
        %963 = vst [vmem:[#allocation3 + $0x10] sm:$0xff] %v956
        %964 = vst [vmem:[#allocation3 + $0x18] sm:$0xff] %v957
        %965 = vst [vmem:[#allocation3 + $0x20] sm:$0xff] %v958
        %966 = vst [vmem:[#allocation3 + $0x28] sm:$0xff] %v959
        %967 = vst [vmem:[#allocation3 + $0x30] sm:$0xff] %v960
        %969 = vset.pattern.permute.xlu0 0
        %970 = vperm.xlu0 %969, %v681
        %v971 = vpop.permute.xlu0 %970
        %v974 = vsel %vm734, %v680, 0
        %976 = vmatpush.msra.mxu0 0.0
        %977 = vmatpush.msra.mxu0 0.0
        %978 = vmatpush.msra.mxu0 0.0
        %979 = vmatpush.msra.mxu0 0.0
        %980 = vmatpush.msra.mxu0 0.0
        %981 = vmatpush.msra.mxu0 0.0
        %982 = vmatpush.msra.mxu0 0.0
        %983 = vmatpush.msra.mxu0 0.0
        %984 = vmatpush.msra.mxu0 0.0
        %985 = vmatpush.msra.mxu0 0.0
        %986 = vmatpush.msra.mxu0 0.0
        %987 = vmatpush.msra.mxu0 0.0
        %988 = vmatpush.msra.mxu0 0.0
        %989 = vmatpush.msra.mxu0 0.0
        %990 = vmatpush.msra.mxu0 0.0
        %991 = vmatpush.msra.mxu0 %v726
        %992 = vmatmul.f32.gmra.mxu0 %v974
        %v993 = vpop.f32.mrf.mxu0
        %v994 = vadd.f32 %v971, %v993
        %995 = vdwg.mxu0
        %996 = vst [vmem:[#allocation4] sm:$0xff] %v994
        %s997 = sadd.s32 8, %s724
        %s998 = scalar_lea.vmem %s588, %s997
        %v999 = vld [vmem:[%s998] sm:$0xff]
        %s1000 = sadd.s32 %s722, 2
        %s1001 = smul.u32 %s1000, 8
        %s1002 = scalar_lea.vmem [#allocation2], %s1001
        %v1003 = vld [vmem:[%s1002] sm:$0xff]
        %v1004 = vld [vmem:[%s729] sm:$0xff]
        %1005 = vmatpush.msra.mxu0 0.0
        %1006 = vmatpush.msra.mxu0 0.0
        %1007 = vmatpush.msra.mxu0 0.0
        %1008 = vmatpush.msra.mxu0 0.0
        %1009 = vmatpush.msra.mxu0 0.0
        %1010 = vmatpush.msra.mxu0 0.0
        %1011 = vmatpush.msra.mxu0 0.0
        %1012 = vmatpush.msra.mxu0 0.0
        %1013 = vmatpush.msra.mxu0 0.0
        %1014 = vmatpush.msra.mxu0 0.0
        %1015 = vmatpush.msra.mxu0 0.0
        %1016 = vmatpush.msra.mxu0 0.0
        %1017 = vmatpush.msra.mxu0 0.0
        %1018 = vmatpush.msra.mxu0 0.0
        %1019 = vmatpush.msra.mxu0 0.0
        %1020 = vmatpush.msra.mxu0 %v1003
        %1021 = vmatmul.f32.gmra.mxu0 %v736
        %v1022 = vpop.f32.mrf.mxu0
        %v1023 = vadd.f32 0.0, %v1022
        %1024 = vmatmul.f32.gmra.mxu0 %v739
        %v1025 = vpop.f32.mrf.mxu0
        %v1026 = vadd.f32 0.0, %v1025
        %1027 = vmatmul.f32.gmra.mxu0 %v742
        %v1028 = vpop.f32.mrf.mxu0
        %v1029 = vadd.f32 0.0, %v1028
        %1030 = vmatmul.f32.gmra.mxu0 %v745
        %v1031 = vpop.f32.mrf.mxu0
        %v1032 = vadd.f32 0.0, %v1031
        %1033 = vmatmul.f32.gmra.mxu0 %v748
        %v1034 = vpop.f32.mrf.mxu0
        %v1035 = vadd.f32 0.0, %v1034
        %1036 = vmatmul.f32.gmra.mxu0 %v751
        %v1037 = vpop.f32.mrf.mxu0
        %v1038 = vadd.f32 0.0, %v1037
        %1039 = vmatmul.f32.gmra.mxu0 %v754
        %v1040 = vpop.f32.mrf.mxu0
        %v1041 = vadd.f32 0.0, %v1040
        %1042 = vdwg.mxu0
        %1043 = vmatpush.msra.mxu0 0.0
        %1044 = vmatpush.msra.mxu0 0.0
        %1045 = vmatpush.msra.mxu0 0.0
        %1046 = vmatpush.msra.mxu0 0.0
        %1047 = vmatpush.msra.mxu0 0.0
        %1048 = vmatpush.msra.mxu0 0.0
        %1049 = vmatpush.msra.mxu0 0.0
        %1050 = vmatpush.msra.mxu0 0.0
        %1051 = vmatpush.msra.mxu0 0.0
        %1052 = vmatpush.msra.mxu0 0.0
        %1053 = vmatpush.msra.mxu0 0.0
        %1054 = vmatpush.msra.mxu0 0.0
        %1055 = vmatpush.msra.mxu0 0.0
        %1056 = vmatpush.msra.mxu0 0.0
        %1057 = vmatpush.msra.mxu0 0.0
        %1058 = vmatpush.msra.mxu0 %v999
        %1059 = vmatmul.f32.gmra.mxu0 %v795
        %v1060 = vpop.f32.mrf.mxu0
        %v1061 = vadd.f32 %v1023, %v1060
        %1062 = vmatmul.f32.gmra.mxu0 %v798
        %v1063 = vpop.f32.mrf.mxu0
        %v1064 = vadd.f32 %v1026, %v1063
        %1065 = vmatmul.f32.gmra.mxu0 %v801
        %v1066 = vpop.f32.mrf.mxu0
        %v1067 = vadd.f32 %v1029, %v1066
        %1068 = vmatmul.f32.gmra.mxu0 %v804
        %v1069 = vpop.f32.mrf.mxu0
        %v1070 = vadd.f32 %v1032, %v1069
        %1071 = vmatmul.f32.gmra.mxu0 %v807
        %v1072 = vpop.f32.mrf.mxu0
        %v1073 = vadd.f32 %v1035, %v1072
        %1074 = vmatmul.f32.gmra.mxu0 %v810
        %v1075 = vpop.f32.mrf.mxu0
        %v1076 = vadd.f32 %v1038, %v1075
        %1077 = vmatmul.f32.gmra.mxu0 %v813
        %v1078 = vpop.f32.mrf.mxu0
        %v1079 = vadd.f32 %v1041, %v1078
        %1080 = vdwg.mxu0
        %1081 = vmatpush.msra.mxu0 0.0
        %1082 = vmatpush.msra.mxu0 0.0
        %1083 = vmatpush.msra.mxu0 0.0
        %1084 = vmatpush.msra.mxu0 0.0
        %1085 = vmatpush.msra.mxu0 0.0
        %1086 = vmatpush.msra.mxu0 0.0
        %1087 = vmatpush.msra.mxu0 0.0
        %1088 = vmatpush.msra.mxu0 0.0
        %1089 = vmatpush.msra.mxu0 0.0
        %1090 = vmatpush.msra.mxu0 0.0
        %1091 = vmatpush.msra.mxu0 0.0
        %1092 = vmatpush.msra.mxu0 0.0
        %1093 = vmatpush.msra.mxu0 0.0
        %1094 = vmatpush.msra.mxu0 0.0
        %1095 = vmatpush.msra.mxu0 0.0
        %1096 = vmatpush.msra.mxu0 %v1004
        %1097 = vmatmul.f32.gmra.mxu0 %v854
        %v1098 = vpop.f32.mrf.mxu0
        %v1099 = vadd.f32 0.0, %v1098
        %1100 = vmatmul.f32.gmra.mxu0 %v857
        %v1101 = vpop.f32.mrf.mxu0
        %v1102 = vadd.f32 0.0, %v1101
        %1103 = vmatmul.f32.gmra.mxu0 %v860
        %v1104 = vpop.f32.mrf.mxu0
        %v1105 = vadd.f32 0.0, %v1104
        %1106 = vmatmul.f32.gmra.mxu0 %v863
        %v1107 = vpop.f32.mrf.mxu0
        %v1108 = vadd.f32 0.0, %v1107
        %1109 = vmatmul.f32.gmra.mxu0 %v866
        %v1110 = vpop.f32.mrf.mxu0
        %v1111 = vadd.f32 0.0, %v1110
        %1112 = vmatmul.f32.gmra.mxu0 %v869
        %v1113 = vpop.f32.mrf.mxu0
        %v1114 = vadd.f32 0.0, %v1113
        %1115 = vmatmul.f32.gmra.mxu0 %v872
        %v1116 = vpop.f32.mrf.mxu0
        %v1117 = vadd.f32 0.0, %v1116
        %1118 = vdwg.mxu0
        %v1119 = vadd.f32 %v1061, %v1099
        %v1120 = vadd.f32 %v1064, %v1102
        %v1121 = vadd.f32 %v1067, %v1105
        %v1122 = vadd.f32 %v1070, %v1108
        %v1123 = vadd.f32 %v1073, %v1111
        %v1124 = vadd.f32 %v1076, %v1114
        %v1125 = vadd.f32 %v1079, %v1117
        %v1126 = vadd.f32 %v1119, %v922
        %v1127 = vadd.f32 %v1120, %v927
        %v1128 = vadd.f32 %v1121, %v932
        %v1129 = vadd.f32 %v1122, %v937
        %v1130 = vadd.f32 %v1123, %v942
        %v1131 = vadd.f32 %v1124, %v947
        %v1132 = vadd.f32 %v1125, %v952
        %s1133 = scalar_lea.vmem [#allocation3], 56
        %1134 = vst [vmem:[%s1133] sm:$0xff] %v1126
        %1135 = vst [vmem:[%s1133 + $0x8] sm:$0xff] %v1127
        %1136 = vst [vmem:[%s1133 + $0x10] sm:$0xff] %v1128
        %1137 = vst [vmem:[%s1133 + $0x18] sm:$0xff] %v1129
        %1138 = vst [vmem:[%s1133 + $0x20] sm:$0xff] %v1130
        %1139 = vst [vmem:[%s1133 + $0x28] sm:$0xff] %v1131
        %1140 = vst [vmem:[%s1133 + $0x30] sm:$0xff] %v1132
        %1141 = vmatpush.msra.mxu0 0.0
        %1142 = vmatpush.msra.mxu0 0.0
        %1143 = vmatpush.msra.mxu0 0.0
        %1144 = vmatpush.msra.mxu0 0.0
        %1145 = vmatpush.msra.mxu0 0.0
        %1146 = vmatpush.msra.mxu0 0.0
        %1147 = vmatpush.msra.mxu0 0.0
        %1148 = vmatpush.msra.mxu0 0.0
        %1149 = vmatpush.msra.mxu0 0.0
        %1150 = vmatpush.msra.mxu0 0.0
        %1151 = vmatpush.msra.mxu0 0.0
        %1152 = vmatpush.msra.mxu0 0.0
        %1153 = vmatpush.msra.mxu0 0.0
        %1154 = vmatpush.msra.mxu0 0.0
        %1155 = vmatpush.msra.mxu0 0.0
        %1156 = vmatpush.msra.mxu0 %v999
        %1157 = vmatmul.f32.gmra.mxu0 %v974
        %v1158 = vpop.f32.mrf.mxu0
        %v1159 = vadd.f32 %v971, %v1158
        %1160 = vdwg.mxu0
        %s1161 = scalar_lea.vmem [#allocation4], 8
        %1162 = vst [vmem:[%s1161] sm:$0xff] %v1159
        %s1163 = sadd.s32 16, %s724
        %s1164 = scalar_lea.vmem %s588, %s1163
        %v1165 = vld [vmem:[%s1164] sm:$0xff]
        %s1166 = sadd.s32 %s722, 3
        %s1167 = smul.u32 %s1166, 8
        %s1168 = scalar_lea.vmem [#allocation2], %s1167
        %v1169 = vld [vmem:[%s1168] sm:$0xff]
        %v1170 = vld [vmem:[%s1002] sm:$0xff]
        %1171 = vmatpush.msra.mxu0 0.0
        %1172 = vmatpush.msra.mxu0 0.0
        %1173 = vmatpush.msra.mxu0 0.0
        %1174 = vmatpush.msra.mxu0 0.0
        %1175 = vmatpush.msra.mxu0 0.0
        %1176 = vmatpush.msra.mxu0 0.0
        %1177 = vmatpush.msra.mxu0 0.0
        %1178 = vmatpush.msra.mxu0 0.0
        %1179 = vmatpush.msra.mxu0 0.0
        %1180 = vmatpush.msra.mxu0 0.0
        %1181 = vmatpush.msra.mxu0 0.0
        %1182 = vmatpush.msra.mxu0 0.0
        %1183 = vmatpush.msra.mxu0 0.0
        %1184 = vmatpush.msra.mxu0 0.0
        %1185 = vmatpush.msra.mxu0 0.0
        %1186 = vmatpush.msra.mxu0 %v1169
        %1187 = vmatmul.f32.gmra.mxu0 %v736
        %v1188 = vpop.f32.mrf.mxu0
        %v1189 = vadd.f32 0.0, %v1188
        %1190 = vmatmul.f32.gmra.mxu0 %v739
        %v1191 = vpop.f32.mrf.mxu0
        %v1192 = vadd.f32 0.0, %v1191
        %1193 = vmatmul.f32.gmra.mxu0 %v742
        %v1194 = vpop.f32.mrf.mxu0
        %v1195 = vadd.f32 0.0, %v1194
        %1196 = vmatmul.f32.gmra.mxu0 %v745
        %v1197 = vpop.f32.mrf.mxu0
        %v1198 = vadd.f32 0.0, %v1197
        %1199 = vmatmul.f32.gmra.mxu0 %v748
        %v1200 = vpop.f32.mrf.mxu0
        %v1201 = vadd.f32 0.0, %v1200
        %1202 = vmatmul.f32.gmra.mxu0 %v751
        %v1203 = vpop.f32.mrf.mxu0
        %v1204 = vadd.f32 0.0, %v1203
        %1205 = vmatmul.f32.gmra.mxu0 %v754
        %v1206 = vpop.f32.mrf.mxu0
        %v1207 = vadd.f32 0.0, %v1206
        %1208 = vdwg.mxu0
        %1209 = vmatpush.msra.mxu0 0.0
        %1210 = vmatpush.msra.mxu0 0.0
        %1211 = vmatpush.msra.mxu0 0.0
        %1212 = vmatpush.msra.mxu0 0.0
        %1213 = vmatpush.msra.mxu0 0.0
        %1214 = vmatpush.msra.mxu0 0.0
        %1215 = vmatpush.msra.mxu0 0.0
        %1216 = vmatpush.msra.mxu0 0.0
        %1217 = vmatpush.msra.mxu0 0.0
        %1218 = vmatpush.msra.mxu0 0.0
        %1219 = vmatpush.msra.mxu0 0.0
        %1220 = vmatpush.msra.mxu0 0.0
        %1221 = vmatpush.msra.mxu0 0.0
        %1222 = vmatpush.msra.mxu0 0.0
        %1223 = vmatpush.msra.mxu0 0.0
        %1224 = vmatpush.msra.mxu0 %v1165
        %1225 = vmatmul.f32.gmra.mxu0 %v795
        %v1226 = vpop.f32.mrf.mxu0
        %v1227 = vadd.f32 %v1189, %v1226
        %1228 = vmatmul.f32.gmra.mxu0 %v798
        %v1229 = vpop.f32.mrf.mxu0
        %v1230 = vadd.f32 %v1192, %v1229
        %1231 = vmatmul.f32.gmra.mxu0 %v801
        %v1232 = vpop.f32.mrf.mxu0
        %v1233 = vadd.f32 %v1195, %v1232
        %1234 = vmatmul.f32.gmra.mxu0 %v804
        %v1235 = vpop.f32.mrf.mxu0
        %v1236 = vadd.f32 %v1198, %v1235
        %1237 = vmatmul.f32.gmra.mxu0 %v807
        %v1238 = vpop.f32.mrf.mxu0
        %v1239 = vadd.f32 %v1201, %v1238
        %1240 = vmatmul.f32.gmra.mxu0 %v810
        %v1241 = vpop.f32.mrf.mxu0
        %v1242 = vadd.f32 %v1204, %v1241
        %1243 = vmatmul.f32.gmra.mxu0 %v813
        %v1244 = vpop.f32.mrf.mxu0
        %v1245 = vadd.f32 %v1207, %v1244
        %1246 = vdwg.mxu0
        %1247 = vmatpush.msra.mxu0 0.0
        %1248 = vmatpush.msra.mxu0 0.0
        %1249 = vmatpush.msra.mxu0 0.0
        %1250 = vmatpush.msra.mxu0 0.0
        %1251 = vmatpush.msra.mxu0 0.0
        %1252 = vmatpush.msra.mxu0 0.0
        %1253 = vmatpush.msra.mxu0 0.0
        %1254 = vmatpush.msra.mxu0 0.0
        %1255 = vmatpush.msra.mxu0 0.0
        %1256 = vmatpush.msra.mxu0 0.0
        %1257 = vmatpush.msra.mxu0 0.0
        %1258 = vmatpush.msra.mxu0 0.0
        %1259 = vmatpush.msra.mxu0 0.0
        %1260 = vmatpush.msra.mxu0 0.0
        %1261 = vmatpush.msra.mxu0 0.0
        %1262 = vmatpush.msra.mxu0 %v1170
        %1263 = vmatmul.f32.gmra.mxu0 %v854
        %v1264 = vpop.f32.mrf.mxu0
        %v1265 = vadd.f32 0.0, %v1264
        %1266 = vmatmul.f32.gmra.mxu0 %v857
        %v1267 = vpop.f32.mrf.mxu0
        %v1268 = vadd.f32 0.0, %v1267
        %1269 = vmatmul.f32.gmra.mxu0 %v860
        %v1270 = vpop.f32.mrf.mxu0
        %v1271 = vadd.f32 0.0, %v1270
        %1272 = vmatmul.f32.gmra.mxu0 %v863
        %v1273 = vpop.f32.mrf.mxu0
        %v1274 = vadd.f32 0.0, %v1273
        %1275 = vmatmul.f32.gmra.mxu0 %v866
        %v1276 = vpop.f32.mrf.mxu0
        %v1277 = vadd.f32 0.0, %v1276
        %1278 = vmatmul.f32.gmra.mxu0 %v869
        %v1279 = vpop.f32.mrf.mxu0
        %v1280 = vadd.f32 0.0, %v1279
        %1281 = vmatmul.f32.gmra.mxu0 %v872
        %v1282 = vpop.f32.mrf.mxu0
        %v1283 = vadd.f32 0.0, %v1282
        %1284 = vdwg.mxu0
        %v1285 = vadd.f32 %v1227, %v1265
        %v1286 = vadd.f32 %v1230, %v1268
        %v1287 = vadd.f32 %v1233, %v1271
        %v1288 = vadd.f32 %v1236, %v1274
        %v1289 = vadd.f32 %v1239, %v1277
        %v1290 = vadd.f32 %v1242, %v1280
        %v1291 = vadd.f32 %v1245, %v1283
        %v1292 = vadd.f32 %v1285, %v922
        %v1293 = vadd.f32 %v1286, %v927
        %v1294 = vadd.f32 %v1287, %v932
        %v1295 = vadd.f32 %v1288, %v937
        %v1296 = vadd.f32 %v1289, %v942
        %v1297 = vadd.f32 %v1290, %v947
        %v1298 = vadd.f32 %v1291, %v952
        %s1299 = scalar_lea.vmem [#allocation3], 112
        %1300 = vst [vmem:[%s1299] sm:$0xff] %v1292
        %1301 = vst [vmem:[%s1299 + $0x8] sm:$0xff] %v1293
        %1302 = vst [vmem:[%s1299 + $0x10] sm:$0xff] %v1294
        %1303 = vst [vmem:[%s1299 + $0x18] sm:$0xff] %v1295
        %1304 = vst [vmem:[%s1299 + $0x20] sm:$0xff] %v1296
        %1305 = vst [vmem:[%s1299 + $0x28] sm:$0xff] %v1297
        %1306 = vst [vmem:[%s1299 + $0x30] sm:$0xff] %v1298
        %1307 = vmatpush.msra.mxu0 0.0
        %1308 = vmatpush.msra.mxu0 0.0
        %1309 = vmatpush.msra.mxu0 0.0
        %1310 = vmatpush.msra.mxu0 0.0
        %1311 = vmatpush.msra.mxu0 0.0
        %1312 = vmatpush.msra.mxu0 0.0
        %1313 = vmatpush.msra.mxu0 0.0
        %1314 = vmatpush.msra.mxu0 0.0
        %1315 = vmatpush.msra.mxu0 0.0
        %1316 = vmatpush.msra.mxu0 0.0
        %1317 = vmatpush.msra.mxu0 0.0
        %1318 = vmatpush.msra.mxu0 0.0
        %1319 = vmatpush.msra.mxu0 0.0
        %1320 = vmatpush.msra.mxu0 0.0
        %1321 = vmatpush.msra.mxu0 0.0
        %1322 = vmatpush.msra.mxu0 %v1165
        %1323 = vmatmul.f32.gmra.mxu0 %v974
        %v1324 = vpop.f32.mrf.mxu0
        %v1325 = vadd.f32 %v971, %v1324
        %1326 = vdwg.mxu0
        %s1327 = scalar_lea.vmem [#allocation4], 16
        %1328 = vst [vmem:[%s1327] sm:$0xff] %v1325
        %s1329 = sadd.s32 24, %s724
        %s1330 = scalar_lea.vmem %s588, %s1329
        %v1331 = vld [vmem:[%s1330] sm:$0xff]
        %s1332 = sadd.s32 %s722, 4
        %s1333 = smul.u32 %s1332, 8
        %s1334 = scalar_lea.vmem [#allocation2], %s1333
        %v1335 = vld [vmem:[%s1334] sm:$0xff]
        %v1336 = vld [vmem:[%s1168] sm:$0xff]
        %1337 = vmatpush.msra.mxu0 0.0
        %1338 = vmatpush.msra.mxu0 0.0
        %1339 = vmatpush.msra.mxu0 0.0
        %1340 = vmatpush.msra.mxu0 0.0
        %1341 = vmatpush.msra.mxu0 0.0
        %1342 = vmatpush.msra.mxu0 0.0
        %1343 = vmatpush.msra.mxu0 0.0
        %1344 = vmatpush.msra.mxu0 0.0
        %1345 = vmatpush.msra.mxu0 0.0
        %1346 = vmatpush.msra.mxu0 0.0
        %1347 = vmatpush.msra.mxu0 0.0
        %1348 = vmatpush.msra.mxu0 0.0
        %1349 = vmatpush.msra.mxu0 0.0
        %1350 = vmatpush.msra.mxu0 0.0
        %1351 = vmatpush.msra.mxu0 0.0
        %1352 = vmatpush.msra.mxu0 %v1335
        %1353 = vmatmul.f32.gmra.mxu0 %v736
        %v1354 = vpop.f32.mrf.mxu0
        %v1355 = vadd.f32 0.0, %v1354
        %1356 = vmatmul.f32.gmra.mxu0 %v739
        %v1357 = vpop.f32.mrf.mxu0
        %v1358 = vadd.f32 0.0, %v1357
        %1359 = vmatmul.f32.gmra.mxu0 %v742
        %v1360 = vpop.f32.mrf.mxu0
        %v1361 = vadd.f32 0.0, %v1360
        %1362 = vmatmul.f32.gmra.mxu0 %v745
        %v1363 = vpop.f32.mrf.mxu0
        %v1364 = vadd.f32 0.0, %v1363
        %1365 = vmatmul.f32.gmra.mxu0 %v748
        %v1366 = vpop.f32.mrf.mxu0
        %v1367 = vadd.f32 0.0, %v1366
        %1368 = vmatmul.f32.gmra.mxu0 %v751
        %v1369 = vpop.f32.mrf.mxu0
        %v1370 = vadd.f32 0.0, %v1369
        %1371 = vmatmul.f32.gmra.mxu0 %v754
        %v1372 = vpop.f32.mrf.mxu0
        %v1373 = vadd.f32 0.0, %v1372
        %1374 = vdwg.mxu0
        %1375 = vmatpush.msra.mxu0 0.0
        %1376 = vmatpush.msra.mxu0 0.0
        %1377 = vmatpush.msra.mxu0 0.0
        %1378 = vmatpush.msra.mxu0 0.0
        %1379 = vmatpush.msra.mxu0 0.0
        %1380 = vmatpush.msra.mxu0 0.0
        %1381 = vmatpush.msra.mxu0 0.0
        %1382 = vmatpush.msra.mxu0 0.0
        %1383 = vmatpush.msra.mxu0 0.0
        %1384 = vmatpush.msra.mxu0 0.0
        %1385 = vmatpush.msra.mxu0 0.0
        %1386 = vmatpush.msra.mxu0 0.0
        %1387 = vmatpush.msra.mxu0 0.0
        %1388 = vmatpush.msra.mxu0 0.0
        %1389 = vmatpush.msra.mxu0 0.0
        %1390 = vmatpush.msra.mxu0 %v1331
        %1391 = vmatmul.f32.gmra.mxu0 %v795
        %v1392 = vpop.f32.mrf.mxu0
        %v1393 = vadd.f32 %v1355, %v1392
        %1394 = vmatmul.f32.gmra.mxu0 %v798
        %v1395 = vpop.f32.mrf.mxu0
        %v1396 = vadd.f32 %v1358, %v1395
        %1397 = vmatmul.f32.gmra.mxu0 %v801
        %v1398 = vpop.f32.mrf.mxu0
        %v1399 = vadd.f32 %v1361, %v1398
        %1400 = vmatmul.f32.gmra.mxu0 %v804
        %v1401 = vpop.f32.mrf.mxu0
        %v1402 = vadd.f32 %v1364, %v1401
        %1403 = vmatmul.f32.gmra.mxu0 %v807
        %v1404 = vpop.f32.mrf.mxu0
        %v1405 = vadd.f32 %v1367, %v1404
        %1406 = vmatmul.f32.gmra.mxu0 %v810
        %v1407 = vpop.f32.mrf.mxu0
        %v1408 = vadd.f32 %v1370, %v1407
        %1409 = vmatmul.f32.gmra.mxu0 %v813
        %v1410 = vpop.f32.mrf.mxu0
        %v1411 = vadd.f32 %v1373, %v1410
        %1412 = vdwg.mxu0
        %1413 = vmatpush.msra.mxu0 0.0
        %1414 = vmatpush.msra.mxu0 0.0
        %1415 = vmatpush.msra.mxu0 0.0
        %1416 = vmatpush.msra.mxu0 0.0
        %1417 = vmatpush.msra.mxu0 0.0
        %1418 = vmatpush.msra.mxu0 0.0
        %1419 = vmatpush.msra.mxu0 0.0
        %1420 = vmatpush.msra.mxu0 0.0
        %1421 = vmatpush.msra.mxu0 0.0
        %1422 = vmatpush.msra.mxu0 0.0
        %1423 = vmatpush.msra.mxu0 0.0
        %1424 = vmatpush.msra.mxu0 0.0
        %1425 = vmatpush.msra.mxu0 0.0
        %1426 = vmatpush.msra.mxu0 0.0
        %1427 = vmatpush.msra.mxu0 0.0
        %1428 = vmatpush.msra.mxu0 %v1336
        %1429 = vmatmul.f32.gmra.mxu0 %v854
        %v1430 = vpop.f32.mrf.mxu0
        %v1431 = vadd.f32 0.0, %v1430
        %1432 = vmatmul.f32.gmra.mxu0 %v857
        %v1433 = vpop.f32.mrf.mxu0
        %v1434 = vadd.f32 0.0, %v1433
        %1435 = vmatmul.f32.gmra.mxu0 %v860
        %v1436 = vpop.f32.mrf.mxu0
        %v1437 = vadd.f32 0.0, %v1436
        %1438 = vmatmul.f32.gmra.mxu0 %v863
        %v1439 = vpop.f32.mrf.mxu0
        %v1440 = vadd.f32 0.0, %v1439
        %1441 = vmatmul.f32.gmra.mxu0 %v866
        %v1442 = vpop.f32.mrf.mxu0
        %v1443 = vadd.f32 0.0, %v1442
        %1444 = vmatmul.f32.gmra.mxu0 %v869
        %v1445 = vpop.f32.mrf.mxu0
        %v1446 = vadd.f32 0.0, %v1445
        %1447 = vmatmul.f32.gmra.mxu0 %v872
        %v1448 = vpop.f32.mrf.mxu0
        %v1449 = vadd.f32 0.0, %v1448
        %1450 = vdwg.mxu0
        %v1451 = vadd.f32 %v1393, %v1431
        %v1452 = vadd.f32 %v1396, %v1434
        %v1453 = vadd.f32 %v1399, %v1437
        %v1454 = vadd.f32 %v1402, %v1440
        %v1455 = vadd.f32 %v1405, %v1443
        %v1456 = vadd.f32 %v1408, %v1446
        %v1457 = vadd.f32 %v1411, %v1449
        %v1458 = vadd.f32 %v1451, %v922
        %v1459 = vadd.f32 %v1452, %v927
        %v1460 = vadd.f32 %v1453, %v932
        %v1461 = vadd.f32 %v1454, %v937
        %v1462 = vadd.f32 %v1455, %v942
        %v1463 = vadd.f32 %v1456, %v947
        %v1464 = vadd.f32 %v1457, %v952
        %s1465 = scalar_lea.vmem [#allocation3], 168
        %1466 = vst [vmem:[%s1465] sm:$0xff] %v1458
        %1467 = vst [vmem:[%s1465 + $0x8] sm:$0xff] %v1459
        %1468 = vst [vmem:[%s1465 + $0x10] sm:$0xff] %v1460
        %1469 = vst [vmem:[%s1465 + $0x18] sm:$0xff] %v1461
        %1470 = vst [vmem:[%s1465 + $0x20] sm:$0xff] %v1462
        %1471 = vst [vmem:[%s1465 + $0x28] sm:$0xff] %v1463
        %1472 = vst [vmem:[%s1465 + $0x30] sm:$0xff] %v1464
        %1473 = vmatpush.msra.mxu0 0.0
        %1474 = vmatpush.msra.mxu0 0.0
        %1475 = vmatpush.msra.mxu0 0.0
        %1476 = vmatpush.msra.mxu0 0.0
        %1477 = vmatpush.msra.mxu0 0.0
        %1478 = vmatpush.msra.mxu0 0.0
        %1479 = vmatpush.msra.mxu0 0.0
        %1480 = vmatpush.msra.mxu0 0.0
        %1481 = vmatpush.msra.mxu0 0.0
        %1482 = vmatpush.msra.mxu0 0.0
        %1483 = vmatpush.msra.mxu0 0.0
        %1484 = vmatpush.msra.mxu0 0.0
        %1485 = vmatpush.msra.mxu0 0.0
        %1486 = vmatpush.msra.mxu0 0.0
        %1487 = vmatpush.msra.mxu0 0.0
        %1488 = vmatpush.msra.mxu0 %v1331
        %1489 = vmatmul.f32.gmra.mxu0 %v974
        %v1490 = vpop.f32.mrf.mxu0
        %v1491 = vadd.f32 %v971, %v1490
        %1492 = vdwg.mxu0
        %s1493 = scalar_lea.vmem [#allocation4], 24
        %1494 = vst [vmem:[%s1493] sm:$0xff] %v1491
        %s1495 = sadd.s32 32, %s724
        %s1496 = scalar_lea.vmem %s588, %s1495
        %v1497 = vld [vmem:[%s1496] sm:$0xff]
        %s1498 = sadd.s32 %s722, 5
        %s1499 = smul.u32 %s1498, 8
        %s1500 = scalar_lea.vmem [#allocation2], %s1499
        %v1501 = vld [vmem:[%s1500] sm:$0xff]
        %v1502 = vld [vmem:[%s1334] sm:$0xff]
        %1503 = vmatpush.msra.mxu0 0.0
        %1504 = vmatpush.msra.mxu0 0.0
        %1505 = vmatpush.msra.mxu0 0.0
        %1506 = vmatpush.msra.mxu0 0.0
        %1507 = vmatpush.msra.mxu0 0.0
        %1508 = vmatpush.msra.mxu0 0.0
        %1509 = vmatpush.msra.mxu0 0.0
        %1510 = vmatpush.msra.mxu0 0.0
        %1511 = vmatpush.msra.mxu0 0.0
        %1512 = vmatpush.msra.mxu0 0.0
        %1513 = vmatpush.msra.mxu0 0.0
        %1514 = vmatpush.msra.mxu0 0.0
        %1515 = vmatpush.msra.mxu0 0.0
        %1516 = vmatpush.msra.mxu0 0.0
        %1517 = vmatpush.msra.mxu0 0.0
        %1518 = vmatpush.msra.mxu0 %v1501
        %1519 = vmatmul.f32.gmra.mxu0 %v736
        %v1520 = vpop.f32.mrf.mxu0
        %v1521 = vadd.f32 0.0, %v1520
        %1522 = vmatmul.f32.gmra.mxu0 %v739
        %v1523 = vpop.f32.mrf.mxu0
        %v1524 = vadd.f32 0.0, %v1523
        %1525 = vmatmul.f32.gmra.mxu0 %v742
        %v1526 = vpop.f32.mrf.mxu0
        %v1527 = vadd.f32 0.0, %v1526
        %1528 = vmatmul.f32.gmra.mxu0 %v745
        %v1529 = vpop.f32.mrf.mxu0
        %v1530 = vadd.f32 0.0, %v1529
        %1531 = vmatmul.f32.gmra.mxu0 %v748
        %v1532 = vpop.f32.mrf.mxu0
        %v1533 = vadd.f32 0.0, %v1532
        %1534 = vmatmul.f32.gmra.mxu0 %v751
        %v1535 = vpop.f32.mrf.mxu0
        %v1536 = vadd.f32 0.0, %v1535
        %1537 = vmatmul.f32.gmra.mxu0 %v754
        %v1538 = vpop.f32.mrf.mxu0
        %v1539 = vadd.f32 0.0, %v1538
        %1540 = vdwg.mxu0
        %1541 = vmatpush.msra.mxu0 0.0
        %1542 = vmatpush.msra.mxu0 0.0
        %1543 = vmatpush.msra.mxu0 0.0
        %1544 = vmatpush.msra.mxu0 0.0
        %1545 = vmatpush.msra.mxu0 0.0
        %1546 = vmatpush.msra.mxu0 0.0
        %1547 = vmatpush.msra.mxu0 0.0
        %1548 = vmatpush.msra.mxu0 0.0
        %1549 = vmatpush.msra.mxu0 0.0
        %1550 = vmatpush.msra.mxu0 0.0
        %1551 = vmatpush.msra.mxu0 0.0
        %1552 = vmatpush.msra.mxu0 0.0
        %1553 = vmatpush.msra.mxu0 0.0
        %1554 = vmatpush.msra.mxu0 0.0
        %1555 = vmatpush.msra.mxu0 0.0
        %1556 = vmatpush.msra.mxu0 %v1497
        %1557 = vmatmul.f32.gmra.mxu0 %v795
        %v1558 = vpop.f32.mrf.mxu0
        %v1559 = vadd.f32 %v1521, %v1558
        %1560 = vmatmul.f32.gmra.mxu0 %v798
        %v1561 = vpop.f32.mrf.mxu0
        %v1562 = vadd.f32 %v1524, %v1561
        %1563 = vmatmul.f32.gmra.mxu0 %v801
        %v1564 = vpop.f32.mrf.mxu0
        %v1565 = vadd.f32 %v1527, %v1564
        %1566 = vmatmul.f32.gmra.mxu0 %v804
        %v1567 = vpop.f32.mrf.mxu0
        %v1568 = vadd.f32 %v1530, %v1567
        %1569 = vmatmul.f32.gmra.mxu0 %v807
        %v1570 = vpop.f32.mrf.mxu0
        %v1571 = vadd.f32 %v1533, %v1570
        %1572 = vmatmul.f32.gmra.mxu0 %v810
        %v1573 = vpop.f32.mrf.mxu0
        %v1574 = vadd.f32 %v1536, %v1573
        %1575 = vmatmul.f32.gmra.mxu0 %v813
        %v1576 = vpop.f32.mrf.mxu0
        %v1577 = vadd.f32 %v1539, %v1576
        %1578 = vdwg.mxu0
        %1579 = vmatpush.msra.mxu0 0.0
        %1580 = vmatpush.msra.mxu0 0.0
        %1581 = vmatpush.msra.mxu0 0.0
        %1582 = vmatpush.msra.mxu0 0.0
        %1583 = vmatpush.msra.mxu0 0.0
        %1584 = vmatpush.msra.mxu0 0.0
        %1585 = vmatpush.msra.mxu0 0.0
        %1586 = vmatpush.msra.mxu0 0.0
        %1587 = vmatpush.msra.mxu0 0.0
        %1588 = vmatpush.msra.mxu0 0.0
        %1589 = vmatpush.msra.mxu0 0.0
        %1590 = vmatpush.msra.mxu0 0.0
        %1591 = vmatpush.msra.mxu0 0.0
        %1592 = vmatpush.msra.mxu0 0.0
        %1593 = vmatpush.msra.mxu0 0.0
        %1594 = vmatpush.msra.mxu0 %v1502
        %1595 = vmatmul.f32.gmra.mxu0 %v854
        %v1596 = vpop.f32.mrf.mxu0
        %v1597 = vadd.f32 0.0, %v1596
        %1598 = vmatmul.f32.gmra.mxu0 %v857
        %v1599 = vpop.f32.mrf.mxu0
        %v1600 = vadd.f32 0.0, %v1599
        %1601 = vmatmul.f32.gmra.mxu0 %v860
        %v1602 = vpop.f32.mrf.mxu0
        %v1603 = vadd.f32 0.0, %v1602
        %1604 = vmatmul.f32.gmra.mxu0 %v863
        %v1605 = vpop.f32.mrf.mxu0
        %v1606 = vadd.f32 0.0, %v1605
        %1607 = vmatmul.f32.gmra.mxu0 %v866
        %v1608 = vpop.f32.mrf.mxu0
        %v1609 = vadd.f32 0.0, %v1608
        %1610 = vmatmul.f32.gmra.mxu0 %v869
        %v1611 = vpop.f32.mrf.mxu0
        %v1612 = vadd.f32 0.0, %v1611
        %1613 = vmatmul.f32.gmra.mxu0 %v872
        %v1614 = vpop.f32.mrf.mxu0
        %v1615 = vadd.f32 0.0, %v1614
        %1616 = vdwg.mxu0
        %v1617 = vadd.f32 %v1559, %v1597
        %v1618 = vadd.f32 %v1562, %v1600
        %v1619 = vadd.f32 %v1565, %v1603
        %v1620 = vadd.f32 %v1568, %v1606
        %v1621 = vadd.f32 %v1571, %v1609
        %v1622 = vadd.f32 %v1574, %v1612
        %v1623 = vadd.f32 %v1577, %v1615
        %v1624 = vadd.f32 %v1617, %v922
        %v1625 = vadd.f32 %v1618, %v927
        %v1626 = vadd.f32 %v1619, %v932
        %v1627 = vadd.f32 %v1620, %v937
        %v1628 = vadd.f32 %v1621, %v942
        %v1629 = vadd.f32 %v1622, %v947
        %v1630 = vadd.f32 %v1623, %v952
        %s1631 = scalar_lea.vmem [#allocation3], 224
        %1632 = vst [vmem:[%s1631] sm:$0xff] %v1624
        %1633 = vst [vmem:[%s1631 + $0x8] sm:$0xff] %v1625
        %1634 = vst [vmem:[%s1631 + $0x10] sm:$0xff] %v1626
        %1635 = vst [vmem:[%s1631 + $0x18] sm:$0xff] %v1627
        %1636 = vst [vmem:[%s1631 + $0x20] sm:$0xff] %v1628
        %1637 = vst [vmem:[%s1631 + $0x28] sm:$0xff] %v1629
        %1638 = vst [vmem:[%s1631 + $0x30] sm:$0xff] %v1630
        %1639 = vmatpush.msra.mxu0 0.0
        %1640 = vmatpush.msra.mxu0 0.0
        %1641 = vmatpush.msra.mxu0 0.0
        %1642 = vmatpush.msra.mxu0 0.0
        %1643 = vmatpush.msra.mxu0 0.0
        %1644 = vmatpush.msra.mxu0 0.0
        %1645 = vmatpush.msra.mxu0 0.0
        %1646 = vmatpush.msra.mxu0 0.0
        %1647 = vmatpush.msra.mxu0 0.0
        %1648 = vmatpush.msra.mxu0 0.0
        %1649 = vmatpush.msra.mxu0 0.0
        %1650 = vmatpush.msra.mxu0 0.0
        %1651 = vmatpush.msra.mxu0 0.0
        %1652 = vmatpush.msra.mxu0 0.0
        %1653 = vmatpush.msra.mxu0 0.0
        %1654 = vmatpush.msra.mxu0 %v1497
        %1655 = vmatmul.f32.gmra.mxu0 %v974
        %v1656 = vpop.f32.mrf.mxu0
        %v1657 = vadd.f32 %v971, %v1656
        %1658 = vdwg.mxu0
        %s1659 = scalar_lea.vmem [#allocation4], 32
        %1660 = vst [vmem:[%s1659] sm:$0xff] %v1657
        %s1661 = sadd.s32 40, %s724
        %s1662 = scalar_lea.vmem %s588, %s1661
        %v1663 = vld [vmem:[%s1662] sm:$0xff]
        %s1664 = sadd.s32 %s722, 6
        %s1665 = smul.u32 %s1664, 8
        %s1666 = scalar_lea.vmem [#allocation2], %s1665
        %v1667 = vld [vmem:[%s1666] sm:$0xff]
        %v1668 = vld [vmem:[%s1500] sm:$0xff]
        %1669 = vmatpush.msra.mxu0 0.0
        %1670 = vmatpush.msra.mxu0 0.0
        %1671 = vmatpush.msra.mxu0 0.0
        %1672 = vmatpush.msra.mxu0 0.0
        %1673 = vmatpush.msra.mxu0 0.0
        %1674 = vmatpush.msra.mxu0 0.0
        %1675 = vmatpush.msra.mxu0 0.0
        %1676 = vmatpush.msra.mxu0 0.0
        %1677 = vmatpush.msra.mxu0 0.0
        %1678 = vmatpush.msra.mxu0 0.0
        %1679 = vmatpush.msra.mxu0 0.0
        %1680 = vmatpush.msra.mxu0 0.0
        %1681 = vmatpush.msra.mxu0 0.0
        %1682 = vmatpush.msra.mxu0 0.0
        %1683 = vmatpush.msra.mxu0 0.0
        %1684 = vmatpush.msra.mxu0 %v1667
        %1685 = vmatmul.f32.gmra.mxu0 %v736
        %v1686 = vpop.f32.mrf.mxu0
        %v1687 = vadd.f32 0.0, %v1686
        %1688 = vmatmul.f32.gmra.mxu0 %v739
        %v1689 = vpop.f32.mrf.mxu0
        %v1690 = vadd.f32 0.0, %v1689
        %1691 = vmatmul.f32.gmra.mxu0 %v742
        %v1692 = vpop.f32.mrf.mxu0
        %v1693 = vadd.f32 0.0, %v1692
        %1694 = vmatmul.f32.gmra.mxu0 %v745
        %v1695 = vpop.f32.mrf.mxu0
        %v1696 = vadd.f32 0.0, %v1695
        %1697 = vmatmul.f32.gmra.mxu0 %v748
        %v1698 = vpop.f32.mrf.mxu0
        %v1699 = vadd.f32 0.0, %v1698
        %1700 = vmatmul.f32.gmra.mxu0 %v751
        %v1701 = vpop.f32.mrf.mxu0
        %v1702 = vadd.f32 0.0, %v1701
        %1703 = vmatmul.f32.gmra.mxu0 %v754
        %v1704 = vpop.f32.mrf.mxu0
        %v1705 = vadd.f32 0.0, %v1704
        %1706 = vdwg.mxu0
        %1707 = vmatpush.msra.mxu0 0.0
        %1708 = vmatpush.msra.mxu0 0.0
        %1709 = vmatpush.msra.mxu0 0.0
        %1710 = vmatpush.msra.mxu0 0.0
        %1711 = vmatpush.msra.mxu0 0.0
        %1712 = vmatpush.msra.mxu0 0.0
        %1713 = vmatpush.msra.mxu0 0.0
        %1714 = vmatpush.msra.mxu0 0.0
        %1715 = vmatpush.msra.mxu0 0.0
        %1716 = vmatpush.msra.mxu0 0.0
        %1717 = vmatpush.msra.mxu0 0.0
        %1718 = vmatpush.msra.mxu0 0.0
        %1719 = vmatpush.msra.mxu0 0.0
        %1720 = vmatpush.msra.mxu0 0.0
        %1721 = vmatpush.msra.mxu0 0.0
        %1722 = vmatpush.msra.mxu0 %v1663
        %1723 = vmatmul.f32.gmra.mxu0 %v795
        %v1724 = vpop.f32.mrf.mxu0
        %v1725 = vadd.f32 %v1687, %v1724
        %1726 = vmatmul.f32.gmra.mxu0 %v798
        %v1727 = vpop.f32.mrf.mxu0
        %v1728 = vadd.f32 %v1690, %v1727
        %1729 = vmatmul.f32.gmra.mxu0 %v801
        %v1730 = vpop.f32.mrf.mxu0
        %v1731 = vadd.f32 %v1693, %v1730
        %1732 = vmatmul.f32.gmra.mxu0 %v804
        %v1733 = vpop.f32.mrf.mxu0
        %v1734 = vadd.f32 %v1696, %v1733
        %1735 = vmatmul.f32.gmra.mxu0 %v807
        %v1736 = vpop.f32.mrf.mxu0
        %v1737 = vadd.f32 %v1699, %v1736
        %1738 = vmatmul.f32.gmra.mxu0 %v810
        %v1739 = vpop.f32.mrf.mxu0
        %v1740 = vadd.f32 %v1702, %v1739
        %1741 = vmatmul.f32.gmra.mxu0 %v813
        %v1742 = vpop.f32.mrf.mxu0
        %v1743 = vadd.f32 %v1705, %v1742
        %1744 = vdwg.mxu0
        %1745 = vmatpush.msra.mxu0 0.0
        %1746 = vmatpush.msra.mxu0 0.0
        %1747 = vmatpush.msra.mxu0 0.0
        %1748 = vmatpush.msra.mxu0 0.0
        %1749 = vmatpush.msra.mxu0 0.0
        %1750 = vmatpush.msra.mxu0 0.0
        %1751 = vmatpush.msra.mxu0 0.0
        %1752 = vmatpush.msra.mxu0 0.0
        %1753 = vmatpush.msra.mxu0 0.0
        %1754 = vmatpush.msra.mxu0 0.0
        %1755 = vmatpush.msra.mxu0 0.0
        %1756 = vmatpush.msra.mxu0 0.0
        %1757 = vmatpush.msra.mxu0 0.0
        %1758 = vmatpush.msra.mxu0 0.0
        %1759 = vmatpush.msra.mxu0 0.0
        %1760 = vmatpush.msra.mxu0 %v1668
        %1761 = vmatmul.f32.gmra.mxu0 %v854
        %v1762 = vpop.f32.mrf.mxu0
        %v1763 = vadd.f32 0.0, %v1762
        %1764 = vmatmul.f32.gmra.mxu0 %v857
        %v1765 = vpop.f32.mrf.mxu0
        %v1766 = vadd.f32 0.0, %v1765
        %1767 = vmatmul.f32.gmra.mxu0 %v860
        %v1768 = vpop.f32.mrf.mxu0
        %v1769 = vadd.f32 0.0, %v1768
        %1770 = vmatmul.f32.gmra.mxu0 %v863
        %v1771 = vpop.f32.mrf.mxu0
        %v1772 = vadd.f32 0.0, %v1771
        %1773 = vmatmul.f32.gmra.mxu0 %v866
        %v1774 = vpop.f32.mrf.mxu0
        %v1775 = vadd.f32 0.0, %v1774
        %1776 = vmatmul.f32.gmra.mxu0 %v869
        %v1777 = vpop.f32.mrf.mxu0
        %v1778 = vadd.f32 0.0, %v1777
        %1779 = vmatmul.f32.gmra.mxu0 %v872
        %v1780 = vpop.f32.mrf.mxu0
        %v1781 = vadd.f32 0.0, %v1780
        %1782 = vdwg.mxu0
        %v1783 = vadd.f32 %v1725, %v1763
        %v1784 = vadd.f32 %v1728, %v1766
        %v1785 = vadd.f32 %v1731, %v1769
        %v1786 = vadd.f32 %v1734, %v1772
        %v1787 = vadd.f32 %v1737, %v1775
        %v1788 = vadd.f32 %v1740, %v1778
        %v1789 = vadd.f32 %v1743, %v1781
        %v1790 = vadd.f32 %v1783, %v922
        %v1791 = vadd.f32 %v1784, %v927
        %v1792 = vadd.f32 %v1785, %v932
        %v1793 = vadd.f32 %v1786, %v937
        %v1794 = vadd.f32 %v1787, %v942
        %v1795 = vadd.f32 %v1788, %v947
        %v1796 = vadd.f32 %v1789, %v952
        %s1797 = scalar_lea.vmem [#allocation3], 280
        %1798 = vst [vmem:[%s1797] sm:$0xff] %v1790
        %1799 = vst [vmem:[%s1797 + $0x8] sm:$0xff] %v1791
        %1800 = vst [vmem:[%s1797 + $0x10] sm:$0xff] %v1792
        %1801 = vst [vmem:[%s1797 + $0x18] sm:$0xff] %v1793
        %1802 = vst [vmem:[%s1797 + $0x20] sm:$0xff] %v1794
        %1803 = vst [vmem:[%s1797 + $0x28] sm:$0xff] %v1795
        %1804 = vst [vmem:[%s1797 + $0x30] sm:$0xff] %v1796
        %1805 = vmatpush.msra.mxu0 0.0
        %1806 = vmatpush.msra.mxu0 0.0
        %1807 = vmatpush.msra.mxu0 0.0
        %1808 = vmatpush.msra.mxu0 0.0
        %1809 = vmatpush.msra.mxu0 0.0
        %1810 = vmatpush.msra.mxu0 0.0
        %1811 = vmatpush.msra.mxu0 0.0
        %1812 = vmatpush.msra.mxu0 0.0
        %1813 = vmatpush.msra.mxu0 0.0
        %1814 = vmatpush.msra.mxu0 0.0
        %1815 = vmatpush.msra.mxu0 0.0
        %1816 = vmatpush.msra.mxu0 0.0
        %1817 = vmatpush.msra.mxu0 0.0
        %1818 = vmatpush.msra.mxu0 0.0
        %1819 = vmatpush.msra.mxu0 0.0
        %1820 = vmatpush.msra.mxu0 %v1663
        %1821 = vmatmul.f32.gmra.mxu0 %v974
        %v1822 = vpop.f32.mrf.mxu0
        %v1823 = vadd.f32 %v971, %v1822
        %1824 = vdwg.mxu0
        %s1825 = scalar_lea.vmem [#allocation4], 40
        %1826 = vst [vmem:[%s1825] sm:$0xff] %v1823
        %s1827 = sadd.s32 48, %s724
        %s1828 = scalar_lea.vmem %s588, %s1827
        %v1829 = vld [vmem:[%s1828] sm:$0xff]
        %s1830 = sadd.s32 %s722, 7
        %s1831 = smul.u32 %s1830, 8
        %s1832 = scalar_lea.vmem [#allocation2], %s1831
        %v1833 = vld [vmem:[%s1832] sm:$0xff]
        %v1834 = vld [vmem:[%s1666] sm:$0xff]
        %1835 = vmatpush.msra.mxu0 0.0
        %1836 = vmatpush.msra.mxu0 0.0
        %1837 = vmatpush.msra.mxu0 0.0
        %1838 = vmatpush.msra.mxu0 0.0
        %1839 = vmatpush.msra.mxu0 0.0
        %1840 = vmatpush.msra.mxu0 0.0
        %1841 = vmatpush.msra.mxu0 0.0
        %1842 = vmatpush.msra.mxu0 0.0
        %1843 = vmatpush.msra.mxu0 0.0
        %1844 = vmatpush.msra.mxu0 0.0
        %1845 = vmatpush.msra.mxu0 0.0
        %1846 = vmatpush.msra.mxu0 0.0
        %1847 = vmatpush.msra.mxu0 0.0
        %1848 = vmatpush.msra.mxu0 0.0
        %1849 = vmatpush.msra.mxu0 0.0
        %1850 = vmatpush.msra.mxu0 %v1833
        %1851 = vmatmul.f32.gmra.mxu0 %v736
        %v1852 = vpop.f32.mrf.mxu0
        %v1853 = vadd.f32 0.0, %v1852
        %1854 = vmatmul.f32.gmra.mxu0 %v739
        %v1855 = vpop.f32.mrf.mxu0
        %v1856 = vadd.f32 0.0, %v1855
        %1857 = vmatmul.f32.gmra.mxu0 %v742
        %v1858 = vpop.f32.mrf.mxu0
        %v1859 = vadd.f32 0.0, %v1858
        %1860 = vmatmul.f32.gmra.mxu0 %v745
        %v1861 = vpop.f32.mrf.mxu0
        %v1862 = vadd.f32 0.0, %v1861
        %1863 = vmatmul.f32.gmra.mxu0 %v748
        %v1864 = vpop.f32.mrf.mxu0
        %v1865 = vadd.f32 0.0, %v1864
        %1866 = vmatmul.f32.gmra.mxu0 %v751
        %v1867 = vpop.f32.mrf.mxu0
        %v1868 = vadd.f32 0.0, %v1867
        %1869 = vmatmul.f32.gmra.mxu0 %v754
        %v1870 = vpop.f32.mrf.mxu0
        %v1871 = vadd.f32 0.0, %v1870
        %1872 = vdwg.mxu0
        %1873 = vmatpush.msra.mxu0 0.0
        %1874 = vmatpush.msra.mxu0 0.0
        %1875 = vmatpush.msra.mxu0 0.0
        %1876 = vmatpush.msra.mxu0 0.0
        %1877 = vmatpush.msra.mxu0 0.0
        %1878 = vmatpush.msra.mxu0 0.0
        %1879 = vmatpush.msra.mxu0 0.0
        %1880 = vmatpush.msra.mxu0 0.0
        %1881 = vmatpush.msra.mxu0 0.0
        %1882 = vmatpush.msra.mxu0 0.0
        %1883 = vmatpush.msra.mxu0 0.0
        %1884 = vmatpush.msra.mxu0 0.0
        %1885 = vmatpush.msra.mxu0 0.0
        %1886 = vmatpush.msra.mxu0 0.0
        %1887 = vmatpush.msra.mxu0 0.0
        %1888 = vmatpush.msra.mxu0 %v1829
        %1889 = vmatmul.f32.gmra.mxu0 %v795
        %v1890 = vpop.f32.mrf.mxu0
        %v1891 = vadd.f32 %v1853, %v1890
        %1892 = vmatmul.f32.gmra.mxu0 %v798
        %v1893 = vpop.f32.mrf.mxu0
        %v1894 = vadd.f32 %v1856, %v1893
        %1895 = vmatmul.f32.gmra.mxu0 %v801
        %v1896 = vpop.f32.mrf.mxu0
        %v1897 = vadd.f32 %v1859, %v1896
        %1898 = vmatmul.f32.gmra.mxu0 %v804
        %v1899 = vpop.f32.mrf.mxu0
        %v1900 = vadd.f32 %v1862, %v1899
        %1901 = vmatmul.f32.gmra.mxu0 %v807
        %v1902 = vpop.f32.mrf.mxu0
        %v1903 = vadd.f32 %v1865, %v1902
        %1904 = vmatmul.f32.gmra.mxu0 %v810
        %v1905 = vpop.f32.mrf.mxu0
        %v1906 = vadd.f32 %v1868, %v1905
        %1907 = vmatmul.f32.gmra.mxu0 %v813
        %v1908 = vpop.f32.mrf.mxu0
        %v1909 = vadd.f32 %v1871, %v1908
        %1910 = vdwg.mxu0
        %1911 = vmatpush.msra.mxu0 0.0
        %1912 = vmatpush.msra.mxu0 0.0
        %1913 = vmatpush.msra.mxu0 0.0
        %1914 = vmatpush.msra.mxu0 0.0
        %1915 = vmatpush.msra.mxu0 0.0
        %1916 = vmatpush.msra.mxu0 0.0
        %1917 = vmatpush.msra.mxu0 0.0
        %1918 = vmatpush.msra.mxu0 0.0
        %1919 = vmatpush.msra.mxu0 0.0
        %1920 = vmatpush.msra.mxu0 0.0
        %1921 = vmatpush.msra.mxu0 0.0
        %1922 = vmatpush.msra.mxu0 0.0
        %1923 = vmatpush.msra.mxu0 0.0
        %1924 = vmatpush.msra.mxu0 0.0
        %1925 = vmatpush.msra.mxu0 0.0
        %1926 = vmatpush.msra.mxu0 %v1834
        %1927 = vmatmul.f32.gmra.mxu0 %v854
        %v1928 = vpop.f32.mrf.mxu0
        %v1929 = vadd.f32 0.0, %v1928
        %1930 = vmatmul.f32.gmra.mxu0 %v857
        %v1931 = vpop.f32.mrf.mxu0
        %v1932 = vadd.f32 0.0, %v1931
        %1933 = vmatmul.f32.gmra.mxu0 %v860
        %v1934 = vpop.f32.mrf.mxu0
        %v1935 = vadd.f32 0.0, %v1934
        %1936 = vmatmul.f32.gmra.mxu0 %v863
        %v1937 = vpop.f32.mrf.mxu0
        %v1938 = vadd.f32 0.0, %v1937
        %1939 = vmatmul.f32.gmra.mxu0 %v866
        %v1940 = vpop.f32.mrf.mxu0
        %v1941 = vadd.f32 0.0, %v1940
        %1942 = vmatmul.f32.gmra.mxu0 %v869
        %v1943 = vpop.f32.mrf.mxu0
        %v1944 = vadd.f32 0.0, %v1943
        %1945 = vmatmul.f32.gmra.mxu0 %v872
        %v1946 = vpop.f32.mrf.mxu0
        %v1947 = vadd.f32 0.0, %v1946
        %1948 = vdwg.mxu0
        %v1949 = vadd.f32 %v1891, %v1929
        %v1950 = vadd.f32 %v1894, %v1932
        %v1951 = vadd.f32 %v1897, %v1935
        %v1952 = vadd.f32 %v1900, %v1938
        %v1953 = vadd.f32 %v1903, %v1941
        %v1954 = vadd.f32 %v1906, %v1944
        %v1955 = vadd.f32 %v1909, %v1947
        %v1956 = vadd.f32 %v1949, %v922
        %v1957 = vadd.f32 %v1950, %v927
        %v1958 = vadd.f32 %v1951, %v932
        %v1959 = vadd.f32 %v1952, %v937
        %v1960 = vadd.f32 %v1953, %v942
        %v1961 = vadd.f32 %v1954, %v947
        %v1962 = vadd.f32 %v1955, %v952
        %s1963 = scalar_lea.vmem [#allocation3], 336
        %1964 = vst [vmem:[%s1963] sm:$0xff] %v1956
        %1965 = vst [vmem:[%s1963 + $0x8] sm:$0xff] %v1957
        %1966 = vst [vmem:[%s1963 + $0x10] sm:$0xff] %v1958
        %1967 = vst [vmem:[%s1963 + $0x18] sm:$0xff] %v1959
        %1968 = vst [vmem:[%s1963 + $0x20] sm:$0xff] %v1960
        %1969 = vst [vmem:[%s1963 + $0x28] sm:$0xff] %v1961
        %1970 = vst [vmem:[%s1963 + $0x30] sm:$0xff] %v1962
        %1971 = vmatpush.msra.mxu0 0.0
        %1972 = vmatpush.msra.mxu0 0.0
        %1973 = vmatpush.msra.mxu0 0.0
        %1974 = vmatpush.msra.mxu0 0.0
        %1975 = vmatpush.msra.mxu0 0.0
        %1976 = vmatpush.msra.mxu0 0.0
        %1977 = vmatpush.msra.mxu0 0.0
        %1978 = vmatpush.msra.mxu0 0.0
        %1979 = vmatpush.msra.mxu0 0.0
        %1980 = vmatpush.msra.mxu0 0.0
        %1981 = vmatpush.msra.mxu0 0.0
        %1982 = vmatpush.msra.mxu0 0.0
        %1983 = vmatpush.msra.mxu0 0.0
        %1984 = vmatpush.msra.mxu0 0.0
        %1985 = vmatpush.msra.mxu0 0.0
        %1986 = vmatpush.msra.mxu0 %v1829
        %1987 = vmatmul.f32.gmra.mxu0 %v974
        %v1988 = vpop.f32.mrf.mxu0
        %v1989 = vadd.f32 %v971, %v1988
        %1990 = vdwg.mxu0
        %s1991 = scalar_lea.vmem [#allocation4], 48
        %1992 = vst [vmem:[%s1991] sm:$0xff] %v1989
        %s1993 = sadd.s32 56, %s724
        %s1994 = scalar_lea.vmem %s588, %s1993
        %v1995 = vld [vmem:[%s1994] sm:$0xff]
        %s1996 = sadd.s32 %s722, 8
        %s1997 = smul.u32 %s1996, 8
        %s1998 = scalar_lea.vmem [#allocation2], %s1997
        %v1999 = vld [vmem:[%s1998] sm:$0xff]
        %v2000 = vld [vmem:[%s1832] sm:$0xff]
        %2001 = vmatpush.msra.mxu0 0.0
        %2002 = vmatpush.msra.mxu0 0.0
        %2003 = vmatpush.msra.mxu0 0.0
        %2004 = vmatpush.msra.mxu0 0.0
        %2005 = vmatpush.msra.mxu0 0.0
        %2006 = vmatpush.msra.mxu0 0.0
        %2007 = vmatpush.msra.mxu0 0.0
        %2008 = vmatpush.msra.mxu0 0.0
        %2009 = vmatpush.msra.mxu0 0.0
        %2010 = vmatpush.msra.mxu0 0.0
        %2011 = vmatpush.msra.mxu0 0.0
        %2012 = vmatpush.msra.mxu0 0.0
        %2013 = vmatpush.msra.mxu0 0.0
        %2014 = vmatpush.msra.mxu0 0.0
        %2015 = vmatpush.msra.mxu0 0.0
        %2016 = vmatpush.msra.mxu0 %v1999
        %2017 = vmatmul.f32.gmra.mxu0 %v736
        %v2018 = vpop.f32.mrf.mxu0
        %v2019 = vadd.f32 0.0, %v2018
        %2020 = vmatmul.f32.gmra.mxu0 %v739
        %v2021 = vpop.f32.mrf.mxu0
        %v2022 = vadd.f32 0.0, %v2021
        %2023 = vmatmul.f32.gmra.mxu0 %v742
        %v2024 = vpop.f32.mrf.mxu0
        %v2025 = vadd.f32 0.0, %v2024
        %2026 = vmatmul.f32.gmra.mxu0 %v745
        %v2027 = vpop.f32.mrf.mxu0
        %v2028 = vadd.f32 0.0, %v2027
        %2029 = vmatmul.f32.gmra.mxu0 %v748
        %v2030 = vpop.f32.mrf.mxu0
        %v2031 = vadd.f32 0.0, %v2030
        %2032 = vmatmul.f32.gmra.mxu0 %v751
        %v2033 = vpop.f32.mrf.mxu0
        %v2034 = vadd.f32 0.0, %v2033
        %2035 = vmatmul.f32.gmra.mxu0 %v754
        %v2036 = vpop.f32.mrf.mxu0
        %v2037 = vadd.f32 0.0, %v2036
        %2038 = vdwg.mxu0
        %2039 = vmatpush.msra.mxu0 0.0
        %2040 = vmatpush.msra.mxu0 0.0
        %2041 = vmatpush.msra.mxu0 0.0
        %2042 = vmatpush.msra.mxu0 0.0
        %2043 = vmatpush.msra.mxu0 0.0
        %2044 = vmatpush.msra.mxu0 0.0
        %2045 = vmatpush.msra.mxu0 0.0
        %2046 = vmatpush.msra.mxu0 0.0
        %2047 = vmatpush.msra.mxu0 0.0
        %2048 = vmatpush.msra.mxu0 0.0
        %2049 = vmatpush.msra.mxu0 0.0
        %2050 = vmatpush.msra.mxu0 0.0
        %2051 = vmatpush.msra.mxu0 0.0
        %2052 = vmatpush.msra.mxu0 0.0
        %2053 = vmatpush.msra.mxu0 0.0
        %2054 = vmatpush.msra.mxu0 %v1995
        %2055 = vmatmul.f32.gmra.mxu0 %v795
        %v2056 = vpop.f32.mrf.mxu0
        %v2057 = vadd.f32 %v2019, %v2056
        %2058 = vmatmul.f32.gmra.mxu0 %v798
        %v2059 = vpop.f32.mrf.mxu0
        %v2060 = vadd.f32 %v2022, %v2059
        %2061 = vmatmul.f32.gmra.mxu0 %v801
        %v2062 = vpop.f32.mrf.mxu0
        %v2063 = vadd.f32 %v2025, %v2062
        %2064 = vmatmul.f32.gmra.mxu0 %v804
        %v2065 = vpop.f32.mrf.mxu0
        %v2066 = vadd.f32 %v2028, %v2065
        %2067 = vmatmul.f32.gmra.mxu0 %v807
        %v2068 = vpop.f32.mrf.mxu0
        %v2069 = vadd.f32 %v2031, %v2068
        %2070 = vmatmul.f32.gmra.mxu0 %v810
        %v2071 = vpop.f32.mrf.mxu0
        %v2072 = vadd.f32 %v2034, %v2071
        %2073 = vmatmul.f32.gmra.mxu0 %v813
        %v2074 = vpop.f32.mrf.mxu0
        %v2075 = vadd.f32 %v2037, %v2074
        %2076 = vdwg.mxu0
        %2077 = vmatpush.msra.mxu0 0.0
        %2078 = vmatpush.msra.mxu0 0.0
        %2079 = vmatpush.msra.mxu0 0.0
        %2080 = vmatpush.msra.mxu0 0.0
        %2081 = vmatpush.msra.mxu0 0.0
        %2082 = vmatpush.msra.mxu0 0.0
        %2083 = vmatpush.msra.mxu0 0.0
        %2084 = vmatpush.msra.mxu0 0.0
        %2085 = vmatpush.msra.mxu0 0.0
        %2086 = vmatpush.msra.mxu0 0.0
        %2087 = vmatpush.msra.mxu0 0.0
        %2088 = vmatpush.msra.mxu0 0.0
        %2089 = vmatpush.msra.mxu0 0.0
        %2090 = vmatpush.msra.mxu0 0.0
        %2091 = vmatpush.msra.mxu0 0.0
        %2092 = vmatpush.msra.mxu0 %v2000
        %2093 = vmatmul.f32.gmra.mxu0 %v854
        %v2094 = vpop.f32.mrf.mxu0
        %v2095 = vadd.f32 0.0, %v2094
        %2096 = vmatmul.f32.gmra.mxu0 %v857
        %v2097 = vpop.f32.mrf.mxu0
        %v2098 = vadd.f32 0.0, %v2097
        %2099 = vmatmul.f32.gmra.mxu0 %v860
        %v2100 = vpop.f32.mrf.mxu0
        %v2101 = vadd.f32 0.0, %v2100
        %2102 = vmatmul.f32.gmra.mxu0 %v863
        %v2103 = vpop.f32.mrf.mxu0
        %v2104 = vadd.f32 0.0, %v2103
        %2105 = vmatmul.f32.gmra.mxu0 %v866
        %v2106 = vpop.f32.mrf.mxu0
        %v2107 = vadd.f32 0.0, %v2106
        %2108 = vmatmul.f32.gmra.mxu0 %v869
        %v2109 = vpop.f32.mrf.mxu0
        %v2110 = vadd.f32 0.0, %v2109
        %2111 = vmatmul.f32.gmra.mxu0 %v872
        %v2112 = vpop.f32.mrf.mxu0
        %v2113 = vadd.f32 0.0, %v2112
        %2114 = vdwg.mxu0
        %v2115 = vadd.f32 %v2057, %v2095
        %v2116 = vadd.f32 %v2060, %v2098
        %v2117 = vadd.f32 %v2063, %v2101
        %v2118 = vadd.f32 %v2066, %v2104
        %v2119 = vadd.f32 %v2069, %v2107
        %v2120 = vadd.f32 %v2072, %v2110
        %v2121 = vadd.f32 %v2075, %v2113
        %v2122 = vadd.f32 %v2115, %v922
        %v2123 = vadd.f32 %v2116, %v927
        %v2124 = vadd.f32 %v2117, %v932
        %v2125 = vadd.f32 %v2118, %v937
        %v2126 = vadd.f32 %v2119, %v942
        %v2127 = vadd.f32 %v2120, %v947
        %v2128 = vadd.f32 %v2121, %v952
        %s2129 = scalar_lea.vmem [#allocation3], 392
        %2130 = vst [vmem:[%s2129] sm:$0xff] %v2122
        %2131 = vst [vmem:[%s2129 + $0x8] sm:$0xff] %v2123
        %2132 = vst [vmem:[%s2129 + $0x10] sm:$0xff] %v2124
        %2133 = vst [vmem:[%s2129 + $0x18] sm:$0xff] %v2125
        %2134 = vst [vmem:[%s2129 + $0x20] sm:$0xff] %v2126
        %2135 = vst [vmem:[%s2129 + $0x28] sm:$0xff] %v2127
        %2136 = vst [vmem:[%s2129 + $0x30] sm:$0xff] %v2128
        %2137 = vmatpush.msra.mxu0 0.0
        %2138 = vmatpush.msra.mxu0 0.0
        %2139 = vmatpush.msra.mxu0 0.0
        %2140 = vmatpush.msra.mxu0 0.0
        %2141 = vmatpush.msra.mxu0 0.0
        %2142 = vmatpush.msra.mxu0 0.0
        %2143 = vmatpush.msra.mxu0 0.0
        %2144 = vmatpush.msra.mxu0 0.0
        %2145 = vmatpush.msra.mxu0 0.0
        %2146 = vmatpush.msra.mxu0 0.0
        %2147 = vmatpush.msra.mxu0 0.0
        %2148 = vmatpush.msra.mxu0 0.0
        %2149 = vmatpush.msra.mxu0 0.0
        %2150 = vmatpush.msra.mxu0 0.0
        %2151 = vmatpush.msra.mxu0 0.0
        %2152 = vmatpush.msra.mxu0 %v1995
        %2153 = vmatmul.f32.gmra.mxu0 %v974
        %v2154 = vpop.f32.mrf.mxu0
        %v2155 = vadd.f32 %v971, %v2154
        %2156 = vdwg.mxu0
        %s2157 = scalar_lea.vmem [#allocation4], 56
        %2158 = vst [vmem:[%s2157] sm:$0xff] %v2155
        %v2159 = vld [vmem:[%s729] sm:$0xff]
        %v2160 = vld [vmem:[%s732] sm:$0xff]
        %s2161 = smul.u32 %s723, 8
        %s2162 = scalar_lea.vmem [#allocation2], %s2161
        %v2163 = vld [vmem:[%s2162] sm:$0xff]
        %v2164 = vld [vmem:[#allocation3] sm:$0xff]
        %v2165 = vld [vmem:[#allocation3 + $0x8] sm:$0xff]
        %v2166 = vld [vmem:[#allocation3 + $0x10] sm:$0xff]
        %v2167 = vld [vmem:[#allocation3 + $0x18] sm:$0xff]
        %v2168 = vld [vmem:[#allocation3 + $0x20] sm:$0xff]
        %v2169 = vld [vmem:[#allocation3 + $0x28] sm:$0xff]
        %v2170 = vld [vmem:[#allocation3 + $0x30] sm:$0xff]
        %v2172 = vsel %vm734, %v652, 0
        %v2175 = vsel %vm734, %v653, 0
        %v2178 = vsel %vm734, %v654, 0
        %v2181 = vsel %vm734, %v655, 0
        %v2184 = vsel %vm734, %v656, 0
        %v2187 = vsel %vm734, %v657, 0
        %v2190 = vsel %vm734, %v658, 0
        %2192 = vmatpush.msra.mxu0 0.0
        %2193 = vmatpush.msra.mxu0 0.0
        %2194 = vmatpush.msra.mxu0 0.0
        %2195 = vmatpush.msra.mxu0 0.0
        %2196 = vmatpush.msra.mxu0 0.0
        %2197 = vmatpush.msra.mxu0 0.0
        %2198 = vmatpush.msra.mxu0 0.0
        %2199 = vmatpush.msra.mxu0 0.0
        %2200 = vmatpush.msra.mxu0 0.0
        %2201 = vmatpush.msra.mxu0 0.0
        %2202 = vmatpush.msra.mxu0 0.0
        %2203 = vmatpush.msra.mxu0 0.0
        %2204 = vmatpush.msra.mxu0 0.0
        %2205 = vmatpush.msra.mxu0 0.0
        %2206 = vmatpush.msra.mxu0 0.0
        %2207 = vmatpush.msra.mxu0 %v2163
        %2208 = vmatmul.f32.gmra.mxu0 %v2172
        %v2209 = vpop.f32.mrf.mxu0
        %v2210 = vadd.f32 0.0, %v2209
        %2211 = vmatmul.f32.gmra.mxu0 %v2175
        %v2212 = vpop.f32.mrf.mxu0
        %v2213 = vadd.f32 0.0, %v2212
        %2214 = vmatmul.f32.gmra.mxu0 %v2178
        %v2215 = vpop.f32.mrf.mxu0
        %v2216 = vadd.f32 0.0, %v2215
        %2217 = vmatmul.f32.gmra.mxu0 %v2181
        %v2218 = vpop.f32.mrf.mxu0
        %v2219 = vadd.f32 0.0, %v2218
        %2220 = vmatmul.f32.gmra.mxu0 %v2184
        %v2221 = vpop.f32.mrf.mxu0
        %v2222 = vadd.f32 0.0, %v2221
        %2223 = vmatmul.f32.gmra.mxu0 %v2187
        %v2224 = vpop.f32.mrf.mxu0
        %v2225 = vadd.f32 0.0, %v2224
        %2226 = vmatmul.f32.gmra.mxu0 %v2190
        %v2227 = vpop.f32.mrf.mxu0
        %v2228 = vadd.f32 0.0, %v2227
        %2229 = vdwg.mxu0
        %v2230 = vadd.f32 %v2164, %v2210
        %v2231 = vadd.f32 %v2165, %v2213
        %v2232 = vadd.f32 %v2166, %v2216
        %v2233 = vadd.f32 %v2167, %v2219
        %v2234 = vadd.f32 %v2168, %v2222
        %v2235 = vadd.f32 %v2169, %v2225
        %v2236 = vadd.f32 %v2170, %v2228
        %v2237 = vxor.u32 %v2230, 2147483648
        %v2238 = vmul.f32 %v2237, 1.442695
        %v2239 = vpow.pop %v2238
        %v2240 = vadd.f32 %v2239, 1.0
        %v2241 = vrcp.pop %v2240
        %v2242 = vmul.f32 %v2240, %v2241
        %v2243 = vsub.f32 1.0, %v2242
        %v2244 = vmul.f32 %v2241, %v2243
        %v2245 = vadd.f32 %v2241, %v2244
        %vm2246 = vweird.f32 %v2240
        %vm2247 = vweird.f32 %v2241
        %vm2248 = vmor %vm2246, %vm2247
        %v2249 = vsel %vm2248, %v2241, %v2245
        %v2250 = vand.u32 2147483647, %v2240
        %vm2251 = vcmp.eq.f32.partialorder %v2250, 8.507059e+37
        %v2252 = vand.u32 %v2240, 2147483648
        %v2253 = vor.u32 1.1754944e-38, %v2252
        %v2254 = vsel %vm2251, %v2253, %v2249
        %v2255 = vmul.f32 1.0, %v2254
        %v2256 = vxor.u32 %v2231, 2147483648
        %v2257 = vmul.f32 %v2256, 1.442695
        %v2258 = vpow.pop %v2257
        %v2259 = vadd.f32 %v2258, 1.0
        %v2260 = vrcp.pop %v2259
        %v2261 = vmul.f32 %v2259, %v2260
        %v2262 = vsub.f32 1.0, %v2261
        %v2263 = vmul.f32 %v2260, %v2262
        %v2264 = vadd.f32 %v2260, %v2263
        %vm2265 = vweird.f32 %v2259
        %vm2266 = vweird.f32 %v2260
        %vm2267 = vmor %vm2265, %vm2266
        %v2268 = vsel %vm2267, %v2260, %v2264
        %v2269 = vand.u32 2147483647, %v2259
        %vm2270 = vcmp.eq.f32.partialorder %v2269, 8.507059e+37
        %v2271 = vand.u32 %v2259, 2147483648
        %v2272 = vor.u32 1.1754944e-38, %v2271
        %v2273 = vsel %vm2270, %v2272, %v2268
        %v2274 = vmul.f32 1.0, %v2273
        %v2275 = vxor.u32 %v2232, 2147483648
        %v2276 = vmul.f32 %v2275, 1.442695
        %v2277 = vpow.pop %v2276
        %v2278 = vadd.f32 %v2277, 1.0
        %v2279 = vrcp.pop %v2278
        %v2280 = vmul.f32 %v2278, %v2279
        %v2281 = vsub.f32 1.0, %v2280
        %v2282 = vmul.f32 %v2279, %v2281
        %v2283 = vadd.f32 %v2279, %v2282
        %vm2284 = vweird.f32 %v2278
        %vm2285 = vweird.f32 %v2279
        %vm2286 = vmor %vm2284, %vm2285
        %v2287 = vsel %vm2286, %v2279, %v2283
        %v2288 = vand.u32 2147483647, %v2278
        %vm2289 = vcmp.eq.f32.partialorder %v2288, 8.507059e+37
        %v2290 = vand.u32 %v2278, 2147483648
        %v2291 = vor.u32 1.1754944e-38, %v2290
        %v2292 = vsel %vm2289, %v2291, %v2287
        %v2293 = vmul.f32 1.0, %v2292
        %v2294 = vmax.f32 %v2233, %v2234
        %v2295 = vmax.f32 %v2235, %v2236
        %v2296 = vmax.f32 %v2294, %v2295
        %v2297 = vsub.f32 %v2233, %v2296
        %v2298 = vmul.f32 %v2297, 1.442695
        %v2299 = vpow.pop %v2298
        %v2300 = vsub.f32 %v2234, %v2296
        %v2301 = vmul.f32 %v2300, 1.442695
        %v2302 = vpow.pop %v2301
        %v2303 = vsub.f32 %v2235, %v2296
        %v2304 = vmul.f32 %v2303, 1.442695
        %v2305 = vpow.pop %v2304
        %v2306 = vsub.f32 %v2236, %v2296
        %v2307 = vmul.f32 %v2306, 1.442695
        %v2308 = vpow.pop %v2307
        %v2309 = vadd.f32 %v2299, %v2302
        %v2310 = vadd.f32 %v2309, %v2305
        %v2311 = vadd.f32 %v2310, %v2308
        %v2312 = vrcp.pop %v2311
        %v2313 = vmul.f32 %v2299, %v2312
        %v2314 = vmul.f32 %v2302, %v2312
        %v2315 = vmul.f32 %v2305, %v2312
        %v2316 = vmul.f32 %v2308, %v2312
        %v2317 = vmul.f32 %v2255, %v2159
        %v2318 = vmul.f32 %v2274, %v2163
        %v2320 = vsel %vm734, %v683, 0
        %2322 = vmatpush.msra.mxu0 0.0
        %2323 = vmatpush.msra.mxu0 0.0
        %2324 = vmatpush.msra.mxu0 0.0
        %2325 = vmatpush.msra.mxu0 0.0
        %2326 = vmatpush.msra.mxu0 0.0
        %2327 = vmatpush.msra.mxu0 0.0
        %2328 = vmatpush.msra.mxu0 0.0
        %2329 = vmatpush.msra.mxu0 0.0
        %2330 = vmatpush.msra.mxu0 0.0
        %2331 = vmatpush.msra.mxu0 0.0
        %2332 = vmatpush.msra.mxu0 0.0
        %2333 = vmatpush.msra.mxu0 0.0
        %2334 = vmatpush.msra.mxu0 0.0
        %2335 = vmatpush.msra.mxu0 0.0
        %2336 = vmatpush.msra.mxu0 0.0
        %2337 = vmatpush.msra.mxu0 %v2318
        %2338 = vmatmul.f32.gmra.mxu0 %v2320
        %v2339 = vpop.f32.mrf.mxu0
        %v2340 = vadd.f32 0.0, %v2339
        %2341 = vdwg.mxu0
        %v2343 = vsel %vm734, %v682, 0
        %2345 = vmatpush.msra.mxu0 0.0
        %2346 = vmatpush.msra.mxu0 0.0
        %2347 = vmatpush.msra.mxu0 0.0
        %2348 = vmatpush.msra.mxu0 0.0
        %2349 = vmatpush.msra.mxu0 0.0
        %2350 = vmatpush.msra.mxu0 0.0
        %2351 = vmatpush.msra.mxu0 0.0
        %2352 = vmatpush.msra.mxu0 0.0
        %2353 = vmatpush.msra.mxu0 0.0
        %2354 = vmatpush.msra.mxu0 0.0
        %2355 = vmatpush.msra.mxu0 0.0
        %2356 = vmatpush.msra.mxu0 0.0
        %2357 = vmatpush.msra.mxu0 0.0
        %2358 = vmatpush.msra.mxu0 0.0
        %2359 = vmatpush.msra.mxu0 0.0
        %2360 = vmatpush.msra.mxu0 %v2317
        %2361 = vmatmul.f32.gmra.mxu0 %v2343
        %v2362 = vpop.f32.mrf.mxu0
        %v2363 = vadd.f32 %v2340, %v2362
        %2364 = vdwg.mxu0
        %v2365 = vmul.f32 %v2293, %v2160
        %v2367 = vsel %vm734, %v684, 0
        %2369 = vmatpush.msra.mxu0 0.0
        %2370 = vmatpush.msra.mxu0 0.0
        %2371 = vmatpush.msra.mxu0 0.0
        %2372 = vmatpush.msra.mxu0 0.0
        %2373 = vmatpush.msra.mxu0 0.0
        %2374 = vmatpush.msra.mxu0 0.0
        %2375 = vmatpush.msra.mxu0 0.0
        %2376 = vmatpush.msra.mxu0 0.0
        %2377 = vmatpush.msra.mxu0 0.0
        %2378 = vmatpush.msra.mxu0 0.0
        %2379 = vmatpush.msra.mxu0 0.0
        %2380 = vmatpush.msra.mxu0 0.0
        %2381 = vmatpush.msra.mxu0 0.0
        %2382 = vmatpush.msra.mxu0 0.0
        %2383 = vmatpush.msra.mxu0 0.0
        %2384 = vmatpush.msra.mxu0 %v2365
        %2385 = vmatmul.f32.gmra.mxu0 %v2367
        %v2386 = vpop.f32.mrf.mxu0
        %v2387 = vadd.f32 0.0, %v2386
        %2388 = vdwg.mxu0
        %v2389 = vadd.f32 %v2363, %v2387
        %2391 = vset.pattern.permute.xlu0 0
        %2392 = vperm.xlu0 %2391, %v685
        %v2393 = vpop.permute.xlu0 %2392
        %v2395 = vadd.f32 %v2389, %v2393
        %v2396 = vld [vmem:[#allocation4] sm:$0xff]
        %v2397 = vadd.f32 %v2396, %v2395
        %v2398 = vtanh.pop %v2397
        %v2399 = vmul.f32 %v2314, %v2163
        %v2400 = vmul.f32 %v2315, %v2159
        %v2401 = vadd.f32 %v2399, %v2400
        %v2402 = vmul.f32 %v2316, %v2160
        %v2403 = vadd.f32 %v2401, %v2402
        %v2404 = vmul.f32 %v2313, %v2398
        %v2405 = vadd.f32 %v2403, %v2404
        %s2406 = ssub.s32 10, %s722
        %s2407 = smul.u32 %s2406, 8
        %s2408 = scalar_lea.vmem [#allocation2], %s2407
        %2409 = vst [vmem:[%s2408] sm:$0xff] %v2405
        %v2410 = vld [vmem:[%s1002] sm:$0xff]
        %v2411 = vld [vmem:[%s729] sm:$0xff]
        %v2412 = vld [vmem:[%s2408] sm:$0xff]
        %v2413 = vld [vmem:[%s1133] sm:$0xff]
        %v2414 = vld [vmem:[%s1133 + $0x8] sm:$0xff]
        %v2415 = vld [vmem:[%s1133 + $0x10] sm:$0xff]
        %v2416 = vld [vmem:[%s1133 + $0x18] sm:$0xff]
        %v2417 = vld [vmem:[%s1133 + $0x20] sm:$0xff]
        %v2418 = vld [vmem:[%s1133 + $0x28] sm:$0xff]
        %v2419 = vld [vmem:[%s1133 + $0x30] sm:$0xff]
        %2420 = vmatpush.msra.mxu0 0.0
        %2421 = vmatpush.msra.mxu0 0.0
        %2422 = vmatpush.msra.mxu0 0.0
        %2423 = vmatpush.msra.mxu0 0.0
        %2424 = vmatpush.msra.mxu0 0.0
        %2425 = vmatpush.msra.mxu0 0.0
        %2426 = vmatpush.msra.mxu0 0.0
        %2427 = vmatpush.msra.mxu0 0.0
        %2428 = vmatpush.msra.mxu0 0.0
        %2429 = vmatpush.msra.mxu0 0.0
        %2430 = vmatpush.msra.mxu0 0.0
        %2431 = vmatpush.msra.mxu0 0.0
        %2432 = vmatpush.msra.mxu0 0.0
        %2433 = vmatpush.msra.mxu0 0.0
        %2434 = vmatpush.msra.mxu0 0.0
        %2435 = vmatpush.msra.mxu0 %v2412
        %2436 = vmatmul.f32.gmra.mxu0 %v2172
        %v2437 = vpop.f32.mrf.mxu0
        %v2438 = vadd.f32 0.0, %v2437
        %2439 = vmatmul.f32.gmra.mxu0 %v2175
        %v2440 = vpop.f32.mrf.mxu0
        %v2441 = vadd.f32 0.0, %v2440
        %2442 = vmatmul.f32.gmra.mxu0 %v2178
        %v2443 = vpop.f32.mrf.mxu0
        %v2444 = vadd.f32 0.0, %v2443
        %2445 = vmatmul.f32.gmra.mxu0 %v2181
        %v2446 = vpop.f32.mrf.mxu0
        %v2447 = vadd.f32 0.0, %v2446
        %2448 = vmatmul.f32.gmra.mxu0 %v2184
        %v2449 = vpop.f32.mrf.mxu0
        %v2450 = vadd.f32 0.0, %v2449
        %2451 = vmatmul.f32.gmra.mxu0 %v2187
        %v2452 = vpop.f32.mrf.mxu0
        %v2453 = vadd.f32 0.0, %v2452
        %2454 = vmatmul.f32.gmra.mxu0 %v2190
        %v2455 = vpop.f32.mrf.mxu0
        %v2456 = vadd.f32 0.0, %v2455
        %2457 = vdwg.mxu0
        %v2458 = vadd.f32 %v2413, %v2438
        %v2459 = vadd.f32 %v2414, %v2441
        %v2460 = vadd.f32 %v2415, %v2444
        %v2461 = vadd.f32 %v2416, %v2447
        %v2462 = vadd.f32 %v2417, %v2450
        %v2463 = vadd.f32 %v2418, %v2453
        %v2464 = vadd.f32 %v2419, %v2456
        %v2465 = vxor.u32 %v2458, 2147483648
        %v2466 = vmul.f32 %v2465, 1.442695
        %v2467 = vpow.pop %v2466
        %v2468 = vadd.f32 %v2467, 1.0
        %v2469 = vrcp.pop %v2468
        %v2470 = vmul.f32 %v2468, %v2469
        %v2471 = vsub.f32 1.0, %v2470
        %v2472 = vmul.f32 %v2469, %v2471
        %v2473 = vadd.f32 %v2469, %v2472
        %vm2474 = vweird.f32 %v2468
        %vm2475 = vweird.f32 %v2469
        %vm2476 = vmor %vm2474, %vm2475
        %v2477 = vsel %vm2476, %v2469, %v2473
        %v2478 = vand.u32 2147483647, %v2468
        %vm2479 = vcmp.eq.f32.partialorder %v2478, 8.507059e+37
        %v2480 = vand.u32 %v2468, 2147483648
        %v2481 = vor.u32 1.1754944e-38, %v2480
        %v2482 = vsel %vm2479, %v2481, %v2477
        %v2483 = vmul.f32 1.0, %v2482
        %v2484 = vxor.u32 %v2459, 2147483648
        %v2485 = vmul.f32 %v2484, 1.442695
        %v2486 = vpow.pop %v2485
        %v2487 = vadd.f32 %v2486, 1.0
        %v2488 = vrcp.pop %v2487
        %v2489 = vmul.f32 %v2487, %v2488
        %v2490 = vsub.f32 1.0, %v2489
        %v2491 = vmul.f32 %v2488, %v2490
        %v2492 = vadd.f32 %v2488, %v2491
        %vm2493 = vweird.f32 %v2487
        %vm2494 = vweird.f32 %v2488
        %vm2495 = vmor %vm2493, %vm2494
        %v2496 = vsel %vm2495, %v2488, %v2492
        %v2497 = vand.u32 2147483647, %v2487
        %vm2498 = vcmp.eq.f32.partialorder %v2497, 8.507059e+37
        %v2499 = vand.u32 %v2487, 2147483648
        %v2500 = vor.u32 1.1754944e-38, %v2499
        %v2501 = vsel %vm2498, %v2500, %v2496
        %v2502 = vmul.f32 1.0, %v2501
        %v2503 = vxor.u32 %v2460, 2147483648
        %v2504 = vmul.f32 %v2503, 1.442695
        %v2505 = vpow.pop %v2504
        %v2506 = vadd.f32 %v2505, 1.0
        %v2507 = vrcp.pop %v2506
        %v2508 = vmul.f32 %v2506, %v2507
        %v2509 = vsub.f32 1.0, %v2508
        %v2510 = vmul.f32 %v2507, %v2509
        %v2511 = vadd.f32 %v2507, %v2510
        %vm2512 = vweird.f32 %v2506
        %vm2513 = vweird.f32 %v2507
        %vm2514 = vmor %vm2512, %vm2513
        %v2515 = vsel %vm2514, %v2507, %v2511
        %v2516 = vand.u32 2147483647, %v2506
        %vm2517 = vcmp.eq.f32.partialorder %v2516, 8.507059e+37
        %v2518 = vand.u32 %v2506, 2147483648
        %v2519 = vor.u32 1.1754944e-38, %v2518
        %v2520 = vsel %vm2517, %v2519, %v2515
        %v2521 = vmul.f32 1.0, %v2520
        %v2522 = vmax.f32 %v2461, %v2462
        %v2523 = vmax.f32 %v2463, %v2464
        %v2524 = vmax.f32 %v2522, %v2523
        %v2525 = vsub.f32 %v2461, %v2524
        %v2526 = vmul.f32 %v2525, 1.442695
        %v2527 = vpow.pop %v2526
        %v2528 = vsub.f32 %v2462, %v2524
        %v2529 = vmul.f32 %v2528, 1.442695
        %v2530 = vpow.pop %v2529
        %v2531 = vsub.f32 %v2463, %v2524
        %v2532 = vmul.f32 %v2531, 1.442695
        %v2533 = vpow.pop %v2532
        %v2534 = vsub.f32 %v2464, %v2524
        %v2535 = vmul.f32 %v2534, 1.442695
        %v2536 = vpow.pop %v2535
        %v2537 = vadd.f32 %v2527, %v2530
        %v2538 = vadd.f32 %v2537, %v2533
        %v2539 = vadd.f32 %v2538, %v2536
        %v2540 = vrcp.pop %v2539
        %v2541 = vmul.f32 %v2527, %v2540
        %v2542 = vmul.f32 %v2530, %v2540
        %v2543 = vmul.f32 %v2533, %v2540
        %v2544 = vmul.f32 %v2536, %v2540
        %v2545 = vmul.f32 %v2483, %v2410
        %v2546 = vmul.f32 %v2502, %v2412
        %2547 = vmatpush.msra.mxu0 0.0
        %2548 = vmatpush.msra.mxu0 0.0
        %2549 = vmatpush.msra.mxu0 0.0
        %2550 = vmatpush.msra.mxu0 0.0
        %2551 = vmatpush.msra.mxu0 0.0
        %2552 = vmatpush.msra.mxu0 0.0
        %2553 = vmatpush.msra.mxu0 0.0
        %2554 = vmatpush.msra.mxu0 0.0
        %2555 = vmatpush.msra.mxu0 0.0
        %2556 = vmatpush.msra.mxu0 0.0
        %2557 = vmatpush.msra.mxu0 0.0
        %2558 = vmatpush.msra.mxu0 0.0
        %2559 = vmatpush.msra.mxu0 0.0
        %2560 = vmatpush.msra.mxu0 0.0
        %2561 = vmatpush.msra.mxu0 0.0
        %2562 = vmatpush.msra.mxu0 %v2546
        %2563 = vmatmul.f32.gmra.mxu0 %v2320
        %v2564 = vpop.f32.mrf.mxu0
        %v2565 = vadd.f32 0.0, %v2564
        %2566 = vdwg.mxu0
        %2567 = vmatpush.msra.mxu0 0.0
        %2568 = vmatpush.msra.mxu0 0.0
        %2569 = vmatpush.msra.mxu0 0.0
        %2570 = vmatpush.msra.mxu0 0.0
        %2571 = vmatpush.msra.mxu0 0.0
        %2572 = vmatpush.msra.mxu0 0.0
        %2573 = vmatpush.msra.mxu0 0.0
        %2574 = vmatpush.msra.mxu0 0.0
        %2575 = vmatpush.msra.mxu0 0.0
        %2576 = vmatpush.msra.mxu0 0.0
        %2577 = vmatpush.msra.mxu0 0.0
        %2578 = vmatpush.msra.mxu0 0.0
        %2579 = vmatpush.msra.mxu0 0.0
        %2580 = vmatpush.msra.mxu0 0.0
        %2581 = vmatpush.msra.mxu0 0.0
        %2582 = vmatpush.msra.mxu0 %v2545
        %2583 = vmatmul.f32.gmra.mxu0 %v2343
        %v2584 = vpop.f32.mrf.mxu0
        %v2585 = vadd.f32 %v2565, %v2584
        %2586 = vdwg.mxu0
        %v2587 = vmul.f32 %v2521, %v2411
        %2588 = vmatpush.msra.mxu0 0.0
        %2589 = vmatpush.msra.mxu0 0.0
        %2590 = vmatpush.msra.mxu0 0.0
        %2591 = vmatpush.msra.mxu0 0.0
        %2592 = vmatpush.msra.mxu0 0.0
        %2593 = vmatpush.msra.mxu0 0.0
        %2594 = vmatpush.msra.mxu0 0.0
        %2595 = vmatpush.msra.mxu0 0.0
        %2596 = vmatpush.msra.mxu0 0.0
        %2597 = vmatpush.msra.mxu0 0.0
        %2598 = vmatpush.msra.mxu0 0.0
        %2599 = vmatpush.msra.mxu0 0.0
        %2600 = vmatpush.msra.mxu0 0.0
        %2601 = vmatpush.msra.mxu0 0.0
        %2602 = vmatpush.msra.mxu0 0.0
        %2603 = vmatpush.msra.mxu0 %v2587
        %2604 = vmatmul.f32.gmra.mxu0 %v2367
        %v2605 = vpop.f32.mrf.mxu0
        %v2606 = vadd.f32 0.0, %v2605
        %2607 = vdwg.mxu0
        %v2608 = vadd.f32 %v2585, %v2606
        %v2609 = vadd.f32 %v2608, %v2393
        %v2610 = vld [vmem:[%s1161] sm:$0xff]
        %v2611 = vadd.f32 %v2610, %v2609
        %v2612 = vtanh.pop %v2611
        %v2613 = vmul.f32 %v2542, %v2412
        %v2614 = vmul.f32 %v2543, %v2410
        %v2615 = vadd.f32 %v2613, %v2614
        %v2616 = vmul.f32 %v2544, %v2411
        %v2617 = vadd.f32 %v2615, %v2616
        %v2618 = vmul.f32 %v2541, %v2612
        %v2619 = vadd.f32 %v2617, %v2618
        %s2620 = ssub.s32 11, %s722
        %s2621 = smul.u32 %s2620, 8
        %s2622 = scalar_lea.vmem [#allocation2], %s2621
        %2623 = vst [vmem:[%s2622] sm:$0xff] %v2619
        %v2624 = vld [vmem:[%s1168] sm:$0xff]
        %v2625 = vld [vmem:[%s1002] sm:$0xff]
        %v2626 = vld [vmem:[%s2622] sm:$0xff]
        %v2627 = vld [vmem:[%s1299] sm:$0xff]
        %v2628 = vld [vmem:[%s1299 + $0x8] sm:$0xff]
        %v2629 = vld [vmem:[%s1299 + $0x10] sm:$0xff]
        %v2630 = vld [vmem:[%s1299 + $0x18] sm:$0xff]
        %v2631 = vld [vmem:[%s1299 + $0x20] sm:$0xff]
        %v2632 = vld [vmem:[%s1299 + $0x28] sm:$0xff]
        %v2633 = vld [vmem:[%s1299 + $0x30] sm:$0xff]
        %2634 = vmatpush.msra.mxu0 0.0
        %2635 = vmatpush.msra.mxu0 0.0
        %2636 = vmatpush.msra.mxu0 0.0
        %2637 = vmatpush.msra.mxu0 0.0
        %2638 = vmatpush.msra.mxu0 0.0
        %2639 = vmatpush.msra.mxu0 0.0
        %2640 = vmatpush.msra.mxu0 0.0
        %2641 = vmatpush.msra.mxu0 0.0
        %2642 = vmatpush.msra.mxu0 0.0
        %2643 = vmatpush.msra.mxu0 0.0
        %2644 = vmatpush.msra.mxu0 0.0
        %2645 = vmatpush.msra.mxu0 0.0
        %2646 = vmatpush.msra.mxu0 0.0
        %2647 = vmatpush.msra.mxu0 0.0
        %2648 = vmatpush.msra.mxu0 0.0
        %2649 = vmatpush.msra.mxu0 %v2626
        %2650 = vmatmul.f32.gmra.mxu0 %v2172
        %v2651 = vpop.f32.mrf.mxu0
        %v2652 = vadd.f32 0.0, %v2651
        %2653 = vmatmul.f32.gmra.mxu0 %v2175
        %v2654 = vpop.f32.mrf.mxu0
        %v2655 = vadd.f32 0.0, %v2654
        %2656 = vmatmul.f32.gmra.mxu0 %v2178
        %v2657 = vpop.f32.mrf.mxu0
        %v2658 = vadd.f32 0.0, %v2657
        %2659 = vmatmul.f32.gmra.mxu0 %v2181
        %v2660 = vpop.f32.mrf.mxu0
        %v2661 = vadd.f32 0.0, %v2660
        %2662 = vmatmul.f32.gmra.mxu0 %v2184
        %v2663 = vpop.f32.mrf.mxu0
        %v2664 = vadd.f32 0.0, %v2663
        %2665 = vmatmul.f32.gmra.mxu0 %v2187
        %v2666 = vpop.f32.mrf.mxu0
        %v2667 = vadd.f32 0.0, %v2666
        %2668 = vmatmul.f32.gmra.mxu0 %v2190
        %v2669 = vpop.f32.mrf.mxu0
        %v2670 = vadd.f32 0.0, %v2669
        %2671 = vdwg.mxu0
        %v2672 = vadd.f32 %v2627, %v2652
        %v2673 = vadd.f32 %v2628, %v2655
        %v2674 = vadd.f32 %v2629, %v2658
        %v2675 = vadd.f32 %v2630, %v2661
        %v2676 = vadd.f32 %v2631, %v2664
        %v2677 = vadd.f32 %v2632, %v2667
        %v2678 = vadd.f32 %v2633, %v2670
        %v2679 = vxor.u32 %v2672, 2147483648
        %v2680 = vmul.f32 %v2679, 1.442695
        %v2681 = vpow.pop %v2680
        %v2682 = vadd.f32 %v2681, 1.0
        %v2683 = vrcp.pop %v2682
        %v2684 = vmul.f32 %v2682, %v2683
        %v2685 = vsub.f32 1.0, %v2684
        %v2686 = vmul.f32 %v2683, %v2685
        %v2687 = vadd.f32 %v2683, %v2686
        %vm2688 = vweird.f32 %v2682
        %vm2689 = vweird.f32 %v2683
        %vm2690 = vmor %vm2688, %vm2689
        %v2691 = vsel %vm2690, %v2683, %v2687
        %v2692 = vand.u32 2147483647, %v2682
        %vm2693 = vcmp.eq.f32.partialorder %v2692, 8.507059e+37
        %v2694 = vand.u32 %v2682, 2147483648
        %v2695 = vor.u32 1.1754944e-38, %v2694
        %v2696 = vsel %vm2693, %v2695, %v2691
        %v2697 = vmul.f32 1.0, %v2696
        %v2698 = vxor.u32 %v2673, 2147483648
        %v2699 = vmul.f32 %v2698, 1.442695
        %v2700 = vpow.pop %v2699
        %v2701 = vadd.f32 %v2700, 1.0
        %v2702 = vrcp.pop %v2701
        %v2703 = vmul.f32 %v2701, %v2702
        %v2704 = vsub.f32 1.0, %v2703
        %v2705 = vmul.f32 %v2702, %v2704
        %v2706 = vadd.f32 %v2702, %v2705
        %vm2707 = vweird.f32 %v2701
        %vm2708 = vweird.f32 %v2702
        %vm2709 = vmor %vm2707, %vm2708
        %v2710 = vsel %vm2709, %v2702, %v2706
        %v2711 = vand.u32 2147483647, %v2701
        %vm2712 = vcmp.eq.f32.partialorder %v2711, 8.507059e+37
        %v2713 = vand.u32 %v2701, 2147483648
        %v2714 = vor.u32 1.1754944e-38, %v2713
        %v2715 = vsel %vm2712, %v2714, %v2710
        %v2716 = vmul.f32 1.0, %v2715
        %v2717 = vxor.u32 %v2674, 2147483648
        %v2718 = vmul.f32 %v2717, 1.442695
        %v2719 = vpow.pop %v2718
        %v2720 = vadd.f32 %v2719, 1.0
        %v2721 = vrcp.pop %v2720
        %v2722 = vmul.f32 %v2720, %v2721
        %v2723 = vsub.f32 1.0, %v2722
        %v2724 = vmul.f32 %v2721, %v2723
        %v2725 = vadd.f32 %v2721, %v2724
        %vm2726 = vweird.f32 %v2720
        %vm2727 = vweird.f32 %v2721
        %vm2728 = vmor %vm2726, %vm2727
        %v2729 = vsel %vm2728, %v2721, %v2725
        %v2730 = vand.u32 2147483647, %v2720
        %vm2731 = vcmp.eq.f32.partialorder %v2730, 8.507059e+37
        %v2732 = vand.u32 %v2720, 2147483648
        %v2733 = vor.u32 1.1754944e-38, %v2732
        %v2734 = vsel %vm2731, %v2733, %v2729
        %v2735 = vmul.f32 1.0, %v2734
        %v2736 = vmax.f32 %v2675, %v2676
        %v2737 = vmax.f32 %v2677, %v2678
        %v2738 = vmax.f32 %v2736, %v2737
        %v2739 = vsub.f32 %v2675, %v2738
        %v2740 = vmul.f32 %v2739, 1.442695
        %v2741 = vpow.pop %v2740
        %v2742 = vsub.f32 %v2676, %v2738
        %v2743 = vmul.f32 %v2742, 1.442695
        %v2744 = vpow.pop %v2743
        %v2745 = vsub.f32 %v2677, %v2738
        %v2746 = vmul.f32 %v2745, 1.442695
        %v2747 = vpow.pop %v2746
        %v2748 = vsub.f32 %v2678, %v2738
        %v2749 = vmul.f32 %v2748, 1.442695
        %v2750 = vpow.pop %v2749
        %v2751 = vadd.f32 %v2741, %v2744
        %v2752 = vadd.f32 %v2751, %v2747
        %v2753 = vadd.f32 %v2752, %v2750
        %v2754 = vrcp.pop %v2753
        %v2755 = vmul.f32 %v2741, %v2754
        %v2756 = vmul.f32 %v2744, %v2754
        %v2757 = vmul.f32 %v2747, %v2754
        %v2758 = vmul.f32 %v2750, %v2754
        %v2759 = vmul.f32 %v2697, %v2624
        %v2760 = vmul.f32 %v2716, %v2626
        %2761 = vmatpush.msra.mxu0 0.0
        %2762 = vmatpush.msra.mxu0 0.0
        %2763 = vmatpush.msra.mxu0 0.0
        %2764 = vmatpush.msra.mxu0 0.0
        %2765 = vmatpush.msra.mxu0 0.0
        %2766 = vmatpush.msra.mxu0 0.0
        %2767 = vmatpush.msra.mxu0 0.0
        %2768 = vmatpush.msra.mxu0 0.0
        %2769 = vmatpush.msra.mxu0 0.0
        %2770 = vmatpush.msra.mxu0 0.0
        %2771 = vmatpush.msra.mxu0 0.0
        %2772 = vmatpush.msra.mxu0 0.0
        %2773 = vmatpush.msra.mxu0 0.0
        %2774 = vmatpush.msra.mxu0 0.0
        %2775 = vmatpush.msra.mxu0 0.0
        %2776 = vmatpush.msra.mxu0 %v2760
        %2777 = vmatmul.f32.gmra.mxu0 %v2320
        %v2778 = vpop.f32.mrf.mxu0
        %v2779 = vadd.f32 0.0, %v2778
        %2780 = vdwg.mxu0
        %2781 = vmatpush.msra.mxu0 0.0
        %2782 = vmatpush.msra.mxu0 0.0
        %2783 = vmatpush.msra.mxu0 0.0
        %2784 = vmatpush.msra.mxu0 0.0
        %2785 = vmatpush.msra.mxu0 0.0
        %2786 = vmatpush.msra.mxu0 0.0
        %2787 = vmatpush.msra.mxu0 0.0
        %2788 = vmatpush.msra.mxu0 0.0
        %2789 = vmatpush.msra.mxu0 0.0
        %2790 = vmatpush.msra.mxu0 0.0
        %2791 = vmatpush.msra.mxu0 0.0
        %2792 = vmatpush.msra.mxu0 0.0
        %2793 = vmatpush.msra.mxu0 0.0
        %2794 = vmatpush.msra.mxu0 0.0
        %2795 = vmatpush.msra.mxu0 0.0
        %2796 = vmatpush.msra.mxu0 %v2759
        %2797 = vmatmul.f32.gmra.mxu0 %v2343
        %v2798 = vpop.f32.mrf.mxu0
        %v2799 = vadd.f32 %v2779, %v2798
        %2800 = vdwg.mxu0
        %v2801 = vmul.f32 %v2735, %v2625
        %2802 = vmatpush.msra.mxu0 0.0
        %2803 = vmatpush.msra.mxu0 0.0
        %2804 = vmatpush.msra.mxu0 0.0
        %2805 = vmatpush.msra.mxu0 0.0
        %2806 = vmatpush.msra.mxu0 0.0
        %2807 = vmatpush.msra.mxu0 0.0
        %2808 = vmatpush.msra.mxu0 0.0
        %2809 = vmatpush.msra.mxu0 0.0
        %2810 = vmatpush.msra.mxu0 0.0
        %2811 = vmatpush.msra.mxu0 0.0
        %2812 = vmatpush.msra.mxu0 0.0
        %2813 = vmatpush.msra.mxu0 0.0
        %2814 = vmatpush.msra.mxu0 0.0
        %2815 = vmatpush.msra.mxu0 0.0
        %2816 = vmatpush.msra.mxu0 0.0
        %2817 = vmatpush.msra.mxu0 %v2801
        %2818 = vmatmul.f32.gmra.mxu0 %v2367
        %v2819 = vpop.f32.mrf.mxu0
        %v2820 = vadd.f32 0.0, %v2819
        %2821 = vdwg.mxu0
        %v2822 = vadd.f32 %v2799, %v2820
        %v2823 = vadd.f32 %v2822, %v2393
        %v2824 = vld [vmem:[%s1327] sm:$0xff]
        %v2825 = vadd.f32 %v2824, %v2823
        %v2826 = vtanh.pop %v2825
        %v2827 = vmul.f32 %v2756, %v2626
        %v2828 = vmul.f32 %v2757, %v2624
        %v2829 = vadd.f32 %v2827, %v2828
        %v2830 = vmul.f32 %v2758, %v2625
        %v2831 = vadd.f32 %v2829, %v2830
        %v2832 = vmul.f32 %v2755, %v2826
        %v2833 = vadd.f32 %v2831, %v2832
        %s2834 = ssub.s32 12, %s722
        %s2835 = smul.u32 %s2834, 8
        %s2836 = scalar_lea.vmem [#allocation2], %s2835
        %2837 = vst [vmem:[%s2836] sm:$0xff] %v2833
        %v2838 = vld [vmem:[%s1334] sm:$0xff]
        %v2839 = vld [vmem:[%s1168] sm:$0xff]
        %v2840 = vld [vmem:[%s2836] sm:$0xff]
        %v2841 = vld [vmem:[%s1465] sm:$0xff]
        %v2842 = vld [vmem:[%s1465 + $0x8] sm:$0xff]
        %v2843 = vld [vmem:[%s1465 + $0x10] sm:$0xff]
        %v2844 = vld [vmem:[%s1465 + $0x18] sm:$0xff]
        %v2845 = vld [vmem:[%s1465 + $0x20] sm:$0xff]
        %v2846 = vld [vmem:[%s1465 + $0x28] sm:$0xff]
        %v2847 = vld [vmem:[%s1465 + $0x30] sm:$0xff]
        %2848 = vmatpush.msra.mxu0 0.0
        %2849 = vmatpush.msra.mxu0 0.0
        %2850 = vmatpush.msra.mxu0 0.0
        %2851 = vmatpush.msra.mxu0 0.0
        %2852 = vmatpush.msra.mxu0 0.0
        %2853 = vmatpush.msra.mxu0 0.0
        %2854 = vmatpush.msra.mxu0 0.0
        %2855 = vmatpush.msra.mxu0 0.0
        %2856 = vmatpush.msra.mxu0 0.0
        %2857 = vmatpush.msra.mxu0 0.0
        %2858 = vmatpush.msra.mxu0 0.0
        %2859 = vmatpush.msra.mxu0 0.0
        %2860 = vmatpush.msra.mxu0 0.0
        %2861 = vmatpush.msra.mxu0 0.0
        %2862 = vmatpush.msra.mxu0 0.0
        %2863 = vmatpush.msra.mxu0 %v2840
        %2864 = vmatmul.f32.gmra.mxu0 %v2172
        %v2865 = vpop.f32.mrf.mxu0
        %v2866 = vadd.f32 0.0, %v2865
        %2867 = vmatmul.f32.gmra.mxu0 %v2175
        %v2868 = vpop.f32.mrf.mxu0
        %v2869 = vadd.f32 0.0, %v2868
        %2870 = vmatmul.f32.gmra.mxu0 %v2178
        %v2871 = vpop.f32.mrf.mxu0
        %v2872 = vadd.f32 0.0, %v2871
        %2873 = vmatmul.f32.gmra.mxu0 %v2181
        %v2874 = vpop.f32.mrf.mxu0
        %v2875 = vadd.f32 0.0, %v2874
        %2876 = vmatmul.f32.gmra.mxu0 %v2184
        %v2877 = vpop.f32.mrf.mxu0
        %v2878 = vadd.f32 0.0, %v2877
        %2879 = vmatmul.f32.gmra.mxu0 %v2187
        %v2880 = vpop.f32.mrf.mxu0
        %v2881 = vadd.f32 0.0, %v2880
        %2882 = vmatmul.f32.gmra.mxu0 %v2190
        %v2883 = vpop.f32.mrf.mxu0
        %v2884 = vadd.f32 0.0, %v2883
        %2885 = vdwg.mxu0
        %v2886 = vadd.f32 %v2841, %v2866
        %v2887 = vadd.f32 %v2842, %v2869
        %v2888 = vadd.f32 %v2843, %v2872
        %v2889 = vadd.f32 %v2844, %v2875
        %v2890 = vadd.f32 %v2845, %v2878
        %v2891 = vadd.f32 %v2846, %v2881
        %v2892 = vadd.f32 %v2847, %v2884
        %v2893 = vxor.u32 %v2886, 2147483648
        %v2894 = vmul.f32 %v2893, 1.442695
        %v2895 = vpow.pop %v2894
        %v2896 = vadd.f32 %v2895, 1.0
        %v2897 = vrcp.pop %v2896
        %v2898 = vmul.f32 %v2896, %v2897
        %v2899 = vsub.f32 1.0, %v2898
        %v2900 = vmul.f32 %v2897, %v2899
        %v2901 = vadd.f32 %v2897, %v2900
        %vm2902 = vweird.f32 %v2896
        %vm2903 = vweird.f32 %v2897
        %vm2904 = vmor %vm2902, %vm2903
        %v2905 = vsel %vm2904, %v2897, %v2901
        %v2906 = vand.u32 2147483647, %v2896
        %vm2907 = vcmp.eq.f32.partialorder %v2906, 8.507059e+37
        %v2908 = vand.u32 %v2896, 2147483648
        %v2909 = vor.u32 1.1754944e-38, %v2908
        %v2910 = vsel %vm2907, %v2909, %v2905
        %v2911 = vmul.f32 1.0, %v2910
        %v2912 = vxor.u32 %v2887, 2147483648
        %v2913 = vmul.f32 %v2912, 1.442695
        %v2914 = vpow.pop %v2913
        %v2915 = vadd.f32 %v2914, 1.0
        %v2916 = vrcp.pop %v2915
        %v2917 = vmul.f32 %v2915, %v2916
        %v2918 = vsub.f32 1.0, %v2917
        %v2919 = vmul.f32 %v2916, %v2918
        %v2920 = vadd.f32 %v2916, %v2919
        %vm2921 = vweird.f32 %v2915
        %vm2922 = vweird.f32 %v2916
        %vm2923 = vmor %vm2921, %vm2922
        %v2924 = vsel %vm2923, %v2916, %v2920
        %v2925 = vand.u32 2147483647, %v2915
        %vm2926 = vcmp.eq.f32.partialorder %v2925, 8.507059e+37
        %v2927 = vand.u32 %v2915, 2147483648
        %v2928 = vor.u32 1.1754944e-38, %v2927
        %v2929 = vsel %vm2926, %v2928, %v2924
        %v2930 = vmul.f32 1.0, %v2929
        %v2931 = vxor.u32 %v2888, 2147483648
        %v2932 = vmul.f32 %v2931, 1.442695
        %v2933 = vpow.pop %v2932
        %v2934 = vadd.f32 %v2933, 1.0
        %v2935 = vrcp.pop %v2934
        %v2936 = vmul.f32 %v2934, %v2935
        %v2937 = vsub.f32 1.0, %v2936
        %v2938 = vmul.f32 %v2935, %v2937
        %v2939 = vadd.f32 %v2935, %v2938
        %vm2940 = vweird.f32 %v2934
        %vm2941 = vweird.f32 %v2935
        %vm2942 = vmor %vm2940, %vm2941
        %v2943 = vsel %vm2942, %v2935, %v2939
        %v2944 = vand.u32 2147483647, %v2934
        %vm2945 = vcmp.eq.f32.partialorder %v2944, 8.507059e+37
        %v2946 = vand.u32 %v2934, 2147483648
        %v2947 = vor.u32 1.1754944e-38, %v2946
        %v2948 = vsel %vm2945, %v2947, %v2943
        %v2949 = vmul.f32 1.0, %v2948
        %v2950 = vmax.f32 %v2889, %v2890
        %v2951 = vmax.f32 %v2891, %v2892
        %v2952 = vmax.f32 %v2950, %v2951
        %v2953 = vsub.f32 %v2889, %v2952
        %v2954 = vmul.f32 %v2953, 1.442695
        %v2955 = vpow.pop %v2954
        %v2956 = vsub.f32 %v2890, %v2952
        %v2957 = vmul.f32 %v2956, 1.442695
        %v2958 = vpow.pop %v2957
        %v2959 = vsub.f32 %v2891, %v2952
        %v2960 = vmul.f32 %v2959, 1.442695
        %v2961 = vpow.pop %v2960
        %v2962 = vsub.f32 %v2892, %v2952
        %v2963 = vmul.f32 %v2962, 1.442695
        %v2964 = vpow.pop %v2963
        %v2965 = vadd.f32 %v2955, %v2958
        %v2966 = vadd.f32 %v2965, %v2961
        %v2967 = vadd.f32 %v2966, %v2964
        %v2968 = vrcp.pop %v2967
        %v2969 = vmul.f32 %v2955, %v2968
        %v2970 = vmul.f32 %v2958, %v2968
        %v2971 = vmul.f32 %v2961, %v2968
        %v2972 = vmul.f32 %v2964, %v2968
        %v2973 = vmul.f32 %v2911, %v2838
        %v2974 = vmul.f32 %v2930, %v2840
        %2975 = vmatpush.msra.mxu0 0.0
        %2976 = vmatpush.msra.mxu0 0.0
        %2977 = vmatpush.msra.mxu0 0.0
        %2978 = vmatpush.msra.mxu0 0.0
        %2979 = vmatpush.msra.mxu0 0.0
        %2980 = vmatpush.msra.mxu0 0.0
        %2981 = vmatpush.msra.mxu0 0.0
        %2982 = vmatpush.msra.mxu0 0.0
        %2983 = vmatpush.msra.mxu0 0.0
        %2984 = vmatpush.msra.mxu0 0.0
        %2985 = vmatpush.msra.mxu0 0.0
        %2986 = vmatpush.msra.mxu0 0.0
        %2987 = vmatpush.msra.mxu0 0.0
        %2988 = vmatpush.msra.mxu0 0.0
        %2989 = vmatpush.msra.mxu0 0.0
        %2990 = vmatpush.msra.mxu0 %v2974
        %2991 = vmatmul.f32.gmra.mxu0 %v2320
        %v2992 = vpop.f32.mrf.mxu0
        %v2993 = vadd.f32 0.0, %v2992
        %2994 = vdwg.mxu0
        %2995 = vmatpush.msra.mxu0 0.0
        %2996 = vmatpush.msra.mxu0 0.0
        %2997 = vmatpush.msra.mxu0 0.0
        %2998 = vmatpush.msra.mxu0 0.0
        %2999 = vmatpush.msra.mxu0 0.0
        %3000 = vmatpush.msra.mxu0 0.0
        %3001 = vmatpush.msra.mxu0 0.0
        %3002 = vmatpush.msra.mxu0 0.0
        %3003 = vmatpush.msra.mxu0 0.0
        %3004 = vmatpush.msra.mxu0 0.0
        %3005 = vmatpush.msra.mxu0 0.0
        %3006 = vmatpush.msra.mxu0 0.0
        %3007 = vmatpush.msra.mxu0 0.0
        %3008 = vmatpush.msra.mxu0 0.0
        %3009 = vmatpush.msra.mxu0 0.0
        %3010 = vmatpush.msra.mxu0 %v2973
        %3011 = vmatmul.f32.gmra.mxu0 %v2343
        %v3012 = vpop.f32.mrf.mxu0
        %v3013 = vadd.f32 %v2993, %v3012
        %3014 = vdwg.mxu0
        %v3015 = vmul.f32 %v2949, %v2839
        %3016 = vmatpush.msra.mxu0 0.0
        %3017 = vmatpush.msra.mxu0 0.0
        %3018 = vmatpush.msra.mxu0 0.0
        %3019 = vmatpush.msra.mxu0 0.0
        %3020 = vmatpush.msra.mxu0 0.0
        %3021 = vmatpush.msra.mxu0 0.0
        %3022 = vmatpush.msra.mxu0 0.0
        %3023 = vmatpush.msra.mxu0 0.0
        %3024 = vmatpush.msra.mxu0 0.0
        %3025 = vmatpush.msra.mxu0 0.0
        %3026 = vmatpush.msra.mxu0 0.0
        %3027 = vmatpush.msra.mxu0 0.0
        %3028 = vmatpush.msra.mxu0 0.0
        %3029 = vmatpush.msra.mxu0 0.0
        %3030 = vmatpush.msra.mxu0 0.0
        %3031 = vmatpush.msra.mxu0 %v3015
        %3032 = vmatmul.f32.gmra.mxu0 %v2367
        %v3033 = vpop.f32.mrf.mxu0
        %v3034 = vadd.f32 0.0, %v3033
        %3035 = vdwg.mxu0
        %v3036 = vadd.f32 %v3013, %v3034
        %v3037 = vadd.f32 %v3036, %v2393
        %v3038 = vld [vmem:[%s1493] sm:$0xff]
        %v3039 = vadd.f32 %v3038, %v3037
        %v3040 = vtanh.pop %v3039
        %v3041 = vmul.f32 %v2970, %v2840
        %v3042 = vmul.f32 %v2971, %v2838
        %v3043 = vadd.f32 %v3041, %v3042
        %v3044 = vmul.f32 %v2972, %v2839
        %v3045 = vadd.f32 %v3043, %v3044
        %v3046 = vmul.f32 %v2969, %v3040
        %v3047 = vadd.f32 %v3045, %v3046
        %s3048 = ssub.s32 13, %s722
        %s3049 = smul.u32 %s3048, 8
        %s3050 = scalar_lea.vmem [#allocation2], %s3049
        %3051 = vst [vmem:[%s3050] sm:$0xff] %v3047
        %v3052 = vld [vmem:[%s1500] sm:$0xff]
        %v3053 = vld [vmem:[%s1334] sm:$0xff]
        %v3054 = vld [vmem:[%s3050] sm:$0xff]
        %v3055 = vld [vmem:[%s1631] sm:$0xff]
        %v3056 = vld [vmem:[%s1631 + $0x8] sm:$0xff]
        %v3057 = vld [vmem:[%s1631 + $0x10] sm:$0xff]
        %v3058 = vld [vmem:[%s1631 + $0x18] sm:$0xff]
        %v3059 = vld [vmem:[%s1631 + $0x20] sm:$0xff]
        %v3060 = vld [vmem:[%s1631 + $0x28] sm:$0xff]
        %v3061 = vld [vmem:[%s1631 + $0x30] sm:$0xff]
        %3062 = vmatpush.msra.mxu0 0.0
        %3063 = vmatpush.msra.mxu0 0.0
        %3064 = vmatpush.msra.mxu0 0.0
        %3065 = vmatpush.msra.mxu0 0.0
        %3066 = vmatpush.msra.mxu0 0.0
        %3067 = vmatpush.msra.mxu0 0.0
        %3068 = vmatpush.msra.mxu0 0.0
        %3069 = vmatpush.msra.mxu0 0.0
        %3070 = vmatpush.msra.mxu0 0.0
        %3071 = vmatpush.msra.mxu0 0.0
        %3072 = vmatpush.msra.mxu0 0.0
        %3073 = vmatpush.msra.mxu0 0.0
        %3074 = vmatpush.msra.mxu0 0.0
        %3075 = vmatpush.msra.mxu0 0.0
        %3076 = vmatpush.msra.mxu0 0.0
        %3077 = vmatpush.msra.mxu0 %v3054
        %3078 = vmatmul.f32.gmra.mxu0 %v2172
        %v3079 = vpop.f32.mrf.mxu0
        %v3080 = vadd.f32 0.0, %v3079
        %3081 = vmatmul.f32.gmra.mxu0 %v2175
        %v3082 = vpop.f32.mrf.mxu0
        %v3083 = vadd.f32 0.0, %v3082
        %3084 = vmatmul.f32.gmra.mxu0 %v2178
        %v3085 = vpop.f32.mrf.mxu0
        %v3086 = vadd.f32 0.0, %v3085
        %3087 = vmatmul.f32.gmra.mxu0 %v2181
        %v3088 = vpop.f32.mrf.mxu0
        %v3089 = vadd.f32 0.0, %v3088
        %3090 = vmatmul.f32.gmra.mxu0 %v2184
        %v3091 = vpop.f32.mrf.mxu0
        %v3092 = vadd.f32 0.0, %v3091
        %3093 = vmatmul.f32.gmra.mxu0 %v2187
        %v3094 = vpop.f32.mrf.mxu0
        %v3095 = vadd.f32 0.0, %v3094
        %3096 = vmatmul.f32.gmra.mxu0 %v2190
        %v3097 = vpop.f32.mrf.mxu0
        %v3098 = vadd.f32 0.0, %v3097
        %3099 = vdwg.mxu0
        %v3100 = vadd.f32 %v3055, %v3080
        %v3101 = vadd.f32 %v3056, %v3083
        %v3102 = vadd.f32 %v3057, %v3086
        %v3103 = vadd.f32 %v3058, %v3089
        %v3104 = vadd.f32 %v3059, %v3092
        %v3105 = vadd.f32 %v3060, %v3095
        %v3106 = vadd.f32 %v3061, %v3098
        %v3107 = vxor.u32 %v3100, 2147483648
        %v3108 = vmul.f32 %v3107, 1.442695
        %v3109 = vpow.pop %v3108
        %v3110 = vadd.f32 %v3109, 1.0
        %v3111 = vrcp.pop %v3110
        %v3112 = vmul.f32 %v3110, %v3111
        %v3113 = vsub.f32 1.0, %v3112
        %v3114 = vmul.f32 %v3111, %v3113
        %v3115 = vadd.f32 %v3111, %v3114
        %vm3116 = vweird.f32 %v3110
        %vm3117 = vweird.f32 %v3111
        %vm3118 = vmor %vm3116, %vm3117
        %v3119 = vsel %vm3118, %v3111, %v3115
        %v3120 = vand.u32 2147483647, %v3110
        %vm3121 = vcmp.eq.f32.partialorder %v3120, 8.507059e+37
        %v3122 = vand.u32 %v3110, 2147483648
        %v3123 = vor.u32 1.1754944e-38, %v3122
        %v3124 = vsel %vm3121, %v3123, %v3119
        %v3125 = vmul.f32 1.0, %v3124
        %v3126 = vxor.u32 %v3101, 2147483648
        %v3127 = vmul.f32 %v3126, 1.442695
        %v3128 = vpow.pop %v3127
        %v3129 = vadd.f32 %v3128, 1.0
        %v3130 = vrcp.pop %v3129
        %v3131 = vmul.f32 %v3129, %v3130
        %v3132 = vsub.f32 1.0, %v3131
        %v3133 = vmul.f32 %v3130, %v3132
        %v3134 = vadd.f32 %v3130, %v3133
        %vm3135 = vweird.f32 %v3129
        %vm3136 = vweird.f32 %v3130
        %vm3137 = vmor %vm3135, %vm3136
        %v3138 = vsel %vm3137, %v3130, %v3134
        %v3139 = vand.u32 2147483647, %v3129
        %vm3140 = vcmp.eq.f32.partialorder %v3139, 8.507059e+37
        %v3141 = vand.u32 %v3129, 2147483648
        %v3142 = vor.u32 1.1754944e-38, %v3141
        %v3143 = vsel %vm3140, %v3142, %v3138
        %v3144 = vmul.f32 1.0, %v3143
        %v3145 = vxor.u32 %v3102, 2147483648
        %v3146 = vmul.f32 %v3145, 1.442695
        %v3147 = vpow.pop %v3146
        %v3148 = vadd.f32 %v3147, 1.0
        %v3149 = vrcp.pop %v3148
        %v3150 = vmul.f32 %v3148, %v3149
        %v3151 = vsub.f32 1.0, %v3150
        %v3152 = vmul.f32 %v3149, %v3151
        %v3153 = vadd.f32 %v3149, %v3152
        %vm3154 = vweird.f32 %v3148
        %vm3155 = vweird.f32 %v3149
        %vm3156 = vmor %vm3154, %vm3155
        %v3157 = vsel %vm3156, %v3149, %v3153
        %v3158 = vand.u32 2147483647, %v3148
        %vm3159 = vcmp.eq.f32.partialorder %v3158, 8.507059e+37
        %v3160 = vand.u32 %v3148, 2147483648
        %v3161 = vor.u32 1.1754944e-38, %v3160
        %v3162 = vsel %vm3159, %v3161, %v3157
        %v3163 = vmul.f32 1.0, %v3162
        %v3164 = vmax.f32 %v3103, %v3104
        %v3165 = vmax.f32 %v3105, %v3106
        %v3166 = vmax.f32 %v3164, %v3165
        %v3167 = vsub.f32 %v3103, %v3166
        %v3168 = vmul.f32 %v3167, 1.442695
        %v3169 = vpow.pop %v3168
        %v3170 = vsub.f32 %v3104, %v3166
        %v3171 = vmul.f32 %v3170, 1.442695
        %v3172 = vpow.pop %v3171
        %v3173 = vsub.f32 %v3105, %v3166
        %v3174 = vmul.f32 %v3173, 1.442695
        %v3175 = vpow.pop %v3174
        %v3176 = vsub.f32 %v3106, %v3166
        %v3177 = vmul.f32 %v3176, 1.442695
        %v3178 = vpow.pop %v3177
        %v3179 = vadd.f32 %v3169, %v3172
        %v3180 = vadd.f32 %v3179, %v3175
        %v3181 = vadd.f32 %v3180, %v3178
        %v3182 = vrcp.pop %v3181
        %v3183 = vmul.f32 %v3169, %v3182
        %v3184 = vmul.f32 %v3172, %v3182
        %v3185 = vmul.f32 %v3175, %v3182
        %v3186 = vmul.f32 %v3178, %v3182
        %v3187 = vmul.f32 %v3125, %v3052
        %v3188 = vmul.f32 %v3144, %v3054
        %3189 = vmatpush.msra.mxu0 0.0
        %3190 = vmatpush.msra.mxu0 0.0
        %3191 = vmatpush.msra.mxu0 0.0
        %3192 = vmatpush.msra.mxu0 0.0
        %3193 = vmatpush.msra.mxu0 0.0
        %3194 = vmatpush.msra.mxu0 0.0
        %3195 = vmatpush.msra.mxu0 0.0
        %3196 = vmatpush.msra.mxu0 0.0
        %3197 = vmatpush.msra.mxu0 0.0
        %3198 = vmatpush.msra.mxu0 0.0
        %3199 = vmatpush.msra.mxu0 0.0
        %3200 = vmatpush.msra.mxu0 0.0
        %3201 = vmatpush.msra.mxu0 0.0
        %3202 = vmatpush.msra.mxu0 0.0
        %3203 = vmatpush.msra.mxu0 0.0
        %3204 = vmatpush.msra.mxu0 %v3188
        %3205 = vmatmul.f32.gmra.mxu0 %v2320
        %v3206 = vpop.f32.mrf.mxu0
        %v3207 = vadd.f32 0.0, %v3206
        %3208 = vdwg.mxu0
        %3209 = vmatpush.msra.mxu0 0.0
        %3210 = vmatpush.msra.mxu0 0.0
        %3211 = vmatpush.msra.mxu0 0.0
        %3212 = vmatpush.msra.mxu0 0.0
        %3213 = vmatpush.msra.mxu0 0.0
        %3214 = vmatpush.msra.mxu0 0.0
        %3215 = vmatpush.msra.mxu0 0.0
        %3216 = vmatpush.msra.mxu0 0.0
        %3217 = vmatpush.msra.mxu0 0.0
        %3218 = vmatpush.msra.mxu0 0.0
        %3219 = vmatpush.msra.mxu0 0.0
        %3220 = vmatpush.msra.mxu0 0.0
        %3221 = vmatpush.msra.mxu0 0.0
        %3222 = vmatpush.msra.mxu0 0.0
        %3223 = vmatpush.msra.mxu0 0.0
        %3224 = vmatpush.msra.mxu0 %v3187
        %3225 = vmatmul.f32.gmra.mxu0 %v2343
        %v3226 = vpop.f32.mrf.mxu0
        %v3227 = vadd.f32 %v3207, %v3226
        %3228 = vdwg.mxu0
        %v3229 = vmul.f32 %v3163, %v3053
        %3230 = vmatpush.msra.mxu0 0.0
        %3231 = vmatpush.msra.mxu0 0.0
        %3232 = vmatpush.msra.mxu0 0.0
        %3233 = vmatpush.msra.mxu0 0.0
        %3234 = vmatpush.msra.mxu0 0.0
        %3235 = vmatpush.msra.mxu0 0.0
        %3236 = vmatpush.msra.mxu0 0.0
        %3237 = vmatpush.msra.mxu0 0.0
        %3238 = vmatpush.msra.mxu0 0.0
        %3239 = vmatpush.msra.mxu0 0.0
        %3240 = vmatpush.msra.mxu0 0.0
        %3241 = vmatpush.msra.mxu0 0.0
        %3242 = vmatpush.msra.mxu0 0.0
        %3243 = vmatpush.msra.mxu0 0.0
        %3244 = vmatpush.msra.mxu0 0.0
        %3245 = vmatpush.msra.mxu0 %v3229
        %3246 = vmatmul.f32.gmra.mxu0 %v2367
        %v3247 = vpop.f32.mrf.mxu0
        %v3248 = vadd.f32 0.0, %v3247
        %3249 = vdwg.mxu0
        %v3250 = vadd.f32 %v3227, %v3248
        %v3251 = vadd.f32 %v3250, %v2393
        %v3252 = vld [vmem:[%s1659] sm:$0xff]
        %v3253 = vadd.f32 %v3252, %v3251
        %v3254 = vtanh.pop %v3253
        %v3255 = vmul.f32 %v3184, %v3054
        %v3256 = vmul.f32 %v3185, %v3052
        %v3257 = vadd.f32 %v3255, %v3256
        %v3258 = vmul.f32 %v3186, %v3053
        %v3259 = vadd.f32 %v3257, %v3258
        %v3260 = vmul.f32 %v3183, %v3254
        %v3261 = vadd.f32 %v3259, %v3260
        %s3262 = ssub.s32 14, %s722
        %s3263 = smul.u32 %s3262, 8
        %s3264 = scalar_lea.vmem [#allocation2], %s3263
        %3265 = vst [vmem:[%s3264] sm:$0xff] %v3261
        %v3266 = vld [vmem:[%s1666] sm:$0xff]
        %v3267 = vld [vmem:[%s1500] sm:$0xff]
        %v3268 = vld [vmem:[%s3264] sm:$0xff]
        %v3269 = vld [vmem:[%s1797] sm:$0xff]
        %v3270 = vld [vmem:[%s1797 + $0x8] sm:$0xff]
        %v3271 = vld [vmem:[%s1797 + $0x10] sm:$0xff]
        %v3272 = vld [vmem:[%s1797 + $0x18] sm:$0xff]
        %v3273 = vld [vmem:[%s1797 + $0x20] sm:$0xff]
        %v3274 = vld [vmem:[%s1797 + $0x28] sm:$0xff]
        %v3275 = vld [vmem:[%s1797 + $0x30] sm:$0xff]
        %3276 = vmatpush.msra.mxu0 0.0
        %3277 = vmatpush.msra.mxu0 0.0
        %3278 = vmatpush.msra.mxu0 0.0
        %3279 = vmatpush.msra.mxu0 0.0
        %3280 = vmatpush.msra.mxu0 0.0
        %3281 = vmatpush.msra.mxu0 0.0
        %3282 = vmatpush.msra.mxu0 0.0
        %3283 = vmatpush.msra.mxu0 0.0
        %3284 = vmatpush.msra.mxu0 0.0
        %3285 = vmatpush.msra.mxu0 0.0
        %3286 = vmatpush.msra.mxu0 0.0
        %3287 = vmatpush.msra.mxu0 0.0
        %3288 = vmatpush.msra.mxu0 0.0
        %3289 = vmatpush.msra.mxu0 0.0
        %3290 = vmatpush.msra.mxu0 0.0
        %3291 = vmatpush.msra.mxu0 %v3268
        %3292 = vmatmul.f32.gmra.mxu0 %v2172
        %v3293 = vpop.f32.mrf.mxu0
        %v3294 = vadd.f32 0.0, %v3293
        %3295 = vmatmul.f32.gmra.mxu0 %v2175
        %v3296 = vpop.f32.mrf.mxu0
        %v3297 = vadd.f32 0.0, %v3296
        %3298 = vmatmul.f32.gmra.mxu0 %v2178
        %v3299 = vpop.f32.mrf.mxu0
        %v3300 = vadd.f32 0.0, %v3299
        %3301 = vmatmul.f32.gmra.mxu0 %v2181
        %v3302 = vpop.f32.mrf.mxu0
        %v3303 = vadd.f32 0.0, %v3302
        %3304 = vmatmul.f32.gmra.mxu0 %v2184
        %v3305 = vpop.f32.mrf.mxu0
        %v3306 = vadd.f32 0.0, %v3305
        %3307 = vmatmul.f32.gmra.mxu0 %v2187
        %v3308 = vpop.f32.mrf.mxu0
        %v3309 = vadd.f32 0.0, %v3308
        %3310 = vmatmul.f32.gmra.mxu0 %v2190
        %v3311 = vpop.f32.mrf.mxu0
        %v3312 = vadd.f32 0.0, %v3311
        %3313 = vdwg.mxu0
        %v3314 = vadd.f32 %v3269, %v3294
        %v3315 = vadd.f32 %v3270, %v3297
        %v3316 = vadd.f32 %v3271, %v3300
        %v3317 = vadd.f32 %v3272, %v3303
        %v3318 = vadd.f32 %v3273, %v3306
        %v3319 = vadd.f32 %v3274, %v3309
        %v3320 = vadd.f32 %v3275, %v3312
        %v3321 = vxor.u32 %v3314, 2147483648
        %v3322 = vmul.f32 %v3321, 1.442695
        %v3323 = vpow.pop %v3322
        %v3324 = vadd.f32 %v3323, 1.0
        %v3325 = vrcp.pop %v3324
        %v3326 = vmul.f32 %v3324, %v3325
        %v3327 = vsub.f32 1.0, %v3326
        %v3328 = vmul.f32 %v3325, %v3327
        %v3329 = vadd.f32 %v3325, %v3328
        %vm3330 = vweird.f32 %v3324
        %vm3331 = vweird.f32 %v3325
        %vm3332 = vmor %vm3330, %vm3331
        %v3333 = vsel %vm3332, %v3325, %v3329
        %v3334 = vand.u32 2147483647, %v3324
        %vm3335 = vcmp.eq.f32.partialorder %v3334, 8.507059e+37
        %v3336 = vand.u32 %v3324, 2147483648
        %v3337 = vor.u32 1.1754944e-38, %v3336
        %v3338 = vsel %vm3335, %v3337, %v3333
        %v3339 = vmul.f32 1.0, %v3338
        %v3340 = vxor.u32 %v3315, 2147483648
        %v3341 = vmul.f32 %v3340, 1.442695
        %v3342 = vpow.pop %v3341
        %v3343 = vadd.f32 %v3342, 1.0
        %v3344 = vrcp.pop %v3343
        %v3345 = vmul.f32 %v3343, %v3344
        %v3346 = vsub.f32 1.0, %v3345
        %v3347 = vmul.f32 %v3344, %v3346
        %v3348 = vadd.f32 %v3344, %v3347
        %vm3349 = vweird.f32 %v3343
        %vm3350 = vweird.f32 %v3344
        %vm3351 = vmor %vm3349, %vm3350
        %v3352 = vsel %vm3351, %v3344, %v3348
        %v3353 = vand.u32 2147483647, %v3343
        %vm3354 = vcmp.eq.f32.partialorder %v3353, 8.507059e+37
        %v3355 = vand.u32 %v3343, 2147483648
        %v3356 = vor.u32 1.1754944e-38, %v3355
        %v3357 = vsel %vm3354, %v3356, %v3352
        %v3358 = vmul.f32 1.0, %v3357
        %v3359 = vxor.u32 %v3316, 2147483648
        %v3360 = vmul.f32 %v3359, 1.442695
        %v3361 = vpow.pop %v3360
        %v3362 = vadd.f32 %v3361, 1.0
        %v3363 = vrcp.pop %v3362
        %v3364 = vmul.f32 %v3362, %v3363
        %v3365 = vsub.f32 1.0, %v3364
        %v3366 = vmul.f32 %v3363, %v3365
        %v3367 = vadd.f32 %v3363, %v3366
        %vm3368 = vweird.f32 %v3362
        %vm3369 = vweird.f32 %v3363
        %vm3370 = vmor %vm3368, %vm3369
        %v3371 = vsel %vm3370, %v3363, %v3367
        %v3372 = vand.u32 2147483647, %v3362
        %vm3373 = vcmp.eq.f32.partialorder %v3372, 8.507059e+37
        %v3374 = vand.u32 %v3362, 2147483648
        %v3375 = vor.u32 1.1754944e-38, %v3374
        %v3376 = vsel %vm3373, %v3375, %v3371
        %v3377 = vmul.f32 1.0, %v3376
        %v3378 = vmax.f32 %v3317, %v3318
        %v3379 = vmax.f32 %v3319, %v3320
        %v3380 = vmax.f32 %v3378, %v3379
        %v3381 = vsub.f32 %v3317, %v3380
        %v3382 = vmul.f32 %v3381, 1.442695
        %v3383 = vpow.pop %v3382
        %v3384 = vsub.f32 %v3318, %v3380
        %v3385 = vmul.f32 %v3384, 1.442695
        %v3386 = vpow.pop %v3385
        %v3387 = vsub.f32 %v3319, %v3380
        %v3388 = vmul.f32 %v3387, 1.442695
        %v3389 = vpow.pop %v3388
        %v3390 = vsub.f32 %v3320, %v3380
        %v3391 = vmul.f32 %v3390, 1.442695
        %v3392 = vpow.pop %v3391
        %v3393 = vadd.f32 %v3383, %v3386
        %v3394 = vadd.f32 %v3393, %v3389
        %v3395 = vadd.f32 %v3394, %v3392
        %v3396 = vrcp.pop %v3395
        %v3397 = vmul.f32 %v3383, %v3396
        %v3398 = vmul.f32 %v3386, %v3396
        %v3399 = vmul.f32 %v3389, %v3396
        %v3400 = vmul.f32 %v3392, %v3396
        %v3401 = vmul.f32 %v3339, %v3266
        %v3402 = vmul.f32 %v3358, %v3268
        %3403 = vmatpush.msra.mxu0 0.0
        %3404 = vmatpush.msra.mxu0 0.0
        %3405 = vmatpush.msra.mxu0 0.0
        %3406 = vmatpush.msra.mxu0 0.0
        %3407 = vmatpush.msra.mxu0 0.0
        %3408 = vmatpush.msra.mxu0 0.0
        %3409 = vmatpush.msra.mxu0 0.0
        %3410 = vmatpush.msra.mxu0 0.0
        %3411 = vmatpush.msra.mxu0 0.0
        %3412 = vmatpush.msra.mxu0 0.0
        %3413 = vmatpush.msra.mxu0 0.0
        %3414 = vmatpush.msra.mxu0 0.0
        %3415 = vmatpush.msra.mxu0 0.0
        %3416 = vmatpush.msra.mxu0 0.0
        %3417 = vmatpush.msra.mxu0 0.0
        %3418 = vmatpush.msra.mxu0 %v3402
        %3419 = vmatmul.f32.gmra.mxu0 %v2320
        %v3420 = vpop.f32.mrf.mxu0
        %v3421 = vadd.f32 0.0, %v3420
        %3422 = vdwg.mxu0
        %3423 = vmatpush.msra.mxu0 0.0
        %3424 = vmatpush.msra.mxu0 0.0
        %3425 = vmatpush.msra.mxu0 0.0
        %3426 = vmatpush.msra.mxu0 0.0
        %3427 = vmatpush.msra.mxu0 0.0
        %3428 = vmatpush.msra.mxu0 0.0
        %3429 = vmatpush.msra.mxu0 0.0
        %3430 = vmatpush.msra.mxu0 0.0
        %3431 = vmatpush.msra.mxu0 0.0
        %3432 = vmatpush.msra.mxu0 0.0
        %3433 = vmatpush.msra.mxu0 0.0
        %3434 = vmatpush.msra.mxu0 0.0
        %3435 = vmatpush.msra.mxu0 0.0
        %3436 = vmatpush.msra.mxu0 0.0
        %3437 = vmatpush.msra.mxu0 0.0
        %3438 = vmatpush.msra.mxu0 %v3401
        %3439 = vmatmul.f32.gmra.mxu0 %v2343
        %v3440 = vpop.f32.mrf.mxu0
        %v3441 = vadd.f32 %v3421, %v3440
        %3442 = vdwg.mxu0
        %v3443 = vmul.f32 %v3377, %v3267
        %3444 = vmatpush.msra.mxu0 0.0
        %3445 = vmatpush.msra.mxu0 0.0
        %3446 = vmatpush.msra.mxu0 0.0
        %3447 = vmatpush.msra.mxu0 0.0
        %3448 = vmatpush.msra.mxu0 0.0
        %3449 = vmatpush.msra.mxu0 0.0
        %3450 = vmatpush.msra.mxu0 0.0
        %3451 = vmatpush.msra.mxu0 0.0
        %3452 = vmatpush.msra.mxu0 0.0
        %3453 = vmatpush.msra.mxu0 0.0
        %3454 = vmatpush.msra.mxu0 0.0
        %3455 = vmatpush.msra.mxu0 0.0
        %3456 = vmatpush.msra.mxu0 0.0
        %3457 = vmatpush.msra.mxu0 0.0
        %3458 = vmatpush.msra.mxu0 0.0
        %3459 = vmatpush.msra.mxu0 %v3443
        %3460 = vmatmul.f32.gmra.mxu0 %v2367
        %v3461 = vpop.f32.mrf.mxu0
        %v3462 = vadd.f32 0.0, %v3461
        %3463 = vdwg.mxu0
        %v3464 = vadd.f32 %v3441, %v3462
        %v3465 = vadd.f32 %v3464, %v2393
        %v3466 = vld [vmem:[%s1825] sm:$0xff]
        %v3467 = vadd.f32 %v3466, %v3465
        %v3468 = vtanh.pop %v3467
        %v3469 = vmul.f32 %v3398, %v3268
        %v3470 = vmul.f32 %v3399, %v3266
        %v3471 = vadd.f32 %v3469, %v3470
        %v3472 = vmul.f32 %v3400, %v3267
        %v3473 = vadd.f32 %v3471, %v3472
        %v3474 = vmul.f32 %v3397, %v3468
        %v3475 = vadd.f32 %v3473, %v3474
        %s3476 = ssub.s32 15, %s722
        %s3477 = smul.u32 %s3476, 8
        %s3478 = scalar_lea.vmem [#allocation2], %s3477
        %3479 = vst [vmem:[%s3478] sm:$0xff] %v3475
        %v3480 = vld [vmem:[%s1832] sm:$0xff]
        %v3481 = vld [vmem:[%s1666] sm:$0xff]
        %v3482 = vld [vmem:[%s3478] sm:$0xff]
        %v3483 = vld [vmem:[%s1963] sm:$0xff]
        %v3484 = vld [vmem:[%s1963 + $0x8] sm:$0xff]
        %v3485 = vld [vmem:[%s1963 + $0x10] sm:$0xff]
        %v3486 = vld [vmem:[%s1963 + $0x18] sm:$0xff]
        %v3487 = vld [vmem:[%s1963 + $0x20] sm:$0xff]
        %v3488 = vld [vmem:[%s1963 + $0x28] sm:$0xff]
        %v3489 = vld [vmem:[%s1963 + $0x30] sm:$0xff]
        %3490 = vmatpush.msra.mxu0 0.0
        %3491 = vmatpush.msra.mxu0 0.0
        %3492 = vmatpush.msra.mxu0 0.0
        %3493 = vmatpush.msra.mxu0 0.0
        %3494 = vmatpush.msra.mxu0 0.0
        %3495 = vmatpush.msra.mxu0 0.0
        %3496 = vmatpush.msra.mxu0 0.0
        %3497 = vmatpush.msra.mxu0 0.0
        %3498 = vmatpush.msra.mxu0 0.0
        %3499 = vmatpush.msra.mxu0 0.0
        %3500 = vmatpush.msra.mxu0 0.0
        %3501 = vmatpush.msra.mxu0 0.0
        %3502 = vmatpush.msra.mxu0 0.0
        %3503 = vmatpush.msra.mxu0 0.0
        %3504 = vmatpush.msra.mxu0 0.0
        %3505 = vmatpush.msra.mxu0 %v3482
        %3506 = vmatmul.f32.gmra.mxu0 %v2172
        %v3507 = vpop.f32.mrf.mxu0
        %v3508 = vadd.f32 0.0, %v3507
        %3509 = vmatmul.f32.gmra.mxu0 %v2175
        %v3510 = vpop.f32.mrf.mxu0
        %v3511 = vadd.f32 0.0, %v3510
        %3512 = vmatmul.f32.gmra.mxu0 %v2178
        %v3513 = vpop.f32.mrf.mxu0
        %v3514 = vadd.f32 0.0, %v3513
        %3515 = vmatmul.f32.gmra.mxu0 %v2181
        %v3516 = vpop.f32.mrf.mxu0
        %v3517 = vadd.f32 0.0, %v3516
        %3518 = vmatmul.f32.gmra.mxu0 %v2184
        %v3519 = vpop.f32.mrf.mxu0
        %v3520 = vadd.f32 0.0, %v3519
        %3521 = vmatmul.f32.gmra.mxu0 %v2187
        %v3522 = vpop.f32.mrf.mxu0
        %v3523 = vadd.f32 0.0, %v3522
        %3524 = vmatmul.f32.gmra.mxu0 %v2190
        %v3525 = vpop.f32.mrf.mxu0
        %v3526 = vadd.f32 0.0, %v3525
        %3527 = vdwg.mxu0
        %v3528 = vadd.f32 %v3483, %v3508
        %v3529 = vadd.f32 %v3484, %v3511
        %v3530 = vadd.f32 %v3485, %v3514
        %v3531 = vadd.f32 %v3486, %v3517
        %v3532 = vadd.f32 %v3487, %v3520
        %v3533 = vadd.f32 %v3488, %v3523
        %v3534 = vadd.f32 %v3489, %v3526
        %v3535 = vxor.u32 %v3528, 2147483648
        %v3536 = vmul.f32 %v3535, 1.442695
        %v3537 = vpow.pop %v3536
        %v3538 = vadd.f32 %v3537, 1.0
        %v3539 = vrcp.pop %v3538
        %v3540 = vmul.f32 %v3538, %v3539
        %v3541 = vsub.f32 1.0, %v3540
        %v3542 = vmul.f32 %v3539, %v3541
        %v3543 = vadd.f32 %v3539, %v3542
        %vm3544 = vweird.f32 %v3538
        %vm3545 = vweird.f32 %v3539
        %vm3546 = vmor %vm3544, %vm3545
        %v3547 = vsel %vm3546, %v3539, %v3543
        %v3548 = vand.u32 2147483647, %v3538
        %vm3549 = vcmp.eq.f32.partialorder %v3548, 8.507059e+37
        %v3550 = vand.u32 %v3538, 2147483648
        %v3551 = vor.u32 1.1754944e-38, %v3550
        %v3552 = vsel %vm3549, %v3551, %v3547
        %v3553 = vmul.f32 1.0, %v3552
        %v3554 = vxor.u32 %v3529, 2147483648
        %v3555 = vmul.f32 %v3554, 1.442695
        %v3556 = vpow.pop %v3555
        %v3557 = vadd.f32 %v3556, 1.0
        %v3558 = vrcp.pop %v3557
        %v3559 = vmul.f32 %v3557, %v3558
        %v3560 = vsub.f32 1.0, %v3559
        %v3561 = vmul.f32 %v3558, %v3560
        %v3562 = vadd.f32 %v3558, %v3561
        %vm3563 = vweird.f32 %v3557
        %vm3564 = vweird.f32 %v3558
        %vm3565 = vmor %vm3563, %vm3564
        %v3566 = vsel %vm3565, %v3558, %v3562
        %v3567 = vand.u32 2147483647, %v3557
        %vm3568 = vcmp.eq.f32.partialorder %v3567, 8.507059e+37
        %v3569 = vand.u32 %v3557, 2147483648
        %v3570 = vor.u32 1.1754944e-38, %v3569
        %v3571 = vsel %vm3568, %v3570, %v3566
        %v3572 = vmul.f32 1.0, %v3571
        %v3573 = vxor.u32 %v3530, 2147483648
        %v3574 = vmul.f32 %v3573, 1.442695
        %v3575 = vpow.pop %v3574
        %v3576 = vadd.f32 %v3575, 1.0
        %v3577 = vrcp.pop %v3576
        %v3578 = vmul.f32 %v3576, %v3577
        %v3579 = vsub.f32 1.0, %v3578
        %v3580 = vmul.f32 %v3577, %v3579
        %v3581 = vadd.f32 %v3577, %v3580
        %vm3582 = vweird.f32 %v3576
        %vm3583 = vweird.f32 %v3577
        %vm3584 = vmor %vm3582, %vm3583
        %v3585 = vsel %vm3584, %v3577, %v3581
        %v3586 = vand.u32 2147483647, %v3576
        %vm3587 = vcmp.eq.f32.partialorder %v3586, 8.507059e+37
        %v3588 = vand.u32 %v3576, 2147483648
        %v3589 = vor.u32 1.1754944e-38, %v3588
        %v3590 = vsel %vm3587, %v3589, %v3585
        %v3591 = vmul.f32 1.0, %v3590
        %v3592 = vmax.f32 %v3531, %v3532
        %v3593 = vmax.f32 %v3533, %v3534
        %v3594 = vmax.f32 %v3592, %v3593
        %v3595 = vsub.f32 %v3531, %v3594
        %v3596 = vmul.f32 %v3595, 1.442695
        %v3597 = vpow.pop %v3596
        %v3598 = vsub.f32 %v3532, %v3594
        %v3599 = vmul.f32 %v3598, 1.442695
        %v3600 = vpow.pop %v3599
        %v3601 = vsub.f32 %v3533, %v3594
        %v3602 = vmul.f32 %v3601, 1.442695
        %v3603 = vpow.pop %v3602
        %v3604 = vsub.f32 %v3534, %v3594
        %v3605 = vmul.f32 %v3604, 1.442695
        %v3606 = vpow.pop %v3605
        %v3607 = vadd.f32 %v3597, %v3600
        %v3608 = vadd.f32 %v3607, %v3603
        %v3609 = vadd.f32 %v3608, %v3606
        %v3610 = vrcp.pop %v3609
        %v3611 = vmul.f32 %v3597, %v3610
        %v3612 = vmul.f32 %v3600, %v3610
        %v3613 = vmul.f32 %v3603, %v3610
        %v3614 = vmul.f32 %v3606, %v3610
        %v3615 = vmul.f32 %v3553, %v3480
        %v3616 = vmul.f32 %v3572, %v3482
        %3617 = vmatpush.msra.mxu0 0.0
        %3618 = vmatpush.msra.mxu0 0.0
        %3619 = vmatpush.msra.mxu0 0.0
        %3620 = vmatpush.msra.mxu0 0.0
        %3621 = vmatpush.msra.mxu0 0.0
        %3622 = vmatpush.msra.mxu0 0.0
        %3623 = vmatpush.msra.mxu0 0.0
        %3624 = vmatpush.msra.mxu0 0.0
        %3625 = vmatpush.msra.mxu0 0.0
        %3626 = vmatpush.msra.mxu0 0.0
        %3627 = vmatpush.msra.mxu0 0.0
        %3628 = vmatpush.msra.mxu0 0.0
        %3629 = vmatpush.msra.mxu0 0.0
        %3630 = vmatpush.msra.mxu0 0.0
        %3631 = vmatpush.msra.mxu0 0.0
        %3632 = vmatpush.msra.mxu0 %v3616
        %3633 = vmatmul.f32.gmra.mxu0 %v2320
        %v3634 = vpop.f32.mrf.mxu0
        %v3635 = vadd.f32 0.0, %v3634
        %3636 = vdwg.mxu0
        %3637 = vmatpush.msra.mxu0 0.0
        %3638 = vmatpush.msra.mxu0 0.0
        %3639 = vmatpush.msra.mxu0 0.0
        %3640 = vmatpush.msra.mxu0 0.0
        %3641 = vmatpush.msra.mxu0 0.0
        %3642 = vmatpush.msra.mxu0 0.0
        %3643 = vmatpush.msra.mxu0 0.0
        %3644 = vmatpush.msra.mxu0 0.0
        %3645 = vmatpush.msra.mxu0 0.0
        %3646 = vmatpush.msra.mxu0 0.0
        %3647 = vmatpush.msra.mxu0 0.0
        %3648 = vmatpush.msra.mxu0 0.0
        %3649 = vmatpush.msra.mxu0 0.0
        %3650 = vmatpush.msra.mxu0 0.0
        %3651 = vmatpush.msra.mxu0 0.0
        %3652 = vmatpush.msra.mxu0 %v3615
        %3653 = vmatmul.f32.gmra.mxu0 %v2343
        %v3654 = vpop.f32.mrf.mxu0
        %v3655 = vadd.f32 %v3635, %v3654
        %3656 = vdwg.mxu0
        %v3657 = vmul.f32 %v3591, %v3481
        %3658 = vmatpush.msra.mxu0 0.0
        %3659 = vmatpush.msra.mxu0 0.0
        %3660 = vmatpush.msra.mxu0 0.0
        %3661 = vmatpush.msra.mxu0 0.0
        %3662 = vmatpush.msra.mxu0 0.0
        %3663 = vmatpush.msra.mxu0 0.0
        %3664 = vmatpush.msra.mxu0 0.0
        %3665 = vmatpush.msra.mxu0 0.0
        %3666 = vmatpush.msra.mxu0 0.0
        %3667 = vmatpush.msra.mxu0 0.0
        %3668 = vmatpush.msra.mxu0 0.0
        %3669 = vmatpush.msra.mxu0 0.0
        %3670 = vmatpush.msra.mxu0 0.0
        %3671 = vmatpush.msra.mxu0 0.0
        %3672 = vmatpush.msra.mxu0 0.0
        %3673 = vmatpush.msra.mxu0 %v3657
        %3674 = vmatmul.f32.gmra.mxu0 %v2367
        %v3675 = vpop.f32.mrf.mxu0
        %v3676 = vadd.f32 0.0, %v3675
        %3677 = vdwg.mxu0
        %v3678 = vadd.f32 %v3655, %v3676
        %v3679 = vadd.f32 %v3678, %v2393
        %v3680 = vld [vmem:[%s1991] sm:$0xff]
        %v3681 = vadd.f32 %v3680, %v3679
        %v3682 = vtanh.pop %v3681
        %v3683 = vmul.f32 %v3612, %v3482
        %v3684 = vmul.f32 %v3613, %v3480
        %v3685 = vadd.f32 %v3683, %v3684
        %v3686 = vmul.f32 %v3614, %v3481
        %v3687 = vadd.f32 %v3685, %v3686
        %v3688 = vmul.f32 %v3611, %v3682
        %v3689 = vadd.f32 %v3687, %v3688
        %s3690 = ssub.s32 16, %s722
        %s3691 = smul.u32 %s3690, 8
        %s3692 = scalar_lea.vmem [#allocation2], %s3691
        %3693 = vst [vmem:[%s3692] sm:$0xff] %v3689
        %v3694 = vld [vmem:[%s1998] sm:$0xff]
        %v3695 = vld [vmem:[%s1832] sm:$0xff]
        %v3696 = vld [vmem:[%s3692] sm:$0xff]
        %v3697 = vld [vmem:[%s2129] sm:$0xff]
        %v3698 = vld [vmem:[%s2129 + $0x8] sm:$0xff]
        %v3699 = vld [vmem:[%s2129 + $0x10] sm:$0xff]
        %v3700 = vld [vmem:[%s2129 + $0x18] sm:$0xff]
        %v3701 = vld [vmem:[%s2129 + $0x20] sm:$0xff]
        %v3702 = vld [vmem:[%s2129 + $0x28] sm:$0xff]
        %v3703 = vld [vmem:[%s2129 + $0x30] sm:$0xff]
        %3704 = vmatpush.msra.mxu0 0.0
        %3705 = vmatpush.msra.mxu0 0.0
        %3706 = vmatpush.msra.mxu0 0.0
        %3707 = vmatpush.msra.mxu0 0.0
        %3708 = vmatpush.msra.mxu0 0.0
        %3709 = vmatpush.msra.mxu0 0.0
        %3710 = vmatpush.msra.mxu0 0.0
        %3711 = vmatpush.msra.mxu0 0.0
        %3712 = vmatpush.msra.mxu0 0.0
        %3713 = vmatpush.msra.mxu0 0.0
        %3714 = vmatpush.msra.mxu0 0.0
        %3715 = vmatpush.msra.mxu0 0.0
        %3716 = vmatpush.msra.mxu0 0.0
        %3717 = vmatpush.msra.mxu0 0.0
        %3718 = vmatpush.msra.mxu0 0.0
        %3719 = vmatpush.msra.mxu0 %v3696
        %3720 = vmatmul.f32.gmra.mxu0 %v2172
        %v3721 = vpop.f32.mrf.mxu0
        %v3722 = vadd.f32 0.0, %v3721
        %3723 = vmatmul.f32.gmra.mxu0 %v2175
        %v3724 = vpop.f32.mrf.mxu0
        %v3725 = vadd.f32 0.0, %v3724
        %3726 = vmatmul.f32.gmra.mxu0 %v2178
        %v3727 = vpop.f32.mrf.mxu0
        %v3728 = vadd.f32 0.0, %v3727
        %3729 = vmatmul.f32.gmra.mxu0 %v2181
        %v3730 = vpop.f32.mrf.mxu0
        %v3731 = vadd.f32 0.0, %v3730
        %3732 = vmatmul.f32.gmra.mxu0 %v2184
        %v3733 = vpop.f32.mrf.mxu0
        %v3734 = vadd.f32 0.0, %v3733
        %3735 = vmatmul.f32.gmra.mxu0 %v2187
        %v3736 = vpop.f32.mrf.mxu0
        %v3737 = vadd.f32 0.0, %v3736
        %3738 = vmatmul.f32.gmra.mxu0 %v2190
        %v3739 = vpop.f32.mrf.mxu0
        %v3740 = vadd.f32 0.0, %v3739
        %3741 = vdwg.mxu0
        %v3742 = vadd.f32 %v3697, %v3722
        %v3743 = vadd.f32 %v3698, %v3725
        %v3744 = vadd.f32 %v3699, %v3728
        %v3745 = vadd.f32 %v3700, %v3731
        %v3746 = vadd.f32 %v3701, %v3734
        %v3747 = vadd.f32 %v3702, %v3737
        %v3748 = vadd.f32 %v3703, %v3740
        %v3749 = vxor.u32 %v3742, 2147483648
        %v3750 = vmul.f32 %v3749, 1.442695
        %v3751 = vpow.pop %v3750
        %v3752 = vadd.f32 %v3751, 1.0
        %v3753 = vrcp.pop %v3752
        %v3754 = vmul.f32 %v3752, %v3753
        %v3755 = vsub.f32 1.0, %v3754
        %v3756 = vmul.f32 %v3753, %v3755
        %v3757 = vadd.f32 %v3753, %v3756
        %vm3758 = vweird.f32 %v3752
        %vm3759 = vweird.f32 %v3753
        %vm3760 = vmor %vm3758, %vm3759
        %v3761 = vsel %vm3760, %v3753, %v3757
        %v3762 = vand.u32 2147483647, %v3752
        %vm3763 = vcmp.eq.f32.partialorder %v3762, 8.507059e+37
        %v3764 = vand.u32 %v3752, 2147483648
        %v3765 = vor.u32 1.1754944e-38, %v3764
        %v3766 = vsel %vm3763, %v3765, %v3761
        %v3767 = vmul.f32 1.0, %v3766
        %v3768 = vxor.u32 %v3743, 2147483648
        %v3769 = vmul.f32 %v3768, 1.442695
        %v3770 = vpow.pop %v3769
        %v3771 = vadd.f32 %v3770, 1.0
        %v3772 = vrcp.pop %v3771
        %v3773 = vmul.f32 %v3771, %v3772
        %v3774 = vsub.f32 1.0, %v3773
        %v3775 = vmul.f32 %v3772, %v3774
        %v3776 = vadd.f32 %v3772, %v3775
        %vm3777 = vweird.f32 %v3771
        %vm3778 = vweird.f32 %v3772
        %vm3779 = vmor %vm3777, %vm3778
        %v3780 = vsel %vm3779, %v3772, %v3776
        %v3781 = vand.u32 2147483647, %v3771
        %vm3782 = vcmp.eq.f32.partialorder %v3781, 8.507059e+37
        %v3783 = vand.u32 %v3771, 2147483648
        %v3784 = vor.u32 1.1754944e-38, %v3783
        %v3785 = vsel %vm3782, %v3784, %v3780
        %v3786 = vmul.f32 1.0, %v3785
        %v3787 = vxor.u32 %v3744, 2147483648
        %v3788 = vmul.f32 %v3787, 1.442695
        %v3789 = vpow.pop %v3788
        %v3790 = vadd.f32 %v3789, 1.0
        %v3791 = vrcp.pop %v3790
        %v3792 = vmul.f32 %v3790, %v3791
        %v3793 = vsub.f32 1.0, %v3792
        %v3794 = vmul.f32 %v3791, %v3793
        %v3795 = vadd.f32 %v3791, %v3794
        %vm3796 = vweird.f32 %v3790
        %vm3797 = vweird.f32 %v3791
        %vm3798 = vmor %vm3796, %vm3797
        %v3799 = vsel %vm3798, %v3791, %v3795
        %v3800 = vand.u32 2147483647, %v3790
        %vm3801 = vcmp.eq.f32.partialorder %v3800, 8.507059e+37
        %v3802 = vand.u32 %v3790, 2147483648
        %v3803 = vor.u32 1.1754944e-38, %v3802
        %v3804 = vsel %vm3801, %v3803, %v3799
        %v3805 = vmul.f32 1.0, %v3804
        %v3806 = vmax.f32 %v3745, %v3746
        %v3807 = vmax.f32 %v3747, %v3748
        %v3808 = vmax.f32 %v3806, %v3807
        %v3809 = vsub.f32 %v3745, %v3808
        %v3810 = vmul.f32 %v3809, 1.442695
        %v3811 = vpow.pop %v3810
        %v3812 = vsub.f32 %v3746, %v3808
        %v3813 = vmul.f32 %v3812, 1.442695
        %v3814 = vpow.pop %v3813
        %v3815 = vsub.f32 %v3747, %v3808
        %v3816 = vmul.f32 %v3815, 1.442695
        %v3817 = vpow.pop %v3816
        %v3818 = vsub.f32 %v3748, %v3808
        %v3819 = vmul.f32 %v3818, 1.442695
        %v3820 = vpow.pop %v3819
        %v3821 = vadd.f32 %v3811, %v3814
        %v3822 = vadd.f32 %v3821, %v3817
        %v3823 = vadd.f32 %v3822, %v3820
        %v3824 = vrcp.pop %v3823
        %v3825 = vmul.f32 %v3811, %v3824
        %v3826 = vmul.f32 %v3814, %v3824
        %v3827 = vmul.f32 %v3817, %v3824
        %v3828 = vmul.f32 %v3820, %v3824
        %v3829 = vmul.f32 %v3767, %v3694
        %v3830 = vmul.f32 %v3786, %v3696
        %3831 = vmatpush.msra.mxu0 0.0
        %3832 = vmatpush.msra.mxu0 0.0
        %3833 = vmatpush.msra.mxu0 0.0
        %3834 = vmatpush.msra.mxu0 0.0
        %3835 = vmatpush.msra.mxu0 0.0
        %3836 = vmatpush.msra.mxu0 0.0
        %3837 = vmatpush.msra.mxu0 0.0
        %3838 = vmatpush.msra.mxu0 0.0
        %3839 = vmatpush.msra.mxu0 0.0
        %3840 = vmatpush.msra.mxu0 0.0
        %3841 = vmatpush.msra.mxu0 0.0
        %3842 = vmatpush.msra.mxu0 0.0
        %3843 = vmatpush.msra.mxu0 0.0
        %3844 = vmatpush.msra.mxu0 0.0
        %3845 = vmatpush.msra.mxu0 0.0
        %3846 = vmatpush.msra.mxu0 %v3830
        %3847 = vmatmul.f32.gmra.mxu0 %v2320
        %v3848 = vpop.f32.mrf.mxu0
        %v3849 = vadd.f32 0.0, %v3848
        %3850 = vdwg.mxu0
        %3851 = vmatpush.msra.mxu0 0.0
        %3852 = vmatpush.msra.mxu0 0.0
        %3853 = vmatpush.msra.mxu0 0.0
        %3854 = vmatpush.msra.mxu0 0.0
        %3855 = vmatpush.msra.mxu0 0.0
        %3856 = vmatpush.msra.mxu0 0.0
        %3857 = vmatpush.msra.mxu0 0.0
        %3858 = vmatpush.msra.mxu0 0.0
        %3859 = vmatpush.msra.mxu0 0.0
        %3860 = vmatpush.msra.mxu0 0.0
        %3861 = vmatpush.msra.mxu0 0.0
        %3862 = vmatpush.msra.mxu0 0.0
        %3863 = vmatpush.msra.mxu0 0.0
        %3864 = vmatpush.msra.mxu0 0.0
        %3865 = vmatpush.msra.mxu0 0.0
        %3866 = vmatpush.msra.mxu0 %v3829
        %3867 = vmatmul.f32.gmra.mxu0 %v2343
        %v3868 = vpop.f32.mrf.mxu0
        %v3869 = vadd.f32 %v3849, %v3868
        %3870 = vdwg.mxu0
        %v3871 = vmul.f32 %v3805, %v3695
        %3872 = vmatpush.msra.mxu0 0.0
        %3873 = vmatpush.msra.mxu0 0.0
        %3874 = vmatpush.msra.mxu0 0.0
        %3875 = vmatpush.msra.mxu0 0.0
        %3876 = vmatpush.msra.mxu0 0.0
        %3877 = vmatpush.msra.mxu0 0.0
        %3878 = vmatpush.msra.mxu0 0.0
        %3879 = vmatpush.msra.mxu0 0.0
        %3880 = vmatpush.msra.mxu0 0.0
        %3881 = vmatpush.msra.mxu0 0.0
        %3882 = vmatpush.msra.mxu0 0.0
        %3883 = vmatpush.msra.mxu0 0.0
        %3884 = vmatpush.msra.mxu0 0.0
        %3885 = vmatpush.msra.mxu0 0.0
        %3886 = vmatpush.msra.mxu0 0.0
        %3887 = vmatpush.msra.mxu0 %v3871
        %3888 = vmatmul.f32.gmra.mxu0 %v2367
        %v3889 = vpop.f32.mrf.mxu0
        %v3890 = vadd.f32 0.0, %v3889
        %3891 = vdwg.mxu0
        %v3892 = vadd.f32 %v3869, %v3890
        %v3893 = vadd.f32 %v3892, %v2393
        %v3894 = vld [vmem:[%s2157] sm:$0xff]
        %v3895 = vadd.f32 %v3894, %v3893
        %v3896 = vtanh.pop %v3895
        %v3897 = vmul.f32 %v3826, %v3696
        %v3898 = vmul.f32 %v3827, %v3694
        %v3899 = vadd.f32 %v3897, %v3898
        %v3900 = vmul.f32 %v3828, %v3695
        %v3901 = vadd.f32 %v3899, %v3900
        %v3902 = vmul.f32 %v3825, %v3896
        %v3903 = vadd.f32 %v3901, %v3902
        %s3904 = ssub.s32 17, %s722
        %s3905 = smul.u32 %s3904, 8
        %s3906 = scalar_lea.vmem [#allocation2], %s3905
        %3907 = vst [vmem:[%s3906] sm:$0xff] %v3903
      $region73: #{hint_forward.2} parent=67 // loop_footer
        %s709 = sadd.s32 1, %s705
      $region74: #{hint_forward.2} parent=67 // loop_footer_branch
        %704 = sbr.rel target = $region70
      $region75: #{hint_forward.2} parent=67 // loop_exit
        _
      %s3908 = scalar_lea.vmem [#allocation2], 64
      %v3909 = vld [vmem:[%s3908] sm:$0xff]
      %3910 = vst [vmem:[%s644] sm:$0xff] %v3909
      %p3911 = scmp.lt.s32.totalorder %s27, 1
      %s3912 = scalar_select %p3911, %s27, 1
      %p3913 = scmp.lt.s32.totalorder %s28, 0
      %s3914 = scalar_select %p3913, %s28, 0
      %s3915 = sadd.s32 %s3914, %s3912
      %s3916 = smul.addr %s3915, 8
      %s3917 = scalar_lea.vmem %s12, %s3916
      // Predicated region
      $region76: #{hint_forward.2} parent=67 // pred_check
        %p3918 = pneg %p369
      $region77: #{hint_forward.2} parent=67 // pred_check_branch
        %3920 = sbr.rel (%p3918) target = $region79
      $region78: #{hint_forward.2} parent=67 // pred_region
        _
      $region79: #{hint_forward.2} parent=67 // pred_fallthru
        _
    $region68: #{hint_forward.2} parent=5 // pred_fallthru
      _
    %p3921 = scmp.le.s32.totalorder 2, %s18
    // Predicated region
    $region80: #{hint_forward.2} parent=5 // pred_check
      %p3922 = pneg %p3921
    $region81: #{hint_forward.2} parent=5 // pred_check_branch
      %3924 = sbr.rel (%p3922) target = $region83
    $region82: #{hint_forward.2} parent=5 // pred_region
      %s3925 = ssub.s32 %s18, 2
      // Predicated region
      $region84: #{hint_forward.2} parent=82 // pred_check
        %p3926 = pneg %p375
      $region85: #{hint_forward.2} parent=82 // pred_check_branch
        %3928 = sbr.rel (%p3926) target = $region87
      $region86: #{hint_forward.2} parent=82 // pred_region
        %p3929 = scmp.lt.s32.totalorder %s29, 1
        %s3930 = scalar_select %p3929, %s29, 1
        %p3931 = scmp.lt.s32.totalorder %s30, 0
        %s3932 = scalar_select %p3931, %s30, 0
        %s3933 = sadd.s32 %s3932, %s3930
        %s3934 = smul.addr %s3933, 8
        %s3935 = scalar_lea.vmem %s12, %s3934
      $region87: #{hint_forward.2} parent=82 // pred_fallthru
        _
    $region83: #{hint_forward.2} parent=5 // pred_fallthru
      _
  $region6: #{hint_forward.2} parent=0 // loop_footer
    %s22 = sadd.s32 1, %s18
  $region7: #{hint_forward.2} parent=0 // loop_footer_branch
    %17 = sbr.rel target = $region3
  $region8: #{hint_forward.2} parent=0 // loop_exit
    _

</llo_original>
